<compile_context>
chip_gen: v5e
topology: v5e:2x2
jax: 0.10.0
libtpu: 0.0.40
codegen_flags: <defaults>
</compile_context>

<pallas_src>
import functools

import jax
import jax.numpy as jnp
from jax.experimental import pallas as pl
from jax.experimental.pallas import tpu as pltpu

NEG_SLOPE = 0.01                     # nn.LeakyReLU() default
BN_EPS = 1e-5                        # nn.BatchNorm* default
_VMEM_LIMIT = 48 * 1024 * 1024       # above the 32 MiB scoped default, < v7x 64 MiB


# ---------------------------------------------------------------------------
# Fused Pallas kernels:  GEMM (bf16 x bf16 -> f32 accumulate)
#                        + train-mode BatchNorm (single-pass sum / sumsq)
#                        + LeakyReLU  [+ optional 1x1-conv projection epilogue]
# ---------------------------------------------------------------------------
def _bn_lrelu(y, g, b, inv_count, mix=None):
    # single-pass statistics over the row (batch*spatial) dimension
    s = jnp.sum(y, axis=0, keepdims=True)
    ss = jnp.sum(y * y, axis=0, keepdims=True)
    if mix is not None:
        # pool the stats over the sub-pixel phase groups packed in the columns
        s = jnp.dot(s, mix, preferred_element_type=jnp.float32)
        ss = jnp.dot(ss, mix, preferred_element_type=jnp.float32)
    mean = s * inv_count
    var = jnp.maximum(ss * inv_count - mean * mean, 0.0)   # clamp E[y^2]-E[y]^2
    z = (y - mean) * jax.lax.rsqrt(var + BN_EPS) * g + b
    return jnp.where(z >= 0, z, NEG_SLOPE * z)


def _gemm_bn_lrelu_kernel(x_ref, w_ref, g_ref, b_ref, o_ref, *, inv_count):
    y = jnp.dot(x_ref[...], w_ref[...], preferred_element_type=jnp.float32)
    o_ref[...] = _bn_lrelu(y, g_ref[...], b_ref[...], inv_count).astype(o_ref.dtype)


def _gemm_pbn_lrelu_kernel(x_ref, w_ref, g_ref, b_ref, m_ref, o_ref, *, inv_count):
    y = jnp.dot(x_ref[...], w_ref[...], preferred_element_type=jnp.float32)
    o_ref[...] = _bn_lrelu(y, g_ref[...], b_ref[...], inv_count,
                           mix=m_ref[...]).astype(o_ref.dtype)


def _gemm_bn_lrelu_proj_kernel(x_ref, w_ref, g_ref, b_ref, wp_ref, o_ref, *,
                               inv_count):
    y = jnp.dot(x_ref[...], w_ref[...], preferred_element_type=jnp.float32)
    z = _bn_lrelu(y, g_ref[...], b_ref[...], inv_count)
    # fused final 1x1 conv (bias=False), stored transposed (out_c, R) so the
    # long axis is lane-dense (A @ B^T contraction pattern).
    o_ref[...] = jax.lax.dot_general(
        wp_ref[...], z.astype(jnp.bfloat16),
        dimension_numbers=(((1,), (1,)), ((), ())),
        preferred_element_type=jnp.float32)


# ---------------------------------------------------------------------------
# Wrappers
# ---------------------------------------------------------------------------
def gemm_bn_lrelu(x, w, gamma, beta, *, n_phases=1, out_dtype=jnp.bfloat16,
                  tile_n=128):
    """out = LeakyReLU(BN_train(x @ w)), with BN stats pooled over `n_phases`
    column groups (used for the 4-phase-packed transposed convolutions)."""
    R, K = x.shape
    N = w.shape[1]
    if n_phases > 1 or N <= tile_n or N % tile_n != 0:
        tn = N                                  # phase groups must not be split
    else:
        tn = tile_n
    inv_count = 1.0 / float(R * n_phases)
    g2 = gamma.reshape(1, N).astype(jnp.float32)
    b2 = beta.reshape(1, N).astype(jnp.float32)

    in_specs = [
        pl.BlockSpec((R, K), lambda j: (0, 0)),
        pl.BlockSpec((K, tn), lambda j: (0, j)),
        pl.BlockSpec((1, tn), lambda j: (0, j)),
        pl.BlockSpec((1, tn), lambda j: (0, j)),
    ]
    args = [x.astype(jnp.bfloat16), w.astype(jnp.bfloat16), g2, b2]
    if n_phases == 1:
        kernel = functools.partial(_gemm_bn_lrelu_kernel, inv_count=inv_count)
    else:
        c = N // n_phases
        # mix[i, j] = 1  iff  i % c == j % c   (phase-pooling of column stats)
        mix = jnp.tile(jnp.eye(c, dtype=jnp.float32), (n_phases, n_phases))
        in_specs.append(pl.BlockSpec((N, N), lambda j: (0, 0)))
        args.append(mix)
        kernel = functools.partial(_gemm_pbn_lrelu_kernel, inv_count=inv_count)

    # TODO(synk): for large batches, add an R-tiled two-pass BN (sum/sumsq
    # accumulated over an R grid axis) so the (R, K) block never exceeds VMEM.
    return pl.pallas_call(
        kernel,
        out_shape=jax.ShapeDtypeStruct((R, N), out_dtype),
        grid=(N // tn,),
        in_specs=in_specs,
        out_specs=pl.BlockSpec((R, tn), lambda j: (0, j)),
        compiler_params=pltpu.CompilerParams(
            dimension_semantics=("parallel",),
            vmem_limit_bytes=_VMEM_LIMIT),
    )(*args)


def gemm_bn_lrelu_proj(x, w, gamma, beta, w_projT):
    """Last 3x3-conv GEMM + BN + LeakyReLU fused with the final 1x1 conv.
    Returns the projection transposed: (out_c, R)."""
    R, K = x.shape
    C = w.shape[1]
    P = w_projT.shape[0]
    g2 = gamma.reshape(1, C).astype(jnp.float32)
    b2 = beta.reshape(1, C).astype(jnp.float32)
    vmem = pl.BlockSpec(memory_space=pltpu.MemorySpace.VMEM)
    kernel = functools.partial(_gemm_bn_lrelu_proj_kernel, inv_count=1.0 / float(R))
    return pl.pallas_call(
        kernel,
        out_shape=jax.ShapeDtypeStruct((P, R), jnp.float32),
        in_specs=[vmem] * 5,
        out_specs=vmem,
        compiler_params=pltpu.CompilerParams(vmem_limit_bytes=_VMEM_LIMIT),
    )(x.astype(jnp.bfloat16), w.astype(jnp.bfloat16), g2, b2,
      w_projT.astype(jnp.bfloat16))


# ---------------------------------------------------------------------------
# Glue (pure data movement, XLA): 3x3 "same" im2col, phase->space reassembly,
# and one-time weight re-layouts.
# ---------------------------------------------------------------------------
def _im2col_3x3_same(x):
    # TODO(synk): patch extraction is HBM-level XLA glue; a halo-read BlockSpec
    # design would keep the 9x channel expansion out of HBM entirely.
    B, H, W, C = x.shape
    xp = jnp.pad(x, ((0, 0), (1, 1), (1, 1), (0, 0)))
    cols = [xp[:, kh:kh + H, kw:kw + W, :] for kh in range(3) for kw in range(3)]
    return jnp.concatenate(cols, axis=-1).reshape(B * H * W, 9 * C)


def _phase_to_space(y2d, B, H, W, cout):
    # GEMM columns are ordered (rh, rw, c):
    #   out[b, 2*qh+rh, 2*qw+rw, c] = y[b, qh, qw, rh, rw, c]
    y = y2d.reshape(B, H, W, 2, 2, cout).transpose(0, 1, 3, 2, 4, 5)
    return y.reshape(B, 2 * H, 2 * W, cout)


def _convtranspose_phase_weight(wt):
    # PyTorch ConvTranspose2d weight (Cin, Cout, 5, 5) with stride=2, padding=2,
    # output_padding=1, decomposed into 4 sub-pixel-phase 3x3 conv kernels and
    # packed as one (9*Cin, 4*Cout) GEMM weight (column order = (rh, rw, cout)).
    # For output phase r and patch offset j (input position q - 1 + j), the
    # contributing transposed-conv tap is k = 4 + r - 2*j when 0 <= k < 5.
    cin, cout = wt.shape[0], wt.shape[1]
    wc = jnp.zeros((3, 3, cin, 2, 2, cout), wt.dtype)
    for rh in range(2):
        for jh in range(3):
            kh = 4 + rh - 2 * jh
            if not 0 <= kh < 5:
                continue
            for rw in range(2):
                for jw in range(3):
                    kw = 4 + rw - 2 * jw
                    if not 0 <= kw < 5:
                        continue
                    wc = wc.at[jh, jw, :, rh, rw, :].set(wt[:, :, kh, kw])
    return wc.reshape(9 * cin, 4 * cout)


def _conv3x3_weight(w):
    # PyTorch Conv2d weight (Cout, Cin, 3, 3) -> im2col GEMM weight (9*Cin, Cout)
    return w.transpose(2, 3, 1, 0).reshape(-1, w.shape[0])


# ---------------------------------------------------------------------------
# Parameters (deterministic, synthetic), kernel-layout prep, forward pass.
# ---------------------------------------------------------------------------
def init_decoder_params(key, code_length, conv_feature_shape, out_shape):
    C0, H0, W0 = conv_feature_shape
    assert C0 == 64, "first UpsampleBlock expects 64 input channels"
    fc_out = C0 * H0 * W0
    ks = jax.random.split(key, 9)

    def w_init(k, fan_in, shape):
        return jax.random.normal(k, shape, jnp.float32) / jnp.sqrt(float(fan_in))

    return dict(
        # fc (the Linear biases b1/b2 are kept for fidelity; they are cancelled
        # exactly by the train-mode BatchNorm mean subtraction, so the kernels
        # never read them)
        w1=w_init(ks[0], code_length, (code_length, 64)),
        b1=0.01 * jax.random.normal(ks[1], (64,), jnp.float32),
        g1=jnp.ones((64,), jnp.float32), be1=jnp.zeros((64,), jnp.float32),
        w2=w_init(ks[2], 64, (64, fc_out)),
        b2=0.01 * jax.random.normal(ks[3], (fc_out,), jnp.float32),
        g2=jnp.ones((fc_out,), jnp.float32), be2=jnp.zeros((fc_out,), jnp.float32),
        # UpsampleBlock 1 (64 -> 32)
        wt1=w_init(ks[4], 64 * 5 * 5, (64, 32, 5, 5)),   # ConvTranspose2d (Cin,Cout,KH,KW)
        g1a=jnp.ones((32,), jnp.float32), b1a=jnp.zeros((32,), jnp.float32),
        wc1=w_init(ks[5], 32 * 3 * 3, (32, 32, 3, 3)),   # Conv2d (Cout,Cin,KH,KW)
        g1b=jnp.ones((32,), jnp.float32), b1b=jnp.zeros((32,), jnp.float32),
        # UpsampleBlock 2 (32 -> 16)
        wt2=w_init(ks[6], 32 * 5 * 5, (32, 16, 5, 5)),
        g2a=jnp.ones((16,), jnp.float32), b2a=jnp.zeros((16,), jnp.float32),
        wc2=w_init(ks[7], 16 * 3 * 3, (16, 16, 3, 3)),
        g2b=jnp.ones((16,), jnp.float32), b2b=jnp.zeros((16,), jnp.float32),
        # final 1x1 conv, bias=False: (out_c, 16, 1, 1)
        wfin=w_init(ks[8], 16, (out_shape[0], 16, 1, 1)),
    )


def prepare_decoder_params(p, conv_feature_shape):
    """One-time re-layout / bf16 cast of the PyTorch-style parameters."""
    C0, H0, W0 = conv_feature_shape
    bf16, f32 = jnp.bfloat16, jnp.float32
    # fc2: permute output columns (and BN1d params) from (C,H,W) to (H,W,C) so
    # the fc head directly emits NHWC features (no materialized transpose).
    w2p = (p["w2"].reshape(64, C0, H0, W0).transpose(0, 2, 3, 1)
           .reshape(64, C0 * H0 * W0))
    g2p = p["g2"].reshape(C0, H0, W0).transpose(1, 2, 0).reshape(-1)
    be2p = p["be2"].reshape(C0, H0, W0).transpose(1, 2, 0).reshape(-1)
    return dict(
        w1=p["w1"].astype(bf16), g1=p["g1"].astype(f32), be1=p["be1"].astype(f32),
        w2=w2p.astype(bf16), g2=g2p.astype(f32), be2=be2p.astype(f32),
        wt1=_convtranspose_phase_weight(p["wt1"]).astype(bf16),
        g1a=jnp.tile(p["g1a"], 4).astype(f32), b1a=jnp.tile(p["b1a"], 4).astype(f32),
        wc1=_conv3x3_weight(p["wc1"]).astype(bf16),
        g1b=p["g1b"].astype(f32), b1b=p["b1b"].astype(f32),
        wt2=_convtranspose_phase_weight(p["wt2"]).astype(bf16),
        g2a=jnp.tile(p["g2a"], 4).astype(f32), b2a=jnp.tile(p["b2a"], 4).astype(f32),
        wc2=_conv3x3_weight(p["wc2"]).astype(bf16),
        g2b=p["g2b"].astype(f32), b2b=p["b2b"].astype(f32),
        wfin=p["wfin"].reshape(p["wfin"].shape[0], 16).astype(bf16),  # (out_c, 16)
    )


def decoder_forward(kp, x, conv_feature_shape):
    C0, H0, W0 = conv_feature_shape
    B = x.shape[0]

    # ---- fc head: two fused Linear + BN1d + LeakyReLU kernels -----------------
    h = gemm_bn_lrelu(x, kp["w1"], kp["g1"], kp["be1"])
    h = gemm_bn_lrelu(h, kp["w2"], kp["g2"], kp["be2"])
    h = h.reshape(B, H0, W0, C0)                    # columns already NHWC-ordered

    # ---- UpsampleBlock 1: ConvTranspose2d(64->32) via 4-phase GEMM + 3x3 conv --
    y = gemm_bn_lrelu(_im2col_3x3_same(h), kp["wt1"], kp["g1a"], kp["b1a"],
                      n_phases=4)
    h = _phase_to_space(y, B, H0, W0, 32)                        # (B, 2H0, 2W0, 32)
    y = gemm_bn_lrelu(_im2col_3x3_same(h), kp["wc1"], kp["g1b"], kp["b1b"])
    h = y.reshape(B, 2 * H0, 2 * W0, 32)

    # ---- UpsampleBlock 2: ConvTranspose2d(32->16) + (3x3 conv fused with final
    #      1x1 conv 16 -> out_c as an in-kernel epilogue) ------------------------
    y = gemm_bn_lrelu(_im2col_3x3_same(h), kp["wt2"], kp["g2a"], kp["b2a"],
                      n_phases=4)
    h = _phase_to_space(y, B, 2 * H0, 2 * W0, 16)                # (B, 4H0, 4W0, 16)
    yT = gemm_bn_lrelu_proj(_im2col_3x3_same(h), kp["wc2"], kp["g2b"], kp["b2b"],
                            kp["wfin"])                          # (out_c, B*4H0*4W0)

    out_c = kp["wfin"].shape[0]
    y = yT.reshape(out_c, B, 4 * H0, 4 * W0).transpose(1, 0, 2, 3)   # back to NCHW
    return y


if __name__ == "__main__":
    code_length = 32
    conv_feature_shape = (64, 4, 4)          # (C, H, W); C must be 64 for the deconv
    out_shape = (1, 16, 16)                  # two x2 upsamples: 4 -> 8 -> 16
    B = 2

    key = jax.random.PRNGKey(0)
    kx, kp = jax.random.split(key)
    x = jax.random.normal(kx, (B, code_length), jnp.float32)
    params = init_decoder_params(kp, code_length, conv_feature_shape, out_shape)
    kparams = prepare_decoder_params(params, conv_feature_shape)

    fwd = jax.jit(functools.partial(decoder_forward,
                                    conv_feature_shape=conv_feature_shape))
    y = fwd(kparams, x)
    jax.block_until_ready(y)

    assert y.shape == (B,) + out_shape, y.shape
    assert bool(jnp.all(jnp.isfinite(y)))
    print("KERNEL_OK")
</pallas_src>

<mosaic_0001>
module attributes {stable_mosaic.version = 11 : i64} {
  func.func @_gemm_bn_lrelu_kernel(%arg0: i32, %arg1: memref<2x64xbf16, #tpu.memory_space<vmem>>, %arg2: memref<64x128xbf16, #tpu.memory_space<vmem>>, %arg3: memref<1x128xf32, #tpu.memory_space<vmem>>, %arg4: memref<1x128xf32, #tpu.memory_space<vmem>>, %arg5: memref<2x128xbf16, #tpu.memory_space<vmem>>) attributes {dimension_semantics = [#tpu.dimension_semantics<parallel>], iteration_bounds = array<i64: 8>, scalar_prefetch = 0 : i64, scratch_operands = 0 : i64, tpu.core_type = #tpu.core_type<tc>, window_params = [{pipeline_mode = #tpu.pipeline_mode<synchronous>, transform_indices = @transform_0, window_bounds = array<i64: 2, 64>}, {transform_indices = @transform_1, window_bounds = array<i64: 64, 128>}, {transform_indices = @transform_2, window_bounds = array<i64: 1, 128>}, {transform_indices = @transform_3, window_bounds = array<i64: 1, 128>}, {transform_indices = @transform_4, window_bounds = array<i64: 2, 128>}]} {
    %c0 = arith.constant 0 : index
    %c0_0 = arith.constant 0 : index
    %0 = vector.load %arg1[%c0, %c0_0] : memref<2x64xbf16, #tpu.memory_space<vmem>>, vector<2x64xbf16>
    %c0_1 = arith.constant 0 : index
    %c0_2 = arith.constant 0 : index
    %1 = vector.load %arg2[%c0_1, %c0_2] : memref<64x128xbf16, #tpu.memory_space<vmem>>, vector<64x128xbf16>
    %cst = arith.constant dense<0.000000e+00> : vector<2x128xf32>
    %2 = tpu.matmul %0, %1, %cst {dimension_numbers = #tpu.dot_dimension_numbers<[1], [0], [0], [1], [0, 0, 1, 1], [], []>} : vector<2x64xbf16>, vector<64x128xbf16>, vector<2x128xf32> -> vector<2x128xf32>
    %c0_3 = arith.constant 0 : index
    %c0_4 = arith.constant 0 : index
    %3 = vector.load %arg3[%c0_3, %c0_4] : memref<1x128xf32, #tpu.memory_space<vmem>>, vector<1x128xf32>
    %c0_5 = arith.constant 0 : index
    %c0_6 = arith.constant 0 : index
    %4 = vector.load %arg4[%c0_5, %c0_6] : memref<1x128xf32, #tpu.memory_space<vmem>>, vector<1x128xf32>
    %cst_7 = arith.constant dense<0.000000e+00> : vector<128xf32>
    %5 = vector.multi_reduction <add>, %2, %cst_7 [0] : vector<2x128xf32> to vector<128xf32>
    %6 = vector.shape_cast %5 : vector<128xf32> to vector<1x128xf32>
    %7 = arith.mulf %2, %2 : vector<2x128xf32>
    %cst_8 = arith.constant dense<0.000000e+00> : vector<128xf32>
    %8 = vector.multi_reduction <add>, %7, %cst_8 [0] : vector<2x128xf32> to vector<128xf32>
    %9 = vector.shape_cast %8 : vector<128xf32> to vector<1x128xf32>
    %cst_9 = arith.constant 5.000000e-01 : f32
    %10 = vector.broadcast %cst_9 : f32 to vector<1x128xf32>
    %11 = arith.mulf %6, %10 : vector<1x128xf32>
    %cst_10 = arith.constant 5.000000e-01 : f32
    %12 = vector.broadcast %cst_10 : f32 to vector<1x128xf32>
    %13 = arith.mulf %9, %12 : vector<1x128xf32>
    %14 = arith.mulf %11, %11 : vector<1x128xf32>
    %15 = arith.subf %13, %14 : vector<1x128xf32>
    %cst_11 = arith.constant 0.000000e+00 : f32
    %16 = vector.broadcast %cst_11 : f32 to vector<1x128xf32>
    %17 = arith.maximumf %15, %16 : vector<1x128xf32>
    %18 = vector.broadcast %11 : vector<1x128xf32> to vector<2x128xf32>
    %19 = arith.subf %2, %18 : vector<2x128xf32>
    %cst_12 = arith.constant 9.99999974E-6 : f32
    %20 = vector.broadcast %cst_12 : f32 to vector<1x128xf32>
    %21 = arith.addf %17, %20 : vector<1x128xf32>
    %22 = math.rsqrt %21 : vector<1x128xf32>
    %23 = vector.broadcast %22 : vector<1x128xf32> to vector<2x128xf32>
    %24 = arith.mulf %19, %23 : vector<2x128xf32>
    %25 = vector.broadcast %3 : vector<1x128xf32> to vector<2x128xf32>
    %26 = arith.mulf %24, %25 : vector<2x128xf32>
    %27 = vector.broadcast %4 : vector<1x128xf32> to vector<2x128xf32>
    %28 = arith.addf %26, %27 : vector<2x128xf32>
    %cst_13 = arith.constant 0.000000e+00 : f32
    %29 = vector.broadcast %cst_13 : f32 to vector<2x128xf32>
    %30 = arith.cmpf oge, %28, %29 : vector<2x128xf32>
    %cst_14 = arith.constant 0.00999999977 : f32
    %31 = vector.broadcast %cst_14 : f32 to vector<2x128xf32>
    %32 = arith.mulf %31, %28 : vector<2x128xf32>
    %33 = arith.select %30, %28, %32 : vector<2x128xi1>, vector<2x128xf32>
    %34 = arith.truncf %33 : vector<2x128xf32> to vector<2x128xbf16>
    %c0_15 = arith.constant 0 : index
    %c0_16 = arith.constant 0 : index
    %35 = vector.load %arg5[%c0_15, %c0_16] : memref<2x128xbf16, #tpu.memory_space<vmem>>, vector<2x128xbf16>
    tpu.vector_store %arg5[%c0_15, %c0_16], %34 {strides = array<i32>} : memref<2x128xbf16, #tpu.memory_space<vmem>>, vector<2x128xbf16>,
    return
  }
  func.func @transform_0(%arg0: i32) -> (i32, i32) {
    %c0_i32 = arith.constant 0 : i32
    %c0_i32_0 = arith.constant 0 : i32
    %c0_i32_1 = arith.constant 0 : i32
    return %c0_i32, %c0_i32_0 : i32, i32
  }
  func.func @transform_1(%arg0: i32) -> (i32, i32) {
    %c0_i32 = arith.constant 0 : i32
    %c0_i32_0 = arith.constant 0 : i32
    return %c0_i32, %arg0 : i32, i32
  }
  func.func @transform_2(%arg0: i32) -> (i32, i32) {
    %c0_i32 = arith.constant 0 : i32
    %c0_i32_0 = arith.constant 0 : i32
    return %c0_i32, %arg0 : i32, i32
  }
  func.func @transform_3(%arg0: i32) -> (i32, i32) {
    %c0_i32 = arith.constant 0 : i32
    %c0_i32_0 = arith.constant 0 : i32
    return %c0_i32, %arg0 : i32, i32
  }
  func.func @transform_4(%arg0: i32) -> (i32, i32) {
    %c0_i32 = arith.constant 0 : i32
    %c0_i32_0 = arith.constant 0 : i32
    return %c0_i32, %arg0 : i32, i32
  }
}

module attributes {stable_mosaic.version = 11 : i64} {
  func.func @_gemm_bn_lrelu_kernel(%arg0: i32, %arg1: memref<2x32xbf16, #tpu.memory_space<vmem>>, %arg2: memref<32x64xbf16, #tpu.memory_space<vmem>>, %arg3: memref<1x64xf32, #tpu.memory_space<vmem>>, %arg4: memref<1x64xf32, #tpu.memory_space<vmem>>, %arg5: memref<2x64xbf16, #tpu.memory_space<vmem>>) attributes {dimension_semantics = [#tpu.dimension_semantics<parallel>], iteration_bounds = array<i64: 1>, scalar_prefetch = 0 : i64, scratch_operands = 0 : i64, tpu.core_type = #tpu.core_type<tc>, window_params = [{pipeline_mode = #tpu.pipeline_mode<synchronous>, transform_indices = @transform_0, window_bounds = array<i64: 2, 32>}, {transform_indices = @transform_1, window_bounds = array<i64: 32, 64>}, {transform_indices = @transform_2, window_bounds = array<i64: 1, 64>}, {transform_indices = @transform_3, window_bounds = array<i64: 1, 64>}, {transform_indices = @transform_4, window_bounds = array<i64: 2, 64>}]} {
    %c0 = arith.constant 0 : index
    %c0_0 = arith.constant 0 : index
    %0 = vector.load %arg1[%c0, %c0_0] : memref<2x32xbf16, #tpu.memory_space<vmem>>, vector<2x32xbf16>
    %c0_1 = arith.constant 0 : index
    %c0_2 = arith.constant 0 : index
    %1 = vector.load %arg2[%c0_1, %c0_2] : memref<32x64xbf16, #tpu.memory_space<vmem>>, vector<32x64xbf16>
    %cst = arith.constant dense<0.000000e+00> : vector<2x64xf32>
    %2 = tpu.matmul %0, %1, %cst {dimension_numbers = #tpu.dot_dimension_numbers<[1], [0], [0], [1], [0, 0, 1, 1], [], []>} : vector<2x32xbf16>, vector<32x64xbf16>, vector<2x64xf32> -> vector<2x64xf32>
    %c0_3 = arith.constant 0 : index
    %c0_4 = arith.constant 0 : index
    %3 = vector.load %arg3[%c0_3, %c0_4] : memref<1x64xf32, #tpu.memory_space<vmem>>, vector<1x64xf32>
    %c0_5 = arith.constant 0 : index
    %c0_6 = arith.constant 0 : index
    %4 = vector.load %arg4[%c0_5, %c0_6] : memref<1x64xf32, #tpu.memory_space<vmem>>, vector<1x64xf32>
    %cst_7 = arith.constant dense<0.000000e+00> : vector<64xf32>
    %5 = vector.multi_reduction <add>, %2, %cst_7 [0] : vector<2x64xf32> to vector<64xf32>
    %6 = vector.shape_cast %5 : vector<64xf32> to vector<1x64xf32>
    %7 = arith.mulf %2, %2 : vector<2x64xf32>
    %cst_8 = arith.constant dense<0.000000e+00> : vector<64xf32>
    %8 = vector.multi_reduction <add>, %7, %cst_8 [0] : vector<2x64xf32> to vector<64xf32>
    %9 = vector.shape_cast %8 : vector<64xf32> to vector<1x64xf32>
    %cst_9 = arith.constant 5.000000e-01 : f32
    %10 = vector.broadcast %cst_9 : f32 to vector<1x64xf32>
    %11 = arith.mulf %6, %10 : vector<1x64xf32>
    %cst_10 = arith.constant 5.000000e-01 : f32
    %12 = vector.broadcast %cst_10 : f32 to vector<1x64xf32>
    %13 = arith.mulf %9, %12 : vector<1x64xf32>
    %14 = arith.mulf %11, %11 : vector<1x64xf32>
    %15 = arith.subf %13, %14 : vector<1x64xf32>
    %cst_11 = arith.constant 0.000000e+00 : f32
    %16 = vector.broadcast %cst_11 : f32 to vector<1x64xf32>
    %17 = arith.maximumf %15, %16 : vector<1x64xf32>
    %18 = vector.broadcast %11 : vector<1x64xf32> to vector<2x64xf32>
    %19 = arith.subf %2, %18 : vector<2x64xf32>
    %cst_12 = arith.constant 9.99999974E-6 : f32
    %20 = vector.broadcast %cst_12 : f32 to vector<1x64xf32>
    %21 = arith.addf %17, %20 : vector<1x64xf32>
    %22 = math.rsqrt %21 : vector<1x64xf32>
    %23 = vector.broadcast %22 : vector<1x64xf32> to vector<2x64xf32>
    %24 = arith.mulf %19, %23 : vector<2x64xf32>
    %25 = vector.broadcast %3 : vector<1x64xf32> to vector<2x64xf32>
    %26 = arith.mulf %24, %25 : vector<2x64xf32>
    %27 = vector.broadcast %4 : vector<1x64xf32> to vector<2x64xf32>
    %28 = arith.addf %26, %27 : vector<2x64xf32>
    %cst_13 = arith.constant 0.000000e+00 : f32
    %29 = vector.broadcast %cst_13 : f32 to vector<2x64xf32>
    %30 = arith.cmpf oge, %28, %29 : vector<2x64xf32>
    %cst_14 = arith.constant 0.00999999977 : f32
    %31 = vector.broadcast %cst_14 : f32 to vector<2x64xf32>
    %32 = arith.mulf %31, %28 : vector<2x64xf32>
    %33 = arith.select %30, %28, %32 : vector<2x64xi1>, vector<2x64xf32>
    %34 = arith.truncf %33 : vector<2x64xf32> to vector<2x64xbf16>
    %c0_15 = arith.constant 0 : index
    %c0_16 = arith.constant 0 : index
    %35 = vector.load %arg5[%c0_15, %c0_16] : memref<2x64xbf16, #tpu.memory_space<vmem>>, vector<2x64xbf16>
    tpu.vector_store %arg5[%c0_15, %c0_16], %34 {strides = array<i32>} : memref<2x64xbf16, #tpu.memory_space<vmem>>, vector<2x64xbf16>,
    return
  }
  func.func @transform_0(%arg0: i32) -> (i32, i32) {
    %c0_i32 = arith.constant 0 : i32
    %c0_i32_0 = arith.constant 0 : i32
    %c0_i32_1 = arith.constant 0 : i32
    return %c0_i32, %c0_i32_0 : i32, i32
  }
  func.func @transform_1(%arg0: i32) -> (i32, i32) {
    %c0_i32 = arith.constant 0 : i32
    %c0_i32_0 = arith.constant 0 : i32
    return %c0_i32, %arg0 : i32, i32
  }
  func.func @transform_2(%arg0: i32) -> (i32, i32) {
    %c0_i32 = arith.constant 0 : i32
    %c0_i32_0 = arith.constant 0 : i32
    return %c0_i32, %arg0 : i32, i32
  }
  func.func @transform_3(%arg0: i32) -> (i32, i32) {
    %c0_i32 = arith.constant 0 : i32
    %c0_i32_0 = arith.constant 0 : i32
    return %c0_i32, %arg0 : i32, i32
  }
  func.func @transform_4(%arg0: i32) -> (i32, i32) {
    %c0_i32 = arith.constant 0 : i32
    %c0_i32_0 = arith.constant 0 : i32
    return %c0_i32, %arg0 : i32, i32
  }
}

module attributes {stable_mosaic.version = 11 : i64} {
  func.func @_gemm_pbn_lrelu_kernel(%arg0: i32, %arg1: memref<32x576xbf16, #tpu.memory_space<vmem>>, %arg2: memref<576x128xbf16, #tpu.memory_space<vmem>>, %arg3: memref<1x128xf32, #tpu.memory_space<vmem>>, %arg4: memref<1x128xf32, #tpu.memory_space<vmem>>, %arg5: memref<128x128xf32, #tpu.memory_space<vmem>>, %arg6: memref<32x128xbf16, #tpu.memory_space<vmem>>) attributes {dimension_semantics = [#tpu.dimension_semantics<parallel>], iteration_bounds = array<i64: 1>, scalar_prefetch = 0 : i64, scratch_operands = 0 : i64, tpu.core_type = #tpu.core_type<tc>, window_params = [{pipeline_mode = #tpu.pipeline_mode<synchronous>, transform_indices = @transform_0, window_bounds = array<i64: 32, 576>}, {transform_indices = @transform_1, window_bounds = array<i64: 576, 128>}, {transform_indices = @transform_2, window_bounds = array<i64: 1, 128>}, {transform_indices = @transform_3, window_bounds = array<i64: 1, 128>}, {pipeline_mode = #tpu.pipeline_mode<synchronous>, transform_indices = @transform_4, window_bounds = array<i64: 128, 128>}, {transform_indices = @transform_5, window_bounds = array<i64: 32, 128>}]} {
    %c0 = arith.constant 0 : index
    %c0_0 = arith.constant 0 : index
    %0 = vector.load %arg1[%c0, %c0_0] : memref<32x576xbf16, #tpu.memory_space<vmem>>, vector<32x576xbf16>
    %c0_1 = arith.constant 0 : index
    %c0_2 = arith.constant 0 : index
    %1 = vector.load %arg2[%c0_1, %c0_2] : memref<576x128xbf16, #tpu.memory_space<vmem>>, vector<576x128xbf16>
    %cst = arith.constant dense<0.000000e+00> : vector<32x128xf32>
    %2 = tpu.matmul %0, %1, %cst {dimension_numbers = #tpu.dot_dimension_numbers<[1], [0], [0], [1], [0, 0, 1, 1], [], []>} : vector<32x576xbf16>, vector<576x128xbf16>, vector<32x128xf32> -> vector<32x128xf32>
    %c0_3 = arith.constant 0 : index
    %c0_4 = arith.constant 0 : index
    %3 = vector.load %arg3[%c0_3, %c0_4] : memref<1x128xf32, #tpu.memory_space<vmem>>, vector<1x128xf32>
    %c0_5 = arith.constant 0 : index
    %c0_6 = arith.constant 0 : index
    %4 = vector.load %arg4[%c0_5, %c0_6] : memref<1x128xf32, #tpu.memory_space<vmem>>, vector<1x128xf32>
    %c0_7 = arith.constant 0 : index
    %c0_8 = arith.constant 0 : index
    %5 = vector.load %arg5[%c0_7, %c0_8] : memref<128x128xf32, #tpu.memory_space<vmem>>, vector<128x128xf32>
    %cst_9 = arith.constant dense<0.000000e+00> : vector<128xf32>
    %6 = vector.multi_reduction <add>, %2, %cst_9 [0] : vector<32x128xf32> to vector<128xf32>
    %7 = vector.shape_cast %6 : vector<128xf32> to vector<1x128xf32>
    %8 = arith.mulf %2, %2 : vector<32x128xf32>
    %cst_10 = arith.constant dense<0.000000e+00> : vector<128xf32>
    %9 = vector.multi_reduction <add>, %8, %cst_10 [0] : vector<32x128xf32> to vector<128xf32>
    %10 = vector.shape_cast %9 : vector<128xf32> to vector<1x128xf32>
    %cst_11 = arith.constant dense<0.000000e+00> : vector<1x128xf32>
    %11 = tpu.matmul %7, %5, %cst_11 {dimension_numbers = #tpu.dot_dimension_numbers<[1], [0], [0], [1], [0, 0, 1, 1], [], []>} : vector<1x128xf32>, vector<128x128xf32>, vector<1x128xf32> -> vector<1x128xf32>
    %cst_12 = arith.constant dense<0.000000e+00> : vector<1x128xf32>
    %12 = tpu.matmul %10, %5, %cst_12 {dimension_numbers = #tpu.dot_dimension_numbers<[1], [0], [0], [1], [0, 0, 1, 1], [], []>} : vector<1x128xf32>, vector<128x128xf32>, vector<1x128xf32> -> vector<1x128xf32>
    %cst_13 = arith.constant 7.812500e-03 : f32
    %13 = vector.broadcast %cst_13 : f32 to vector<1x128xf32>
    %14 = arith.mulf %11, %13 : vector<1x128xf32>
    %cst_14 = arith.constant 7.812500e-03 : f32
    %15 = vector.broadcast %cst_14 : f32 to vector<1x128xf32>
    %16 = arith.mulf %12, %15 : vector<1x128xf32>
    %17 = arith.mulf %14, %14 : vector<1x128xf32>
    %18 = arith.subf %16, %17 : vector<1x128xf32>
    %cst_15 = arith.constant 0.000000e+00 : f32
    %19 = vector.broadcast %cst_15 : f32 to vector<1x128xf32>
    %20 = arith.maximumf %18, %19 : vector<1x128xf32>
    %21 = vector.broadcast %14 : vector<1x128xf32> to vector<32x128xf32>
    %22 = arith.subf %2, %21 : vector<32x128xf32>
    %cst_16 = arith.constant 9.99999974E-6 : f32
    %23 = vector.broadcast %cst_16 : f32 to vector<1x128xf32>
    %24 = arith.addf %20, %23 : vector<1x128xf32>
    %25 = math.rsqrt %24 : vector<1x128xf32>
    %26 = vector.broadcast %25 : vector<1x128xf32> to vector<32x128xf32>
    %27 = arith.mulf %22, %26 : vector<32x128xf32>
    %28 = vector.broadcast %3 : vector<1x128xf32> to vector<32x128xf32>
    %29 = arith.mulf %27, %28 : vector<32x128xf32>
    %30 = vector.broadcast %4 : vector<1x128xf32> to vector<32x128xf32>
    %31 = arith.addf %29, %30 : vector<32x128xf32>
    %cst_17 = arith.constant 0.000000e+00 : f32
    %32 = vector.broadcast %cst_17 : f32 to vector<32x128xf32>
    %33 = arith.cmpf oge, %31, %32 : vector<32x128xf32>
    %cst_18 = arith.constant 0.00999999977 : f32
    %34 = vector.broadcast %cst_18 : f32 to vector<32x128xf32>
    %35 = arith.mulf %34, %31 : vector<32x128xf32>
    %36 = arith.select %33, %31, %35 : vector<32x128xi1>, vector<32x128xf32>
    %37 = arith.truncf %36 : vector<32x128xf32> to vector<32x128xbf16>
    %c0_19 = arith.constant 0 : index
    %c0_20 = arith.constant 0 : index
    %38 = vector.load %arg6[%c0_19, %c0_20] : memref<32x128xbf16, #tpu.memory_space<vmem>>, vector<32x128xbf16>
    tpu.vector_store %arg6[%c0_19, %c0_20], %37 {strides = array<i32>} : memref<32x128xbf16, #tpu.memory_space<vmem>>, vector<32x128xbf16>,
    return
  }
  func.func @transform_0(%arg0: i32) -> (i32, i32) {
    %c0_i32 = arith.constant 0 : i32
    %c0_i32_0 = arith.constant 0 : i32
    %c0_i32_1 = arith.constant 0 : i32
    return %c0_i32, %c0_i32_0 : i32, i32
  }
  func.func @transform_1(%arg0: i32) -> (i32, i32) {
    %c0_i32 = arith.constant 0 : i32
    %c0_i32_0 = arith.constant 0 : i32
    return %c0_i32, %arg0 : i32, i32
  }
  func.func @transform_2(%arg0: i32) -> (i32, i32) {
    %c0_i32 = arith.constant 0 : i32
    %c0_i32_0 = arith.constant 0 : i32
    return %c0_i32, %arg0 : i32, i32
  }
  func.func @transform_3(%arg0: i32) -> (i32, i32) {
    %c0_i32 = arith.constant 0 : i32
    %c0_i32_0 = arith.constant 0 : i32
    return %c0_i32, %arg0 : i32, i32
  }
  func.func @transform_4(%arg0: i32) -> (i32, i32) {
    %c0_i32 = arith.constant 0 : i32
    %c0_i32_0 = arith.constant 0 : i32
    %c0_i32_1 = arith.constant 0 : i32
    return %c0_i32, %c0_i32_0 : i32, i32
  }
  func.func @transform_5(%arg0: i32) -> (i32, i32) {
    %c0_i32 = arith.constant 0 : i32
    %c0_i32_0 = arith.constant 0 : i32
    return %c0_i32, %arg0 : i32, i32
  }
}

module attributes {stable_mosaic.version = 11 : i64} {
  func.func @_gemm_bn_lrelu_kernel(%arg0: i32, %arg1: memref<128x288xbf16, #tpu.memory_space<vmem>>, %arg2: memref<288x32xbf16, #tpu.memory_space<vmem>>, %arg3: memref<1x32xf32, #tpu.memory_space<vmem>>, %arg4: memref<1x32xf32, #tpu.memory_space<vmem>>, %arg5: memref<128x32xbf16, #tpu.memory_space<vmem>>) attributes {dimension_semantics = [#tpu.dimension_semantics<parallel>], iteration_bounds = array<i64: 1>, scalar_prefetch = 0 : i64, scratch_operands = 0 : i64, tpu.core_type = #tpu.core_type<tc>, window_params = [{pipeline_mode = #tpu.pipeline_mode<synchronous>, transform_indices = @transform_0, window_bounds = array<i64: 128, 288>}, {transform_indices = @transform_1, window_bounds = array<i64: 288, 32>}, {transform_indices = @transform_2, window_bounds = array<i64: 1, 32>}, {transform_indices = @transform_3, window_bounds = array<i64: 1, 32>}, {transform_indices = @transform_4, window_bounds = array<i64: 128, 32>}]} {
    %c0 = arith.constant 0 : index
    %c0_0 = arith.constant 0 : index
    %0 = vector.load %arg1[%c0, %c0_0] : memref<128x288xbf16, #tpu.memory_space<vmem>>, vector<128x288xbf16>
    %c0_1 = arith.constant 0 : index
    %c0_2 = arith.constant 0 : index
    %1 = vector.load %arg2[%c0_1, %c0_2] : memref<288x32xbf16, #tpu.memory_space<vmem>>, vector<288x32xbf16>
    %cst = arith.constant dense<0.000000e+00> : vector<128x32xf32>
    %2 = tpu.matmul %0, %1, %cst {dimension_numbers = #tpu.dot_dimension_numbers<[1], [0], [0], [1], [0, 0, 1, 1], [], []>} : vector<128x288xbf16>, vector<288x32xbf16>, vector<128x32xf32> -> vector<128x32xf32>
    %c0_3 = arith.constant 0 : index
    %c0_4 = arith.constant 0 : index
    %3 = vector.load %arg3[%c0_3, %c0_4] : memref<1x32xf32, #tpu.memory_space<vmem>>, vector<1x32xf32>
    %c0_5 = arith.constant 0 : index
    %c0_6 = arith.constant 0 : index
    %4 = vector.load %arg4[%c0_5, %c0_6] : memref<1x32xf32, #tpu.memory_space<vmem>>, vector<1x32xf32>
    %cst_7 = arith.constant dense<0.000000e+00> : vector<32xf32>
    %5 = vector.multi_reduction <add>, %2, %cst_7 [0] : vector<128x32xf32> to vector<32xf32>
    %6 = vector.shape_cast %5 : vector<32xf32> to vector<1x32xf32>
    %7 = arith.mulf %2, %2 : vector<128x32xf32>
    %cst_8 = arith.constant dense<0.000000e+00> : vector<32xf32>
    %8 = vector.multi_reduction <add>, %7, %cst_8 [0] : vector<128x32xf32> to vector<32xf32>
    %9 = vector.shape_cast %8 : vector<32xf32> to vector<1x32xf32>
    %cst_9 = arith.constant 7.812500e-03 : f32
    %10 = vector.broadcast %cst_9 : f32 to vector<1x32xf32>
    %11 = arith.mulf %6, %10 : vector<1x32xf32>
    %cst_10 = arith.constant 7.812500e-03 : f32
    %12 = vector.broadcast %cst_10 : f32 to vector<1x32xf32>
    %13 = arith.mulf %9, %12 : vector<1x32xf32>
    %14 = arith.mulf %11, %11 : vector<1x32xf32>
    %15 = arith.subf %13, %14 : vector<1x32xf32>
    %cst_11 = arith.constant 0.000000e+00 : f32
    %16 = vector.broadcast %cst_11 : f32 to vector<1x32xf32>
    %17 = arith.maximumf %15, %16 : vector<1x32xf32>
    %18 = vector.broadcast %11 : vector<1x32xf32> to vector<128x32xf32>
    %19 = arith.subf %2, %18 : vector<128x32xf32>
    %cst_12 = arith.constant 9.99999974E-6 : f32
    %20 = vector.broadcast %cst_12 : f32 to vector<1x32xf32>
    %21 = arith.addf %17, %20 : vector<1x32xf32>
    %22 = math.rsqrt %21 : vector<1x32xf32>
    %23 = vector.broadcast %22 : vector<1x32xf32> to vector<128x32xf32>
    %24 = arith.mulf %19, %23 : vector<128x32xf32>
    %25 = vector.broadcast %3 : vector<1x32xf32> to vector<128x32xf32>
    %26 = arith.mulf %24, %25 : vector<128x32xf32>
    %27 = vector.broadcast %4 : vector<1x32xf32> to vector<128x32xf32>
    %28 = arith.addf %26, %27 : vector<128x32xf32>
    %cst_13 = arith.constant 0.000000e+00 : f32
    %29 = vector.broadcast %cst_13 : f32 to vector<128x32xf32>
    %30 = arith.cmpf oge, %28, %29 : vector<128x32xf32>
    %cst_14 = arith.constant 0.00999999977 : f32
    %31 = vector.broadcast %cst_14 : f32 to vector<128x32xf32>
    %32 = arith.mulf %31, %28 : vector<128x32xf32>
    %33 = arith.select %30, %28, %32 : vector<128x32xi1>, vector<128x32xf32>
    %34 = arith.truncf %33 : vector<128x32xf32> to vector<128x32xbf16>
    %c0_15 = arith.constant 0 : index
    %c0_16 = arith.constant 0 : index
    %35 = vector.load %arg5[%c0_15, %c0_16] : memref<128x32xbf16, #tpu.memory_space<vmem>>, vector<128x32xbf16>
    tpu.vector_store %arg5[%c0_15, %c0_16], %34 {strides = array<i32>} : memref<128x32xbf16, #tpu.memory_space<vmem>>, vector<128x32xbf16>,
    return
  }
  func.func @transform_0(%arg0: i32) -> (i32, i32) {
    %c0_i32 = arith.constant 0 : i32
    %c0_i32_0 = arith.constant 0 : i32
    %c0_i32_1 = arith.constant 0 : i32
    return %c0_i32, %c0_i32_0 : i32, i32
  }
  func.func @transform_1(%arg0: i32) -> (i32, i32) {
    %c0_i32 = arith.constant 0 : i32
    %c0_i32_0 = arith.constant 0 : i32
    return %c0_i32, %arg0 : i32, i32
  }
  func.func @transform_2(%arg0: i32) -> (i32, i32) {
    %c0_i32 = arith.constant 0 : i32
    %c0_i32_0 = arith.constant 0 : i32
    return %c0_i32, %arg0 : i32, i32
  }
  func.func @transform_3(%arg0: i32) -> (i32, i32) {
    %c0_i32 = arith.constant 0 : i32
    %c0_i32_0 = arith.constant 0 : i32
    return %c0_i32, %arg0 : i32, i32
  }
  func.func @transform_4(%arg0: i32) -> (i32, i32) {
    %c0_i32 = arith.constant 0 : i32
    %c0_i32_0 = arith.constant 0 : i32
    return %c0_i32, %arg0 : i32, i32
  }
}

module attributes {stable_mosaic.version = 11 : i64} {
  func.func @_gemm_pbn_lrelu_kernel(%arg0: i32, %arg1: memref<128x288xbf16, #tpu.memory_space<vmem>>, %arg2: memref<288x64xbf16, #tpu.memory_space<vmem>>, %arg3: memref<1x64xf32, #tpu.memory_space<vmem>>, %arg4: memref<1x64xf32, #tpu.memory_space<vmem>>, %arg5: memref<64x64xf32, #tpu.memory_space<vmem>>, %arg6: memref<128x64xbf16, #tpu.memory_space<vmem>>) attributes {dimension_semantics = [#tpu.dimension_semantics<parallel>], iteration_bounds = array<i64: 1>, scalar_prefetch = 0 : i64, scratch_operands = 0 : i64, tpu.core_type = #tpu.core_type<tc>, window_params = [{pipeline_mode = #tpu.pipeline_mode<synchronous>, transform_indices = @transform_0, window_bounds = array<i64: 128, 288>}, {transform_indices = @transform_1, window_bounds = array<i64: 288, 64>}, {transform_indices = @transform_2, window_bounds = array<i64: 1, 64>}, {transform_indices = @transform_3, window_bounds = array<i64: 1, 64>}, {pipeline_mode = #tpu.pipeline_mode<synchronous>, transform_indices = @transform_4, window_bounds = array<i64: 64, 64>}, {transform_indices = @transform_5, window_bounds = array<i64: 128, 64>}]} {
    %c0 = arith.constant 0 : index
    %c0_0 = arith.constant 0 : index
    %0 = vector.load %arg1[%c0, %c0_0] : memref<128x288xbf16, #tpu.memory_space<vmem>>, vector<128x288xbf16>
    %c0_1 = arith.constant 0 : index
    %c0_2 = arith.constant 0 : index
    %1 = vector.load %arg2[%c0_1, %c0_2] : memref<288x64xbf16, #tpu.memory_space<vmem>>, vector<288x64xbf16>
    %cst = arith.constant dense<0.000000e+00> : vector<128x64xf32>
    %2 = tpu.matmul %0, %1, %cst {dimension_numbers = #tpu.dot_dimension_numbers<[1], [0], [0], [1], [0, 0, 1, 1], [], []>} : vector<128x288xbf16>, vector<288x64xbf16>, vector<128x64xf32> -> vector<128x64xf32>
    %c0_3 = arith.constant 0 : index
    %c0_4 = arith.constant 0 : index
    %3 = vector.load %arg3[%c0_3, %c0_4] : memref<1x64xf32, #tpu.memory_space<vmem>>, vector<1x64xf32>
    %c0_5 = arith.constant 0 : index
    %c0_6 = arith.constant 0 : index
    %4 = vector.load %arg4[%c0_5, %c0_6] : memref<1x64xf32, #tpu.memory_space<vmem>>, vector<1x64xf32>
    %c0_7 = arith.constant 0 : index
    %c0_8 = arith.constant 0 : index
    %5 = vector.load %arg5[%c0_7, %c0_8] : memref<64x64xf32, #tpu.memory_space<vmem>>, vector<64x64xf32>
    %cst_9 = arith.constant dense<0.000000e+00> : vector<64xf32>
    %6 = vector.multi_reduction <add>, %2, %cst_9 [0] : vector<128x64xf32> to vector<64xf32>
    %7 = vector.shape_cast %6 : vector<64xf32> to vector<1x64xf32>
    %8 = arith.mulf %2, %2 : vector<128x64xf32>
    %cst_10 = arith.constant dense<0.000000e+00> : vector<64xf32>
    %9 = vector.multi_reduction <add>, %8, %cst_10 [0] : vector<128x64xf32> to vector<64xf32>
    %10 = vector.shape_cast %9 : vector<64xf32> to vector<1x64xf32>
    %cst_11 = arith.constant dense<0.000000e+00> : vector<1x64xf32>
    %11 = tpu.matmul %7, %5, %cst_11 {dimension_numbers = #tpu.dot_dimension_numbers<[1], [0], [0], [1], [0, 0, 1, 1], [], []>} : vector<1x64xf32>, vector<64x64xf32>, vector<1x64xf32> -> vector<1x64xf32>
    %cst_12 = arith.constant dense<0.000000e+00> : vector<1x64xf32>
    %12 = tpu.matmul %10, %5, %cst_12 {dimension_numbers = #tpu.dot_dimension_numbers<[1], [0], [0], [1], [0, 0, 1, 1], [], []>} : vector<1x64xf32>, vector<64x64xf32>, vector<1x64xf32> -> vector<1x64xf32>
    %cst_13 = arith.constant 0.001953125 : f32
    %13 = vector.broadcast %cst_13 : f32 to vector<1x64xf32>
    %14 = arith.mulf %11, %13 : vector<1x64xf32>
    %cst_14 = arith.constant 0.001953125 : f32
    %15 = vector.broadcast %cst_14 : f32 to vector<1x64xf32>
    %16 = arith.mulf %12, %15 : vector<1x64xf32>
    %17 = arith.mulf %14, %14 : vector<1x64xf32>
    %18 = arith.subf %16, %17 : vector<1x64xf32>
    %cst_15 = arith.constant 0.000000e+00 : f32
    %19 = vector.broadcast %cst_15 : f32 to vector<1x64xf32>
    %20 = arith.maximumf %18, %19 : vector<1x64xf32>
    %21 = vector.broadcast %14 : vector<1x64xf32> to vector<128x64xf32>
    %22 = arith.subf %2, %21 : vector<128x64xf32>
    %cst_16 = arith.constant 9.99999974E-6 : f32
    %23 = vector.broadcast %cst_16 : f32 to vector<1x64xf32>
    %24 = arith.addf %20, %23 : vector<1x64xf32>
    %25 = math.rsqrt %24 : vector<1x64xf32>
    %26 = vector.broadcast %25 : vector<1x64xf32> to vector<128x64xf32>
    %27 = arith.mulf %22, %26 : vector<128x64xf32>
    %28 = vector.broadcast %3 : vector<1x64xf32> to vector<128x64xf32>
    %29 = arith.mulf %27, %28 : vector<128x64xf32>
    %30 = vector.broadcast %4 : vector<1x64xf32> to vector<128x64xf32>
    %31 = arith.addf %29, %30 : vector<128x64xf32>
    %cst_17 = arith.constant 0.000000e+00 : f32
    %32 = vector.broadcast %cst_17 : f32 to vector<128x64xf32>
    %33 = arith.cmpf oge, %31, %32 : vector<128x64xf32>
    %cst_18 = arith.constant 0.00999999977 : f32
    %34 = vector.broadcast %cst_18 : f32 to vector<128x64xf32>
    %35 = arith.mulf %34, %31 : vector<128x64xf32>
    %36 = arith.select %33, %31, %35 : vector<128x64xi1>, vector<128x64xf32>
    %37 = arith.truncf %36 : vector<128x64xf32> to vector<128x64xbf16>
    %c0_19 = arith.constant 0 : index
    %c0_20 = arith.constant 0 : index
    %38 = vector.load %arg6[%c0_19, %c0_20] : memref<128x64xbf16, #tpu.memory_space<vmem>>, vector<128x64xbf16>
    tpu.vector_store %arg6[%c0_19, %c0_20], %37 {strides = array<i32>} : memref<128x64xbf16, #tpu.memory_space<vmem>>, vector<128x64xbf16>,
    return
  }
  func.func @transform_0(%arg0: i32) -> (i32, i32) {
    %c0_i32 = arith.constant 0 : i32
    %c0_i32_0 = arith.constant 0 : i32
    %c0_i32_1 = arith.constant 0 : i32
    return %c0_i32, %c0_i32_0 : i32, i32
  }
  func.func @transform_1(%arg0: i32) -> (i32, i32) {
    %c0_i32 = arith.constant 0 : i32
    %c0_i32_0 = arith.constant 0 : i32
    return %c0_i32, %arg0 : i32, i32
  }
  func.func @transform_2(%arg0: i32) -> (i32, i32) {
    %c0_i32 = arith.constant 0 : i32
    %c0_i32_0 = arith.constant 0 : i32
    return %c0_i32, %arg0 : i32, i32
  }
  func.func @transform_3(%arg0: i32) -> (i32, i32) {
    %c0_i32 = arith.constant 0 : i32
    %c0_i32_0 = arith.constant 0 : i32
    return %c0_i32, %arg0 : i32, i32
  }
  func.func @transform_4(%arg0: i32) -> (i32, i32) {
    %c0_i32 = arith.constant 0 : i32
    %c0_i32_0 = arith.constant 0 : i32
    %c0_i32_1 = arith.constant 0 : i32
    return %c0_i32, %c0_i32_0 : i32, i32
  }
  func.func @transform_5(%arg0: i32) -> (i32, i32) {
    %c0_i32 = arith.constant 0 : i32
    %c0_i32_0 = arith.constant 0 : i32
    return %c0_i32, %arg0 : i32, i32
  }
}

module attributes {stable_mosaic.version = 11 : i64} {
  func.func @_gemm_bn_lrelu_proj_kernel(%arg0: memref<512x144xbf16, #tpu.memory_space<vmem>>, %arg1: memref<144x16xbf16, #tpu.memory_space<vmem>>, %arg2: memref<1x16xf32, #tpu.memory_space<vmem>>, %arg3: memref<1x16xf32, #tpu.memory_space<vmem>>, %arg4: memref<1x16xbf16, #tpu.memory_space<vmem>>, %arg5: memref<1x512xf32, #tpu.memory_space<vmem>>) attributes {dimension_semantics = [], scalar_prefetch = 0 : i64, scratch_operands = 0 : i64, tpu.core_type = #tpu.core_type<tc>} {
    %c0 = arith.constant 0 : index
    %c0_0 = arith.constant 0 : index
    %0 = vector.load %arg0[%c0, %c0_0] : memref<512x144xbf16, #tpu.memory_space<vmem>>, vector<512x144xbf16>
    %c0_1 = arith.constant 0 : index
    %c0_2 = arith.constant 0 : index
    %1 = vector.load %arg1[%c0_1, %c0_2] : memref<144x16xbf16, #tpu.memory_space<vmem>>, vector<144x16xbf16>
    %cst = arith.constant dense<0.000000e+00> : vector<512x16xf32>
    %2 = tpu.matmul %0, %1, %cst {dimension_numbers = #tpu.dot_dimension_numbers<[1], [0], [0], [1], [0, 0, 1, 1], [], []>} : vector<512x144xbf16>, vector<144x16xbf16>, vector<512x16xf32> -> vector<512x16xf32>
    %c0_3 = arith.constant 0 : index
    %c0_4 = arith.constant 0 : index
    %3 = vector.load %arg2[%c0_3, %c0_4] : memref<1x16xf32, #tpu.memory_space<vmem>>, vector<1x16xf32>
    %c0_5 = arith.constant 0 : index
    %c0_6 = arith.constant 0 : index
    %4 = vector.load %arg3[%c0_5, %c0_6] : memref<1x16xf32, #tpu.memory_space<vmem>>, vector<1x16xf32>
    %cst_7 = arith.constant dense<0.000000e+00> : vector<16xf32>
    %5 = vector.multi_reduction <add>, %2, %cst_7 [0] : vector<512x16xf32> to vector<16xf32>
    %6 = vector.shape_cast %5 : vector<16xf32> to vector<1x16xf32>
    %7 = arith.mulf %2, %2 : vector<512x16xf32>
    %cst_8 = arith.constant dense<0.000000e+00> : vector<16xf32>
    %8 = vector.multi_reduction <add>, %7, %cst_8 [0] : vector<512x16xf32> to vector<16xf32>
    %9 = vector.shape_cast %8 : vector<16xf32> to vector<1x16xf32>
    %cst_9 = arith.constant 0.001953125 : f32
    %10 = vector.broadcast %cst_9 : f32 to vector<1x16xf32>
    %11 = arith.mulf %6, %10 : vector<1x16xf32>
    %cst_10 = arith.constant 0.001953125 : f32
    %12 = vector.broadcast %cst_10 : f32 to vector<1x16xf32>
    %13 = arith.mulf %9, %12 : vector<1x16xf32>
    %14 = arith.mulf %11, %11 : vector<1x16xf32>
    %15 = arith.subf %13, %14 : vector<1x16xf32>
    %cst_11 = arith.constant 0.000000e+00 : f32
    %16 = vector.broadcast %cst_11 : f32 to vector<1x16xf32>
    %17 = arith.maximumf %15, %16 : vector<1x16xf32>
    %18 = vector.broadcast %11 : vector<1x16xf32> to vector<512x16xf32>
    %19 = arith.subf %2, %18 : vector<512x16xf32>
    %cst_12 = arith.constant 9.99999974E-6 : f32
    %20 = vector.broadcast %cst_12 : f32 to vector<1x16xf32>
    %21 = arith.addf %17, %20 : vector<1x16xf32>
    %22 = math.rsqrt %21 : vector<1x16xf32>
    %23 = vector.broadcast %22 : vector<1x16xf32> to vector<512x16xf32>
    %24 = arith.mulf %19, %23 : vector<512x16xf32>
    %25 = vector.broadcast %3 : vector<1x16xf32> to vector<512x16xf32>
    %26 = arith.mulf %24, %25 : vector<512x16xf32>
    %27 = vector.broadcast %4 : vector<1x16xf32> to vector<512x16xf32>
    %28 = arith.addf %26, %27 : vector<512x16xf32>
    %cst_13 = arith.constant 0.000000e+00 : f32
    %29 = vector.broadcast %cst_13 : f32 to vector<512x16xf32>
    %30 = arith.cmpf oge, %28, %29 : vector<512x16xf32>
    %cst_14 = arith.constant 0.00999999977 : f32
    %31 = vector.broadcast %cst_14 : f32 to vector<512x16xf32>
    %32 = arith.mulf %31, %28 : vector<512x16xf32>
    %33 = arith.select %30, %28, %32 : vector<512x16xi1>, vector<512x16xf32>
    %c0_15 = arith.constant 0 : index
    %c0_16 = arith.constant 0 : index
    %34 = vector.load %arg4[%c0_15, %c0_16] : memref<1x16xbf16, #tpu.memory_space<vmem>>, vector<1x16xbf16>
    %35 = arith.truncf %33 : vector<512x16xf32> to vector<512x16xbf16>
    %cst_17 = arith.constant dense<0.000000e+00> : vector<1x512xf32>
    %36 = tpu.matmul %34, %35, %cst_17 {dimension_numbers = #tpu.dot_dimension_numbers<[1], [1], [0], [0], [0, 0, 1, 0], [], []>} : vector<1x16xbf16>, vector<512x16xbf16>, vector<1x512xf32> -> vector<1x512xf32>
    %c0_18 = arith.constant 0 : index
    %c0_19 = arith.constant 0 : index
    %37 = vector.load %arg5[%c0_18, %c0_19] : memref<1x512xf32, #tpu.memory_space<vmem>>, vector<1x512xf32>
    tpu.vector_store %arg5[%c0_18, %c0_19], %36 {strides = array<i32>} : memref<1x512xf32, #tpu.memory_space<vmem>>, vector<1x512xf32>,
    return
  }
}

</mosaic_0001>

<llo_original>
// kernel: tile.13
$region0: #{tile.13}
  #allocation0 [shape = 's32[1]{0}', space=sflag, size = 0x4, scoped, tag = 'scoped memory for tile.13']
  %s0 = inlined_call_operand.vmem [shape: f32[32,32], index: 0, kind: input, shape index: {}]
  %s1 = inlined_call_operand.vmem [shape: f32[4,32,4,32], index: 1, kind: output, shape index: {}]
  // Predicated region
  $region2: #{tile.13} parent=0 // pred_check
    _
  $region3: #{tile.13} parent=0 // pred_check_branch
    %3 = sbr.rel (0) target = $region5
  $region4: #{tile.13} parent=0 // pred_region
    _
  $region5: #{tile.13} parent=0 // pred_fallthru
    _
  %v4 = vld [vmem:[%s0] ss:$0 sm:$0xff]
  %5 = vst [vmem:[%s1] sm:$0xf] %v4
  %s6 = scalar_lea.vmem %s1, 128
  %7 = vst [vmem:[%s6] sm:$0xf] %v4
  %s8 = scalar_lea.vmem %s1, 256
  %9 = vst [vmem:[%s8] sm:$0xf] %v4
  %s10 = scalar_lea.vmem %s1, 384
  %11 = vst [vmem:[%s10] sm:$0xf] %v4
  %s12 = scalar_lea.vmem %s0, 1
  %v13 = vld [vmem:[%s12] ss:$0 sm:$0xff]
  %s14 = scalar_lea.vmem %s1, 4
  %15 = vst [vmem:[%s14] sm:$0xf] %v13
  %s16 = scalar_lea.vmem %s1, 132
  %17 = vst [vmem:[%s16] sm:$0xf] %v13
  %s18 = scalar_lea.vmem %s1, 260
  %19 = vst [vmem:[%s18] sm:$0xf] %v13
  %s20 = scalar_lea.vmem %s1, 388
  %21 = vst [vmem:[%s20] sm:$0xf] %v13
  %s22 = scalar_lea.vmem %s0, 2
  %v23 = vld [vmem:[%s22] ss:$0 sm:$0xff]
  %s24 = scalar_lea.vmem %s1, 8
  %25 = vst [vmem:[%s24] sm:$0xf] %v23
  %s26 = scalar_lea.vmem %s1, 136
  %27 = vst [vmem:[%s26] sm:$0xf] %v23
  %s28 = scalar_lea.vmem %s1, 264
  %29 = vst [vmem:[%s28] sm:$0xf] %v23
  %s30 = scalar_lea.vmem %s1, 392
  %31 = vst [vmem:[%s30] sm:$0xf] %v23
  %s32 = scalar_lea.vmem %s0, 3
  %v33 = vld [vmem:[%s32] ss:$0 sm:$0xff]
  %s34 = scalar_lea.vmem %s1, 12
  %35 = vst [vmem:[%s34] sm:$0xf] %v33
  %s36 = scalar_lea.vmem %s1, 140
  %37 = vst [vmem:[%s36] sm:$0xf] %v33
  %s38 = scalar_lea.vmem %s1, 268
  %39 = vst [vmem:[%s38] sm:$0xf] %v33
  %s40 = scalar_lea.vmem %s1, 396
  %41 = vst [vmem:[%s40] sm:$0xf] %v33
  %s42 = scalar_lea.vmem %s0, 4
  %v43 = vld [vmem:[%s42] ss:$0 sm:$0xff]
  %s44 = scalar_lea.vmem %s1, 16
  %45 = vst [vmem:[%s44] sm:$0xf] %v43
  %s46 = scalar_lea.vmem %s1, 144
  %47 = vst [vmem:[%s46] sm:$0xf] %v43
  %s48 = scalar_lea.vmem %s1, 272
  %49 = vst [vmem:[%s48] sm:$0xf] %v43
  %s50 = scalar_lea.vmem %s1, 400
  %51 = vst [vmem:[%s50] sm:$0xf] %v43
  %s52 = scalar_lea.vmem %s0, 5
  %v53 = vld [vmem:[%s52] ss:$0 sm:$0xff]
  %s54 = scalar_lea.vmem %s1, 20
  %55 = vst [vmem:[%s54] sm:$0xf] %v53
  %s56 = scalar_lea.vmem %s1, 148
  %57 = vst [vmem:[%s56] sm:$0xf] %v53
  %s58 = scalar_lea.vmem %s1, 276
  %59 = vst [vmem:[%s58] sm:$0xf] %v53
  %s60 = scalar_lea.vmem %s1, 404
  %61 = vst [vmem:[%s60] sm:$0xf] %v53
  %s62 = scalar_lea.vmem %s0, 6
  %v63 = vld [vmem:[%s62] ss:$0 sm:$0xff]
  %s64 = scalar_lea.vmem %s1, 24
  %65 = vst [vmem:[%s64] sm:$0xf] %v63
  %s66 = scalar_lea.vmem %s1, 152
  %67 = vst [vmem:[%s66] sm:$0xf] %v63
  %s68 = scalar_lea.vmem %s1, 280
  %69 = vst [vmem:[%s68] sm:$0xf] %v63
  %s70 = scalar_lea.vmem %s1, 408
  %71 = vst [vmem:[%s70] sm:$0xf] %v63
  %s72 = scalar_lea.vmem %s0, 7
  %v73 = vld [vmem:[%s72] ss:$0 sm:$0xff]
  %s74 = scalar_lea.vmem %s1, 28
  %75 = vst [vmem:[%s74] sm:$0xf] %v73
  %s76 = scalar_lea.vmem %s1, 156
  %77 = vst [vmem:[%s76] sm:$0xf] %v73
  %s78 = scalar_lea.vmem %s1, 284
  %79 = vst [vmem:[%s78] sm:$0xf] %v73
  %s80 = scalar_lea.vmem %s1, 412
  %81 = vst [vmem:[%s80] sm:$0xf] %v73
  %s82 = scalar_lea.vmem %s0, 8
  %v83 = vld [vmem:[%s82] ss:$0 sm:$0xff]
  %s84 = scalar_lea.vmem %s1, 32
  %85 = vst [vmem:[%s84] sm:$0xf] %v83
  %s86 = scalar_lea.vmem %s1, 160
  %87 = vst [vmem:[%s86] sm:$0xf] %v83
  %s88 = scalar_lea.vmem %s1, 288
  %89 = vst [vmem:[%s88] sm:$0xf] %v83
  %s90 = scalar_lea.vmem %s1, 416
  %91 = vst [vmem:[%s90] sm:$0xf] %v83
  %s92 = scalar_lea.vmem %s0, 8
  %s93 = scalar_lea.vmem %s92, 1
  %v94 = vld [vmem:[%s93] ss:$0 sm:$0xff]
  %s95 = scalar_lea.vmem %s1, 36
  %96 = vst [vmem:[%s95] sm:$0xf] %v94
  %s97 = scalar_lea.vmem %s1, 164
  %98 = vst [vmem:[%s97] sm:$0xf] %v94
  %s99 = scalar_lea.vmem %s1, 292
  %100 = vst [vmem:[%s99] sm:$0xf] %v94
  %s101 = scalar_lea.vmem %s1, 420
  %102 = vst [vmem:[%s101] sm:$0xf] %v94
  %s103 = scalar_lea.vmem %s0, 8
  %s104 = scalar_lea.vmem %s103, 2
  %v105 = vld [vmem:[%s104] ss:$0 sm:$0xff]
  %s106 = scalar_lea.vmem %s1, 40
  %107 = vst [vmem:[%s106] sm:$0xf] %v105
  %s108 = scalar_lea.vmem %s1, 168
  %109 = vst [vmem:[%s108] sm:$0xf] %v105
  %s110 = scalar_lea.vmem %s1, 296
  %111 = vst [vmem:[%s110] sm:$0xf] %v105
  %s112 = scalar_lea.vmem %s1, 424
  %113 = vst [vmem:[%s112] sm:$0xf] %v105
  %s114 = scalar_lea.vmem %s0, 8
  %s115 = scalar_lea.vmem %s114, 3
  %v116 = vld [vmem:[%s115] ss:$0 sm:$0xff]
  %s117 = scalar_lea.vmem %s1, 44
  %118 = vst [vmem:[%s117] sm:$0xf] %v116
  %s119 = scalar_lea.vmem %s1, 172
  %120 = vst [vmem:[%s119] sm:$0xf] %v116
  %s121 = scalar_lea.vmem %s1, 300
  %122 = vst [vmem:[%s121] sm:$0xf] %v116
  %s123 = scalar_lea.vmem %s1, 428
  %124 = vst [vmem:[%s123] sm:$0xf] %v116
  %s125 = scalar_lea.vmem %s0, 8
  %s126 = scalar_lea.vmem %s125, 4
  %v127 = vld [vmem:[%s126] ss:$0 sm:$0xff]
  %s128 = scalar_lea.vmem %s1, 48
  %129 = vst [vmem:[%s128] sm:$0xf] %v127
  %s130 = scalar_lea.vmem %s1, 176
  %131 = vst [vmem:[%s130] sm:$0xf] %v127
  %s132 = scalar_lea.vmem %s1, 304
  %133 = vst [vmem:[%s132] sm:$0xf] %v127
  %s134 = scalar_lea.vmem %s1, 432
  %135 = vst [vmem:[%s134] sm:$0xf] %v127
  %s136 = scalar_lea.vmem %s0, 8
  %s137 = scalar_lea.vmem %s136, 5
  %v138 = vld [vmem:[%s137] ss:$0 sm:$0xff]
  %s139 = scalar_lea.vmem %s1, 52
  %140 = vst [vmem:[%s139] sm:$0xf] %v138
  %s141 = scalar_lea.vmem %s1, 180
  %142 = vst [vmem:[%s141] sm:$0xf] %v138
  %s143 = scalar_lea.vmem %s1, 308
  %144 = vst [vmem:[%s143] sm:$0xf] %v138
  %s145 = scalar_lea.vmem %s1, 436
  %146 = vst [vmem:[%s145] sm:$0xf] %v138
  %s147 = scalar_lea.vmem %s0, 8
  %s148 = scalar_lea.vmem %s147, 6
  %v149 = vld [vmem:[%s148] ss:$0 sm:$0xff]
  %s150 = scalar_lea.vmem %s1, 56
  %151 = vst [vmem:[%s150] sm:$0xf] %v149
  %s152 = scalar_lea.vmem %s1, 184
  %153 = vst [vmem:[%s152] sm:$0xf] %v149
  %s154 = scalar_lea.vmem %s1, 312
  %155 = vst [vmem:[%s154] sm:$0xf] %v149
  %s156 = scalar_lea.vmem %s1, 440
  %157 = vst [vmem:[%s156] sm:$0xf] %v149
  %s158 = scalar_lea.vmem %s0, 8
  %s159 = scalar_lea.vmem %s158, 7
  %v160 = vld [vmem:[%s159] ss:$0 sm:$0xff]
  %s161 = scalar_lea.vmem %s1, 60
  %162 = vst [vmem:[%s161] sm:$0xf] %v160
  %s163 = scalar_lea.vmem %s1, 188
  %164 = vst [vmem:[%s163] sm:$0xf] %v160
  %s165 = scalar_lea.vmem %s1, 316
  %166 = vst [vmem:[%s165] sm:$0xf] %v160
  %s167 = scalar_lea.vmem %s1, 444
  %168 = vst [vmem:[%s167] sm:$0xf] %v160
  %s169 = scalar_lea.vmem %s0, 16
  %v170 = vld [vmem:[%s169] ss:$0 sm:$0xff]
  %s171 = scalar_lea.vmem %s1, 64
  %172 = vst [vmem:[%s171] sm:$0xf] %v170
  %s173 = scalar_lea.vmem %s1, 192
  %174 = vst [vmem:[%s173] sm:$0xf] %v170
  %s175 = scalar_lea.vmem %s1, 320
  %176 = vst [vmem:[%s175] sm:$0xf] %v170
  %s177 = scalar_lea.vmem %s1, 448
  %178 = vst [vmem:[%s177] sm:$0xf] %v170
  %s179 = scalar_lea.vmem %s0, 16
  %s180 = scalar_lea.vmem %s179, 1
  %v181 = vld [vmem:[%s180] ss:$0 sm:$0xff]
  %s182 = scalar_lea.vmem %s1, 68
  %183 = vst [vmem:[%s182] sm:$0xf] %v181
  %s184 = scalar_lea.vmem %s1, 196
  %185 = vst [vmem:[%s184] sm:$0xf] %v181
  %s186 = scalar_lea.vmem %s1, 324
  %187 = vst [vmem:[%s186] sm:$0xf] %v181
  %s188 = scalar_lea.vmem %s1, 452
  %189 = vst [vmem:[%s188] sm:$0xf] %v181
  %s190 = scalar_lea.vmem %s0, 16
  %s191 = scalar_lea.vmem %s190, 2
  %v192 = vld [vmem:[%s191] ss:$0 sm:$0xff]
  %s193 = scalar_lea.vmem %s1, 72
  %194 = vst [vmem:[%s193] sm:$0xf] %v192
  %s195 = scalar_lea.vmem %s1, 200
  %196 = vst [vmem:[%s195] sm:$0xf] %v192
  %s197 = scalar_lea.vmem %s1, 328
  %198 = vst [vmem:[%s197] sm:$0xf] %v192
  %s199 = scalar_lea.vmem %s1, 456
  %200 = vst [vmem:[%s199] sm:$0xf] %v192
  %s201 = scalar_lea.vmem %s0, 16
  %s202 = scalar_lea.vmem %s201, 3
  %v203 = vld [vmem:[%s202] ss:$0 sm:$0xff]
  %s204 = scalar_lea.vmem %s1, 76
  %205 = vst [vmem:[%s204] sm:$0xf] %v203
  %s206 = scalar_lea.vmem %s1, 204
  %207 = vst [vmem:[%s206] sm:$0xf] %v203
  %s208 = scalar_lea.vmem %s1, 332
  %209 = vst [vmem:[%s208] sm:$0xf] %v203
  %s210 = scalar_lea.vmem %s1, 460
  %211 = vst [vmem:[%s210] sm:$0xf] %v203
  %s212 = scalar_lea.vmem %s0, 16
  %s213 = scalar_lea.vmem %s212, 4
  %v214 = vld [vmem:[%s213] ss:$0 sm:$0xff]
  %s215 = scalar_lea.vmem %s1, 80
  %216 = vst [vmem:[%s215] sm:$0xf] %v214
  %s217 = scalar_lea.vmem %s1, 208
  %218 = vst [vmem:[%s217] sm:$0xf] %v214
  %s219 = scalar_lea.vmem %s1, 336
  %220 = vst [vmem:[%s219] sm:$0xf] %v214
  %s221 = scalar_lea.vmem %s1, 464
  %222 = vst [vmem:[%s221] sm:$0xf] %v214
  %s223 = scalar_lea.vmem %s0, 16
  %s224 = scalar_lea.vmem %s223, 5
  %v225 = vld [vmem:[%s224] ss:$0 sm:$0xff]
  %s226 = scalar_lea.vmem %s1, 84
  %227 = vst [vmem:[%s226] sm:$0xf] %v225
  %s228 = scalar_lea.vmem %s1, 212
  %229 = vst [vmem:[%s228] sm:$0xf] %v225
  %s230 = scalar_lea.vmem %s1, 340
  %231 = vst [vmem:[%s230] sm:$0xf] %v225
  %s232 = scalar_lea.vmem %s1, 468
  %233 = vst [vmem:[%s232] sm:$0xf] %v225
  %s234 = scalar_lea.vmem %s0, 16
  %s235 = scalar_lea.vmem %s234, 6
  %v236 = vld [vmem:[%s235] ss:$0 sm:$0xff]
  %s237 = scalar_lea.vmem %s1, 88
  %238 = vst [vmem:[%s237] sm:$0xf] %v236
  %s239 = scalar_lea.vmem %s1, 216
  %240 = vst [vmem:[%s239] sm:$0xf] %v236
  %s241 = scalar_lea.vmem %s1, 344
  %242 = vst [vmem:[%s241] sm:$0xf] %v236
  %s243 = scalar_lea.vmem %s1, 472
  %244 = vst [vmem:[%s243] sm:$0xf] %v236
  %s245 = scalar_lea.vmem %s0, 16
  %s246 = scalar_lea.vmem %s245, 7
  %v247 = vld [vmem:[%s246] ss:$0 sm:$0xff]
  %s248 = scalar_lea.vmem %s1, 92
  %249 = vst [vmem:[%s248] sm:$0xf] %v247
  %s250 = scalar_lea.vmem %s1, 220
  %251 = vst [vmem:[%s250] sm:$0xf] %v247
  %s252 = scalar_lea.vmem %s1, 348
  %253 = vst [vmem:[%s252] sm:$0xf] %v247
  %s254 = scalar_lea.vmem %s1, 476
  %255 = vst [vmem:[%s254] sm:$0xf] %v247
  %s256 = scalar_lea.vmem %s0, 24
  %v257 = vld [vmem:[%s256] ss:$0 sm:$0xff]
  %s258 = scalar_lea.vmem %s1, 96
  %259 = vst [vmem:[%s258] sm:$0xf] %v257
  %s260 = scalar_lea.vmem %s1, 224
  %261 = vst [vmem:[%s260] sm:$0xf] %v257
  %s262 = scalar_lea.vmem %s1, 352
  %263 = vst [vmem:[%s262] sm:$0xf] %v257
  %s264 = scalar_lea.vmem %s1, 480
  %265 = vst [vmem:[%s264] sm:$0xf] %v257
  %s266 = scalar_lea.vmem %s0, 24
  %s267 = scalar_lea.vmem %s266, 1
  %v268 = vld [vmem:[%s267] ss:$0 sm:$0xff]
  %s269 = scalar_lea.vmem %s1, 100
  %270 = vst [vmem:[%s269] sm:$0xf] %v268
  %s271 = scalar_lea.vmem %s1, 228
  %272 = vst [vmem:[%s271] sm:$0xf] %v268
  %s273 = scalar_lea.vmem %s1, 356
  %274 = vst [vmem:[%s273] sm:$0xf] %v268
  %s275 = scalar_lea.vmem %s1, 484
  %276 = vst [vmem:[%s275] sm:$0xf] %v268
  %s277 = scalar_lea.vmem %s0, 24
  %s278 = scalar_lea.vmem %s277, 2
  %v279 = vld [vmem:[%s278] ss:$0 sm:$0xff]
  %s280 = scalar_lea.vmem %s1, 104
  %281 = vst [vmem:[%s280] sm:$0xf] %v279
  %s282 = scalar_lea.vmem %s1, 232
  %283 = vst [vmem:[%s282] sm:$0xf] %v279
  %s284 = scalar_lea.vmem %s1, 360
  %285 = vst [vmem:[%s284] sm:$0xf] %v279
  %s286 = scalar_lea.vmem %s1, 488
  %287 = vst [vmem:[%s286] sm:$0xf] %v279
  %s288 = scalar_lea.vmem %s0, 24
  %s289 = scalar_lea.vmem %s288, 3
  %v290 = vld [vmem:[%s289] ss:$0 sm:$0xff]
  %s291 = scalar_lea.vmem %s1, 108
  %292 = vst [vmem:[%s291] sm:$0xf] %v290
  %s293 = scalar_lea.vmem %s1, 236
  %294 = vst [vmem:[%s293] sm:$0xf] %v290
  %s295 = scalar_lea.vmem %s1, 364
  %296 = vst [vmem:[%s295] sm:$0xf] %v290
  %s297 = scalar_lea.vmem %s1, 492
  %298 = vst [vmem:[%s297] sm:$0xf] %v290
  %s299 = scalar_lea.vmem %s0, 24
  %s300 = scalar_lea.vmem %s299, 4
  %v301 = vld [vmem:[%s300] ss:$0 sm:$0xff]
  %s302 = scalar_lea.vmem %s1, 112
  %303 = vst [vmem:[%s302] sm:$0xf] %v301
  %s304 = scalar_lea.vmem %s1, 240
  %305 = vst [vmem:[%s304] sm:$0xf] %v301
  %s306 = scalar_lea.vmem %s1, 368
  %307 = vst [vmem:[%s306] sm:$0xf] %v301
  %s308 = scalar_lea.vmem %s1, 496
  %309 = vst [vmem:[%s308] sm:$0xf] %v301
  %s310 = scalar_lea.vmem %s0, 24
  %s311 = scalar_lea.vmem %s310, 5
  %v312 = vld [vmem:[%s311] ss:$0 sm:$0xff]
  %s313 = scalar_lea.vmem %s1, 116
  %314 = vst [vmem:[%s313] sm:$0xf] %v312
  %s315 = scalar_lea.vmem %s1, 244
  %316 = vst [vmem:[%s315] sm:$0xf] %v312
  %s317 = scalar_lea.vmem %s1, 372
  %318 = vst [vmem:[%s317] sm:$0xf] %v312
  %s319 = scalar_lea.vmem %s1, 500
  %320 = vst [vmem:[%s319] sm:$0xf] %v312
  %s321 = scalar_lea.vmem %s0, 24
  %s322 = scalar_lea.vmem %s321, 6
  %v323 = vld [vmem:[%s322] ss:$0 sm:$0xff]
  %s324 = scalar_lea.vmem %s1, 120
  %325 = vst [vmem:[%s324] sm:$0xf] %v323
  %s326 = scalar_lea.vmem %s1, 248
  %327 = vst [vmem:[%s326] sm:$0xf] %v323
  %s328 = scalar_lea.vmem %s1, 376
  %329 = vst [vmem:[%s328] sm:$0xf] %v323
  %s330 = scalar_lea.vmem %s1, 504
  %331 = vst [vmem:[%s330] sm:$0xf] %v323
  %s332 = scalar_lea.vmem %s0, 24
  %s333 = scalar_lea.vmem %s332, 7
  %v334 = vld [vmem:[%s333] ss:$0 sm:$0xff]
  %s335 = scalar_lea.vmem %s1, 124
  %336 = vst [vmem:[%s335] sm:$0xf] %v334
  %s337 = scalar_lea.vmem %s1, 252
  %338 = vst [vmem:[%s337] sm:$0xf] %v334
  %s339 = scalar_lea.vmem %s1, 380
  %340 = vst [vmem:[%s339] sm:$0xf] %v334
  %s341 = scalar_lea.vmem %s1, 508
  %342 = vst [vmem:[%s341] sm:$0xf] %v334

// kernel: decoder_forward.7
$region0: #{decoder_forward.7}
  #allocation0 [shape = 'u32[]', space=smem, size = 0x4, offset = 0x4, fixed_abs, tag = 'smem constant byte address 0x4 - core index']
  #allocation1 [shape = 'u32[72,128]{1,0:T(1,128)}', space=vmem, size = 0x9000, scoped, tag = 'internal scratch']
  %s0 = inlined_call_operand.vmem [shape: bf16[2,64], index: 0, kind: input, shape index: {}]
  %s1 = inlined_call_operand.hbm [shape: bf16[64,1024], index: 1, kind: input, shape index: {}]
  %s2 = inlined_call_operand.vmem [shape: f32[1,1024], index: 2, kind: input, shape index: {}]
  %s3 = inlined_call_operand.vmem [shape: f32[1,1024], index: 3, kind: input, shape index: {}]
  %s4 = inlined_call_operand.vmem [shape: bf16[2,1024], index: 4, kind: output, shape index: {}]
  %s5 = sld [smem:[#allocation0]]
  $region53: #{decoder_forward.7} parent=0
    _
  %s7 = ssub.s32 1, %s5
  %s8 = scalar_select 0, %s7, %s5
  $region1: #{decoder_forward.7} parent=0
    #allocation2 [shape = 'u8[32768]{0}', space=vmem, size = 0x8000, scoped, tag = 'input window, operand 1']
    #allocation3 [shape = 's32[2]{0}', space=sflag, size = 0x8, scoped, tag = 'scoped memory for decoder_forward.7']
    %9 = vsyncpa [#allocation3], 0
    %s10 = scalar_lea.sflag [#allocation3], 1
    %11 = vsyncpa %s10, 0
    loop: start=0, step=1, limit=10
    $region2: #{decoder_forward.7} parent=1 // loop_pre_header
      _
    $region3: #{decoder_forward.7} parent=1 // loop_header
      %s13 = sphi 0, %s17
      %p14 = scmp.ge.s32.totalorder %s13, 10
      %s21 = sphi 0, %s21
      %s23 = sphi 0, %s21
      %s24 = sphi 0, %s23
      %s38 = sphi 0, %s24
      %s44 = sphi 0, %s46
      %s47 = sphi 0, %s44
      %s48 = sphi 0, %s47
      %s64 = sphi 0, %s48
      %s70 = sphi 0, %s72
      %s73 = sphi 0, %s70
      %s74 = sphi 0, %s73
      %s90 = sphi 0, %s74
      %s96 = sphi 0, %s98
      %s99 = sphi 0, %s96
      %s100 = sphi 0, %s99
      %s116 = sphi 0, %s100
      %s122 = sphi 0, %s124
      %s125 = sphi 0, %s122
      %s126 = sphi 0, %s125
      %s142 = sphi 0, %s126
    $region4: #{decoder_forward.7} parent=1 // loop_header_branch
      %16 = sbr.rel (%p14) target = $region8
    $region5: #{decoder_forward.7} parent=1 // loop_body
      %s18 = ssub.s32 %s13, 1
      %s19 = ssub.s32 %s13, 2
      %s20 = sadd.s32 %s13, 1
      %s22 = sadd.s32 %s21, 1
      %p25 = scmp.eq.s32.totalorder %s13, 7
      %p26 = scmp.ne.s32.totalorder %s21, %s23
      %p27 = scmp.eq.s32.totalorder %s13, 0
      %p28 = por %p26, %p27
      %p29 = scmp.ne.s32.totalorder %s21, %s23
      %p30 = scmp.eq.s32.totalorder %s18, 7
      %p31 = por %p29, %p30
      %p32 = scmp.ne.s32.totalorder %s23, %s24
      %p33 = scmp.eq.s32.totalorder %s18, 0
      %p34 = por %p32, %p33
      %p35 = scmp.ne.s32.totalorder %s23, %s24
      %p36 = scmp.eq.s32.totalorder %s19, 7
      %p37 = por %p35, %p36
      %p39 = scmp.ne.s32.totalorder %s24, %s38
      %p40 = scmp.eq.s32.totalorder %s19, 0
      %p41 = por %p39, %p40
      %s42 = ssub.s32 %s13, %s20
      %p43 = scmp.eq.s32.totalorder %s42, 0
      %s45 = sadd.s32 %s44, 1
      %s46 = scalar_select %p43, %s44, %s45
      %p49 = pneg %p43
      %p50 = scmp.eq.s32.totalorder %s13, 7
      %p51 = por %p49, %p50
      %p52 = scmp.ne.s32.totalorder %s44, %s47
      %p53 = scmp.eq.s32.totalorder %s13, 0
      %p54 = por %p52, %p53
      %p55 = scmp.ne.s32.totalorder %s44, %s47
      %p56 = scmp.eq.s32.totalorder %s18, 7
      %p57 = por %p55, %p56
      %p58 = scmp.ne.s32.totalorder %s47, %s48
      %p59 = scmp.eq.s32.totalorder %s18, 0
      %p60 = por %p58, %p59
      %p61 = scmp.ne.s32.totalorder %s47, %s48
      %p62 = scmp.eq.s32.totalorder %s19, 7
      %p63 = por %p61, %p62
      %p65 = scmp.ne.s32.totalorder %s48, %s64
      %p66 = scmp.eq.s32.totalorder %s19, 0
      %p67 = por %p65, %p66
      %s68 = ssub.s32 %s13, %s20
      %p69 = scmp.eq.s32.totalorder %s68, 0
      %s71 = sadd.s32 %s70, 1
      %s72 = scalar_select %p69, %s70, %s71
      %p75 = pneg %p69
      %p76 = scmp.eq.s32.totalorder %s13, 7
      %p77 = por %p75, %p76
      %p78 = scmp.ne.s32.totalorder %s70, %s73
      %p79 = scmp.eq.s32.totalorder %s13, 0
      %p80 = por %p78, %p79
      %p81 = scmp.ne.s32.totalorder %s70, %s73
      %p82 = scmp.eq.s32.totalorder %s18, 7
      %p83 = por %p81, %p82
      %p84 = scmp.ne.s32.totalorder %s73, %s74
      %p85 = scmp.eq.s32.totalorder %s18, 0
      %p86 = por %p84, %p85
      %p87 = scmp.ne.s32.totalorder %s73, %s74
      %p88 = scmp.eq.s32.totalorder %s19, 7
      %p89 = por %p87, %p88
      %p91 = scmp.ne.s32.totalorder %s74, %s90
      %p92 = scmp.eq.s32.totalorder %s19, 0
      %p93 = por %p91, %p92
      %s94 = ssub.s32 %s13, %s20
      %p95 = scmp.eq.s32.totalorder %s94, 0
      %s97 = sadd.s32 %s96, 1
      %s98 = scalar_select %p95, %s96, %s97
      %p101 = pneg %p95
      %p102 = scmp.eq.s32.totalorder %s13, 7
      %p103 = por %p101, %p102
      %p104 = scmp.ne.s32.totalorder %s96, %s99
      %p105 = scmp.eq.s32.totalorder %s13, 0
      %p106 = por %p104, %p105
      %p107 = scmp.ne.s32.totalorder %s96, %s99
      %p108 = scmp.eq.s32.totalorder %s18, 7
      %p109 = por %p107, %p108
      %p110 = scmp.ne.s32.totalorder %s99, %s100
      %p111 = scmp.eq.s32.totalorder %s18, 0
      %p112 = por %p110, %p111
      %p113 = scmp.ne.s32.totalorder %s99, %s100
      %p114 = scmp.eq.s32.totalorder %s19, 7
      %p115 = por %p113, %p114
      %p117 = scmp.ne.s32.totalorder %s100, %s116
      %p118 = scmp.eq.s32.totalorder %s19, 0
      %p119 = por %p117, %p118
      %s120 = ssub.s32 %s13, %s20
      %p121 = scmp.eq.s32.totalorder %s120, 0
      %s123 = sadd.s32 %s122, 1
      %s124 = scalar_select %p121, %s122, %s123
      %p127 = pneg %p121
      %p128 = scmp.eq.s32.totalorder %s13, 7
      %p129 = por %p127, %p128
      %p130 = scmp.ne.s32.totalorder %s122, %s125
      %p131 = scmp.eq.s32.totalorder %s13, 0
      %p132 = por %p130, %p131
      %p133 = scmp.ne.s32.totalorder %s122, %s125
      %p134 = scmp.eq.s32.totalorder %s18, 7
      %p135 = por %p133, %p134
      %p136 = scmp.ne.s32.totalorder %s125, %s126
      %p137 = scmp.eq.s32.totalorder %s18, 0
      %p138 = por %p136, %p137
      %p139 = scmp.ne.s32.totalorder %s125, %s126
      %p140 = scmp.eq.s32.totalorder %s19, 7
      %p141 = por %p139, %p140
      %p143 = scmp.ne.s32.totalorder %s126, %s142
      %p144 = scmp.eq.s32.totalorder %s19, 0
      %p145 = por %p143, %p144
      %p146 = scmp.le.s32.totalorder 1, %s13
      %p147 = scmp.lt.s32.totalorder %s13, 9
      %p148 = pnand %p146, %p147
      %p149 = pneg %p148
      // Predicated region
      $region9: #{decoder_forward.7} parent=5 // pred_check
        _
      $region10: #{decoder_forward.7} parent=5 // pred_check_branch
        %151 = sbr.rel (%p148) target = $region12
      $region11: #{decoder_forward.7} parent=5 // pred_region
        %s152 = ssub.s32 %s13, 1
        // Predicated region
        $region13: #{decoder_forward.7} parent=11 // pred_check
          %p153 = pneg %p34
        $region14: #{decoder_forward.7} parent=11 // pred_check_branch
          %155 = sbr.rel (%p153) target = $region16
        $region15: #{decoder_forward.7} parent=11 // pred_region
          _
        $region16: #{decoder_forward.7} parent=11 // pred_fallthru
          _
      $region12: #{decoder_forward.7} parent=5 // pred_fallthru
        _
      %p156 = scmp.lt.s32.totalorder %s13, 8
      // Predicated region
      $region17: #{decoder_forward.7} parent=5 // pred_check
        %p157 = pneg %p156
      $region18: #{decoder_forward.7} parent=5 // pred_check_branch
        %159 = sbr.rel (%p157) target = $region20
      $region19: #{decoder_forward.7} parent=5 // pred_region
        // Predicated region
        $region21: #{decoder_forward.7} parent=19 // pred_check
          %p160 = pneg %p54
        $region22: #{decoder_forward.7} parent=19 // pred_check_branch
          %162 = sbr.rel (%p160) target = $region24
        $region23: #{decoder_forward.7} parent=19 // pred_region
          %s163 = sand.u32 %s44, 1
          %s164 = scalar_lea.sflag [#allocation3], %s163
          %s165 = sand.u32 %s44, 1
          %s166 = smul.addr %s165, 32
          %s167 = scalar_lea.vmem [#allocation2], %s166
          %169 = vsyncadd %s164, 0
          %s170 = smul.addr %s13, 4
          %s171 = scalar_lea.hbm %s1, %s170
          %s172 = sshll.u32 %s171, 4
          %s173 = int_to_ptr.hbm [resolvable:$true] %s172
          %s174 = sshll.u32 %s167, 4
          %s175 = int_to_ptr.vmem [resolvable:$true] %s174
          %180 = dma.hbm_to_vmem [thread:$0]  %s173, 512, %s175, %s164, 512, 64, 4
        $region24: #{decoder_forward.7} parent=19 // pred_fallthru
          _
        // Predicated region
        $region25: #{decoder_forward.7} parent=19 // pred_check
          %p181 = pneg %p80
        $region26: #{decoder_forward.7} parent=19 // pred_check_branch
          %183 = sbr.rel (%p181) target = $region28
        $region27: #{decoder_forward.7} parent=19 // pred_region
          %p184 = scmp.lt.s32.totalorder %s13, 7
          %s185 = scalar_select %p184, %s13, 7
          %s186 = scalar_lea.vmem %s2, %s185
        $region28: #{decoder_forward.7} parent=19 // pred_fallthru
          _
        // Predicated region
        $region29: #{decoder_forward.7} parent=19 // pred_check
          %p187 = pneg %p106
        $region30: #{decoder_forward.7} parent=19 // pred_check_branch
          %189 = sbr.rel (%p187) target = $region32
        $region31: #{decoder_forward.7} parent=19 // pred_region
          %p190 = scmp.lt.s32.totalorder %s13, 7
          %s191 = scalar_select %p190, %s13, 7
          %s192 = scalar_lea.vmem %s3, %s191
        $region32: #{decoder_forward.7} parent=19 // pred_fallthru
          _
      $region20: #{decoder_forward.7} parent=5 // pred_fallthru
        _
      %p193 = scmp.le.s32.totalorder 1, %s13
      %p194 = scmp.lt.s32.totalorder %s13, 9
      %p195 = pnand %p193, %p194
      %p196 = pneg %p195
      // Predicated region
      $region33: #{decoder_forward.7} parent=5 // pred_check
        _
      $region34: #{decoder_forward.7} parent=5 // pred_check_branch
        %198 = sbr.rel (%p195) target = $region36
      $region35: #{decoder_forward.7} parent=5 // pred_region
        %s199 = ssub.s32 %s13, 1
        %s200 = sand.u32 %s47, 1
        %s201 = scalar_lea.sflag [#allocation3], %s200
        %s202 = sand.u32 %s47, 1
        %s203 = smul.addr %s202, 32
        %s204 = scalar_lea.vmem [#allocation2], %s203
        // Predicated region
        $region37: #{decoder_forward.7} parent=35 // pred_check
          %p205 = pneg %p60
        $region38: #{decoder_forward.7} parent=35 // pred_check_branch
          %207 = sbr.rel (%p205) target = $region40
        $region39: #{decoder_forward.7} parent=35 // pred_region
          %209 = dma.done %s201, 512
        $region40: #{decoder_forward.7} parent=35 // pred_fallthru
          _
        %p210 = pneg %p34
        %p211 = pneg %p31
        %s212 = sand.u32 %s47, 1
        %s213 = scalar_lea.sflag [#allocation3], %s212
        %s214 = sand.u32 %s47, 1
        %s215 = smul.addr %s214, 32
        %s216 = scalar_lea.vmem [#allocation2], %s215
        %p217 = pneg %p60
        %p218 = pneg %p57
        %p219 = scmp.lt.s32.totalorder %s18, 7
        %s220 = scalar_select %p219, %s18, 7
        %s221 = scalar_lea.vmem %s2, %s220
        %p222 = pneg %p86
        %p223 = pneg %p83
        %p224 = scmp.lt.s32.totalorder %s18, 7
        %s225 = scalar_select %p224, %s18, 7
        %s226 = scalar_lea.vmem %s3, %s225
        %p227 = pneg %p112
        %p228 = pneg %p109
        %p229 = pneg %p138
        %p230 = pneg %p135
        %p231 = scmp.lt.s32.totalorder %s18, 7
        %s232 = scalar_select %p231, %s18, 7
        %s233 = scalar_lea.vmem %s4, %s232
        %p234 = scmp.lt.s32.totalorder %s18, 7
        %s235 = scalar_select %p234, %s18, 7
        %s236 = scalar_lea.vmem %s2, %s235
        %p237 = scmp.lt.s32.totalorder %s18, 7
        %s238 = scalar_select %p237, %s18, 7
        %s239 = scalar_lea.vmem %s3, %s238
        %p240 = scmp.lt.s32.totalorder %s18, 7
        %s241 = scalar_select %p240, %s18, 7
        %s242 = scalar_lea.vmem %s4, %s241
        %v244 = vld [vmem:[%s0] sm:$0x1]
        %v245 = vld [vmem:[%s204] sm:$0xf]
        %v246 = vld [vmem:[%s204 + $0x4] sm:$0xf]
        %v247 = vld [vmem:[%s204 + $0x8] sm:$0xf]
        %v248 = vld [vmem:[%s204 + $0xc] sm:$0xf]
        %v249 = vld [vmem:[%s204 + $0x10] sm:$0xf]
        %v250 = vld [vmem:[%s204 + $0x14] sm:$0xf]
        %v251 = vld [vmem:[%s204 + $0x18] sm:$0xf]
        %v252 = vld [vmem:[%s204 + $0x1c] sm:$0xf]
        %v261 = vunpack.c.l.b16 %v245
        %v262 = vunpack.c.l.b16 %v246
        %v263 = vunpack.c.l.b16 %v247
        %v264 = vunpack.c.l.b16 %v248
        %v265 = vunpack.c.l.b16 %v249
        %v266 = vunpack.c.l.b16 %v250
        %v267 = vunpack.c.l.b16 %v251
        %v268 = vunpack.c.l.b16 %v252
        %v269 = vpack.c.b16 %v262, %v261
        %v270 = vpack.c.b16 %v264, %v263
        %v271 = vpack.c.b16 %v266, %v265
        %v272 = vpack.c.b16 %v268, %v267
        %vm277 = vcmask 523264
        %v279 = vsel %vm277, %v244, 0
        %281 = vmatpush.bf16.msra.mxu0 0
        %282 = vmatpush.bf16.msra.mxu0 0
        %283 = vmatpush.bf16.msra.mxu0 0
        %284 = vmatpush.bf16.msra.mxu0 0
        %285 = vmatpush.bf16.msra.mxu0 %v272
        %286 = vmatpush.bf16.msra.mxu0 %v271
        %287 = vmatpush.bf16.msra.mxu0 %v270
        %288 = vmatpush.bf16.msra.mxu0 %v269
        %289 = vmatmul.bf16.gmra.mxu0 %v279
        %v290 = vpop.f32.mrf.mxu0
        %v291 = vadd.f32 0.0, %v290
        %v292 = vpop.f32.mrf.mxu0
        %293 = vdwg.mxu0
        %v294 = vld [vmem:[%s236] sm:$0x1]
        %v295 = vld [vmem:[%s239] sm:$0x1]
        %vm296 = vcmask 1041408
        %v297 = vsel %vm296, %v291, 0.0
        %v298 = vrot.slane %v297, 4
        %v299 = vadd.f32 %v297, %v298
        %v300 = vrot.slane %v299, 2
        %v301 = vadd.f32 %v299, %v300
        %v302 = vrot.slane %v301, 1
        %v303 = vadd.f32 %v301, %v302
        %v304 = vmul.f32 %v291, %v291
        %v305 = vsel %vm296, %v304, 0.0
        %v306 = vrot.slane %v305, 4
        %v307 = vadd.f32 %v305, %v306
        %v308 = vrot.slane %v307, 2
        %v309 = vadd.f32 %v307, %v308
        %v310 = vrot.slane %v309, 1
        %v311 = vadd.f32 %v309, %v310
        %v312 = vmul.f32 %v303, 0.5
        %v313 = vmul.f32 %v311, 0.5
        %v314 = vmul.f32 %v312, %v312
        %v315 = vsub.f32 %v313, %v314
        %v316 = vmax.f32 %v315, 0.0
        %v317 = vsub.f32 %v291, %v312
        %v318 = vadd.f32 %v316, 1e-05
        %v319 = vrsqrt.pop %v318
        %v320 = vmul.f32 %v319, %v318
        %v321 = vmul.f32 %v320, %v319
        %v322 = vmul.f32 0.5, %v321
        %v323 = vsub.f32 1.5, %v322
        %v324 = vmul.f32 %v319, %v323
        %vm325 = vweird.f32 %v318
        %vm326 = vweird.f32 %v319
        %vm327 = vmor %vm325, %vm326
        %v328 = vsel %vm327, %v319, %v324
        %v329 = vmul.f32 %v317, %v328
        %v331 = vperm.slane %v294, 0
        %v333 = vmul.f32 %v329, %v331
        %v335 = vperm.slane %v295, 0
        %v337 = vadd.f32 %v333, %v335
        %vm338 = vcmp.ge.f32.partialorder %v337, 0.0
        %v339 = vmul.f32 %v337, 0.01
        %v340 = vsel %vm338, %v337, %v339
        %v341 = vpack.c.bf16 %v340, %v340
        %342 = vst [vmem:[%s242] sm:$0x1] %v341
        %p343 = scmp.lt.s32.totalorder %s18, 7
        %s344 = scalar_select %p343, %s18, 7
        %s345 = scalar_lea.vmem %s4, %s344
        // Predicated region
        $region41: #{decoder_forward.7} parent=35 // pred_check
          %p346 = pneg %p135
        $region42: #{decoder_forward.7} parent=35 // pred_check_branch
          %348 = sbr.rel (%p346) target = $region44
        $region43: #{decoder_forward.7} parent=35 // pred_region
          _
        $region44: #{decoder_forward.7} parent=35 // pred_fallthru
          _
      $region36: #{decoder_forward.7} parent=5 // pred_fallthru
        _
      %p349 = scmp.le.s32.totalorder 2, %s13
      // Predicated region
      $region45: #{decoder_forward.7} parent=5 // pred_check
        %p350 = pneg %p349
      $region46: #{decoder_forward.7} parent=5 // pred_check_branch
        %352 = sbr.rel (%p350) target = $region48
      $region47: #{decoder_forward.7} parent=5 // pred_region
        %s353 = ssub.s32 %s13, 2
        // Predicated region
        $region49: #{decoder_forward.7} parent=47 // pred_check
          %p354 = pneg %p141
        $region50: #{decoder_forward.7} parent=47 // pred_check_branch
          %356 = sbr.rel (%p354) target = $region52
        $region51: #{decoder_forward.7} parent=47 // pred_region
          %p357 = scmp.lt.s32.totalorder %s19, 7
          %s358 = scalar_select %p357, %s19, 7
          %s359 = scalar_lea.vmem %s4, %s358
        $region52: #{decoder_forward.7} parent=47 // pred_fallthru
          _
      $region48: #{decoder_forward.7} parent=5 // pred_fallthru
        _
    $region6: #{decoder_forward.7} parent=1 // loop_footer
      %s17 = sadd.s32 1, %s13
    $region7: #{decoder_forward.7} parent=1 // loop_footer_branch
      %12 = sbr.rel target = $region3
    $region8: #{decoder_forward.7} parent=1 // loop_exit
      _
    %360 = vsyncpa [#allocation3], 1
    %s361 = scalar_lea.sflag [#allocation3], 1
    %362 = vsyncpa %s361, 1

// kernel: decoder_forward.6
$region0: #{decoder_forward.6}
  #allocation0 [shape = 'u32[]', space=smem, size = 0x4, offset = 0x4, fixed_abs, tag = 'smem constant byte address 0x4 - core index']
  #allocation1 [shape = 'u32[72,128]{1,0:T(1,128)}', space=vmem, size = 0x9000, scoped, tag = 'internal scratch']
  %s0 = inlined_call_operand.vmem [shape: bf16[2,32], index: 0, kind: input, shape index: {}]
  %s1 = inlined_call_operand.hbm [shape: bf16[32,64], index: 1, kind: input, shape index: {}]
  %s2 = inlined_call_operand.vmem [shape: f32[1,64], index: 2, kind: input, shape index: {}]
  %s3 = inlined_call_operand.vmem [shape: f32[1,64], index: 3, kind: input, shape index: {}]
  %s4 = inlined_call_operand.vmem [shape: bf16[2,64], index: 4, kind: output, shape index: {}]
  %s5 = sld [smem:[#allocation0]]
  $region30: #{decoder_forward.6} parent=0
    _
  %s7 = ssub.s32 1, %s5
  %s8 = scalar_select 0, %s7, %s5
  $region1: #{decoder_forward.6} parent=0
    #allocation2 [shape = 'u8[8192]{0}', space=vmem, size = 0x2000, scoped, tag = 'input window, operand 1, single buffered']
    #allocation3 [shape = 's32[1]{0}', space=sflag, size = 0x4, scoped, tag = 'scoped memory for decoder_forward.6']
    %9 = vsyncpa [#allocation3], 0
    // Predicated region
    $region2: #{decoder_forward.6} parent=1 // pred_check
      _
    $region3: #{decoder_forward.6} parent=1 // pred_check_branch
      %11 = sbr.rel (0) target = $region5
    $region4: #{decoder_forward.6} parent=1 // pred_region
      _
    $region5: #{decoder_forward.6} parent=1 // pred_fallthru
      _
    // Predicated region
    $region6: #{decoder_forward.6} parent=1 // pred_check
      _
    $region7: #{decoder_forward.6} parent=1 // pred_check_branch
      %13 = sbr.rel (0) target = $region9
    $region8: #{decoder_forward.6} parent=1 // pred_region
      %15 = vsyncadd [#allocation3], 0
      %s16 = sshll.u32 %s1, 4
      %s17 = int_to_ptr.hbm [resolvable:$true] %s16
      %s18 = sshll.u32 [#allocation2], 4
      %s19 = int_to_ptr.vmem [resolvable:$true] %s18
      %24 = dma.hbm_to_vmem [thread:$0]  %s17, 256, %s19, [#allocation3], 64, 64, 4
    $region9: #{decoder_forward.6} parent=1 // pred_fallthru
      _
    // Predicated region
    $region10: #{decoder_forward.6} parent=1 // pred_check
      _
    $region11: #{decoder_forward.6} parent=1 // pred_check_branch
      %26 = sbr.rel (0) target = $region13
    $region12: #{decoder_forward.6} parent=1 // pred_region
      _
    $region13: #{decoder_forward.6} parent=1 // pred_fallthru
      _
    // Predicated region
    $region14: #{decoder_forward.6} parent=1 // pred_check
      _
    $region15: #{decoder_forward.6} parent=1 // pred_check_branch
      %28 = sbr.rel (0) target = $region17
    $region16: #{decoder_forward.6} parent=1 // pred_region
      _
    $region17: #{decoder_forward.6} parent=1 // pred_fallthru
      _
    // Predicated region
    $region18: #{decoder_forward.6} parent=1 // pred_check
      _
    $region19: #{decoder_forward.6} parent=1 // pred_check_branch
      %30 = sbr.rel (0) target = $region21
    $region20: #{decoder_forward.6} parent=1 // pred_region
      %32 = dma.done [#allocation3], 256
    $region21: #{decoder_forward.6} parent=1 // pred_fallthru
      _
    %v34 = vld [vmem:[%s0] sm:$0x1]
    %v35 = vld [vmem:[#allocation2] sm:$0xf]
    %v36 = vld [vmem:[#allocation2 + $0x4] sm:$0xf]
    %v37 = vld [vmem:[#allocation2 + $0x8] sm:$0xf]
    %v38 = vld [vmem:[#allocation2 + $0xc] sm:$0xf]
    %v43 = vunpack.c.l.b16 %v35
    %v44 = vunpack.c.l.b16 %v36
    %v45 = vunpack.c.l.b16 %v37
    %v46 = vunpack.c.l.b16 %v38
    %v47 = vpack.c.b16 %v44, %v43
    %v48 = vpack.c.b16 %v46, %v45
    %vm51 = vcmask 261120
    %v53 = vsel %vm51, %v34, 0
    %55 = vmatpush.bf16.msra.mxu0 0
    %56 = vmatpush.bf16.msra.mxu0 0
    %57 = vmatpush.bf16.msra.mxu0 0
    %58 = vmatpush.bf16.msra.mxu0 0
    %59 = vmatpush.bf16.msra.mxu0 0
    %60 = vmatpush.bf16.msra.mxu0 0
    %61 = vmatpush.bf16.msra.mxu0 %v48
    %62 = vmatpush.bf16.msra.mxu0 %v47
    %63 = vmatmul.bf16.gmra.mxu0 %v53
    %v64 = vpop.f32.mrf.mxu0
    %v65 = vadd.f32 0.0, %v64
    %v66 = vpop.f32.mrf.mxu0
    %67 = vdwg.mxu0
    %v68 = vld [vmem:[%s2] sm:$0x1]
    %v69 = vld [vmem:[%s3] sm:$0x1]
    %vm70 = vcmask 517120
    %v71 = vsel %vm70, %v65, 0.0
    %v72 = vrot.slane %v71, 4
    %v73 = vadd.f32 %v71, %v72
    %v74 = vrot.slane %v73, 2
    %v75 = vadd.f32 %v73, %v74
    %v76 = vrot.slane %v75, 1
    %v77 = vadd.f32 %v75, %v76
    %v78 = vmul.f32 %v65, %v65
    %v79 = vsel %vm70, %v78, 0.0
    %v80 = vrot.slane %v79, 4
    %v81 = vadd.f32 %v79, %v80
    %v82 = vrot.slane %v81, 2
    %v83 = vadd.f32 %v81, %v82
    %v84 = vrot.slane %v83, 1
    %v85 = vadd.f32 %v83, %v84
    %v86 = vmul.f32 %v77, 0.5
    %v87 = vmul.f32 %v85, 0.5
    %v88 = vmul.f32 %v86, %v86
    %v89 = vsub.f32 %v87, %v88
    %v90 = vmax.f32 %v89, 0.0
    %v91 = vsub.f32 %v65, %v86
    %v92 = vadd.f32 %v90, 1e-05
    %v93 = vrsqrt.pop %v92
    %v94 = vmul.f32 %v93, %v92
    %v95 = vmul.f32 %v94, %v93
    %v96 = vmul.f32 0.5, %v95
    %v97 = vsub.f32 1.5, %v96
    %v98 = vmul.f32 %v93, %v97
    %vm99 = vweird.f32 %v92
    %vm100 = vweird.f32 %v93
    %vm101 = vmor %vm99, %vm100
    %v102 = vsel %vm101, %v93, %v98
    %v103 = vmul.f32 %v91, %v102
    %v105 = vperm.slane %v68, 0
    %v107 = vmul.f32 %v103, %v105
    %v109 = vperm.slane %v69, 0
    %v111 = vadd.f32 %v107, %v109
    %vm112 = vcmp.ge.f32.partialorder %v111, 0.0
    %v113 = vmul.f32 %v111, 0.01
    %v114 = vsel %vm112, %v111, %v113
    %v115 = vpack.c.bf16 %v114, %v114
    %vm116 = vcmask 516096
    %117 = vst.msk [vmem:[%s4] sm:$0x1] %vm116, %v115
    // Predicated region
    $region22: #{decoder_forward.6} parent=1 // pred_check
      _
    $region23: #{decoder_forward.6} parent=1 // pred_check_branch
      %119 = sbr.rel (0) target = $region25
    $region24: #{decoder_forward.6} parent=1 // pred_region
      _
    $region25: #{decoder_forward.6} parent=1 // pred_fallthru
      _
    // Predicated region
    $region26: #{decoder_forward.6} parent=1 // pred_check
      _
    $region27: #{decoder_forward.6} parent=1 // pred_check_branch
      %121 = sbr.rel (0) target = $region29
    $region28: #{decoder_forward.6} parent=1 // pred_region
      _
    $region29: #{decoder_forward.6} parent=1 // pred_fallthru
      _
    %122 = vsyncpa [#allocation3], 1

// kernel: tile.14
$region0: #{tile.14}
  %s0 = inlined_call_operand.vmem [shape: f32[4,32,4,32], index: 0, kind: input, shape index: {}]
  %s1 = inlined_call_operand.vmem [shape: f32[128,128], index: 1, kind: output, shape index: {}]
  $region1: #{tile.14} parent=0
    #allocation0 [shape = 'u8[524288]{0}', space=vmem, size = 0x80000, scoped, tag = 'scoped mem for input reshape']
    %s3 = ssub.s32 16, 1
    %s4 = scalar_lea.vmem %s0, 508
    %v5 = vld [vmem:[%s4] sm:%s3]
    %s6 = scalar_lea.vmem [#allocation0], 1016
    %7 = vst [vmem:[%s6] sm:%s3] %v5
    %s8 = scalar_lea.vmem %s0, 504
    %v9 = vld [vmem:[%s8] sm:%s3]
    %s10 = scalar_lea.vmem [#allocation0], 1008
    %11 = vst [vmem:[%s10] sm:%s3] %v9
    %s12 = scalar_lea.vmem %s0, 500
    %v13 = vld [vmem:[%s12] sm:%s3]
    %s14 = scalar_lea.vmem [#allocation0], 1000
    %15 = vst [vmem:[%s14] sm:%s3] %v13
    %s16 = scalar_lea.vmem %s0, 496
    %v17 = vld [vmem:[%s16] sm:%s3]
    %s18 = scalar_lea.vmem [#allocation0], 992
    %19 = vst [vmem:[%s18] sm:%s3] %v17
    %s20 = scalar_lea.vmem %s0, 492
    %v21 = vld [vmem:[%s20] sm:%s3]
    %s22 = scalar_lea.vmem [#allocation0], 984
    %23 = vst [vmem:[%s22] sm:%s3] %v21
    %s24 = scalar_lea.vmem %s0, 488
    %v25 = vld [vmem:[%s24] sm:%s3]
    %s26 = scalar_lea.vmem [#allocation0], 976
    %27 = vst [vmem:[%s26] sm:%s3] %v25
    %s28 = scalar_lea.vmem %s0, 484
    %v29 = vld [vmem:[%s28] sm:%s3]
    %s30 = scalar_lea.vmem [#allocation0], 968
    %31 = vst [vmem:[%s30] sm:%s3] %v29
    %s32 = scalar_lea.vmem %s0, 480
    %v33 = vld [vmem:[%s32] sm:%s3]
    %s34 = scalar_lea.vmem [#allocation0], 960
    %35 = vst [vmem:[%s34] sm:%s3] %v33
    %s36 = scalar_lea.vmem %s0, 476
    %v37 = vld [vmem:[%s36] sm:%s3]
    %s38 = scalar_lea.vmem [#allocation0], 952
    %39 = vst [vmem:[%s38] sm:%s3] %v37
    %s40 = scalar_lea.vmem %s0, 472
    %v41 = vld [vmem:[%s40] sm:%s3]
    %s42 = scalar_lea.vmem [#allocation0], 944
    %43 = vst [vmem:[%s42] sm:%s3] %v41
    %s44 = scalar_lea.vmem %s0, 468
    %v45 = vld [vmem:[%s44] sm:%s3]
    %s46 = scalar_lea.vmem [#allocation0], 936
    %47 = vst [vmem:[%s46] sm:%s3] %v45
    %s48 = scalar_lea.vmem %s0, 464
    %v49 = vld [vmem:[%s48] sm:%s3]
    %s50 = scalar_lea.vmem [#allocation0], 928
    %51 = vst [vmem:[%s50] sm:%s3] %v49
    %s52 = scalar_lea.vmem %s0, 460
    %v53 = vld [vmem:[%s52] sm:%s3]
    %s54 = scalar_lea.vmem [#allocation0], 920
    %55 = vst [vmem:[%s54] sm:%s3] %v53
    %s56 = scalar_lea.vmem %s0, 456
    %v57 = vld [vmem:[%s56] sm:%s3]
    %s58 = scalar_lea.vmem [#allocation0], 912
    %59 = vst [vmem:[%s58] sm:%s3] %v57
    %s60 = scalar_lea.vmem %s0, 452
    %v61 = vld [vmem:[%s60] sm:%s3]
    %s62 = scalar_lea.vmem [#allocation0], 904
    %63 = vst [vmem:[%s62] sm:%s3] %v61
    %s64 = scalar_lea.vmem %s0, 448
    %v65 = vld [vmem:[%s64] sm:%s3]
    %s66 = scalar_lea.vmem [#allocation0], 896
    %67 = vst [vmem:[%s66] sm:%s3] %v65
    %s68 = scalar_lea.vmem %s0, 444
    %v69 = vld [vmem:[%s68] sm:%s3]
    %s70 = scalar_lea.vmem [#allocation0], 888
    %71 = vst [vmem:[%s70] sm:%s3] %v69
    %s72 = scalar_lea.vmem %s0, 440
    %v73 = vld [vmem:[%s72] sm:%s3]
    %s74 = scalar_lea.vmem [#allocation0], 880
    %75 = vst [vmem:[%s74] sm:%s3] %v73
    %s76 = scalar_lea.vmem %s0, 436
    %v77 = vld [vmem:[%s76] sm:%s3]
    %s78 = scalar_lea.vmem [#allocation0], 872
    %79 = vst [vmem:[%s78] sm:%s3] %v77
    %s80 = scalar_lea.vmem %s0, 432
    %v81 = vld [vmem:[%s80] sm:%s3]
    %s82 = scalar_lea.vmem [#allocation0], 864
    %83 = vst [vmem:[%s82] sm:%s3] %v81
    %s84 = scalar_lea.vmem %s0, 428
    %v85 = vld [vmem:[%s84] sm:%s3]
    %s86 = scalar_lea.vmem [#allocation0], 856
    %87 = vst [vmem:[%s86] sm:%s3] %v85
    %s88 = scalar_lea.vmem %s0, 424
    %v89 = vld [vmem:[%s88] sm:%s3]
    %s90 = scalar_lea.vmem [#allocation0], 848
    %91 = vst [vmem:[%s90] sm:%s3] %v89
    %s92 = scalar_lea.vmem %s0, 420
    %v93 = vld [vmem:[%s92] sm:%s3]
    %s94 = scalar_lea.vmem [#allocation0], 840
    %95 = vst [vmem:[%s94] sm:%s3] %v93
    %s96 = scalar_lea.vmem %s0, 416
    %v97 = vld [vmem:[%s96] sm:%s3]
    %s98 = scalar_lea.vmem [#allocation0], 832
    %99 = vst [vmem:[%s98] sm:%s3] %v97
    %s100 = scalar_lea.vmem %s0, 412
    %v101 = vld [vmem:[%s100] sm:%s3]
    %s102 = scalar_lea.vmem [#allocation0], 824
    %103 = vst [vmem:[%s102] sm:%s3] %v101
    %s104 = scalar_lea.vmem %s0, 408
    %v105 = vld [vmem:[%s104] sm:%s3]
    %s106 = scalar_lea.vmem [#allocation0], 816
    %107 = vst [vmem:[%s106] sm:%s3] %v105
    %s108 = scalar_lea.vmem %s0, 404
    %v109 = vld [vmem:[%s108] sm:%s3]
    %s110 = scalar_lea.vmem [#allocation0], 808
    %111 = vst [vmem:[%s110] sm:%s3] %v109
    %s112 = scalar_lea.vmem %s0, 400
    %v113 = vld [vmem:[%s112] sm:%s3]
    %s114 = scalar_lea.vmem [#allocation0], 800
    %115 = vst [vmem:[%s114] sm:%s3] %v113
    %s116 = scalar_lea.vmem %s0, 396
    %v117 = vld [vmem:[%s116] sm:%s3]
    %s118 = scalar_lea.vmem [#allocation0], 792
    %119 = vst [vmem:[%s118] sm:%s3] %v117
    %s120 = scalar_lea.vmem %s0, 392
    %v121 = vld [vmem:[%s120] sm:%s3]
    %s122 = scalar_lea.vmem [#allocation0], 784
    %123 = vst [vmem:[%s122] sm:%s3] %v121
    %s124 = scalar_lea.vmem %s0, 388
    %v125 = vld [vmem:[%s124] sm:%s3]
    %s126 = scalar_lea.vmem [#allocation0], 776
    %127 = vst [vmem:[%s126] sm:%s3] %v125
    %s128 = scalar_lea.vmem %s0, 384
    %v129 = vld [vmem:[%s128] sm:%s3]
    %s130 = scalar_lea.vmem [#allocation0], 768
    %131 = vst [vmem:[%s130] sm:%s3] %v129
    %s132 = scalar_lea.vmem %s0, 380
    %v133 = vld [vmem:[%s132] sm:%s3]
    %s134 = scalar_lea.vmem [#allocation0], 760
    %135 = vst [vmem:[%s134] sm:%s3] %v133
    %s136 = scalar_lea.vmem %s0, 376
    %v137 = vld [vmem:[%s136] sm:%s3]
    %s138 = scalar_lea.vmem [#allocation0], 752
    %139 = vst [vmem:[%s138] sm:%s3] %v137
    %s140 = scalar_lea.vmem %s0, 372
    %v141 = vld [vmem:[%s140] sm:%s3]
    %s142 = scalar_lea.vmem [#allocation0], 744
    %143 = vst [vmem:[%s142] sm:%s3] %v141
    %s144 = scalar_lea.vmem %s0, 368
    %v145 = vld [vmem:[%s144] sm:%s3]
    %s146 = scalar_lea.vmem [#allocation0], 736
    %147 = vst [vmem:[%s146] sm:%s3] %v145
    %s148 = scalar_lea.vmem %s0, 364
    %v149 = vld [vmem:[%s148] sm:%s3]
    %s150 = scalar_lea.vmem [#allocation0], 728
    %151 = vst [vmem:[%s150] sm:%s3] %v149
    %s152 = scalar_lea.vmem %s0, 360
    %v153 = vld [vmem:[%s152] sm:%s3]
    %s154 = scalar_lea.vmem [#allocation0], 720
    %155 = vst [vmem:[%s154] sm:%s3] %v153
    %s156 = scalar_lea.vmem %s0, 356
    %v157 = vld [vmem:[%s156] sm:%s3]
    %s158 = scalar_lea.vmem [#allocation0], 712
    %159 = vst [vmem:[%s158] sm:%s3] %v157
    %s160 = scalar_lea.vmem %s0, 352
    %v161 = vld [vmem:[%s160] sm:%s3]
    %s162 = scalar_lea.vmem [#allocation0], 704
    %163 = vst [vmem:[%s162] sm:%s3] %v161
    %s164 = scalar_lea.vmem %s0, 348
    %v165 = vld [vmem:[%s164] sm:%s3]
    %s166 = scalar_lea.vmem [#allocation0], 696
    %167 = vst [vmem:[%s166] sm:%s3] %v165
    %s168 = scalar_lea.vmem %s0, 344
    %v169 = vld [vmem:[%s168] sm:%s3]
    %s170 = scalar_lea.vmem [#allocation0], 688
    %171 = vst [vmem:[%s170] sm:%s3] %v169
    %s172 = scalar_lea.vmem %s0, 340
    %v173 = vld [vmem:[%s172] sm:%s3]
    %s174 = scalar_lea.vmem [#allocation0], 680
    %175 = vst [vmem:[%s174] sm:%s3] %v173
    %s176 = scalar_lea.vmem %s0, 336
    %v177 = vld [vmem:[%s176] sm:%s3]
    %s178 = scalar_lea.vmem [#allocation0], 672
    %179 = vst [vmem:[%s178] sm:%s3] %v177
    %s180 = scalar_lea.vmem %s0, 332
    %v181 = vld [vmem:[%s180] sm:%s3]
    %s182 = scalar_lea.vmem [#allocation0], 664
    %183 = vst [vmem:[%s182] sm:%s3] %v181
    %s184 = scalar_lea.vmem %s0, 328
    %v185 = vld [vmem:[%s184] sm:%s3]
    %s186 = scalar_lea.vmem [#allocation0], 656
    %187 = vst [vmem:[%s186] sm:%s3] %v185
    %s188 = scalar_lea.vmem %s0, 324
    %v189 = vld [vmem:[%s188] sm:%s3]
    %s190 = scalar_lea.vmem [#allocation0], 648
    %191 = vst [vmem:[%s190] sm:%s3] %v189
    %s192 = scalar_lea.vmem %s0, 320
    %v193 = vld [vmem:[%s192] sm:%s3]
    %s194 = scalar_lea.vmem [#allocation0], 640
    %195 = vst [vmem:[%s194] sm:%s3] %v193
    %s196 = scalar_lea.vmem %s0, 316
    %v197 = vld [vmem:[%s196] sm:%s3]
    %s198 = scalar_lea.vmem [#allocation0], 632
    %199 = vst [vmem:[%s198] sm:%s3] %v197
    %s200 = scalar_lea.vmem %s0, 312
    %v201 = vld [vmem:[%s200] sm:%s3]
    %s202 = scalar_lea.vmem [#allocation0], 624
    %203 = vst [vmem:[%s202] sm:%s3] %v201
    %s204 = scalar_lea.vmem %s0, 308
    %v205 = vld [vmem:[%s204] sm:%s3]
    %s206 = scalar_lea.vmem [#allocation0], 616
    %207 = vst [vmem:[%s206] sm:%s3] %v205
    %s208 = scalar_lea.vmem %s0, 304
    %v209 = vld [vmem:[%s208] sm:%s3]
    %s210 = scalar_lea.vmem [#allocation0], 608
    %211 = vst [vmem:[%s210] sm:%s3] %v209
    %s212 = scalar_lea.vmem %s0, 300
    %v213 = vld [vmem:[%s212] sm:%s3]
    %s214 = scalar_lea.vmem [#allocation0], 600
    %215 = vst [vmem:[%s214] sm:%s3] %v213
    %s216 = scalar_lea.vmem %s0, 296
    %v217 = vld [vmem:[%s216] sm:%s3]
    %s218 = scalar_lea.vmem [#allocation0], 592
    %219 = vst [vmem:[%s218] sm:%s3] %v217
    %s220 = scalar_lea.vmem %s0, 292
    %v221 = vld [vmem:[%s220] sm:%s3]
    %s222 = scalar_lea.vmem [#allocation0], 584
    %223 = vst [vmem:[%s222] sm:%s3] %v221
    %s224 = scalar_lea.vmem %s0, 288
    %v225 = vld [vmem:[%s224] sm:%s3]
    %s226 = scalar_lea.vmem [#allocation0], 576
    %227 = vst [vmem:[%s226] sm:%s3] %v225
    %s228 = scalar_lea.vmem %s0, 284
    %v229 = vld [vmem:[%s228] sm:%s3]
    %s230 = scalar_lea.vmem [#allocation0], 568
    %231 = vst [vmem:[%s230] sm:%s3] %v229
    %s232 = scalar_lea.vmem %s0, 280
    %v233 = vld [vmem:[%s232] sm:%s3]
    %s234 = scalar_lea.vmem [#allocation0], 560
    %235 = vst [vmem:[%s234] sm:%s3] %v233
    %s236 = scalar_lea.vmem %s0, 276
    %v237 = vld [vmem:[%s236] sm:%s3]
    %s238 = scalar_lea.vmem [#allocation0], 552
    %239 = vst [vmem:[%s238] sm:%s3] %v237
    %s240 = scalar_lea.vmem %s0, 272
    %v241 = vld [vmem:[%s240] sm:%s3]
    %s242 = scalar_lea.vmem [#allocation0], 544
    %243 = vst [vmem:[%s242] sm:%s3] %v241
    %s244 = scalar_lea.vmem %s0, 268
    %v245 = vld [vmem:[%s244] sm:%s3]
    %s246 = scalar_lea.vmem [#allocation0], 536
    %247 = vst [vmem:[%s246] sm:%s3] %v245
    %s248 = scalar_lea.vmem %s0, 264
    %v249 = vld [vmem:[%s248] sm:%s3]
    %s250 = scalar_lea.vmem [#allocation0], 528
    %251 = vst [vmem:[%s250] sm:%s3] %v249
    %s252 = scalar_lea.vmem %s0, 260
    %v253 = vld [vmem:[%s252] sm:%s3]
    %s254 = scalar_lea.vmem [#allocation0], 520
    %255 = vst [vmem:[%s254] sm:%s3] %v253
    %s256 = scalar_lea.vmem %s0, 256
    %v257 = vld [vmem:[%s256] sm:%s3]
    %s258 = scalar_lea.vmem [#allocation0], 512
    %259 = vst [vmem:[%s258] sm:%s3] %v257
    %s260 = scalar_lea.vmem %s0, 252
    %v261 = vld [vmem:[%s260] sm:%s3]
    %s262 = scalar_lea.vmem [#allocation0], 504
    %263 = vst [vmem:[%s262] sm:%s3] %v261
    %s264 = scalar_lea.vmem %s0, 248
    %v265 = vld [vmem:[%s264] sm:%s3]
    %s266 = scalar_lea.vmem [#allocation0], 496
    %267 = vst [vmem:[%s266] sm:%s3] %v265
    %s268 = scalar_lea.vmem %s0, 244
    %v269 = vld [vmem:[%s268] sm:%s3]
    %s270 = scalar_lea.vmem [#allocation0], 488
    %271 = vst [vmem:[%s270] sm:%s3] %v269
    %s272 = scalar_lea.vmem %s0, 240
    %v273 = vld [vmem:[%s272] sm:%s3]
    %s274 = scalar_lea.vmem [#allocation0], 480
    %275 = vst [vmem:[%s274] sm:%s3] %v273
    %s276 = scalar_lea.vmem %s0, 236
    %v277 = vld [vmem:[%s276] sm:%s3]
    %s278 = scalar_lea.vmem [#allocation0], 472
    %279 = vst [vmem:[%s278] sm:%s3] %v277
    %s280 = scalar_lea.vmem %s0, 232
    %v281 = vld [vmem:[%s280] sm:%s3]
    %s282 = scalar_lea.vmem [#allocation0], 464
    %283 = vst [vmem:[%s282] sm:%s3] %v281
    %s284 = scalar_lea.vmem %s0, 228
    %v285 = vld [vmem:[%s284] sm:%s3]
    %s286 = scalar_lea.vmem [#allocation0], 456
    %287 = vst [vmem:[%s286] sm:%s3] %v285
    %s288 = scalar_lea.vmem %s0, 224
    %v289 = vld [vmem:[%s288] sm:%s3]
    %s290 = scalar_lea.vmem [#allocation0], 448
    %291 = vst [vmem:[%s290] sm:%s3] %v289
    %s292 = scalar_lea.vmem %s0, 220
    %v293 = vld [vmem:[%s292] sm:%s3]
    %s294 = scalar_lea.vmem [#allocation0], 440
    %295 = vst [vmem:[%s294] sm:%s3] %v293
    %s296 = scalar_lea.vmem %s0, 216
    %v297 = vld [vmem:[%s296] sm:%s3]
    %s298 = scalar_lea.vmem [#allocation0], 432
    %299 = vst [vmem:[%s298] sm:%s3] %v297
    %s300 = scalar_lea.vmem %s0, 212
    %v301 = vld [vmem:[%s300] sm:%s3]
    %s302 = scalar_lea.vmem [#allocation0], 424
    %303 = vst [vmem:[%s302] sm:%s3] %v301
    %s304 = scalar_lea.vmem %s0, 208
    %v305 = vld [vmem:[%s304] sm:%s3]
    %s306 = scalar_lea.vmem [#allocation0], 416
    %307 = vst [vmem:[%s306] sm:%s3] %v305
    %s308 = scalar_lea.vmem %s0, 204
    %v309 = vld [vmem:[%s308] sm:%s3]
    %s310 = scalar_lea.vmem [#allocation0], 408
    %311 = vst [vmem:[%s310] sm:%s3] %v309
    %s312 = scalar_lea.vmem %s0, 200
    %v313 = vld [vmem:[%s312] sm:%s3]
    %s314 = scalar_lea.vmem [#allocation0], 400
    %315 = vst [vmem:[%s314] sm:%s3] %v313
    %s316 = scalar_lea.vmem %s0, 196
    %v317 = vld [vmem:[%s316] sm:%s3]
    %s318 = scalar_lea.vmem [#allocation0], 392
    %319 = vst [vmem:[%s318] sm:%s3] %v317
    %s320 = scalar_lea.vmem %s0, 192
    %v321 = vld [vmem:[%s320] sm:%s3]
    %s322 = scalar_lea.vmem [#allocation0], 384
    %323 = vst [vmem:[%s322] sm:%s3] %v321
    %s324 = scalar_lea.vmem %s0, 188
    %v325 = vld [vmem:[%s324] sm:%s3]
    %s326 = scalar_lea.vmem [#allocation0], 376
    %327 = vst [vmem:[%s326] sm:%s3] %v325
    %s328 = scalar_lea.vmem %s0, 184
    %v329 = vld [vmem:[%s328] sm:%s3]
    %s330 = scalar_lea.vmem [#allocation0], 368
    %331 = vst [vmem:[%s330] sm:%s3] %v329
    %s332 = scalar_lea.vmem %s0, 180
    %v333 = vld [vmem:[%s332] sm:%s3]
    %s334 = scalar_lea.vmem [#allocation0], 360
    %335 = vst [vmem:[%s334] sm:%s3] %v333
    %s336 = scalar_lea.vmem %s0, 176
    %v337 = vld [vmem:[%s336] sm:%s3]
    %s338 = scalar_lea.vmem [#allocation0], 352
    %339 = vst [vmem:[%s338] sm:%s3] %v337
    %s340 = scalar_lea.vmem %s0, 172
    %v341 = vld [vmem:[%s340] sm:%s3]
    %s342 = scalar_lea.vmem [#allocation0], 344
    %343 = vst [vmem:[%s342] sm:%s3] %v341
    %s344 = scalar_lea.vmem %s0, 168
    %v345 = vld [vmem:[%s344] sm:%s3]
    %s346 = scalar_lea.vmem [#allocation0], 336
    %347 = vst [vmem:[%s346] sm:%s3] %v345
    %s348 = scalar_lea.vmem %s0, 164
    %v349 = vld [vmem:[%s348] sm:%s3]
    %s350 = scalar_lea.vmem [#allocation0], 328
    %351 = vst [vmem:[%s350] sm:%s3] %v349
    %s352 = scalar_lea.vmem %s0, 160
    %v353 = vld [vmem:[%s352] sm:%s3]
    %s354 = scalar_lea.vmem [#allocation0], 320
    %355 = vst [vmem:[%s354] sm:%s3] %v353
    %s356 = scalar_lea.vmem %s0, 156
    %v357 = vld [vmem:[%s356] sm:%s3]
    %s358 = scalar_lea.vmem [#allocation0], 312
    %359 = vst [vmem:[%s358] sm:%s3] %v357
    %s360 = scalar_lea.vmem %s0, 152
    %v361 = vld [vmem:[%s360] sm:%s3]
    %s362 = scalar_lea.vmem [#allocation0], 304
    %363 = vst [vmem:[%s362] sm:%s3] %v361
    %s364 = scalar_lea.vmem %s0, 148
    %v365 = vld [vmem:[%s364] sm:%s3]
    %s366 = scalar_lea.vmem [#allocation0], 296
    %367 = vst [vmem:[%s366] sm:%s3] %v365
    %s368 = scalar_lea.vmem %s0, 144
    %v369 = vld [vmem:[%s368] sm:%s3]
    %s370 = scalar_lea.vmem [#allocation0], 288
    %371 = vst [vmem:[%s370] sm:%s3] %v369
    %s372 = scalar_lea.vmem %s0, 140
    %v373 = vld [vmem:[%s372] sm:%s3]
    %s374 = scalar_lea.vmem [#allocation0], 280
    %375 = vst [vmem:[%s374] sm:%s3] %v373
    %s376 = scalar_lea.vmem %s0, 136
    %v377 = vld [vmem:[%s376] sm:%s3]
    %s378 = scalar_lea.vmem [#allocation0], 272
    %379 = vst [vmem:[%s378] sm:%s3] %v377
    %s380 = scalar_lea.vmem %s0, 132
    %v381 = vld [vmem:[%s380] sm:%s3]
    %s382 = scalar_lea.vmem [#allocation0], 264
    %383 = vst [vmem:[%s382] sm:%s3] %v381
    %s384 = scalar_lea.vmem %s0, 128
    %v385 = vld [vmem:[%s384] sm:%s3]
    %s386 = scalar_lea.vmem [#allocation0], 256
    %387 = vst [vmem:[%s386] sm:%s3] %v385
    %s388 = scalar_lea.vmem %s0, 124
    %v389 = vld [vmem:[%s388] sm:%s3]
    %s390 = scalar_lea.vmem [#allocation0], 248
    %391 = vst [vmem:[%s390] sm:%s3] %v389
    %s392 = scalar_lea.vmem %s0, 120
    %v393 = vld [vmem:[%s392] sm:%s3]
    %s394 = scalar_lea.vmem [#allocation0], 240
    %395 = vst [vmem:[%s394] sm:%s3] %v393
    %s396 = scalar_lea.vmem %s0, 116
    %v397 = vld [vmem:[%s396] sm:%s3]
    %s398 = scalar_lea.vmem [#allocation0], 232
    %399 = vst [vmem:[%s398] sm:%s3] %v397
    %s400 = scalar_lea.vmem %s0, 112
    %v401 = vld [vmem:[%s400] sm:%s3]
    %s402 = scalar_lea.vmem [#allocation0], 224
    %403 = vst [vmem:[%s402] sm:%s3] %v401
    %s404 = scalar_lea.vmem %s0, 108
    %v405 = vld [vmem:[%s404] sm:%s3]
    %s406 = scalar_lea.vmem [#allocation0], 216
    %407 = vst [vmem:[%s406] sm:%s3] %v405
    %s408 = scalar_lea.vmem %s0, 104
    %v409 = vld [vmem:[%s408] sm:%s3]
    %s410 = scalar_lea.vmem [#allocation0], 208
    %411 = vst [vmem:[%s410] sm:%s3] %v409
    %s412 = scalar_lea.vmem %s0, 100
    %v413 = vld [vmem:[%s412] sm:%s3]
    %s414 = scalar_lea.vmem [#allocation0], 200
    %415 = vst [vmem:[%s414] sm:%s3] %v413
    %s416 = scalar_lea.vmem %s0, 96
    %v417 = vld [vmem:[%s416] sm:%s3]
    %s418 = scalar_lea.vmem [#allocation0], 192
    %419 = vst [vmem:[%s418] sm:%s3] %v417
    %s420 = scalar_lea.vmem %s0, 92
    %v421 = vld [vmem:[%s420] sm:%s3]
    %s422 = scalar_lea.vmem [#allocation0], 184
    %423 = vst [vmem:[%s422] sm:%s3] %v421
    %s424 = scalar_lea.vmem %s0, 88
    %v425 = vld [vmem:[%s424] sm:%s3]
    %s426 = scalar_lea.vmem [#allocation0], 176
    %427 = vst [vmem:[%s426] sm:%s3] %v425
    %s428 = scalar_lea.vmem %s0, 84
    %v429 = vld [vmem:[%s428] sm:%s3]
    %s430 = scalar_lea.vmem [#allocation0], 168
    %431 = vst [vmem:[%s430] sm:%s3] %v429
    %s432 = scalar_lea.vmem %s0, 80
    %v433 = vld [vmem:[%s432] sm:%s3]
    %s434 = scalar_lea.vmem [#allocation0], 160
    %435 = vst [vmem:[%s434] sm:%s3] %v433
    %s436 = scalar_lea.vmem %s0, 76
    %v437 = vld [vmem:[%s436] sm:%s3]
    %s438 = scalar_lea.vmem [#allocation0], 152
    %439 = vst [vmem:[%s438] sm:%s3] %v437
    %s440 = scalar_lea.vmem %s0, 72
    %v441 = vld [vmem:[%s440] sm:%s3]
    %s442 = scalar_lea.vmem [#allocation0], 144
    %443 = vst [vmem:[%s442] sm:%s3] %v441
    %s444 = scalar_lea.vmem %s0, 68
    %v445 = vld [vmem:[%s444] sm:%s3]
    %s446 = scalar_lea.vmem [#allocation0], 136
    %447 = vst [vmem:[%s446] sm:%s3] %v445
    %s448 = scalar_lea.vmem %s0, 64
    %v449 = vld [vmem:[%s448] sm:%s3]
    %s450 = scalar_lea.vmem [#allocation0], 128
    %451 = vst [vmem:[%s450] sm:%s3] %v449
    %s452 = scalar_lea.vmem %s0, 60
    %v453 = vld [vmem:[%s452] sm:%s3]
    %s454 = scalar_lea.vmem [#allocation0], 120
    %455 = vst [vmem:[%s454] sm:%s3] %v453
    %s456 = scalar_lea.vmem %s0, 56
    %v457 = vld [vmem:[%s456] sm:%s3]
    %s458 = scalar_lea.vmem [#allocation0], 112
    %459 = vst [vmem:[%s458] sm:%s3] %v457
    %s460 = scalar_lea.vmem %s0, 52
    %v461 = vld [vmem:[%s460] sm:%s3]
    %s462 = scalar_lea.vmem [#allocation0], 104
    %463 = vst [vmem:[%s462] sm:%s3] %v461
    %s464 = scalar_lea.vmem %s0, 48
    %v465 = vld [vmem:[%s464] sm:%s3]
    %s466 = scalar_lea.vmem [#allocation0], 96
    %467 = vst [vmem:[%s466] sm:%s3] %v465
    %s468 = scalar_lea.vmem %s0, 44
    %v469 = vld [vmem:[%s468] sm:%s3]
    %s470 = scalar_lea.vmem [#allocation0], 88
    %471 = vst [vmem:[%s470] sm:%s3] %v469
    %s472 = scalar_lea.vmem %s0, 40
    %v473 = vld [vmem:[%s472] sm:%s3]
    %s474 = scalar_lea.vmem [#allocation0], 80
    %475 = vst [vmem:[%s474] sm:%s3] %v473
    %s476 = scalar_lea.vmem %s0, 36
    %v477 = vld [vmem:[%s476] sm:%s3]
    %s478 = scalar_lea.vmem [#allocation0], 72
    %479 = vst [vmem:[%s478] sm:%s3] %v477
    %s480 = scalar_lea.vmem %s0, 32
    %v481 = vld [vmem:[%s480] sm:%s3]
    %s482 = scalar_lea.vmem [#allocation0], 64
    %483 = vst [vmem:[%s482] sm:%s3] %v481
    %s484 = scalar_lea.vmem %s0, 28
    %v485 = vld [vmem:[%s484] sm:%s3]
    %s486 = scalar_lea.vmem [#allocation0], 56
    %487 = vst [vmem:[%s486] sm:%s3] %v485
    %s488 = scalar_lea.vmem %s0, 24
    %v489 = vld [vmem:[%s488] sm:%s3]
    %s490 = scalar_lea.vmem [#allocation0], 48
    %491 = vst [vmem:[%s490] sm:%s3] %v489
    %s492 = scalar_lea.vmem %s0, 20
    %v493 = vld [vmem:[%s492] sm:%s3]
    %s494 = scalar_lea.vmem [#allocation0], 40
    %495 = vst [vmem:[%s494] sm:%s3] %v493
    %s496 = scalar_lea.vmem %s0, 16
    %v497 = vld [vmem:[%s496] sm:%s3]
    %s498 = scalar_lea.vmem [#allocation0], 32
    %499 = vst [vmem:[%s498] sm:%s3] %v497
    %s500 = scalar_lea.vmem %s0, 12
    %v501 = vld [vmem:[%s500] sm:%s3]
    %s502 = scalar_lea.vmem [#allocation0], 24
    %503 = vst [vmem:[%s502] sm:%s3] %v501
    %s504 = scalar_lea.vmem %s0, 8
    %v505 = vld [vmem:[%s504] sm:%s3]
    %s506 = scalar_lea.vmem [#allocation0], 16
    %507 = vst [vmem:[%s506] sm:%s3] %v505
    %s508 = scalar_lea.vmem %s0, 4
    %v509 = vld [vmem:[%s508] sm:%s3]
    %s510 = scalar_lea.vmem [#allocation0], 8
    %511 = vst [vmem:[%s510] sm:%s3] %v509
    %v512 = vld [vmem:[%s0] sm:%s3]
    %513 = vst [vmem:[#allocation0] sm:%s3] %v512
    %v514 = vld [vmem:[#allocation0] ss:$8 sm:$0xf]
    %v515 = vld [vmem:[#allocation0] ss:$8 sm:$0xf0]
    %vm516 = vcmask 1047556
    %v517 = vsel %vm516, %v515, %v514
    %vm518 = vcmask 261120
    %519 = vst.msk [vmem:[%s1] sm:$0xff] %vm518, %v517
    %s520 = scalar_lea.vmem [#allocation0], 64
    %v521 = vld [vmem:[%s520] ss:$8 sm:$0xf]
    %s522 = scalar_lea.vmem [#allocation0], 64
    %v523 = vld [vmem:[%s522] ss:$8 sm:$0xf0]
    %vm524 = vcmask 1047556
    %v525 = vsel %vm524, %v523, %v521
    %vm526 = vcmask 261120
    %s527 = scalar_lea.vmem %s1, 8
    %528 = vst.msk [vmem:[%s527] sm:$0xff] %vm526, %v525
    %s529 = scalar_lea.vmem [#allocation0], 128
    %v530 = vld [vmem:[%s529] ss:$8 sm:$0xf]
    %s531 = scalar_lea.vmem [#allocation0], 128
    %v532 = vld [vmem:[%s531] ss:$8 sm:$0xf0]
    %vm533 = vcmask 1047556
    %v534 = vsel %vm533, %v532, %v530
    %vm535 = vcmask 261120
    %s536 = scalar_lea.vmem %s1, 16
    %537 = vst.msk [vmem:[%s536] sm:$0xff] %vm535, %v534
    %s538 = scalar_lea.vmem [#allocation0], 192
    %v539 = vld [vmem:[%s538] ss:$8 sm:$0xf]
    %s540 = scalar_lea.vmem [#allocation0], 192
    %v541 = vld [vmem:[%s540] ss:$8 sm:$0xf0]
    %vm542 = vcmask 1047556
    %v543 = vsel %vm542, %v541, %v539
    %vm544 = vcmask 261120
    %s545 = scalar_lea.vmem %s1, 24
    %546 = vst.msk [vmem:[%s545] sm:$0xff] %vm544, %v543
    %s547 = scalar_lea.vmem [#allocation0], 256
    %v548 = vld [vmem:[%s547] ss:$8 sm:$0xf]
    %s549 = scalar_lea.vmem [#allocation0], 256
    %v550 = vld [vmem:[%s549] ss:$8 sm:$0xf0]
    %vm551 = vcmask 1047556
    %v552 = vsel %vm551, %v550, %v548
    %vm553 = vcmask 261120
    %s554 = scalar_lea.vmem %s1, 32
    %555 = vst.msk [vmem:[%s554] sm:$0xff] %vm553, %v552
    %s556 = scalar_lea.vmem [#allocation0], 320
    %v557 = vld [vmem:[%s556] ss:$8 sm:$0xf]
    %s558 = scalar_lea.vmem [#allocation0], 320
    %v559 = vld [vmem:[%s558] ss:$8 sm:$0xf0]
    %vm560 = vcmask 1047556
    %v561 = vsel %vm560, %v559, %v557
    %vm562 = vcmask 261120
    %s563 = scalar_lea.vmem %s1, 40
    %564 = vst.msk [vmem:[%s563] sm:$0xff] %vm562, %v561
    %s565 = scalar_lea.vmem [#allocation0], 384
    %v566 = vld [vmem:[%s565] ss:$8 sm:$0xf]
    %s567 = scalar_lea.vmem [#allocation0], 384
    %v568 = vld [vmem:[%s567] ss:$8 sm:$0xf0]
    %vm569 = vcmask 1047556
    %v570 = vsel %vm569, %v568, %v566
    %vm571 = vcmask 261120
    %s572 = scalar_lea.vmem %s1, 48
    %573 = vst.msk [vmem:[%s572] sm:$0xff] %vm571, %v570
    %s574 = scalar_lea.vmem [#allocation0], 448
    %v575 = vld [vmem:[%s574] ss:$8 sm:$0xf]
    %s576 = scalar_lea.vmem [#allocation0], 448
    %v577 = vld [vmem:[%s576] ss:$8 sm:$0xf0]
    %vm578 = vcmask 1047556
    %v579 = vsel %vm578, %v577, %v575
    %vm580 = vcmask 261120
    %s581 = scalar_lea.vmem %s1, 56
    %582 = vst.msk [vmem:[%s581] sm:$0xff] %vm580, %v579
    %s583 = scalar_lea.vmem [#allocation0], 512
    %v584 = vld [vmem:[%s583] ss:$8 sm:$0xf]
    %s585 = scalar_lea.vmem [#allocation0], 512
    %v586 = vld [vmem:[%s585] ss:$8 sm:$0xf0]
    %vm587 = vcmask 1047556
    %v588 = vsel %vm587, %v586, %v584
    %vm589 = vcmask 261120
    %s590 = scalar_lea.vmem %s1, 64
    %591 = vst.msk [vmem:[%s590] sm:$0xff] %vm589, %v588
    %s592 = scalar_lea.vmem [#allocation0], 576
    %v593 = vld [vmem:[%s592] ss:$8 sm:$0xf]
    %s594 = scalar_lea.vmem [#allocation0], 576
    %v595 = vld [vmem:[%s594] ss:$8 sm:$0xf0]
    %vm596 = vcmask 1047556
    %v597 = vsel %vm596, %v595, %v593
    %vm598 = vcmask 261120
    %s599 = scalar_lea.vmem %s1, 72
    %600 = vst.msk [vmem:[%s599] sm:$0xff] %vm598, %v597
    %s601 = scalar_lea.vmem [#allocation0], 640
    %v602 = vld [vmem:[%s601] ss:$8 sm:$0xf]
    %s603 = scalar_lea.vmem [#allocation0], 640
    %v604 = vld [vmem:[%s603] ss:$8 sm:$0xf0]
    %vm605 = vcmask 1047556
    %v606 = vsel %vm605, %v604, %v602
    %vm607 = vcmask 261120
    %s608 = scalar_lea.vmem %s1, 80
    %609 = vst.msk [vmem:[%s608] sm:$0xff] %vm607, %v606
    %s610 = scalar_lea.vmem [#allocation0], 704
    %v611 = vld [vmem:[%s610] ss:$8 sm:$0xf]
    %s612 = scalar_lea.vmem [#allocation0], 704
    %v613 = vld [vmem:[%s612] ss:$8 sm:$0xf0]
    %vm614 = vcmask 1047556
    %v615 = vsel %vm614, %v613, %v611
    %vm616 = vcmask 261120
    %s617 = scalar_lea.vmem %s1, 88
    %618 = vst.msk [vmem:[%s617] sm:$0xff] %vm616, %v615
    %s619 = scalar_lea.vmem [#allocation0], 768
    %v620 = vld [vmem:[%s619] ss:$8 sm:$0xf]
    %s621 = scalar_lea.vmem [#allocation0], 768
    %v622 = vld [vmem:[%s621] ss:$8 sm:$0xf0]
    %vm623 = vcmask 1047556
    %v624 = vsel %vm623, %v622, %v620
    %vm625 = vcmask 261120
    %s626 = scalar_lea.vmem %s1, 96
    %627 = vst.msk [vmem:[%s626] sm:$0xff] %vm625, %v624
    %s628 = scalar_lea.vmem [#allocation0], 832
    %v629 = vld [vmem:[%s628] ss:$8 sm:$0xf]
    %s630 = scalar_lea.vmem [#allocation0], 832
    %v631 = vld [vmem:[%s630] ss:$8 sm:$0xf0]
    %vm632 = vcmask 1047556
    %v633 = vsel %vm632, %v631, %v629
    %vm634 = vcmask 261120
    %s635 = scalar_lea.vmem %s1, 104
    %636 = vst.msk [vmem:[%s635] sm:$0xff] %vm634, %v633
    %s637 = scalar_lea.vmem [#allocation0], 896
    %v638 = vld [vmem:[%s637] ss:$8 sm:$0xf]
    %s639 = scalar_lea.vmem [#allocation0], 896
    %v640 = vld [vmem:[%s639] ss:$8 sm:$0xf0]
    %vm641 = vcmask 1047556
    %v642 = vsel %vm641, %v640, %v638
    %vm643 = vcmask 261120
    %s644 = scalar_lea.vmem %s1, 112
    %645 = vst.msk [vmem:[%s644] sm:$0xff] %vm643, %v642
    %s646 = scalar_lea.vmem [#allocation0], 960
    %v647 = vld [vmem:[%s646] ss:$8 sm:$0xf]
    %s648 = scalar_lea.vmem [#allocation0], 960
    %v649 = vld [vmem:[%s648] ss:$8 sm:$0xf0]
    %vm650 = vcmask 1047556
    %v651 = vsel %vm650, %v649, %v647
    %vm652 = vcmask 261120
    %s653 = scalar_lea.vmem %s1, 120
    %654 = vst.msk [vmem:[%s653] sm:$0xff] %vm652, %v651
    %s655 = scalar_lea.vmem [#allocation0], 3
    %v656 = vld [vmem:[%s655] ss:$8 sm:$0xf]
    %s657 = scalar_lea.vmem [#allocation0], 3
    %v658 = vld [vmem:[%s657] ss:$8 sm:$0xf0]
    %vm659 = vcmask 1047556
    %v660 = vsel %vm659, %v658, %v656
    %661 = vrot.lane.b32.xlu0 %v660, 96
    %v662 = vpop.permute.xlu0 %661
    %vm663 = vcmask 1048320
    %664 = vst.msk [vmem:[%s1] sm:$0xff] %vm663, %v662
    %s665 = scalar_lea.vmem [#allocation0], 259
    %v666 = vld [vmem:[%s665] ss:$8 sm:$0xf]
    %s667 = scalar_lea.vmem [#allocation0], 259
    %v668 = vld [vmem:[%s667] ss:$8 sm:$0xf0]
    %vm669 = vcmask 1047556
    %v670 = vsel %vm669, %v668, %v666
    %671 = vrot.lane.b32.xlu0 %v670, 96
    %v672 = vpop.permute.xlu0 %671
    %vm673 = vcmask 1048320
    %s674 = scalar_lea.vmem %s1, 32
    %675 = vst.msk [vmem:[%s674] sm:$0xff] %vm673, %v672
    %s676 = scalar_lea.vmem [#allocation0], 515
    %v677 = vld [vmem:[%s676] ss:$8 sm:$0xf]
    %s678 = scalar_lea.vmem [#allocation0], 515
    %v679 = vld [vmem:[%s678] ss:$8 sm:$0xf0]
    %vm680 = vcmask 1047556
    %v681 = vsel %vm680, %v679, %v677
    %682 = vrot.lane.b32.xlu0 %v681, 96
    %v683 = vpop.permute.xlu0 %682
    %vm684 = vcmask 1048320
    %s685 = scalar_lea.vmem %s1, 64
    %686 = vst.msk [vmem:[%s685] sm:$0xff] %vm684, %v683
    %s687 = scalar_lea.vmem [#allocation0], 771
    %v688 = vld [vmem:[%s687] ss:$8 sm:$0xf]
    %s689 = scalar_lea.vmem [#allocation0], 771
    %v690 = vld [vmem:[%s689] ss:$8 sm:$0xf0]
    %vm691 = vcmask 1047556
    %v692 = vsel %vm691, %v690, %v688
    %693 = vrot.lane.b32.xlu0 %v692, 96
    %v694 = vpop.permute.xlu0 %693
    %vm695 = vcmask 1048320
    %s696 = scalar_lea.vmem %s1, 96
    %697 = vst.msk [vmem:[%s696] sm:$0xff] %vm695, %v694
    %s698 = scalar_lea.vmem [#allocation0], 67
    %v699 = vld [vmem:[%s698] ss:$8 sm:$0xf]
    %s700 = scalar_lea.vmem [#allocation0], 67
    %v701 = vld [vmem:[%s700] ss:$8 sm:$0xf0]
    %vm702 = vcmask 1047556
    %v703 = vsel %vm702, %v701, %v699
    %704 = vrot.lane.b32.xlu0 %v703, 96
    %v705 = vpop.permute.xlu0 %704
    %vm706 = vcmask 1048320
    %s707 = scalar_lea.vmem %s1, 8
    %708 = vst.msk [vmem:[%s707] sm:$0xff] %vm706, %v705
    %s709 = scalar_lea.vmem [#allocation0], 323
    %v710 = vld [vmem:[%s709] ss:$8 sm:$0xf]
    %s711 = scalar_lea.vmem [#allocation0], 323
    %v712 = vld [vmem:[%s711] ss:$8 sm:$0xf0]
    %vm713 = vcmask 1047556
    %v714 = vsel %vm713, %v712, %v710
    %715 = vrot.lane.b32.xlu0 %v714, 96
    %v716 = vpop.permute.xlu0 %715
    %vm717 = vcmask 1048320
    %s718 = scalar_lea.vmem %s1, 40
    %719 = vst.msk [vmem:[%s718] sm:$0xff] %vm717, %v716
    %s720 = scalar_lea.vmem [#allocation0], 579
    %v721 = vld [vmem:[%s720] ss:$8 sm:$0xf]
    %s722 = scalar_lea.vmem [#allocation0], 579
    %v723 = vld [vmem:[%s722] ss:$8 sm:$0xf0]
    %vm724 = vcmask 1047556
    %v725 = vsel %vm724, %v723, %v721
    %726 = vrot.lane.b32.xlu0 %v725, 96
    %v727 = vpop.permute.xlu0 %726
    %vm728 = vcmask 1048320
    %s729 = scalar_lea.vmem %s1, 72
    %730 = vst.msk [vmem:[%s729] sm:$0xff] %vm728, %v727
    %s731 = scalar_lea.vmem [#allocation0], 835
    %v732 = vld [vmem:[%s731] ss:$8 sm:$0xf]
    %s733 = scalar_lea.vmem [#allocation0], 835
    %v734 = vld [vmem:[%s733] ss:$8 sm:$0xf0]
    %vm735 = vcmask 1047556
    %v736 = vsel %vm735, %v734, %v732
    %737 = vrot.lane.b32.xlu0 %v736, 96
    %v738 = vpop.permute.xlu0 %737
    %vm739 = vcmask 1048320
    %s740 = scalar_lea.vmem %s1, 104
    %741 = vst.msk [vmem:[%s740] sm:$0xff] %vm739, %v738
    %s742 = scalar_lea.vmem [#allocation0], 131
    %v743 = vld [vmem:[%s742] ss:$8 sm:$0xf]
    %s744 = scalar_lea.vmem [#allocation0], 131
    %v745 = vld [vmem:[%s744] ss:$8 sm:$0xf0]
    %vm746 = vcmask 1047556
    %v747 = vsel %vm746, %v745, %v743
    %748 = vrot.lane.b32.xlu0 %v747, 96
    %v749 = vpop.permute.xlu0 %748
    %vm750 = vcmask 1048320
    %s751 = scalar_lea.vmem %s1, 16
    %752 = vst.msk [vmem:[%s751] sm:$0xff] %vm750, %v749
    %s753 = scalar_lea.vmem [#allocation0], 387
    %v754 = vld [vmem:[%s753] ss:$8 sm:$0xf]
    %s755 = scalar_lea.vmem [#allocation0], 387
    %v756 = vld [vmem:[%s755] ss:$8 sm:$0xf0]
    %vm757 = vcmask 1047556
    %v758 = vsel %vm757, %v756, %v754
    %759 = vrot.lane.b32.xlu0 %v758, 96
    %v760 = vpop.permute.xlu0 %759
    %vm761 = vcmask 1048320
    %s762 = scalar_lea.vmem %s1, 48
    %763 = vst.msk [vmem:[%s762] sm:$0xff] %vm761, %v760
    %s764 = scalar_lea.vmem [#allocation0], 643
    %v765 = vld [vmem:[%s764] ss:$8 sm:$0xf]
    %s766 = scalar_lea.vmem [#allocation0], 643
    %v767 = vld [vmem:[%s766] ss:$8 sm:$0xf0]
    %vm768 = vcmask 1047556
    %v769 = vsel %vm768, %v767, %v765
    %770 = vrot.lane.b32.xlu0 %v769, 96
    %v771 = vpop.permute.xlu0 %770
    %vm772 = vcmask 1048320
    %s773 = scalar_lea.vmem %s1, 80
    %774 = vst.msk [vmem:[%s773] sm:$0xff] %vm772, %v771
    %s775 = scalar_lea.vmem [#allocation0], 899
    %v776 = vld [vmem:[%s775] ss:$8 sm:$0xf]
    %s777 = scalar_lea.vmem [#allocation0], 899
    %v778 = vld [vmem:[%s777] ss:$8 sm:$0xf0]
    %vm779 = vcmask 1047556
    %v780 = vsel %vm779, %v778, %v776
    %781 = vrot.lane.b32.xlu0 %v780, 96
    %v782 = vpop.permute.xlu0 %781
    %vm783 = vcmask 1048320
    %s784 = scalar_lea.vmem %s1, 112
    %785 = vst.msk [vmem:[%s784] sm:$0xff] %vm783, %v782
    %s786 = scalar_lea.vmem [#allocation0], 195
    %v787 = vld [vmem:[%s786] ss:$8 sm:$0xf]
    %s788 = scalar_lea.vmem [#allocation0], 195
    %v789 = vld [vmem:[%s788] ss:$8 sm:$0xf0]
    %vm790 = vcmask 1047556
    %v791 = vsel %vm790, %v789, %v787
    %792 = vrot.lane.b32.xlu0 %v791, 96
    %v793 = vpop.permute.xlu0 %792
    %vm794 = vcmask 1048320
    %s795 = scalar_lea.vmem %s1, 24
    %796 = vst.msk [vmem:[%s795] sm:$0xff] %vm794, %v793
    %s797 = scalar_lea.vmem [#allocation0], 451
    %v798 = vld [vmem:[%s797] ss:$8 sm:$0xf]
    %s799 = scalar_lea.vmem [#allocation0], 451
    %v800 = vld [vmem:[%s799] ss:$8 sm:$0xf0]
    %vm801 = vcmask 1047556
    %v802 = vsel %vm801, %v800, %v798
    %803 = vrot.lane.b32.xlu0 %v802, 96
    %v804 = vpop.permute.xlu0 %803
    %vm805 = vcmask 1048320
    %s806 = scalar_lea.vmem %s1, 56
    %807 = vst.msk [vmem:[%s806] sm:$0xff] %vm805, %v804
    %s808 = scalar_lea.vmem [#allocation0], 707
    %v809 = vld [vmem:[%s808] ss:$8 sm:$0xf]
    %s810 = scalar_lea.vmem [#allocation0], 707
    %v811 = vld [vmem:[%s810] ss:$8 sm:$0xf0]
    %vm812 = vcmask 1047556
    %v813 = vsel %vm812, %v811, %v809
    %814 = vrot.lane.b32.xlu0 %v813, 96
    %v815 = vpop.permute.xlu0 %814
    %vm816 = vcmask 1048320
    %s817 = scalar_lea.vmem %s1, 88
    %818 = vst.msk [vmem:[%s817] sm:$0xff] %vm816, %v815
    %s819 = scalar_lea.vmem [#allocation0], 963
    %v820 = vld [vmem:[%s819] ss:$8 sm:$0xf]
    %s821 = scalar_lea.vmem [#allocation0], 963
    %v822 = vld [vmem:[%s821] ss:$8 sm:$0xf0]
    %vm823 = vcmask 1047556
    %v824 = vsel %vm823, %v822, %v820
    %825 = vrot.lane.b32.xlu0 %v824, 96
    %v826 = vpop.permute.xlu0 %825
    %vm827 = vcmask 1048320
    %s828 = scalar_lea.vmem %s1, 120
    %829 = vst.msk [vmem:[%s828] sm:$0xff] %vm827, %v826
    %s830 = scalar_lea.vmem [#allocation0], 2
    %v831 = vld [vmem:[%s830] ss:$8 sm:$0xf]
    %s832 = scalar_lea.vmem [#allocation0], 2
    %v833 = vld [vmem:[%s832] ss:$8 sm:$0xf0]
    %vm834 = vcmask 1047556
    %v835 = vsel %vm834, %v833, %v831
    %836 = vrot.lane.b32.xlu0 %v835, 64
    %v837 = vpop.permute.xlu0 %836
    %vm838 = vcmask 785920
    %839 = vst.msk [vmem:[%s1] sm:$0xff] %vm838, %v837
    %s840 = scalar_lea.vmem [#allocation0], 258
    %v841 = vld [vmem:[%s840] ss:$8 sm:$0xf]
    %s842 = scalar_lea.vmem [#allocation0], 258
    %v843 = vld [vmem:[%s842] ss:$8 sm:$0xf0]
    %vm844 = vcmask 1047556
    %v845 = vsel %vm844, %v843, %v841
    %846 = vrot.lane.b32.xlu0 %v845, 64
    %v847 = vpop.permute.xlu0 %846
    %vm848 = vcmask 785920
    %s849 = scalar_lea.vmem %s1, 32
    %850 = vst.msk [vmem:[%s849] sm:$0xff] %vm848, %v847
    %s851 = scalar_lea.vmem [#allocation0], 514
    %v852 = vld [vmem:[%s851] ss:$8 sm:$0xf]
    %s853 = scalar_lea.vmem [#allocation0], 514
    %v854 = vld [vmem:[%s853] ss:$8 sm:$0xf0]
    %vm855 = vcmask 1047556
    %v856 = vsel %vm855, %v854, %v852
    %857 = vrot.lane.b32.xlu0 %v856, 64
    %v858 = vpop.permute.xlu0 %857
    %vm859 = vcmask 785920
    %s860 = scalar_lea.vmem %s1, 64
    %861 = vst.msk [vmem:[%s860] sm:$0xff] %vm859, %v858
    %s862 = scalar_lea.vmem [#allocation0], 770
    %v863 = vld [vmem:[%s862] ss:$8 sm:$0xf]
    %s864 = scalar_lea.vmem [#allocation0], 770
    %v865 = vld [vmem:[%s864] ss:$8 sm:$0xf0]
    %vm866 = vcmask 1047556
    %v867 = vsel %vm866, %v865, %v863
    %868 = vrot.lane.b32.xlu0 %v867, 64
    %v869 = vpop.permute.xlu0 %868
    %vm870 = vcmask 785920
    %s871 = scalar_lea.vmem %s1, 96
    %872 = vst.msk [vmem:[%s871] sm:$0xff] %vm870, %v869
    %s873 = scalar_lea.vmem [#allocation0], 66
    %v874 = vld [vmem:[%s873] ss:$8 sm:$0xf]
    %s875 = scalar_lea.vmem [#allocation0], 66
    %v876 = vld [vmem:[%s875] ss:$8 sm:$0xf0]
    %vm877 = vcmask 1047556
    %v878 = vsel %vm877, %v876, %v874
    %879 = vrot.lane.b32.xlu0 %v878, 64
    %v880 = vpop.permute.xlu0 %879
    %vm881 = vcmask 785920
    %s882 = scalar_lea.vmem %s1, 8
    %883 = vst.msk [vmem:[%s882] sm:$0xff] %vm881, %v880
    %s884 = scalar_lea.vmem [#allocation0], 322
    %v885 = vld [vmem:[%s884] ss:$8 sm:$0xf]
    %s886 = scalar_lea.vmem [#allocation0], 322
    %v887 = vld [vmem:[%s886] ss:$8 sm:$0xf0]
    %vm888 = vcmask 1047556
    %v889 = vsel %vm888, %v887, %v885
    %890 = vrot.lane.b32.xlu0 %v889, 64
    %v891 = vpop.permute.xlu0 %890
    %vm892 = vcmask 785920
    %s893 = scalar_lea.vmem %s1, 40
    %894 = vst.msk [vmem:[%s893] sm:$0xff] %vm892, %v891
    %s895 = scalar_lea.vmem [#allocation0], 578
    %v896 = vld [vmem:[%s895] ss:$8 sm:$0xf]
    %s897 = scalar_lea.vmem [#allocation0], 578
    %v898 = vld [vmem:[%s897] ss:$8 sm:$0xf0]
    %vm899 = vcmask 1047556
    %v900 = vsel %vm899, %v898, %v896
    %901 = vrot.lane.b32.xlu0 %v900, 64
    %v902 = vpop.permute.xlu0 %901
    %vm903 = vcmask 785920
    %s904 = scalar_lea.vmem %s1, 72
    %905 = vst.msk [vmem:[%s904] sm:$0xff] %vm903, %v902
    %s906 = scalar_lea.vmem [#allocation0], 834
    %v907 = vld [vmem:[%s906] ss:$8 sm:$0xf]
    %s908 = scalar_lea.vmem [#allocation0], 834
    %v909 = vld [vmem:[%s908] ss:$8 sm:$0xf0]
    %vm910 = vcmask 1047556
    %v911 = vsel %vm910, %v909, %v907
    %912 = vrot.lane.b32.xlu0 %v911, 64
    %v913 = vpop.permute.xlu0 %912
    %vm914 = vcmask 785920
    %s915 = scalar_lea.vmem %s1, 104
    %916 = vst.msk [vmem:[%s915] sm:$0xff] %vm914, %v913
    %s917 = scalar_lea.vmem [#allocation0], 130
    %v918 = vld [vmem:[%s917] ss:$8 sm:$0xf]
    %s919 = scalar_lea.vmem [#allocation0], 130
    %v920 = vld [vmem:[%s919] ss:$8 sm:$0xf0]
    %vm921 = vcmask 1047556
    %v922 = vsel %vm921, %v920, %v918
    %923 = vrot.lane.b32.xlu0 %v922, 64
    %v924 = vpop.permute.xlu0 %923
    %vm925 = vcmask 785920
    %s926 = scalar_lea.vmem %s1, 16
    %927 = vst.msk [vmem:[%s926] sm:$0xff] %vm925, %v924
    %s928 = scalar_lea.vmem [#allocation0], 386
    %v929 = vld [vmem:[%s928] ss:$8 sm:$0xf]
    %s930 = scalar_lea.vmem [#allocation0], 386
    %v931 = vld [vmem:[%s930] ss:$8 sm:$0xf0]
    %vm932 = vcmask 1047556
    %v933 = vsel %vm932, %v931, %v929
    %934 = vrot.lane.b32.xlu0 %v933, 64
    %v935 = vpop.permute.xlu0 %934
    %vm936 = vcmask 785920
    %s937 = scalar_lea.vmem %s1, 48
    %938 = vst.msk [vmem:[%s937] sm:$0xff] %vm936, %v935
    %s939 = scalar_lea.vmem [#allocation0], 642
    %v940 = vld [vmem:[%s939] ss:$8 sm:$0xf]
    %s941 = scalar_lea.vmem [#allocation0], 642
    %v942 = vld [vmem:[%s941] ss:$8 sm:$0xf0]
    %vm943 = vcmask 1047556
    %v944 = vsel %vm943, %v942, %v940
    %945 = vrot.lane.b32.xlu0 %v944, 64
    %v946 = vpop.permute.xlu0 %945
    %vm947 = vcmask 785920
    %s948 = scalar_lea.vmem %s1, 80
    %949 = vst.msk [vmem:[%s948] sm:$0xff] %vm947, %v946
    %s950 = scalar_lea.vmem [#allocation0], 898
    %v951 = vld [vmem:[%s950] ss:$8 sm:$0xf]
    %s952 = scalar_lea.vmem [#allocation0], 898
    %v953 = vld [vmem:[%s952] ss:$8 sm:$0xf0]
    %vm954 = vcmask 1047556
    %v955 = vsel %vm954, %v953, %v951
    %956 = vrot.lane.b32.xlu0 %v955, 64
    %v957 = vpop.permute.xlu0 %956
    %vm958 = vcmask 785920
    %s959 = scalar_lea.vmem %s1, 112
    %960 = vst.msk [vmem:[%s959] sm:$0xff] %vm958, %v957
    %s961 = scalar_lea.vmem [#allocation0], 194
    %v962 = vld [vmem:[%s961] ss:$8 sm:$0xf]
    %s963 = scalar_lea.vmem [#allocation0], 194
    %v964 = vld [vmem:[%s963] ss:$8 sm:$0xf0]
    %vm965 = vcmask 1047556
    %v966 = vsel %vm965, %v964, %v962
    %967 = vrot.lane.b32.xlu0 %v966, 64
    %v968 = vpop.permute.xlu0 %967
    %vm969 = vcmask 785920
    %s970 = scalar_lea.vmem %s1, 24
    %971 = vst.msk [vmem:[%s970] sm:$0xff] %vm969, %v968
    %s972 = scalar_lea.vmem [#allocation0], 450
    %v973 = vld [vmem:[%s972] ss:$8 sm:$0xf]
    %s974 = scalar_lea.vmem [#allocation0], 450
    %v975 = vld [vmem:[%s974] ss:$8 sm:$0xf0]
    %vm976 = vcmask 1047556
    %v977 = vsel %vm976, %v975, %v973
    %978 = vrot.lane.b32.xlu0 %v977, 64
    %v979 = vpop.permute.xlu0 %978
    %vm980 = vcmask 785920
    %s981 = scalar_lea.vmem %s1, 56
    %982 = vst.msk [vmem:[%s981] sm:$0xff] %vm980, %v979
    %s983 = scalar_lea.vmem [#allocation0], 706
    %v984 = vld [vmem:[%s983] ss:$8 sm:$0xf]
    %s985 = scalar_lea.vmem [#allocation0], 706
    %v986 = vld [vmem:[%s985] ss:$8 sm:$0xf0]
    %vm987 = vcmask 1047556
    %v988 = vsel %vm987, %v986, %v984
    %989 = vrot.lane.b32.xlu0 %v988, 64
    %v990 = vpop.permute.xlu0 %989
    %vm991 = vcmask 785920
    %s992 = scalar_lea.vmem %s1, 88
    %993 = vst.msk [vmem:[%s992] sm:$0xff] %vm991, %v990
    %s994 = scalar_lea.vmem [#allocation0], 962
    %v995 = vld [vmem:[%s994] ss:$8 sm:$0xf]
    %s996 = scalar_lea.vmem [#allocation0], 962
    %v997 = vld [vmem:[%s996] ss:$8 sm:$0xf0]
    %vm998 = vcmask 1047556
    %v999 = vsel %vm998, %v997, %v995
    %1000 = vrot.lane.b32.xlu0 %v999, 64
    %v1001 = vpop.permute.xlu0 %1000
    %vm1002 = vcmask 785920
    %s1003 = scalar_lea.vmem %s1, 120
    %1004 = vst.msk [vmem:[%s1003] sm:$0xff] %vm1002, %v1001
    %s1005 = scalar_lea.vmem [#allocation0], 1
    %v1006 = vld [vmem:[%s1005] ss:$8 sm:$0xf]
    %s1007 = scalar_lea.vmem [#allocation0], 1
    %v1008 = vld [vmem:[%s1007] ss:$8 sm:$0xf0]
    %vm1009 = vcmask 1047556
    %v1010 = vsel %vm1009, %v1008, %v1006
    %1011 = vrot.lane.b32.xlu0 %v1010, 32
    %v1012 = vpop.permute.xlu0 %1011
    %vm1013 = vcmask 523520
    %1014 = vst.msk [vmem:[%s1] sm:$0xff] %vm1013, %v1012
    %s1015 = scalar_lea.vmem [#allocation0], 257
    %v1016 = vld [vmem:[%s1015] ss:$8 sm:$0xf]
    %s1017 = scalar_lea.vmem [#allocation0], 257
    %v1018 = vld [vmem:[%s1017] ss:$8 sm:$0xf0]
    %vm1019 = vcmask 1047556
    %v1020 = vsel %vm1019, %v1018, %v1016
    %1021 = vrot.lane.b32.xlu0 %v1020, 32
    %v1022 = vpop.permute.xlu0 %1021
    %vm1023 = vcmask 523520
    %s1024 = scalar_lea.vmem %s1, 32
    %1025 = vst.msk [vmem:[%s1024] sm:$0xff] %vm1023, %v1022
    %s1026 = scalar_lea.vmem [#allocation0], 513
    %v1027 = vld [vmem:[%s1026] ss:$8 sm:$0xf]
    %s1028 = scalar_lea.vmem [#allocation0], 513
    %v1029 = vld [vmem:[%s1028] ss:$8 sm:$0xf0]
    %vm1030 = vcmask 1047556
    %v1031 = vsel %vm1030, %v1029, %v1027
    %1032 = vrot.lane.b32.xlu0 %v1031, 32
    %v1033 = vpop.permute.xlu0 %1032
    %vm1034 = vcmask 523520
    %s1035 = scalar_lea.vmem %s1, 64
    %1036 = vst.msk [vmem:[%s1035] sm:$0xff] %vm1034, %v1033
    %s1037 = scalar_lea.vmem [#allocation0], 769
    %v1038 = vld [vmem:[%s1037] ss:$8 sm:$0xf]
    %s1039 = scalar_lea.vmem [#allocation0], 769
    %v1040 = vld [vmem:[%s1039] ss:$8 sm:$0xf0]
    %vm1041 = vcmask 1047556
    %v1042 = vsel %vm1041, %v1040, %v1038
    %1043 = vrot.lane.b32.xlu0 %v1042, 32
    %v1044 = vpop.permute.xlu0 %1043
    %vm1045 = vcmask 523520
    %s1046 = scalar_lea.vmem %s1, 96
    %1047 = vst.msk [vmem:[%s1046] sm:$0xff] %vm1045, %v1044
    %s1048 = scalar_lea.vmem [#allocation0], 65
    %v1049 = vld [vmem:[%s1048] ss:$8 sm:$0xf]
    %s1050 = scalar_lea.vmem [#allocation0], 65
    %v1051 = vld [vmem:[%s1050] ss:$8 sm:$0xf0]
    %vm1052 = vcmask 1047556
    %v1053 = vsel %vm1052, %v1051, %v1049
    %1054 = vrot.lane.b32.xlu0 %v1053, 32
    %v1055 = vpop.permute.xlu0 %1054
    %vm1056 = vcmask 523520
    %s1057 = scalar_lea.vmem %s1, 8
    %1058 = vst.msk [vmem:[%s1057] sm:$0xff] %vm1056, %v1055
    %s1059 = scalar_lea.vmem [#allocation0], 321
    %v1060 = vld [vmem:[%s1059] ss:$8 sm:$0xf]
    %s1061 = scalar_lea.vmem [#allocation0], 321
    %v1062 = vld [vmem:[%s1061] ss:$8 sm:$0xf0]
    %vm1063 = vcmask 1047556
    %v1064 = vsel %vm1063, %v1062, %v1060
    %1065 = vrot.lane.b32.xlu0 %v1064, 32
    %v1066 = vpop.permute.xlu0 %1065
    %vm1067 = vcmask 523520
    %s1068 = scalar_lea.vmem %s1, 40
    %1069 = vst.msk [vmem:[%s1068] sm:$0xff] %vm1067, %v1066
    %s1070 = scalar_lea.vmem [#allocation0], 577
    %v1071 = vld [vmem:[%s1070] ss:$8 sm:$0xf]
    %s1072 = scalar_lea.vmem [#allocation0], 577
    %v1073 = vld [vmem:[%s1072] ss:$8 sm:$0xf0]
    %vm1074 = vcmask 1047556
    %v1075 = vsel %vm1074, %v1073, %v1071
    %1076 = vrot.lane.b32.xlu0 %v1075, 32
    %v1077 = vpop.permute.xlu0 %1076
    %vm1078 = vcmask 523520
    %s1079 = scalar_lea.vmem %s1, 72
    %1080 = vst.msk [vmem:[%s1079] sm:$0xff] %vm1078, %v1077
    %s1081 = scalar_lea.vmem [#allocation0], 833
    %v1082 = vld [vmem:[%s1081] ss:$8 sm:$0xf]
    %s1083 = scalar_lea.vmem [#allocation0], 833
    %v1084 = vld [vmem:[%s1083] ss:$8 sm:$0xf0]
    %vm1085 = vcmask 1047556
    %v1086 = vsel %vm1085, %v1084, %v1082
    %1087 = vrot.lane.b32.xlu0 %v1086, 32
    %v1088 = vpop.permute.xlu0 %1087
    %vm1089 = vcmask 523520
    %s1090 = scalar_lea.vmem %s1, 104
    %1091 = vst.msk [vmem:[%s1090] sm:$0xff] %vm1089, %v1088
    %s1092 = scalar_lea.vmem [#allocation0], 129
    %v1093 = vld [vmem:[%s1092] ss:$8 sm:$0xf]
    %s1094 = scalar_lea.vmem [#allocation0], 129
    %v1095 = vld [vmem:[%s1094] ss:$8 sm:$0xf0]
    %vm1096 = vcmask 1047556
    %v1097 = vsel %vm1096, %v1095, %v1093
    %1098 = vrot.lane.b32.xlu0 %v1097, 32
    %v1099 = vpop.permute.xlu0 %1098
    %vm1100 = vcmask 523520
    %s1101 = scalar_lea.vmem %s1, 16
    %1102 = vst.msk [vmem:[%s1101] sm:$0xff] %vm1100, %v1099
    %s1103 = scalar_lea.vmem [#allocation0], 385
    %v1104 = vld [vmem:[%s1103] ss:$8 sm:$0xf]
    %s1105 = scalar_lea.vmem [#allocation0], 385
    %v1106 = vld [vmem:[%s1105] ss:$8 sm:$0xf0]
    %vm1107 = vcmask 1047556
    %v1108 = vsel %vm1107, %v1106, %v1104
    %1109 = vrot.lane.b32.xlu0 %v1108, 32
    %v1110 = vpop.permute.xlu0 %1109
    %vm1111 = vcmask 523520
    %s1112 = scalar_lea.vmem %s1, 48
    %1113 = vst.msk [vmem:[%s1112] sm:$0xff] %vm1111, %v1110
    %s1114 = scalar_lea.vmem [#allocation0], 641
    %v1115 = vld [vmem:[%s1114] ss:$8 sm:$0xf]
    %s1116 = scalar_lea.vmem [#allocation0], 641
    %v1117 = vld [vmem:[%s1116] ss:$8 sm:$0xf0]
    %vm1118 = vcmask 1047556
    %v1119 = vsel %vm1118, %v1117, %v1115
    %1120 = vrot.lane.b32.xlu0 %v1119, 32
    %v1121 = vpop.permute.xlu0 %1120
    %vm1122 = vcmask 523520
    %s1123 = scalar_lea.vmem %s1, 80
    %1124 = vst.msk [vmem:[%s1123] sm:$0xff] %vm1122, %v1121
    %s1125 = scalar_lea.vmem [#allocation0], 897
    %v1126 = vld [vmem:[%s1125] ss:$8 sm:$0xf]
    %s1127 = scalar_lea.vmem [#allocation0], 897
    %v1128 = vld [vmem:[%s1127] ss:$8 sm:$0xf0]
    %vm1129 = vcmask 1047556
    %v1130 = vsel %vm1129, %v1128, %v1126
    %1131 = vrot.lane.b32.xlu0 %v1130, 32
    %v1132 = vpop.permute.xlu0 %1131
    %vm1133 = vcmask 523520
    %s1134 = scalar_lea.vmem %s1, 112
    %1135 = vst.msk [vmem:[%s1134] sm:$0xff] %vm1133, %v1132
    %s1136 = scalar_lea.vmem [#allocation0], 193
    %v1137 = vld [vmem:[%s1136] ss:$8 sm:$0xf]
    %s1138 = scalar_lea.vmem [#allocation0], 193
    %v1139 = vld [vmem:[%s1138] ss:$8 sm:$0xf0]
    %vm1140 = vcmask 1047556
    %v1141 = vsel %vm1140, %v1139, %v1137
    %1142 = vrot.lane.b32.xlu0 %v1141, 32
    %v1143 = vpop.permute.xlu0 %1142
    %vm1144 = vcmask 523520
    %s1145 = scalar_lea.vmem %s1, 24
    %1146 = vst.msk [vmem:[%s1145] sm:$0xff] %vm1144, %v1143
    %s1147 = scalar_lea.vmem [#allocation0], 449
    %v1148 = vld [vmem:[%s1147] ss:$8 sm:$0xf]
    %s1149 = scalar_lea.vmem [#allocation0], 449
    %v1150 = vld [vmem:[%s1149] ss:$8 sm:$0xf0]
    %vm1151 = vcmask 1047556
    %v1152 = vsel %vm1151, %v1150, %v1148
    %1153 = vrot.lane.b32.xlu0 %v1152, 32
    %v1154 = vpop.permute.xlu0 %1153
    %vm1155 = vcmask 523520
    %s1156 = scalar_lea.vmem %s1, 56
    %1157 = vst.msk [vmem:[%s1156] sm:$0xff] %vm1155, %v1154
    %s1158 = scalar_lea.vmem [#allocation0], 705
    %v1159 = vld [vmem:[%s1158] ss:$8 sm:$0xf]
    %s1160 = scalar_lea.vmem [#allocation0], 705
    %v1161 = vld [vmem:[%s1160] ss:$8 sm:$0xf0]
    %vm1162 = vcmask 1047556
    %v1163 = vsel %vm1162, %v1161, %v1159
    %1164 = vrot.lane.b32.xlu0 %v1163, 32
    %v1165 = vpop.permute.xlu0 %1164
    %vm1166 = vcmask 523520
    %s1167 = scalar_lea.vmem %s1, 88
    %1168 = vst.msk [vmem:[%s1167] sm:$0xff] %vm1166, %v1165
    %s1169 = scalar_lea.vmem [#allocation0], 961
    %v1170 = vld [vmem:[%s1169] ss:$8 sm:$0xf]
    %s1171 = scalar_lea.vmem [#allocation0], 961
    %v1172 = vld [vmem:[%s1171] ss:$8 sm:$0xf0]
    %vm1173 = vcmask 1047556
    %v1174 = vsel %vm1173, %v1172, %v1170
    %1175 = vrot.lane.b32.xlu0 %v1174, 32
    %v1176 = vpop.permute.xlu0 %1175
    %vm1177 = vcmask 523520
    %s1178 = scalar_lea.vmem %s1, 120
    %1179 = vst.msk [vmem:[%s1178] sm:$0xff] %vm1177, %v1176

// kernel: tile.18
$region0: #{tile.18}
  #allocation0 [shape = 's32[1]{0}', space=sflag, size = 0x4, scoped, tag = 'scoped memory for tile.18']
  %s0 = inlined_call_operand.vmem [shape: f32[16,16], index: 0, kind: input, shape index: {}]
  %s1 = inlined_call_operand.vmem [shape: f32[4,16,4,16], index: 1, kind: output, shape index: {}]
  // Predicated region
  $region2: #{tile.18} parent=0 // pred_check
    _
  $region3: #{tile.18} parent=0 // pred_check_branch
    %3 = sbr.rel (0) target = $region5
  $region4: #{tile.18} parent=0 // pred_region
    _
  $region5: #{tile.18} parent=0 // pred_fallthru
    _
  %v4 = vld [vmem:[%s0] ss:$0 sm:$0xff]
  %5 = vst [vmem:[%s1] sm:$0xf] %v4
  %s6 = scalar_lea.vmem %s1, 64
  %7 = vst [vmem:[%s6] sm:$0xf] %v4
  %s8 = scalar_lea.vmem %s1, 128
  %9 = vst [vmem:[%s8] sm:$0xf] %v4
  %s10 = scalar_lea.vmem %s1, 192
  %11 = vst [vmem:[%s10] sm:$0xf] %v4
  %s12 = scalar_lea.vmem %s0, 1
  %v13 = vld [vmem:[%s12] ss:$0 sm:$0xff]
  %s14 = scalar_lea.vmem %s1, 4
  %15 = vst [vmem:[%s14] sm:$0xf] %v13
  %s16 = scalar_lea.vmem %s1, 68
  %17 = vst [vmem:[%s16] sm:$0xf] %v13
  %s18 = scalar_lea.vmem %s1, 132
  %19 = vst [vmem:[%s18] sm:$0xf] %v13
  %s20 = scalar_lea.vmem %s1, 196
  %21 = vst [vmem:[%s20] sm:$0xf] %v13
  %s22 = scalar_lea.vmem %s0, 2
  %v23 = vld [vmem:[%s22] ss:$0 sm:$0xff]
  %s24 = scalar_lea.vmem %s1, 8
  %25 = vst [vmem:[%s24] sm:$0xf] %v23
  %s26 = scalar_lea.vmem %s1, 72
  %27 = vst [vmem:[%s26] sm:$0xf] %v23
  %s28 = scalar_lea.vmem %s1, 136
  %29 = vst [vmem:[%s28] sm:$0xf] %v23
  %s30 = scalar_lea.vmem %s1, 200
  %31 = vst [vmem:[%s30] sm:$0xf] %v23
  %s32 = scalar_lea.vmem %s0, 3
  %v33 = vld [vmem:[%s32] ss:$0 sm:$0xff]
  %s34 = scalar_lea.vmem %s1, 12
  %35 = vst [vmem:[%s34] sm:$0xf] %v33
  %s36 = scalar_lea.vmem %s1, 76
  %37 = vst [vmem:[%s36] sm:$0xf] %v33
  %s38 = scalar_lea.vmem %s1, 140
  %39 = vst [vmem:[%s38] sm:$0xf] %v33
  %s40 = scalar_lea.vmem %s1, 204
  %41 = vst [vmem:[%s40] sm:$0xf] %v33
  %s42 = scalar_lea.vmem %s0, 4
  %v43 = vld [vmem:[%s42] ss:$0 sm:$0xff]
  %s44 = scalar_lea.vmem %s1, 16
  %45 = vst [vmem:[%s44] sm:$0xf] %v43
  %s46 = scalar_lea.vmem %s1, 80
  %47 = vst [vmem:[%s46] sm:$0xf] %v43
  %s48 = scalar_lea.vmem %s1, 144
  %49 = vst [vmem:[%s48] sm:$0xf] %v43
  %s50 = scalar_lea.vmem %s1, 208
  %51 = vst [vmem:[%s50] sm:$0xf] %v43
  %s52 = scalar_lea.vmem %s0, 5
  %v53 = vld [vmem:[%s52] ss:$0 sm:$0xff]
  %s54 = scalar_lea.vmem %s1, 20
  %55 = vst [vmem:[%s54] sm:$0xf] %v53
  %s56 = scalar_lea.vmem %s1, 84
  %57 = vst [vmem:[%s56] sm:$0xf] %v53
  %s58 = scalar_lea.vmem %s1, 148
  %59 = vst [vmem:[%s58] sm:$0xf] %v53
  %s60 = scalar_lea.vmem %s1, 212
  %61 = vst [vmem:[%s60] sm:$0xf] %v53
  %s62 = scalar_lea.vmem %s0, 6
  %v63 = vld [vmem:[%s62] ss:$0 sm:$0xff]
  %s64 = scalar_lea.vmem %s1, 24
  %65 = vst [vmem:[%s64] sm:$0xf] %v63
  %s66 = scalar_lea.vmem %s1, 88
  %67 = vst [vmem:[%s66] sm:$0xf] %v63
  %s68 = scalar_lea.vmem %s1, 152
  %69 = vst [vmem:[%s68] sm:$0xf] %v63
  %s70 = scalar_lea.vmem %s1, 216
  %71 = vst [vmem:[%s70] sm:$0xf] %v63
  %s72 = scalar_lea.vmem %s0, 7
  %v73 = vld [vmem:[%s72] ss:$0 sm:$0xff]
  %s74 = scalar_lea.vmem %s1, 28
  %75 = vst [vmem:[%s74] sm:$0xf] %v73
  %s76 = scalar_lea.vmem %s1, 92
  %77 = vst [vmem:[%s76] sm:$0xf] %v73
  %s78 = scalar_lea.vmem %s1, 156
  %79 = vst [vmem:[%s78] sm:$0xf] %v73
  %s80 = scalar_lea.vmem %s1, 220
  %81 = vst [vmem:[%s80] sm:$0xf] %v73
  %s82 = scalar_lea.vmem %s0, 8
  %v83 = vld [vmem:[%s82] ss:$0 sm:$0xff]
  %s84 = scalar_lea.vmem %s1, 32
  %85 = vst [vmem:[%s84] sm:$0xf] %v83
  %s86 = scalar_lea.vmem %s1, 96
  %87 = vst [vmem:[%s86] sm:$0xf] %v83
  %s88 = scalar_lea.vmem %s1, 160
  %89 = vst [vmem:[%s88] sm:$0xf] %v83
  %s90 = scalar_lea.vmem %s1, 224
  %91 = vst [vmem:[%s90] sm:$0xf] %v83
  %s92 = scalar_lea.vmem %s0, 8
  %s93 = scalar_lea.vmem %s92, 1
  %v94 = vld [vmem:[%s93] ss:$0 sm:$0xff]
  %s95 = scalar_lea.vmem %s1, 36
  %96 = vst [vmem:[%s95] sm:$0xf] %v94
  %s97 = scalar_lea.vmem %s1, 100
  %98 = vst [vmem:[%s97] sm:$0xf] %v94
  %s99 = scalar_lea.vmem %s1, 164
  %100 = vst [vmem:[%s99] sm:$0xf] %v94
  %s101 = scalar_lea.vmem %s1, 228
  %102 = vst [vmem:[%s101] sm:$0xf] %v94
  %s103 = scalar_lea.vmem %s0, 8
  %s104 = scalar_lea.vmem %s103, 2
  %v105 = vld [vmem:[%s104] ss:$0 sm:$0xff]
  %s106 = scalar_lea.vmem %s1, 40
  %107 = vst [vmem:[%s106] sm:$0xf] %v105
  %s108 = scalar_lea.vmem %s1, 104
  %109 = vst [vmem:[%s108] sm:$0xf] %v105
  %s110 = scalar_lea.vmem %s1, 168
  %111 = vst [vmem:[%s110] sm:$0xf] %v105
  %s112 = scalar_lea.vmem %s1, 232
  %113 = vst [vmem:[%s112] sm:$0xf] %v105
  %s114 = scalar_lea.vmem %s0, 8
  %s115 = scalar_lea.vmem %s114, 3
  %v116 = vld [vmem:[%s115] ss:$0 sm:$0xff]
  %s117 = scalar_lea.vmem %s1, 44
  %118 = vst [vmem:[%s117] sm:$0xf] %v116
  %s119 = scalar_lea.vmem %s1, 108
  %120 = vst [vmem:[%s119] sm:$0xf] %v116
  %s121 = scalar_lea.vmem %s1, 172
  %122 = vst [vmem:[%s121] sm:$0xf] %v116
  %s123 = scalar_lea.vmem %s1, 236
  %124 = vst [vmem:[%s123] sm:$0xf] %v116
  %s125 = scalar_lea.vmem %s0, 8
  %s126 = scalar_lea.vmem %s125, 4
  %v127 = vld [vmem:[%s126] ss:$0 sm:$0xff]
  %s128 = scalar_lea.vmem %s1, 48
  %129 = vst [vmem:[%s128] sm:$0xf] %v127
  %s130 = scalar_lea.vmem %s1, 112
  %131 = vst [vmem:[%s130] sm:$0xf] %v127
  %s132 = scalar_lea.vmem %s1, 176
  %133 = vst [vmem:[%s132] sm:$0xf] %v127
  %s134 = scalar_lea.vmem %s1, 240
  %135 = vst [vmem:[%s134] sm:$0xf] %v127
  %s136 = scalar_lea.vmem %s0, 8
  %s137 = scalar_lea.vmem %s136, 5
  %v138 = vld [vmem:[%s137] ss:$0 sm:$0xff]
  %s139 = scalar_lea.vmem %s1, 52
  %140 = vst [vmem:[%s139] sm:$0xf] %v138
  %s141 = scalar_lea.vmem %s1, 116
  %142 = vst [vmem:[%s141] sm:$0xf] %v138
  %s143 = scalar_lea.vmem %s1, 180
  %144 = vst [vmem:[%s143] sm:$0xf] %v138
  %s145 = scalar_lea.vmem %s1, 244
  %146 = vst [vmem:[%s145] sm:$0xf] %v138
  %s147 = scalar_lea.vmem %s0, 8
  %s148 = scalar_lea.vmem %s147, 6
  %v149 = vld [vmem:[%s148] ss:$0 sm:$0xff]
  %s150 = scalar_lea.vmem %s1, 56
  %151 = vst [vmem:[%s150] sm:$0xf] %v149
  %s152 = scalar_lea.vmem %s1, 120
  %153 = vst [vmem:[%s152] sm:$0xf] %v149
  %s154 = scalar_lea.vmem %s1, 184
  %155 = vst [vmem:[%s154] sm:$0xf] %v149
  %s156 = scalar_lea.vmem %s1, 248
  %157 = vst [vmem:[%s156] sm:$0xf] %v149
  %s158 = scalar_lea.vmem %s0, 8
  %s159 = scalar_lea.vmem %s158, 7
  %v160 = vld [vmem:[%s159] ss:$0 sm:$0xff]
  %s161 = scalar_lea.vmem %s1, 60
  %162 = vst [vmem:[%s161] sm:$0xf] %v160
  %s163 = scalar_lea.vmem %s1, 124
  %164 = vst [vmem:[%s163] sm:$0xf] %v160
  %s165 = scalar_lea.vmem %s1, 188
  %166 = vst [vmem:[%s165] sm:$0xf] %v160
  %s167 = scalar_lea.vmem %s1, 252
  %168 = vst [vmem:[%s167] sm:$0xf] %v160

// kernel: tile.19
$region0: #{tile.19}
  %s0 = inlined_call_operand.vmem [shape: f32[4,16,4,16], index: 0, kind: input, shape index: {}]
  %s1 = inlined_call_operand.vmem [shape: f32[64,64], index: 1, kind: output, shape index: {}]
  $region1: #{tile.19} parent=0
    #allocation0 [shape = 'u8[262144]{0}', space=vmem, size = 0x40000, scoped, tag = 'scoped mem for input reshape']
    %s3 = ssub.s32 16, 1
    %s4 = scalar_lea.vmem %s0, 252
    %v5 = vld [vmem:[%s4] sm:%s3]
    %s6 = scalar_lea.vmem [#allocation0], 504
    %7 = vst [vmem:[%s6] sm:%s3] %v5
    %s8 = scalar_lea.vmem %s0, 248
    %v9 = vld [vmem:[%s8] sm:%s3]
    %s10 = scalar_lea.vmem [#allocation0], 496
    %11 = vst [vmem:[%s10] sm:%s3] %v9
    %s12 = scalar_lea.vmem %s0, 244
    %v13 = vld [vmem:[%s12] sm:%s3]
    %s14 = scalar_lea.vmem [#allocation0], 488
    %15 = vst [vmem:[%s14] sm:%s3] %v13
    %s16 = scalar_lea.vmem %s0, 240
    %v17 = vld [vmem:[%s16] sm:%s3]
    %s18 = scalar_lea.vmem [#allocation0], 480
    %19 = vst [vmem:[%s18] sm:%s3] %v17
    %s20 = scalar_lea.vmem %s0, 236
    %v21 = vld [vmem:[%s20] sm:%s3]
    %s22 = scalar_lea.vmem [#allocation0], 472
    %23 = vst [vmem:[%s22] sm:%s3] %v21
    %s24 = scalar_lea.vmem %s0, 232
    %v25 = vld [vmem:[%s24] sm:%s3]
    %s26 = scalar_lea.vmem [#allocation0], 464
    %27 = vst [vmem:[%s26] sm:%s3] %v25
    %s28 = scalar_lea.vmem %s0, 228
    %v29 = vld [vmem:[%s28] sm:%s3]
    %s30 = scalar_lea.vmem [#allocation0], 456
    %31 = vst [vmem:[%s30] sm:%s3] %v29
    %s32 = scalar_lea.vmem %s0, 224
    %v33 = vld [vmem:[%s32] sm:%s3]
    %s34 = scalar_lea.vmem [#allocation0], 448
    %35 = vst [vmem:[%s34] sm:%s3] %v33
    %s36 = scalar_lea.vmem %s0, 220
    %v37 = vld [vmem:[%s36] sm:%s3]
    %s38 = scalar_lea.vmem [#allocation0], 440
    %39 = vst [vmem:[%s38] sm:%s3] %v37
    %s40 = scalar_lea.vmem %s0, 216
    %v41 = vld [vmem:[%s40] sm:%s3]
    %s42 = scalar_lea.vmem [#allocation0], 432
    %43 = vst [vmem:[%s42] sm:%s3] %v41
    %s44 = scalar_lea.vmem %s0, 212
    %v45 = vld [vmem:[%s44] sm:%s3]
    %s46 = scalar_lea.vmem [#allocation0], 424
    %47 = vst [vmem:[%s46] sm:%s3] %v45
    %s48 = scalar_lea.vmem %s0, 208
    %v49 = vld [vmem:[%s48] sm:%s3]
    %s50 = scalar_lea.vmem [#allocation0], 416
    %51 = vst [vmem:[%s50] sm:%s3] %v49
    %s52 = scalar_lea.vmem %s0, 204
    %v53 = vld [vmem:[%s52] sm:%s3]
    %s54 = scalar_lea.vmem [#allocation0], 408
    %55 = vst [vmem:[%s54] sm:%s3] %v53
    %s56 = scalar_lea.vmem %s0, 200
    %v57 = vld [vmem:[%s56] sm:%s3]
    %s58 = scalar_lea.vmem [#allocation0], 400
    %59 = vst [vmem:[%s58] sm:%s3] %v57
    %s60 = scalar_lea.vmem %s0, 196
    %v61 = vld [vmem:[%s60] sm:%s3]
    %s62 = scalar_lea.vmem [#allocation0], 392
    %63 = vst [vmem:[%s62] sm:%s3] %v61
    %s64 = scalar_lea.vmem %s0, 192
    %v65 = vld [vmem:[%s64] sm:%s3]
    %s66 = scalar_lea.vmem [#allocation0], 384
    %67 = vst [vmem:[%s66] sm:%s3] %v65
    %s68 = scalar_lea.vmem %s0, 188
    %v69 = vld [vmem:[%s68] sm:%s3]
    %s70 = scalar_lea.vmem [#allocation0], 376
    %71 = vst [vmem:[%s70] sm:%s3] %v69
    %s72 = scalar_lea.vmem %s0, 184
    %v73 = vld [vmem:[%s72] sm:%s3]
    %s74 = scalar_lea.vmem [#allocation0], 368
    %75 = vst [vmem:[%s74] sm:%s3] %v73
    %s76 = scalar_lea.vmem %s0, 180
    %v77 = vld [vmem:[%s76] sm:%s3]
    %s78 = scalar_lea.vmem [#allocation0], 360
    %79 = vst [vmem:[%s78] sm:%s3] %v77
    %s80 = scalar_lea.vmem %s0, 176
    %v81 = vld [vmem:[%s80] sm:%s3]
    %s82 = scalar_lea.vmem [#allocation0], 352
    %83 = vst [vmem:[%s82] sm:%s3] %v81
    %s84 = scalar_lea.vmem %s0, 172
    %v85 = vld [vmem:[%s84] sm:%s3]
    %s86 = scalar_lea.vmem [#allocation0], 344
    %87 = vst [vmem:[%s86] sm:%s3] %v85
    %s88 = scalar_lea.vmem %s0, 168
    %v89 = vld [vmem:[%s88] sm:%s3]
    %s90 = scalar_lea.vmem [#allocation0], 336
    %91 = vst [vmem:[%s90] sm:%s3] %v89
    %s92 = scalar_lea.vmem %s0, 164
    %v93 = vld [vmem:[%s92] sm:%s3]
    %s94 = scalar_lea.vmem [#allocation0], 328
    %95 = vst [vmem:[%s94] sm:%s3] %v93
    %s96 = scalar_lea.vmem %s0, 160
    %v97 = vld [vmem:[%s96] sm:%s3]
    %s98 = scalar_lea.vmem [#allocation0], 320
    %99 = vst [vmem:[%s98] sm:%s3] %v97
    %s100 = scalar_lea.vmem %s0, 156
    %v101 = vld [vmem:[%s100] sm:%s3]
    %s102 = scalar_lea.vmem [#allocation0], 312
    %103 = vst [vmem:[%s102] sm:%s3] %v101
    %s104 = scalar_lea.vmem %s0, 152
    %v105 = vld [vmem:[%s104] sm:%s3]
    %s106 = scalar_lea.vmem [#allocation0], 304
    %107 = vst [vmem:[%s106] sm:%s3] %v105
    %s108 = scalar_lea.vmem %s0, 148
    %v109 = vld [vmem:[%s108] sm:%s3]
    %s110 = scalar_lea.vmem [#allocation0], 296
    %111 = vst [vmem:[%s110] sm:%s3] %v109
    %s112 = scalar_lea.vmem %s0, 144
    %v113 = vld [vmem:[%s112] sm:%s3]
    %s114 = scalar_lea.vmem [#allocation0], 288
    %115 = vst [vmem:[%s114] sm:%s3] %v113
    %s116 = scalar_lea.vmem %s0, 140
    %v117 = vld [vmem:[%s116] sm:%s3]
    %s118 = scalar_lea.vmem [#allocation0], 280
    %119 = vst [vmem:[%s118] sm:%s3] %v117
    %s120 = scalar_lea.vmem %s0, 136
    %v121 = vld [vmem:[%s120] sm:%s3]
    %s122 = scalar_lea.vmem [#allocation0], 272
    %123 = vst [vmem:[%s122] sm:%s3] %v121
    %s124 = scalar_lea.vmem %s0, 132
    %v125 = vld [vmem:[%s124] sm:%s3]
    %s126 = scalar_lea.vmem [#allocation0], 264
    %127 = vst [vmem:[%s126] sm:%s3] %v125
    %s128 = scalar_lea.vmem %s0, 128
    %v129 = vld [vmem:[%s128] sm:%s3]
    %s130 = scalar_lea.vmem [#allocation0], 256
    %131 = vst [vmem:[%s130] sm:%s3] %v129
    %s132 = scalar_lea.vmem %s0, 124
    %v133 = vld [vmem:[%s132] sm:%s3]
    %s134 = scalar_lea.vmem [#allocation0], 248
    %135 = vst [vmem:[%s134] sm:%s3] %v133
    %s136 = scalar_lea.vmem %s0, 120
    %v137 = vld [vmem:[%s136] sm:%s3]
    %s138 = scalar_lea.vmem [#allocation0], 240
    %139 = vst [vmem:[%s138] sm:%s3] %v137
    %s140 = scalar_lea.vmem %s0, 116
    %v141 = vld [vmem:[%s140] sm:%s3]
    %s142 = scalar_lea.vmem [#allocation0], 232
    %143 = vst [vmem:[%s142] sm:%s3] %v141
    %s144 = scalar_lea.vmem %s0, 112
    %v145 = vld [vmem:[%s144] sm:%s3]
    %s146 = scalar_lea.vmem [#allocation0], 224
    %147 = vst [vmem:[%s146] sm:%s3] %v145
    %s148 = scalar_lea.vmem %s0, 108
    %v149 = vld [vmem:[%s148] sm:%s3]
    %s150 = scalar_lea.vmem [#allocation0], 216
    %151 = vst [vmem:[%s150] sm:%s3] %v149
    %s152 = scalar_lea.vmem %s0, 104
    %v153 = vld [vmem:[%s152] sm:%s3]
    %s154 = scalar_lea.vmem [#allocation0], 208
    %155 = vst [vmem:[%s154] sm:%s3] %v153
    %s156 = scalar_lea.vmem %s0, 100
    %v157 = vld [vmem:[%s156] sm:%s3]
    %s158 = scalar_lea.vmem [#allocation0], 200
    %159 = vst [vmem:[%s158] sm:%s3] %v157
    %s160 = scalar_lea.vmem %s0, 96
    %v161 = vld [vmem:[%s160] sm:%s3]
    %s162 = scalar_lea.vmem [#allocation0], 192
    %163 = vst [vmem:[%s162] sm:%s3] %v161
    %s164 = scalar_lea.vmem %s0, 92
    %v165 = vld [vmem:[%s164] sm:%s3]
    %s166 = scalar_lea.vmem [#allocation0], 184
    %167 = vst [vmem:[%s166] sm:%s3] %v165
    %s168 = scalar_lea.vmem %s0, 88
    %v169 = vld [vmem:[%s168] sm:%s3]
    %s170 = scalar_lea.vmem [#allocation0], 176
    %171 = vst [vmem:[%s170] sm:%s3] %v169
    %s172 = scalar_lea.vmem %s0, 84
    %v173 = vld [vmem:[%s172] sm:%s3]
    %s174 = scalar_lea.vmem [#allocation0], 168
    %175 = vst [vmem:[%s174] sm:%s3] %v173
    %s176 = scalar_lea.vmem %s0, 80
    %v177 = vld [vmem:[%s176] sm:%s3]
    %s178 = scalar_lea.vmem [#allocation0], 160
    %179 = vst [vmem:[%s178] sm:%s3] %v177
    %s180 = scalar_lea.vmem %s0, 76
    %v181 = vld [vmem:[%s180] sm:%s3]
    %s182 = scalar_lea.vmem [#allocation0], 152
    %183 = vst [vmem:[%s182] sm:%s3] %v181
    %s184 = scalar_lea.vmem %s0, 72
    %v185 = vld [vmem:[%s184] sm:%s3]
    %s186 = scalar_lea.vmem [#allocation0], 144
    %187 = vst [vmem:[%s186] sm:%s3] %v185
    %s188 = scalar_lea.vmem %s0, 68
    %v189 = vld [vmem:[%s188] sm:%s3]
    %s190 = scalar_lea.vmem [#allocation0], 136
    %191 = vst [vmem:[%s190] sm:%s3] %v189
    %s192 = scalar_lea.vmem %s0, 64
    %v193 = vld [vmem:[%s192] sm:%s3]
    %s194 = scalar_lea.vmem [#allocation0], 128
    %195 = vst [vmem:[%s194] sm:%s3] %v193
    %s196 = scalar_lea.vmem %s0, 60
    %v197 = vld [vmem:[%s196] sm:%s3]
    %s198 = scalar_lea.vmem [#allocation0], 120
    %199 = vst [vmem:[%s198] sm:%s3] %v197
    %s200 = scalar_lea.vmem %s0, 56
    %v201 = vld [vmem:[%s200] sm:%s3]
    %s202 = scalar_lea.vmem [#allocation0], 112
    %203 = vst [vmem:[%s202] sm:%s3] %v201
    %s204 = scalar_lea.vmem %s0, 52
    %v205 = vld [vmem:[%s204] sm:%s3]
    %s206 = scalar_lea.vmem [#allocation0], 104
    %207 = vst [vmem:[%s206] sm:%s3] %v205
    %s208 = scalar_lea.vmem %s0, 48
    %v209 = vld [vmem:[%s208] sm:%s3]
    %s210 = scalar_lea.vmem [#allocation0], 96
    %211 = vst [vmem:[%s210] sm:%s3] %v209
    %s212 = scalar_lea.vmem %s0, 44
    %v213 = vld [vmem:[%s212] sm:%s3]
    %s214 = scalar_lea.vmem [#allocation0], 88
    %215 = vst [vmem:[%s214] sm:%s3] %v213
    %s216 = scalar_lea.vmem %s0, 40
    %v217 = vld [vmem:[%s216] sm:%s3]
    %s218 = scalar_lea.vmem [#allocation0], 80
    %219 = vst [vmem:[%s218] sm:%s3] %v217
    %s220 = scalar_lea.vmem %s0, 36
    %v221 = vld [vmem:[%s220] sm:%s3]
    %s222 = scalar_lea.vmem [#allocation0], 72
    %223 = vst [vmem:[%s222] sm:%s3] %v221
    %s224 = scalar_lea.vmem %s0, 32
    %v225 = vld [vmem:[%s224] sm:%s3]
    %s226 = scalar_lea.vmem [#allocation0], 64
    %227 = vst [vmem:[%s226] sm:%s3] %v225
    %s228 = scalar_lea.vmem %s0, 28
    %v229 = vld [vmem:[%s228] sm:%s3]
    %s230 = scalar_lea.vmem [#allocation0], 56
    %231 = vst [vmem:[%s230] sm:%s3] %v229
    %s232 = scalar_lea.vmem %s0, 24
    %v233 = vld [vmem:[%s232] sm:%s3]
    %s234 = scalar_lea.vmem [#allocation0], 48
    %235 = vst [vmem:[%s234] sm:%s3] %v233
    %s236 = scalar_lea.vmem %s0, 20
    %v237 = vld [vmem:[%s236] sm:%s3]
    %s238 = scalar_lea.vmem [#allocation0], 40
    %239 = vst [vmem:[%s238] sm:%s3] %v237
    %s240 = scalar_lea.vmem %s0, 16
    %v241 = vld [vmem:[%s240] sm:%s3]
    %s242 = scalar_lea.vmem [#allocation0], 32
    %243 = vst [vmem:[%s242] sm:%s3] %v241
    %s244 = scalar_lea.vmem %s0, 12
    %v245 = vld [vmem:[%s244] sm:%s3]
    %s246 = scalar_lea.vmem [#allocation0], 24
    %247 = vst [vmem:[%s246] sm:%s3] %v245
    %s248 = scalar_lea.vmem %s0, 8
    %v249 = vld [vmem:[%s248] sm:%s3]
    %s250 = scalar_lea.vmem [#allocation0], 16
    %251 = vst [vmem:[%s250] sm:%s3] %v249
    %s252 = scalar_lea.vmem %s0, 4
    %v253 = vld [vmem:[%s252] sm:%s3]
    %s254 = scalar_lea.vmem [#allocation0], 8
    %255 = vst [vmem:[%s254] sm:%s3] %v253
    %v256 = vld [vmem:[%s0] sm:%s3]
    %257 = vst [vmem:[#allocation0] sm:%s3] %v256
    %v258 = vld [vmem:[#allocation0] ss:$8 sm:$0xf]
    %v259 = vld [vmem:[#allocation0] ss:$8 sm:$0xf0]
    %vm260 = vcmask 1047556
    %v261 = vsel %vm260, %v259, %v258
    %vm262 = vcmask 130048
    %263 = vst.msk [vmem:[%s1] sm:$0xff] %vm262, %v261
    %s264 = scalar_lea.vmem [#allocation0], 64
    %v265 = vld [vmem:[%s264] ss:$8 sm:$0xf]
    %s266 = scalar_lea.vmem [#allocation0], 64
    %v267 = vld [vmem:[%s266] ss:$8 sm:$0xf0]
    %vm268 = vcmask 1047556
    %v269 = vsel %vm268, %v267, %v265
    %vm270 = vcmask 130048
    %s271 = scalar_lea.vmem %s1, 8
    %272 = vst.msk [vmem:[%s271] sm:$0xff] %vm270, %v269
    %s273 = scalar_lea.vmem [#allocation0], 128
    %v274 = vld [vmem:[%s273] ss:$8 sm:$0xf]
    %s275 = scalar_lea.vmem [#allocation0], 128
    %v276 = vld [vmem:[%s275] ss:$8 sm:$0xf0]
    %vm277 = vcmask 1047556
    %v278 = vsel %vm277, %v276, %v274
    %vm279 = vcmask 130048
    %s280 = scalar_lea.vmem %s1, 16
    %281 = vst.msk [vmem:[%s280] sm:$0xff] %vm279, %v278
    %s282 = scalar_lea.vmem [#allocation0], 192
    %v283 = vld [vmem:[%s282] ss:$8 sm:$0xf]
    %s284 = scalar_lea.vmem [#allocation0], 192
    %v285 = vld [vmem:[%s284] ss:$8 sm:$0xf0]
    %vm286 = vcmask 1047556
    %v287 = vsel %vm286, %v285, %v283
    %vm288 = vcmask 130048
    %s289 = scalar_lea.vmem %s1, 24
    %290 = vst.msk [vmem:[%s289] sm:$0xff] %vm288, %v287
    %s291 = scalar_lea.vmem [#allocation0], 256
    %v292 = vld [vmem:[%s291] ss:$8 sm:$0xf]
    %s293 = scalar_lea.vmem [#allocation0], 256
    %v294 = vld [vmem:[%s293] ss:$8 sm:$0xf0]
    %vm295 = vcmask 1047556
    %v296 = vsel %vm295, %v294, %v292
    %vm297 = vcmask 130048
    %s298 = scalar_lea.vmem %s1, 32
    %299 = vst.msk [vmem:[%s298] sm:$0xff] %vm297, %v296
    %s300 = scalar_lea.vmem [#allocation0], 320
    %v301 = vld [vmem:[%s300] ss:$8 sm:$0xf]
    %s302 = scalar_lea.vmem [#allocation0], 320
    %v303 = vld [vmem:[%s302] ss:$8 sm:$0xf0]
    %vm304 = vcmask 1047556
    %v305 = vsel %vm304, %v303, %v301
    %vm306 = vcmask 130048
    %s307 = scalar_lea.vmem %s1, 40
    %308 = vst.msk [vmem:[%s307] sm:$0xff] %vm306, %v305
    %s309 = scalar_lea.vmem [#allocation0], 384
    %v310 = vld [vmem:[%s309] ss:$8 sm:$0xf]
    %s311 = scalar_lea.vmem [#allocation0], 384
    %v312 = vld [vmem:[%s311] ss:$8 sm:$0xf0]
    %vm313 = vcmask 1047556
    %v314 = vsel %vm313, %v312, %v310
    %vm315 = vcmask 130048
    %s316 = scalar_lea.vmem %s1, 48
    %317 = vst.msk [vmem:[%s316] sm:$0xff] %vm315, %v314
    %s318 = scalar_lea.vmem [#allocation0], 448
    %v319 = vld [vmem:[%s318] ss:$8 sm:$0xf]
    %s320 = scalar_lea.vmem [#allocation0], 448
    %v321 = vld [vmem:[%s320] ss:$8 sm:$0xf0]
    %vm322 = vcmask 1047556
    %v323 = vsel %vm322, %v321, %v319
    %vm324 = vcmask 130048
    %s325 = scalar_lea.vmem %s1, 56
    %326 = vst.msk [vmem:[%s325] sm:$0xff] %vm324, %v323
    %s327 = scalar_lea.vmem [#allocation0], 3
    %v328 = vld [vmem:[%s327] ss:$8 sm:$0xf]
    %s329 = scalar_lea.vmem [#allocation0], 3
    %v330 = vld [vmem:[%s329] ss:$8 sm:$0xf0]
    %vm331 = vcmask 1047556
    %v332 = vsel %vm331, %v330, %v328
    %333 = vrot.lane.b32.xlu0 %v332, 48
    %v334 = vpop.permute.xlu0 %333
    %vm335 = vcmask 523648
    %336 = vst.msk [vmem:[%s1] sm:$0xff] %vm335, %v334
    %s337 = scalar_lea.vmem [#allocation0], 259
    %v338 = vld [vmem:[%s337] ss:$8 sm:$0xf]
    %s339 = scalar_lea.vmem [#allocation0], 259
    %v340 = vld [vmem:[%s339] ss:$8 sm:$0xf0]
    %vm341 = vcmask 1047556
    %v342 = vsel %vm341, %v340, %v338
    %343 = vrot.lane.b32.xlu0 %v342, 48
    %v344 = vpop.permute.xlu0 %343
    %vm345 = vcmask 523648
    %s346 = scalar_lea.vmem %s1, 32
    %347 = vst.msk [vmem:[%s346] sm:$0xff] %vm345, %v344
    %s348 = scalar_lea.vmem [#allocation0], 67
    %v349 = vld [vmem:[%s348] ss:$8 sm:$0xf]
    %s350 = scalar_lea.vmem [#allocation0], 67
    %v351 = vld [vmem:[%s350] ss:$8 sm:$0xf0]
    %vm352 = vcmask 1047556
    %v353 = vsel %vm352, %v351, %v349
    %354 = vrot.lane.b32.xlu0 %v353, 48
    %v355 = vpop.permute.xlu0 %354
    %vm356 = vcmask 523648
    %s357 = scalar_lea.vmem %s1, 8
    %358 = vst.msk [vmem:[%s357] sm:$0xff] %vm356, %v355
    %s359 = scalar_lea.vmem [#allocation0], 323
    %v360 = vld [vmem:[%s359] ss:$8 sm:$0xf]
    %s361 = scalar_lea.vmem [#allocation0], 323
    %v362 = vld [vmem:[%s361] ss:$8 sm:$0xf0]
    %vm363 = vcmask 1047556
    %v364 = vsel %vm363, %v362, %v360
    %365 = vrot.lane.b32.xlu0 %v364, 48
    %v366 = vpop.permute.xlu0 %365
    %vm367 = vcmask 523648
    %s368 = scalar_lea.vmem %s1, 40
    %369 = vst.msk [vmem:[%s368] sm:$0xff] %vm367, %v366
    %s370 = scalar_lea.vmem [#allocation0], 131
    %v371 = vld [vmem:[%s370] ss:$8 sm:$0xf]
    %s372 = scalar_lea.vmem [#allocation0], 131
    %v373 = vld [vmem:[%s372] ss:$8 sm:$0xf0]
    %vm374 = vcmask 1047556
    %v375 = vsel %vm374, %v373, %v371
    %376 = vrot.lane.b32.xlu0 %v375, 48
    %v377 = vpop.permute.xlu0 %376
    %vm378 = vcmask 523648
    %s379 = scalar_lea.vmem %s1, 16
    %380 = vst.msk [vmem:[%s379] sm:$0xff] %vm378, %v377
    %s381 = scalar_lea.vmem [#allocation0], 387
    %v382 = vld [vmem:[%s381] ss:$8 sm:$0xf]
    %s383 = scalar_lea.vmem [#allocation0], 387
    %v384 = vld [vmem:[%s383] ss:$8 sm:$0xf0]
    %vm385 = vcmask 1047556
    %v386 = vsel %vm385, %v384, %v382
    %387 = vrot.lane.b32.xlu0 %v386, 48
    %v388 = vpop.permute.xlu0 %387
    %vm389 = vcmask 523648
    %s390 = scalar_lea.vmem %s1, 48
    %391 = vst.msk [vmem:[%s390] sm:$0xff] %vm389, %v388
    %s392 = scalar_lea.vmem [#allocation0], 195
    %v393 = vld [vmem:[%s392] ss:$8 sm:$0xf]
    %s394 = scalar_lea.vmem [#allocation0], 195
    %v395 = vld [vmem:[%s394] ss:$8 sm:$0xf0]
    %vm396 = vcmask 1047556
    %v397 = vsel %vm396, %v395, %v393
    %398 = vrot.lane.b32.xlu0 %v397, 48
    %v399 = vpop.permute.xlu0 %398
    %vm400 = vcmask 523648
    %s401 = scalar_lea.vmem %s1, 24
    %402 = vst.msk [vmem:[%s401] sm:$0xff] %vm400, %v399
    %s403 = scalar_lea.vmem [#allocation0], 451
    %v404 = vld [vmem:[%s403] ss:$8 sm:$0xf]
    %s405 = scalar_lea.vmem [#allocation0], 451
    %v406 = vld [vmem:[%s405] ss:$8 sm:$0xf0]
    %vm407 = vcmask 1047556
    %v408 = vsel %vm407, %v406, %v404
    %409 = vrot.lane.b32.xlu0 %v408, 48
    %v410 = vpop.permute.xlu0 %409
    %vm411 = vcmask 523648
    %s412 = scalar_lea.vmem %s1, 56
    %413 = vst.msk [vmem:[%s412] sm:$0xff] %vm411, %v410
    %s414 = scalar_lea.vmem [#allocation0], 2
    %v415 = vld [vmem:[%s414] ss:$8 sm:$0xf]
    %s416 = scalar_lea.vmem [#allocation0], 2
    %v417 = vld [vmem:[%s416] ss:$8 sm:$0xf0]
    %vm418 = vcmask 1047556
    %v419 = vsel %vm418, %v417, %v415
    %420 = vrot.lane.b32.xlu0 %v419, 32
    %v421 = vpop.permute.xlu0 %420
    %vm422 = vcmask 392448
    %423 = vst.msk [vmem:[%s1] sm:$0xff] %vm422, %v421
    %s424 = scalar_lea.vmem [#allocation0], 258
    %v425 = vld [vmem:[%s424] ss:$8 sm:$0xf]
    %s426 = scalar_lea.vmem [#allocation0], 258
    %v427 = vld [vmem:[%s426] ss:$8 sm:$0xf0]
    %vm428 = vcmask 1047556
    %v429 = vsel %vm428, %v427, %v425
    %430 = vrot.lane.b32.xlu0 %v429, 32
    %v431 = vpop.permute.xlu0 %430
    %vm432 = vcmask 392448
    %s433 = scalar_lea.vmem %s1, 32
    %434 = vst.msk [vmem:[%s433] sm:$0xff] %vm432, %v431
    %s435 = scalar_lea.vmem [#allocation0], 66
    %v436 = vld [vmem:[%s435] ss:$8 sm:$0xf]
    %s437 = scalar_lea.vmem [#allocation0], 66
    %v438 = vld [vmem:[%s437] ss:$8 sm:$0xf0]
    %vm439 = vcmask 1047556
    %v440 = vsel %vm439, %v438, %v436
    %441 = vrot.lane.b32.xlu0 %v440, 32
    %v442 = vpop.permute.xlu0 %441
    %vm443 = vcmask 392448
    %s444 = scalar_lea.vmem %s1, 8
    %445 = vst.msk [vmem:[%s444] sm:$0xff] %vm443, %v442
    %s446 = scalar_lea.vmem [#allocation0], 322
    %v447 = vld [vmem:[%s446] ss:$8 sm:$0xf]
    %s448 = scalar_lea.vmem [#allocation0], 322
    %v449 = vld [vmem:[%s448] ss:$8 sm:$0xf0]
    %vm450 = vcmask 1047556
    %v451 = vsel %vm450, %v449, %v447
    %452 = vrot.lane.b32.xlu0 %v451, 32
    %v453 = vpop.permute.xlu0 %452
    %vm454 = vcmask 392448
    %s455 = scalar_lea.vmem %s1, 40
    %456 = vst.msk [vmem:[%s455] sm:$0xff] %vm454, %v453
    %s457 = scalar_lea.vmem [#allocation0], 130
    %v458 = vld [vmem:[%s457] ss:$8 sm:$0xf]
    %s459 = scalar_lea.vmem [#allocation0], 130
    %v460 = vld [vmem:[%s459] ss:$8 sm:$0xf0]
    %vm461 = vcmask 1047556
    %v462 = vsel %vm461, %v460, %v458
    %463 = vrot.lane.b32.xlu0 %v462, 32
    %v464 = vpop.permute.xlu0 %463
    %vm465 = vcmask 392448
    %s466 = scalar_lea.vmem %s1, 16
    %467 = vst.msk [vmem:[%s466] sm:$0xff] %vm465, %v464
    %s468 = scalar_lea.vmem [#allocation0], 386
    %v469 = vld [vmem:[%s468] ss:$8 sm:$0xf]
    %s470 = scalar_lea.vmem [#allocation0], 386
    %v471 = vld [vmem:[%s470] ss:$8 sm:$0xf0]
    %vm472 = vcmask 1047556
    %v473 = vsel %vm472, %v471, %v469
    %474 = vrot.lane.b32.xlu0 %v473, 32
    %v475 = vpop.permute.xlu0 %474
    %vm476 = vcmask 392448
    %s477 = scalar_lea.vmem %s1, 48
    %478 = vst.msk [vmem:[%s477] sm:$0xff] %vm476, %v475
    %s479 = scalar_lea.vmem [#allocation0], 194
    %v480 = vld [vmem:[%s479] ss:$8 sm:$0xf]
    %s481 = scalar_lea.vmem [#allocation0], 194
    %v482 = vld [vmem:[%s481] ss:$8 sm:$0xf0]
    %vm483 = vcmask 1047556
    %v484 = vsel %vm483, %v482, %v480
    %485 = vrot.lane.b32.xlu0 %v484, 32
    %v486 = vpop.permute.xlu0 %485
    %vm487 = vcmask 392448
    %s488 = scalar_lea.vmem %s1, 24
    %489 = vst.msk [vmem:[%s488] sm:$0xff] %vm487, %v486
    %s490 = scalar_lea.vmem [#allocation0], 450
    %v491 = vld [vmem:[%s490] ss:$8 sm:$0xf]
    %s492 = scalar_lea.vmem [#allocation0], 450
    %v493 = vld [vmem:[%s492] ss:$8 sm:$0xf0]
    %vm494 = vcmask 1047556
    %v495 = vsel %vm494, %v493, %v491
    %496 = vrot.lane.b32.xlu0 %v495, 32
    %v497 = vpop.permute.xlu0 %496
    %vm498 = vcmask 392448
    %s499 = scalar_lea.vmem %s1, 56
    %500 = vst.msk [vmem:[%s499] sm:$0xff] %vm498, %v497
    %s501 = scalar_lea.vmem [#allocation0], 1
    %v502 = vld [vmem:[%s501] ss:$8 sm:$0xf]
    %s503 = scalar_lea.vmem [#allocation0], 1
    %v504 = vld [vmem:[%s503] ss:$8 sm:$0xf0]
    %vm505 = vcmask 1047556
    %v506 = vsel %vm505, %v504, %v502
    %507 = vrot.lane.b32.xlu0 %v506, 16
    %v508 = vpop.permute.xlu0 %507
    %vm509 = vcmask 261248
    %510 = vst.msk [vmem:[%s1] sm:$0xff] %vm509, %v508
    %s511 = scalar_lea.vmem [#allocation0], 257
    %v512 = vld [vmem:[%s511] ss:$8 sm:$0xf]
    %s513 = scalar_lea.vmem [#allocation0], 257
    %v514 = vld [vmem:[%s513] ss:$8 sm:$0xf0]
    %vm515 = vcmask 1047556
    %v516 = vsel %vm515, %v514, %v512
    %517 = vrot.lane.b32.xlu0 %v516, 16
    %v518 = vpop.permute.xlu0 %517
    %vm519 = vcmask 261248
    %s520 = scalar_lea.vmem %s1, 32
    %521 = vst.msk [vmem:[%s520] sm:$0xff] %vm519, %v518
    %s522 = scalar_lea.vmem [#allocation0], 65
    %v523 = vld [vmem:[%s522] ss:$8 sm:$0xf]
    %s524 = scalar_lea.vmem [#allocation0], 65
    %v525 = vld [vmem:[%s524] ss:$8 sm:$0xf0]
    %vm526 = vcmask 1047556
    %v527 = vsel %vm526, %v525, %v523
    %528 = vrot.lane.b32.xlu0 %v527, 16
    %v529 = vpop.permute.xlu0 %528
    %vm530 = vcmask 261248
    %s531 = scalar_lea.vmem %s1, 8
    %532 = vst.msk [vmem:[%s531] sm:$0xff] %vm530, %v529
    %s533 = scalar_lea.vmem [#allocation0], 321
    %v534 = vld [vmem:[%s533] ss:$8 sm:$0xf]
    %s535 = scalar_lea.vmem [#allocation0], 321
    %v536 = vld [vmem:[%s535] ss:$8 sm:$0xf0]
    %vm537 = vcmask 1047556
    %v538 = vsel %vm537, %v536, %v534
    %539 = vrot.lane.b32.xlu0 %v538, 16
    %v540 = vpop.permute.xlu0 %539
    %vm541 = vcmask 261248
    %s542 = scalar_lea.vmem %s1, 40
    %543 = vst.msk [vmem:[%s542] sm:$0xff] %vm541, %v540
    %s544 = scalar_lea.vmem [#allocation0], 129
    %v545 = vld [vmem:[%s544] ss:$8 sm:$0xf]
    %s546 = scalar_lea.vmem [#allocation0], 129
    %v547 = vld [vmem:[%s546] ss:$8 sm:$0xf0]
    %vm548 = vcmask 1047556
    %v549 = vsel %vm548, %v547, %v545
    %550 = vrot.lane.b32.xlu0 %v549, 16
    %v551 = vpop.permute.xlu0 %550
    %vm552 = vcmask 261248
    %s553 = scalar_lea.vmem %s1, 16
    %554 = vst.msk [vmem:[%s553] sm:$0xff] %vm552, %v551
    %s555 = scalar_lea.vmem [#allocation0], 385
    %v556 = vld [vmem:[%s555] ss:$8 sm:$0xf]
    %s557 = scalar_lea.vmem [#allocation0], 385
    %v558 = vld [vmem:[%s557] ss:$8 sm:$0xf0]
    %vm559 = vcmask 1047556
    %v560 = vsel %vm559, %v558, %v556
    %561 = vrot.lane.b32.xlu0 %v560, 16
    %v562 = vpop.permute.xlu0 %561
    %vm563 = vcmask 261248
    %s564 = scalar_lea.vmem %s1, 48
    %565 = vst.msk [vmem:[%s564] sm:$0xff] %vm563, %v562
    %s566 = scalar_lea.vmem [#allocation0], 193
    %v567 = vld [vmem:[%s566] ss:$8 sm:$0xf]
    %s568 = scalar_lea.vmem [#allocation0], 193
    %v569 = vld [vmem:[%s568] ss:$8 sm:$0xf0]
    %vm570 = vcmask 1047556
    %v571 = vsel %vm570, %v569, %v567
    %572 = vrot.lane.b32.xlu0 %v571, 16
    %v573 = vpop.permute.xlu0 %572
    %vm574 = vcmask 261248
    %s575 = scalar_lea.vmem %s1, 24
    %576 = vst.msk [vmem:[%s575] sm:$0xff] %vm574, %v573
    %s577 = scalar_lea.vmem [#allocation0], 449
    %v578 = vld [vmem:[%s577] ss:$8 sm:$0xf]
    %s579 = scalar_lea.vmem [#allocation0], 449
    %v580 = vld [vmem:[%s579] ss:$8 sm:$0xf0]
    %vm581 = vcmask 1047556
    %v582 = vsel %vm581, %v580, %v578
    %583 = vrot.lane.b32.xlu0 %v582, 16
    %v584 = vpop.permute.xlu0 %583
    %vm585 = vcmask 261248
    %s586 = scalar_lea.vmem %s1, 56
    %587 = vst.msk [vmem:[%s586] sm:$0xff] %vm585, %v584

// kernel: decoder_forward.8
$region0: #{decoder_forward.8}
  #allocation0 [shape = 'u32[]', space=smem, size = 0x4, offset = 0x4, fixed_abs, tag = 'smem constant byte address 0x4 - core index']
  #allocation1 [shape = 'u32[72,128]{1,0:T(1,128)}', space=vmem, size = 0x9000, scoped, tag = 'internal scratch']
  %s0 = inlined_call_operand.vmem [shape: bf16[32,576], index: 0, kind: input, shape index: {}]
  %s1 = inlined_call_operand.vmem [shape: bf16[576,128], index: 1, kind: input, shape index: {}]
  %s2 = inlined_call_operand.vmem [shape: f32[1,128], index: 2, kind: input, shape index: {}]
  %s3 = inlined_call_operand.vmem [shape: f32[1,128], index: 3, kind: input, shape index: {}]
  %s4 = inlined_call_operand.vmem [shape: f32[128,128], index: 4, kind: input, shape index: {}]
  %s5 = inlined_call_operand.vmem [shape: bf16[32,128], index: 5, kind: output, shape index: {}]
  %s6 = sld [smem:[#allocation0]]
  $region30: #{decoder_forward.8} parent=0
    _
  %s8 = ssub.s32 1, %s6
  %s9 = scalar_select 0, %s8, %s6
  // Predicated region
  $region2: #{decoder_forward.8} parent=0 // pred_check
    _
  $region3: #{decoder_forward.8} parent=0 // pred_check_branch
    %11 = sbr.rel (0) target = $region5
  $region4: #{decoder_forward.8} parent=0 // pred_region
    _
  $region5: #{decoder_forward.8} parent=0 // pred_fallthru
    _
  // Predicated region
  $region6: #{decoder_forward.8} parent=0 // pred_check
    _
  $region7: #{decoder_forward.8} parent=0 // pred_check_branch
    %13 = sbr.rel (0) target = $region9
  $region8: #{decoder_forward.8} parent=0 // pred_region
    _
  $region9: #{decoder_forward.8} parent=0 // pred_fallthru
    _
  // Predicated region
  $region10: #{decoder_forward.8} parent=0 // pred_check
    _
  $region11: #{decoder_forward.8} parent=0 // pred_check_branch
    %15 = sbr.rel (0) target = $region13
  $region12: #{decoder_forward.8} parent=0 // pred_region
    _
  $region13: #{decoder_forward.8} parent=0 // pred_fallthru
    _
  // Predicated region
  $region14: #{decoder_forward.8} parent=0 // pred_check
    _
  $region15: #{decoder_forward.8} parent=0 // pred_check_branch
    %17 = sbr.rel (0) target = $region17
  $region16: #{decoder_forward.8} parent=0 // pred_region
    _
  $region17: #{decoder_forward.8} parent=0 // pred_fallthru
    _
  // Predicated region
  $region18: #{decoder_forward.8} parent=0 // pred_check
    _
  $region19: #{decoder_forward.8} parent=0 // pred_check_branch
    %19 = sbr.rel (0) target = $region21
  $region20: #{decoder_forward.8} parent=0 // pred_region
    _
  $region21: #{decoder_forward.8} parent=0 // pred_fallthru
    _
  %v21 = vld [vmem:[%s0] sm:$0xff]
  %v22 = vld [vmem:[%s0 + $0x8] sm:$0xff]
  %v23 = vld [vmem:[%s0 + $0x10] sm:$0xf]
  %v24 = vld [vmem:[%s0 + $0x14] sm:$0xff]
  %v25 = vld [vmem:[%s0 + $0x1c] sm:$0xff]
  %v26 = vld [vmem:[%s0 + $0x24] sm:$0xf]
  %v27 = vld [vmem:[%s0 + $0x28] sm:$0xff]
  %v28 = vld [vmem:[%s0 + $0x30] sm:$0xff]
  %v29 = vld [vmem:[%s0 + $0x38] sm:$0xf]
  %v30 = vld [vmem:[%s0 + $0x3c] sm:$0xff]
  %v31 = vld [vmem:[%s0 + $0x44] sm:$0xff]
  %v32 = vld [vmem:[%s0 + $0x4c] sm:$0xf]
  %v33 = vld [vmem:[%s1] sm:$0xf]
  %v34 = vld [vmem:[%s1 + $0x4] sm:$0xf]
  %v35 = vld [vmem:[%s1 + $0x8] sm:$0xf]
  %v36 = vld [vmem:[%s1 + $0xc] sm:$0xf]
  %v37 = vld [vmem:[%s1 + $0x10] sm:$0xf]
  %v38 = vld [vmem:[%s1 + $0x14] sm:$0xf]
  %v39 = vld [vmem:[%s1 + $0x18] sm:$0xf]
  %v40 = vld [vmem:[%s1 + $0x1c] sm:$0xf]
  %v41 = vld [vmem:[%s1 + $0x20] sm:$0xf]
  %v42 = vld [vmem:[%s1 + $0x24] sm:$0xf]
  %v43 = vld [vmem:[%s1 + $0x28] sm:$0xf]
  %v44 = vld [vmem:[%s1 + $0x2c] sm:$0xf]
  %v45 = vld [vmem:[%s1 + $0x30] sm:$0xf]
  %v46 = vld [vmem:[%s1 + $0x34] sm:$0xf]
  %v47 = vld [vmem:[%s1 + $0x38] sm:$0xf]
  %v48 = vld [vmem:[%s1 + $0x3c] sm:$0xf]
  %v49 = vld [vmem:[%s1 + $0x40] sm:$0xf]
  %v50 = vld [vmem:[%s1 + $0x44] sm:$0xf]
  %v51 = vld [vmem:[%s1 + $0x48] sm:$0xf]
  %v52 = vld [vmem:[%s1 + $0x4c] sm:$0xf]
  %v53 = vld [vmem:[%s1 + $0x50] sm:$0xf]
  %v54 = vld [vmem:[%s1 + $0x54] sm:$0xf]
  %v55 = vld [vmem:[%s1 + $0x58] sm:$0xf]
  %v56 = vld [vmem:[%s1 + $0x5c] sm:$0xf]
  %v57 = vld [vmem:[%s1 + $0x60] sm:$0xf]
  %v58 = vld [vmem:[%s1 + $0x64] sm:$0xf]
  %v59 = vld [vmem:[%s1 + $0x68] sm:$0xf]
  %v60 = vld [vmem:[%s1 + $0x6c] sm:$0xf]
  %v61 = vld [vmem:[%s1 + $0x70] sm:$0xf]
  %v62 = vld [vmem:[%s1 + $0x74] sm:$0xf]
  %v63 = vld [vmem:[%s1 + $0x78] sm:$0xf]
  %v64 = vld [vmem:[%s1 + $0x7c] sm:$0xf]
  %v65 = vld [vmem:[%s1 + $0x80] sm:$0xf]
  %v66 = vld [vmem:[%s1 + $0x84] sm:$0xf]
  %v67 = vld [vmem:[%s1 + $0x88] sm:$0xf]
  %v68 = vld [vmem:[%s1 + $0x8c] sm:$0xf]
  %v69 = vld [vmem:[%s1 + $0x90] sm:$0xf]
  %v70 = vld [vmem:[%s1 + $0x94] sm:$0xf]
  %v71 = vld [vmem:[%s1 + $0x98] sm:$0xf]
  %v72 = vld [vmem:[%s1 + $0x9c] sm:$0xf]
  %v73 = vld [vmem:[%s1 + $0xa0] sm:$0xf]
  %v74 = vld [vmem:[%s1 + $0xa4] sm:$0xf]
  %v75 = vld [vmem:[%s1 + $0xa8] sm:$0xf]
  %v76 = vld [vmem:[%s1 + $0xac] sm:$0xf]
  %v77 = vld [vmem:[%s1 + $0xb0] sm:$0xf]
  %v78 = vld [vmem:[%s1 + $0xb4] sm:$0xf]
  %v79 = vld [vmem:[%s1 + $0xb8] sm:$0xf]
  %v80 = vld [vmem:[%s1 + $0xbc] sm:$0xf]
  %v81 = vld [vmem:[%s1 + $0xc0] sm:$0xf]
  %v82 = vld [vmem:[%s1 + $0xc4] sm:$0xf]
  %v83 = vld [vmem:[%s1 + $0xc8] sm:$0xf]
  %v84 = vld [vmem:[%s1 + $0xcc] sm:$0xf]
  %v85 = vld [vmem:[%s1 + $0xd0] sm:$0xf]
  %v86 = vld [vmem:[%s1 + $0xd4] sm:$0xf]
  %v87 = vld [vmem:[%s1 + $0xd8] sm:$0xf]
  %v88 = vld [vmem:[%s1 + $0xdc] sm:$0xf]
  %v89 = vld [vmem:[%s1 + $0xe0] sm:$0xf]
  %v90 = vld [vmem:[%s1 + $0xe4] sm:$0xf]
  %v91 = vld [vmem:[%s1 + $0xe8] sm:$0xf]
  %v92 = vld [vmem:[%s1 + $0xec] sm:$0xf]
  %v93 = vld [vmem:[%s1 + $0xf0] sm:$0xf]
  %v94 = vld [vmem:[%s1 + $0xf4] sm:$0xf]
  %v95 = vld [vmem:[%s1 + $0xf8] sm:$0xf]
  %v96 = vld [vmem:[%s1 + $0xfc] sm:$0xf]
  %v97 = vld [vmem:[%s1 + $0x100] sm:$0xf]
  %v98 = vld [vmem:[%s1 + $0x104] sm:$0xf]
  %v99 = vld [vmem:[%s1 + $0x108] sm:$0xf]
  %v100 = vld [vmem:[%s1 + $0x10c] sm:$0xf]
  %v101 = vld [vmem:[%s1 + $0x110] sm:$0xf]
  %v102 = vld [vmem:[%s1 + $0x114] sm:$0xf]
  %v103 = vld [vmem:[%s1 + $0x118] sm:$0xf]
  %v104 = vld [vmem:[%s1 + $0x11c] sm:$0xf]
  %v117 = vunpack.c.l.b16 %v21
  %v118 = vunpack.c.h.b16 %v21
  %v119 = vunpack.c.l.b16 %v22
  %v120 = vunpack.c.h.b16 %v22
  %v121 = vunpack.c.l.b16 %v23
  %v122 = vunpack.c.l.b16 %v24
  %v123 = vunpack.c.h.b16 %v24
  %v124 = vunpack.c.l.b16 %v25
  %v125 = vunpack.c.h.b16 %v25
  %v126 = vunpack.c.l.b16 %v26
  %v127 = vunpack.c.l.b16 %v27
  %v128 = vunpack.c.h.b16 %v27
  %v129 = vunpack.c.l.b16 %v28
  %v130 = vunpack.c.h.b16 %v28
  %v131 = vunpack.c.l.b16 %v29
  %v132 = vunpack.c.l.b16 %v30
  %v133 = vunpack.c.h.b16 %v30
  %v134 = vunpack.c.l.b16 %v31
  %v135 = vunpack.c.h.b16 %v31
  %v136 = vunpack.c.l.b16 %v32
  %v137 = vpack.c.b16 %v122, %v117
  %v138 = vpack.c.b16 %v123, %v118
  %v139 = vpack.c.b16 %v124, %v119
  %v140 = vpack.c.b16 %v125, %v120
  %v141 = vpack.c.b16 %v126, %v121
  %v142 = vpack.c.b16 %v132, %v127
  %v143 = vpack.c.b16 %v133, %v128
  %v144 = vpack.c.b16 %v134, %v129
  %v145 = vpack.c.b16 %v135, %v130
  %v146 = vpack.c.b16 %v136, %v131
  %v227 = vunpack.c.l.b16 %v33
  %v228 = vunpack.c.l.b16 %v34
  %v229 = vunpack.c.l.b16 %v35
  %v230 = vunpack.c.l.b16 %v36
  %v231 = vunpack.c.l.b16 %v37
  %v232 = vunpack.c.l.b16 %v38
  %v233 = vunpack.c.l.b16 %v39
  %v234 = vunpack.c.l.b16 %v40
  %v235 = vunpack.c.l.b16 %v41
  %v236 = vunpack.c.l.b16 %v42
  %v237 = vunpack.c.l.b16 %v43
  %v238 = vunpack.c.l.b16 %v44
  %v239 = vunpack.c.l.b16 %v45
  %v240 = vunpack.c.l.b16 %v46
  %v241 = vunpack.c.l.b16 %v47
  %v242 = vunpack.c.l.b16 %v48
  %v243 = vunpack.c.l.b16 %v49
  %v244 = vunpack.c.l.b16 %v50
  %v245 = vunpack.c.l.b16 %v51
  %v246 = vunpack.c.l.b16 %v52
  %v247 = vunpack.c.l.b16 %v53
  %v248 = vunpack.c.l.b16 %v54
  %v249 = vunpack.c.l.b16 %v55
  %v250 = vunpack.c.l.b16 %v56
  %v251 = vunpack.c.l.b16 %v57
  %v252 = vunpack.c.l.b16 %v58
  %v253 = vunpack.c.l.b16 %v59
  %v254 = vunpack.c.l.b16 %v60
  %v255 = vunpack.c.l.b16 %v61
  %v256 = vunpack.c.l.b16 %v62
  %v257 = vunpack.c.l.b16 %v63
  %v258 = vunpack.c.l.b16 %v64
  %v259 = vunpack.c.l.b16 %v65
  %v260 = vunpack.c.l.b16 %v66
  %v261 = vunpack.c.l.b16 %v67
  %v262 = vunpack.c.l.b16 %v68
  %v263 = vunpack.c.l.b16 %v69
  %v264 = vunpack.c.l.b16 %v70
  %v265 = vunpack.c.l.b16 %v71
  %v266 = vunpack.c.l.b16 %v72
  %v267 = vunpack.c.l.b16 %v73
  %v268 = vunpack.c.l.b16 %v74
  %v269 = vunpack.c.l.b16 %v75
  %v270 = vunpack.c.l.b16 %v76
  %v271 = vunpack.c.l.b16 %v77
  %v272 = vunpack.c.l.b16 %v78
  %v273 = vunpack.c.l.b16 %v79
  %v274 = vunpack.c.l.b16 %v80
  %v275 = vunpack.c.l.b16 %v81
  %v276 = vunpack.c.l.b16 %v82
  %v277 = vunpack.c.l.b16 %v83
  %v278 = vunpack.c.l.b16 %v84
  %v279 = vunpack.c.l.b16 %v85
  %v280 = vunpack.c.l.b16 %v86
  %v281 = vunpack.c.l.b16 %v87
  %v282 = vunpack.c.l.b16 %v88
  %v283 = vunpack.c.l.b16 %v89
  %v284 = vunpack.c.l.b16 %v90
  %v285 = vunpack.c.l.b16 %v91
  %v286 = vunpack.c.l.b16 %v92
  %v287 = vunpack.c.l.b16 %v93
  %v288 = vunpack.c.l.b16 %v94
  %v289 = vunpack.c.l.b16 %v95
  %v290 = vunpack.c.l.b16 %v96
  %v291 = vunpack.c.l.b16 %v97
  %v292 = vunpack.c.l.b16 %v98
  %v293 = vunpack.c.l.b16 %v99
  %v294 = vunpack.c.l.b16 %v100
  %v295 = vunpack.c.l.b16 %v101
  %v296 = vunpack.c.l.b16 %v102
  %v297 = vunpack.c.l.b16 %v103
  %v298 = vunpack.c.l.b16 %v104
  %v299 = vpack.c.b16 %v228, %v227
  %v300 = vpack.c.b16 %v230, %v229
  %v301 = vpack.c.b16 %v232, %v231
  %v302 = vpack.c.b16 %v234, %v233
  %v303 = vpack.c.b16 %v236, %v235
  %v304 = vpack.c.b16 %v238, %v237
  %v305 = vpack.c.b16 %v240, %v239
  %v306 = vpack.c.b16 %v242, %v241
  %v307 = vpack.c.b16 %v244, %v243
  %v308 = vpack.c.b16 %v246, %v245
  %v309 = vpack.c.b16 %v248, %v247
  %v310 = vpack.c.b16 %v250, %v249
  %v311 = vpack.c.b16 %v252, %v251
  %v312 = vpack.c.b16 %v254, %v253
  %v313 = vpack.c.b16 %v256, %v255
  %v314 = vpack.c.b16 %v258, %v257
  %v315 = vpack.c.b16 %v260, %v259
  %v316 = vpack.c.b16 %v262, %v261
  %v317 = vpack.c.b16 %v264, %v263
  %v318 = vpack.c.b16 %v266, %v265
  %v319 = vpack.c.b16 %v268, %v267
  %v320 = vpack.c.b16 %v270, %v269
  %v321 = vpack.c.b16 %v272, %v271
  %v322 = vpack.c.b16 %v274, %v273
  %v323 = vpack.c.b16 %v276, %v275
  %v324 = vpack.c.b16 %v278, %v277
  %v325 = vpack.c.b16 %v280, %v279
  %v326 = vpack.c.b16 %v282, %v281
  %v327 = vpack.c.b16 %v284, %v283
  %v328 = vpack.c.b16 %v286, %v285
  %v329 = vpack.c.b16 %v288, %v287
  %v330 = vpack.c.b16 %v290, %v289
  %v331 = vpack.c.b16 %v292, %v291
  %v332 = vpack.c.b16 %v294, %v293
  %v333 = vpack.c.b16 %v296, %v295
  %v334 = vpack.c.b16 %v298, %v297
  %vm371 = vcmask 523264
  %v373 = vsel %vm371, %v141, 0
  %v376 = vsel %vm371, %v146, 0
  %378 = vmatpush.bf16.msra.mxu0 %v306
  %379 = vmatpush.bf16.msra.mxu0 %v305
  %380 = vmatpush.bf16.msra.mxu0 %v304
  %381 = vmatpush.bf16.msra.mxu0 %v303
  %382 = vmatpush.bf16.msra.mxu0 %v302
  %383 = vmatpush.bf16.msra.mxu0 %v301
  %384 = vmatpush.bf16.msra.mxu0 %v300
  %385 = vmatpush.bf16.msra.mxu0 %v299
  %386 = vmatmul.bf16.gmra.mxu0 %v137
  %v387 = vpop.f32.mrf.mxu0
  %v388 = vadd.f32 0.0, %v387
  %v389 = vpop.f32.mrf.mxu0
  %v390 = vadd.f32 0.0, %v389
  %391 = vmatmul.bf16.gmra.mxu0 %v142
  %v392 = vpop.f32.mrf.mxu0
  %v393 = vadd.f32 0.0, %v392
  %v394 = vpop.f32.mrf.mxu0
  %v395 = vadd.f32 0.0, %v394
  %396 = vdwg.mxu0
  %397 = vmatpush.bf16.msra.mxu0 %v314
  %398 = vmatpush.bf16.msra.mxu0 %v313
  %399 = vmatpush.bf16.msra.mxu0 %v312
  %400 = vmatpush.bf16.msra.mxu0 %v311
  %401 = vmatpush.bf16.msra.mxu0 %v310
  %402 = vmatpush.bf16.msra.mxu0 %v309
  %403 = vmatpush.bf16.msra.mxu0 %v308
  %404 = vmatpush.bf16.msra.mxu0 %v307
  %405 = vmatmul.bf16.gmra.mxu0 %v138
  %v406 = vpop.f32.mrf.mxu0
  %v407 = vadd.f32 %v388, %v406
  %v408 = vpop.f32.mrf.mxu0
  %v409 = vadd.f32 %v390, %v408
  %410 = vmatmul.bf16.gmra.mxu0 %v143
  %v411 = vpop.f32.mrf.mxu0
  %v412 = vadd.f32 %v393, %v411
  %v413 = vpop.f32.mrf.mxu0
  %v414 = vadd.f32 %v395, %v413
  %415 = vdwg.mxu0
  %416 = vmatpush.bf16.msra.mxu0 %v322
  %417 = vmatpush.bf16.msra.mxu0 %v321
  %418 = vmatpush.bf16.msra.mxu0 %v320
  %419 = vmatpush.bf16.msra.mxu0 %v319
  %420 = vmatpush.bf16.msra.mxu0 %v318
  %421 = vmatpush.bf16.msra.mxu0 %v317
  %422 = vmatpush.bf16.msra.mxu0 %v316
  %423 = vmatpush.bf16.msra.mxu0 %v315
  %424 = vmatmul.bf16.gmra.mxu0 %v139
  %v425 = vpop.f32.mrf.mxu0
  %v426 = vadd.f32 %v407, %v425
  %v427 = vpop.f32.mrf.mxu0
  %v428 = vadd.f32 %v409, %v427
  %429 = vmatmul.bf16.gmra.mxu0 %v144
  %v430 = vpop.f32.mrf.mxu0
  %v431 = vadd.f32 %v412, %v430
  %v432 = vpop.f32.mrf.mxu0
  %v433 = vadd.f32 %v414, %v432
  %434 = vdwg.mxu0
  %435 = vmatpush.bf16.msra.mxu0 %v330
  %436 = vmatpush.bf16.msra.mxu0 %v329
  %437 = vmatpush.bf16.msra.mxu0 %v328
  %438 = vmatpush.bf16.msra.mxu0 %v327
  %439 = vmatpush.bf16.msra.mxu0 %v326
  %440 = vmatpush.bf16.msra.mxu0 %v325
  %441 = vmatpush.bf16.msra.mxu0 %v324
  %442 = vmatpush.bf16.msra.mxu0 %v323
  %443 = vmatmul.bf16.gmra.mxu0 %v140
  %v444 = vpop.f32.mrf.mxu0
  %v445 = vadd.f32 %v426, %v444
  %v446 = vpop.f32.mrf.mxu0
  %v447 = vadd.f32 %v428, %v446
  %448 = vmatmul.bf16.gmra.mxu0 %v145
  %v449 = vpop.f32.mrf.mxu0
  %v450 = vadd.f32 %v431, %v449
  %v451 = vpop.f32.mrf.mxu0
  %v452 = vadd.f32 %v433, %v451
  %453 = vdwg.mxu0
  %454 = vmatpush.bf16.msra.mxu0 0
  %455 = vmatpush.bf16.msra.mxu0 0
  %456 = vmatpush.bf16.msra.mxu0 0
  %457 = vmatpush.bf16.msra.mxu0 0
  %458 = vmatpush.bf16.msra.mxu0 %v334
  %459 = vmatpush.bf16.msra.mxu0 %v333
  %460 = vmatpush.bf16.msra.mxu0 %v332
  %461 = vmatpush.bf16.msra.mxu0 %v331
  %462 = vmatmul.bf16.gmra.mxu0 %v373
  %v463 = vpop.f32.mrf.mxu0
  %v464 = vadd.f32 %v445, %v463
  %v465 = vpop.f32.mrf.mxu0
  %v466 = vadd.f32 %v447, %v465
  %467 = vmatmul.bf16.gmra.mxu0 %v376
  %v468 = vpop.f32.mrf.mxu0
  %v469 = vadd.f32 %v450, %v468
  %v470 = vpop.f32.mrf.mxu0
  %v471 = vadd.f32 %v452, %v470
  %472 = vdwg.mxu0
  %v473 = vld [vmem:[%s2] sm:$0x1]
  %v474 = vld [vmem:[%s3] sm:$0x1]
  %v475 = vld [vmem:[%s4] sm:$0xff]
  %v476 = vld [vmem:[%s4 + $0x8] sm:$0xff]
  %v477 = vld [vmem:[%s4 + $0x10] sm:$0xff]
  %v478 = vld [vmem:[%s4 + $0x18] sm:$0xff]
  %v479 = vld [vmem:[%s4 + $0x20] sm:$0xff]
  %v480 = vld [vmem:[%s4 + $0x28] sm:$0xff]
  %v481 = vld [vmem:[%s4 + $0x30] sm:$0xff]
  %v482 = vld [vmem:[%s4 + $0x38] sm:$0xff]
  %v483 = vld [vmem:[%s4 + $0x40] sm:$0xff]
  %v484 = vld [vmem:[%s4 + $0x48] sm:$0xff]
  %v485 = vld [vmem:[%s4 + $0x50] sm:$0xff]
  %v486 = vld [vmem:[%s4 + $0x58] sm:$0xff]
  %v487 = vld [vmem:[%s4 + $0x60] sm:$0xff]
  %v488 = vld [vmem:[%s4 + $0x68] sm:$0xff]
  %v489 = vld [vmem:[%s4 + $0x70] sm:$0xff]
  %v490 = vld [vmem:[%s4 + $0x78] sm:$0xff]
  %v491 = vadd.f32 %v464, %v466
  %v492 = vadd.f32 %v491, %v469
  %v493 = vadd.f32 %v492, %v471
  %v494 = vrot.slane %v493, 4
  %v495 = vadd.f32 %v493, %v494
  %v496 = vrot.slane %v495, 2
  %v497 = vadd.f32 %v495, %v496
  %v498 = vrot.slane %v497, 1
  %v499 = vadd.f32 %v497, %v498
  %v500 = vmul.f32 %v464, %v464
  %v501 = vmul.f32 %v466, %v466
  %v502 = vmul.f32 %v469, %v469
  %v503 = vmul.f32 %v471, %v471
  %v504 = vadd.f32 %v500, %v501
  %v505 = vadd.f32 %v504, %v502
  %v506 = vadd.f32 %v505, %v503
  %v507 = vrot.slane %v506, 4
  %v508 = vadd.f32 %v506, %v507
  %v509 = vrot.slane %v508, 2
  %v510 = vadd.f32 %v508, %v509
  %v511 = vrot.slane %v510, 1
  %v512 = vadd.f32 %v510, %v511
  %513 = vmatpush.msra.mxu0 %v490
  %514 = vmatpush.msra.mxu0 %v489
  %515 = vmatpush.msra.mxu0 %v488
  %516 = vmatpush.msra.mxu0 %v487
  %517 = vmatpush.msra.mxu0 %v486
  %518 = vmatpush.msra.mxu0 %v485
  %519 = vmatpush.msra.mxu0 %v484
  %520 = vmatpush.msra.mxu0 %v483
  %521 = vmatpush.msra.mxu0 %v482
  %522 = vmatpush.msra.mxu0 %v481
  %523 = vmatpush.msra.mxu0 %v480
  %524 = vmatpush.msra.mxu0 %v479
  %525 = vmatpush.msra.mxu0 %v478
  %526 = vmatpush.msra.mxu0 %v477
  %527 = vmatpush.msra.mxu0 %v476
  %528 = vmatpush.msra.mxu0 %v475
  %529 = vmatmul.f32.gmra.mxu0 %v499
  %v530 = vpop.f32.mrf.mxu0
  %v531 = vadd.f32 0.0, %v530
  %532 = vdwg.mxu0
  %533 = vmatpush.msra.mxu0 %v490
  %534 = vmatpush.msra.mxu0 %v489
  %535 = vmatpush.msra.mxu0 %v488
  %536 = vmatpush.msra.mxu0 %v487
  %537 = vmatpush.msra.mxu0 %v486
  %538 = vmatpush.msra.mxu0 %v485
  %539 = vmatpush.msra.mxu0 %v484
  %540 = vmatpush.msra.mxu0 %v483
  %541 = vmatpush.msra.mxu0 %v482
  %542 = vmatpush.msra.mxu0 %v481
  %543 = vmatpush.msra.mxu0 %v480
  %544 = vmatpush.msra.mxu0 %v479
  %545 = vmatpush.msra.mxu0 %v478
  %546 = vmatpush.msra.mxu0 %v477
  %547 = vmatpush.msra.mxu0 %v476
  %548 = vmatpush.msra.mxu0 %v475
  %549 = vmatmul.f32.gmra.mxu0 %v512
  %v550 = vpop.f32.mrf.mxu0
  %v551 = vadd.f32 0.0, %v550
  %552 = vdwg.mxu0
  %v553 = vmul.f32 %v531, 0.0078125
  %v554 = vmul.f32 %v551, 0.0078125
  %v555 = vmul.f32 %v553, %v553
  %v556 = vsub.f32 %v554, %v555
  %v557 = vmax.f32 %v556, 0.0
  %v558 = vperm.slane %v553, 0
  %v559 = vsub.f32 %v464, %v558
  %v560 = vsub.f32 %v466, %v558
  %v561 = vsub.f32 %v469, %v558
  %v562 = vsub.f32 %v471, %v558
  %v563 = vadd.f32 %v557, 1e-05
  %v564 = vrsqrt.pop %v563
  %v565 = vmul.f32 %v564, %v563
  %v566 = vmul.f32 %v565, %v564
  %v567 = vmul.f32 0.5, %v566
  %v568 = vsub.f32 1.5, %v567
  %v569 = vmul.f32 %v564, %v568
  %vm570 = vweird.f32 %v563
  %vm571 = vweird.f32 %v564
  %vm572 = vmor %vm570, %vm571
  %v573 = vsel %vm572, %v564, %v569
  %v574 = vperm.slane %v573, 0
  %v575 = vmul.f32 %v559, %v574
  %v576 = vmul.f32 %v560, %v574
  %v577 = vmul.f32 %v561, %v574
  %v578 = vmul.f32 %v562, %v574
  %v580 = vperm.slane %v473, 0
  %v582 = vmul.f32 %v575, %v580
  %v583 = vmul.f32 %v576, %v580
  %v584 = vmul.f32 %v577, %v580
  %v585 = vmul.f32 %v578, %v580
  %v587 = vperm.slane %v474, 0
  %v589 = vadd.f32 %v582, %v587
  %v590 = vadd.f32 %v583, %v587
  %v591 = vadd.f32 %v584, %v587
  %v592 = vadd.f32 %v585, %v587
  %vm593 = vcmp.ge.f32.partialorder %v589, 0.0
  %vm594 = vcmp.ge.f32.partialorder %v590, 0.0
  %vm595 = vcmp.ge.f32.partialorder %v591, 0.0
  %vm596 = vcmp.ge.f32.partialorder %v592, 0.0
  %v597 = vmul.f32 %v589, 0.01
  %v598 = vmul.f32 %v590, 0.01
  %v599 = vmul.f32 %v591, 0.01
  %v600 = vmul.f32 %v592, 0.01
  %v601 = vsel %vm593, %v589, %v597
  %v602 = vsel %vm594, %v590, %v598
  %v603 = vsel %vm595, %v591, %v599
  %v604 = vsel %vm596, %v592, %v600
  %v605 = vpack.c.bf16 %v601, %v601
  %v606 = vpack.c.bf16 %v602, %v602
  %v607 = vpack.c.bf16 %v603, %v603
  %v608 = vpack.c.bf16 %v604, %v604
  %609 = vst [vmem:[%s5] sm:$0xf] %v605
  %610 = vst [vmem:[%s5 + $0x4] sm:$0xf] %v606
  %611 = vst [vmem:[%s5 + $0x8] sm:$0xf] %v607
  %612 = vst [vmem:[%s5 + $0xc] sm:$0xf] %v608
  // Predicated region
  $region22: #{decoder_forward.8} parent=0 // pred_check
    _
  $region23: #{decoder_forward.8} parent=0 // pred_check_branch
    %614 = sbr.rel (0) target = $region25
  $region24: #{decoder_forward.8} parent=0 // pred_region
    _
  $region25: #{decoder_forward.8} parent=0 // pred_fallthru
    _
  // Predicated region
  $region26: #{decoder_forward.8} parent=0 // pred_check
    _
  $region27: #{decoder_forward.8} parent=0 // pred_check_branch
    %616 = sbr.rel (0) target = $region29
  $region28: #{decoder_forward.8} parent=0 // pred_region
    _
  $region29: #{decoder_forward.8} parent=0 // pred_fallthru
    _

// kernel: decoder_forward.9
$region0: #{decoder_forward.9}
  #allocation0 [shape = 'u32[]', space=smem, size = 0x4, offset = 0x4, fixed_abs, tag = 'smem constant byte address 0x4 - core index']
  #allocation1 [shape = 'u32[72,128]{1,0:T(1,128)}', space=vmem, size = 0x9000, scoped, tag = 'internal scratch']
  %s0 = inlined_call_operand.vmem [shape: bf16[128,288], index: 0, kind: input, shape index: {}]
  %s1 = inlined_call_operand.vmem [shape: bf16[288,32], index: 1, kind: input, shape index: {}]
  %s2 = inlined_call_operand.vmem [shape: f32[1,32], index: 2, kind: input, shape index: {}]
  %s3 = inlined_call_operand.vmem [shape: f32[1,32], index: 3, kind: input, shape index: {}]
  %s4 = inlined_call_operand.vmem [shape: bf16[128,32], index: 4, kind: output, shape index: {}]
  %s5 = sld [smem:[#allocation0]]
  $region26: #{decoder_forward.9} parent=0
    _
  %s7 = ssub.s32 1, %s5
  %s8 = scalar_select 0, %s7, %s5
  // Predicated region
  $region2: #{decoder_forward.9} parent=0 // pred_check
    _
  $region3: #{decoder_forward.9} parent=0 // pred_check_branch
    %10 = sbr.rel (0) target = $region5
  $region4: #{decoder_forward.9} parent=0 // pred_region
    _
  $region5: #{decoder_forward.9} parent=0 // pred_fallthru
    _
  // Predicated region
  $region6: #{decoder_forward.9} parent=0 // pred_check
    _
  $region7: #{decoder_forward.9} parent=0 // pred_check_branch
    %12 = sbr.rel (0) target = $region9
  $region8: #{decoder_forward.9} parent=0 // pred_region
    _
  $region9: #{decoder_forward.9} parent=0 // pred_fallthru
    _
  // Predicated region
  $region10: #{decoder_forward.9} parent=0 // pred_check
    _
  $region11: #{decoder_forward.9} parent=0 // pred_check_branch
    %14 = sbr.rel (0) target = $region13
  $region12: #{decoder_forward.9} parent=0 // pred_region
    _
  $region13: #{decoder_forward.9} parent=0 // pred_fallthru
    _
  // Predicated region
  $region14: #{decoder_forward.9} parent=0 // pred_check
    _
  $region15: #{decoder_forward.9} parent=0 // pred_check_branch
    %16 = sbr.rel (0) target = $region17
  $region16: #{decoder_forward.9} parent=0 // pred_region
    _
  $region17: #{decoder_forward.9} parent=0 // pred_fallthru
    _
  %v18 = vld [vmem:[%s0] sm:$0xff]
  %v19 = vld [vmem:[%s0 + $0x8] sm:$0xf]
  %v20 = vld [vmem:[%s0 + $0xc] sm:$0xff]
  %v21 = vld [vmem:[%s0 + $0x14] sm:$0xf]
  %v22 = vld [vmem:[%s0 + $0x18] sm:$0xff]
  %v23 = vld [vmem:[%s0 + $0x20] sm:$0xf]
  %v24 = vld [vmem:[%s0 + $0x24] sm:$0xff]
  %v25 = vld [vmem:[%s0 + $0x2c] sm:$0xf]
  %v26 = vld [vmem:[%s0 + $0x30] sm:$0xff]
  %v27 = vld [vmem:[%s0 + $0x38] sm:$0xf]
  %v28 = vld [vmem:[%s0 + $0x3c] sm:$0xff]
  %v29 = vld [vmem:[%s0 + $0x44] sm:$0xf]
  %v30 = vld [vmem:[%s0 + $0x48] sm:$0xff]
  %v31 = vld [vmem:[%s0 + $0x50] sm:$0xf]
  %v32 = vld [vmem:[%s0 + $0x54] sm:$0xff]
  %v33 = vld [vmem:[%s0 + $0x5c] sm:$0xf]
  %v34 = vld [vmem:[%s0 + $0x60] sm:$0xff]
  %v35 = vld [vmem:[%s0 + $0x68] sm:$0xf]
  %v36 = vld [vmem:[%s0 + $0x6c] sm:$0xff]
  %v37 = vld [vmem:[%s0 + $0x74] sm:$0xf]
  %v38 = vld [vmem:[%s0 + $0x78] sm:$0xff]
  %v39 = vld [vmem:[%s0 + $0x80] sm:$0xf]
  %v40 = vld [vmem:[%s0 + $0x84] sm:$0xff]
  %v41 = vld [vmem:[%s0 + $0x8c] sm:$0xf]
  %v42 = vld [vmem:[%s0 + $0x90] sm:$0xff]
  %v43 = vld [vmem:[%s0 + $0x98] sm:$0xf]
  %v44 = vld [vmem:[%s0 + $0x9c] sm:$0xff]
  %v45 = vld [vmem:[%s0 + $0xa4] sm:$0xf]
  %v46 = vld [vmem:[%s0 + $0xa8] sm:$0xff]
  %v47 = vld [vmem:[%s0 + $0xb0] sm:$0xf]
  %v48 = vld [vmem:[%s0 + $0xb4] sm:$0xff]
  %v49 = vld [vmem:[%s0 + $0xbc] sm:$0xf]
  %v50 = vld [vmem:[%s1] sm:$0xf]
  %v51 = vld [vmem:[%s1 + $0x4] sm:$0xf]
  %v52 = vld [vmem:[%s1 + $0x8] sm:$0xf]
  %v53 = vld [vmem:[%s1 + $0xc] sm:$0xf]
  %v54 = vld [vmem:[%s1 + $0x10] sm:$0xf]
  %v55 = vld [vmem:[%s1 + $0x14] sm:$0xf]
  %v56 = vld [vmem:[%s1 + $0x18] sm:$0xf]
  %v57 = vld [vmem:[%s1 + $0x1c] sm:$0xf]
  %v58 = vld [vmem:[%s1 + $0x20] sm:$0xf]
  %v59 = vld [vmem:[%s1 + $0x24] sm:$0xf]
  %v60 = vld [vmem:[%s1 + $0x28] sm:$0xf]
  %v61 = vld [vmem:[%s1 + $0x2c] sm:$0xf]
  %v62 = vld [vmem:[%s1 + $0x30] sm:$0xf]
  %v63 = vld [vmem:[%s1 + $0x34] sm:$0xf]
  %v64 = vld [vmem:[%s1 + $0x38] sm:$0xf]
  %v65 = vld [vmem:[%s1 + $0x3c] sm:$0xf]
  %v66 = vld [vmem:[%s1 + $0x40] sm:$0xf]
  %v67 = vld [vmem:[%s1 + $0x44] sm:$0xf]
  %v68 = vld [vmem:[%s1 + $0x48] sm:$0xf]
  %v69 = vld [vmem:[%s1 + $0x4c] sm:$0xf]
  %v70 = vld [vmem:[%s1 + $0x50] sm:$0xf]
  %v71 = vld [vmem:[%s1 + $0x54] sm:$0xf]
  %v72 = vld [vmem:[%s1 + $0x58] sm:$0xf]
  %v73 = vld [vmem:[%s1 + $0x5c] sm:$0xf]
  %v74 = vld [vmem:[%s1 + $0x60] sm:$0xf]
  %v75 = vld [vmem:[%s1 + $0x64] sm:$0xf]
  %v76 = vld [vmem:[%s1 + $0x68] sm:$0xf]
  %v77 = vld [vmem:[%s1 + $0x6c] sm:$0xf]
  %v78 = vld [vmem:[%s1 + $0x70] sm:$0xf]
  %v79 = vld [vmem:[%s1 + $0x74] sm:$0xf]
  %v80 = vld [vmem:[%s1 + $0x78] sm:$0xf]
  %v81 = vld [vmem:[%s1 + $0x7c] sm:$0xf]
  %v82 = vld [vmem:[%s1 + $0x80] sm:$0xf]
  %v83 = vld [vmem:[%s1 + $0x84] sm:$0xf]
  %v84 = vld [vmem:[%s1 + $0x88] sm:$0xf]
  %v85 = vld [vmem:[%s1 + $0x8c] sm:$0xf]
  %v118 = vunpack.c.l.b16 %v18
  %v119 = vunpack.c.h.b16 %v18
  %v120 = vunpack.c.l.b16 %v19
  %v121 = vunpack.c.l.b16 %v20
  %v122 = vunpack.c.h.b16 %v20
  %v123 = vunpack.c.l.b16 %v21
  %v124 = vunpack.c.l.b16 %v22
  %v125 = vunpack.c.h.b16 %v22
  %v126 = vunpack.c.l.b16 %v23
  %v127 = vunpack.c.l.b16 %v24
  %v128 = vunpack.c.h.b16 %v24
  %v129 = vunpack.c.l.b16 %v25
  %v130 = vunpack.c.l.b16 %v26
  %v131 = vunpack.c.h.b16 %v26
  %v132 = vunpack.c.l.b16 %v27
  %v133 = vunpack.c.l.b16 %v28
  %v134 = vunpack.c.h.b16 %v28
  %v135 = vunpack.c.l.b16 %v29
  %v136 = vunpack.c.l.b16 %v30
  %v137 = vunpack.c.h.b16 %v30
  %v138 = vunpack.c.l.b16 %v31
  %v139 = vunpack.c.l.b16 %v32
  %v140 = vunpack.c.h.b16 %v32
  %v141 = vunpack.c.l.b16 %v33
  %v142 = vunpack.c.l.b16 %v34
  %v143 = vunpack.c.h.b16 %v34
  %v144 = vunpack.c.l.b16 %v35
  %v145 = vunpack.c.l.b16 %v36
  %v146 = vunpack.c.h.b16 %v36
  %v147 = vunpack.c.l.b16 %v37
  %v148 = vunpack.c.l.b16 %v38
  %v149 = vunpack.c.h.b16 %v38
  %v150 = vunpack.c.l.b16 %v39
  %v151 = vunpack.c.l.b16 %v40
  %v152 = vunpack.c.h.b16 %v40
  %v153 = vunpack.c.l.b16 %v41
  %v154 = vunpack.c.l.b16 %v42
  %v155 = vunpack.c.h.b16 %v42
  %v156 = vunpack.c.l.b16 %v43
  %v157 = vunpack.c.l.b16 %v44
  %v158 = vunpack.c.h.b16 %v44
  %v159 = vunpack.c.l.b16 %v45
  %v160 = vunpack.c.l.b16 %v46
  %v161 = vunpack.c.h.b16 %v46
  %v162 = vunpack.c.l.b16 %v47
  %v163 = vunpack.c.l.b16 %v48
  %v164 = vunpack.c.h.b16 %v48
  %v165 = vunpack.c.l.b16 %v49
  %v166 = vpack.c.b16 %v121, %v118
  %v167 = vpack.c.b16 %v122, %v119
  %v168 = vpack.c.b16 %v123, %v120
  %v169 = vpack.c.b16 %v127, %v124
  %v170 = vpack.c.b16 %v128, %v125
  %v171 = vpack.c.b16 %v129, %v126
  %v172 = vpack.c.b16 %v133, %v130
  %v173 = vpack.c.b16 %v134, %v131
  %v174 = vpack.c.b16 %v135, %v132
  %v175 = vpack.c.b16 %v139, %v136
  %v176 = vpack.c.b16 %v140, %v137
  %v177 = vpack.c.b16 %v141, %v138
  %v178 = vpack.c.b16 %v145, %v142
  %v179 = vpack.c.b16 %v146, %v143
  %v180 = vpack.c.b16 %v147, %v144
  %v181 = vpack.c.b16 %v151, %v148
  %v182 = vpack.c.b16 %v152, %v149
  %v183 = vpack.c.b16 %v153, %v150
  %v184 = vpack.c.b16 %v157, %v154
  %v185 = vpack.c.b16 %v158, %v155
  %v186 = vpack.c.b16 %v159, %v156
  %v187 = vpack.c.b16 %v163, %v160
  %v188 = vpack.c.b16 %v164, %v161
  %v189 = vpack.c.b16 %v165, %v162
  %v242 = vunpack.c.l.b16 %v50
  %v243 = vunpack.c.l.b16 %v51
  %v244 = vunpack.c.l.b16 %v52
  %v245 = vunpack.c.l.b16 %v53
  %v246 = vunpack.c.l.b16 %v54
  %v247 = vunpack.c.l.b16 %v55
  %v248 = vunpack.c.l.b16 %v56
  %v249 = vunpack.c.l.b16 %v57
  %v250 = vunpack.c.l.b16 %v58
  %v251 = vunpack.c.l.b16 %v59
  %v252 = vunpack.c.l.b16 %v60
  %v253 = vunpack.c.l.b16 %v61
  %v254 = vunpack.c.l.b16 %v62
  %v255 = vunpack.c.l.b16 %v63
  %v256 = vunpack.c.l.b16 %v64
  %v257 = vunpack.c.l.b16 %v65
  %v258 = vunpack.c.l.b16 %v66
  %v259 = vunpack.c.l.b16 %v67
  %v260 = vunpack.c.l.b16 %v68
  %v261 = vunpack.c.l.b16 %v69
  %v262 = vunpack.c.l.b16 %v70
  %v263 = vunpack.c.l.b16 %v71
  %v264 = vunpack.c.l.b16 %v72
  %v265 = vunpack.c.l.b16 %v73
  %v266 = vunpack.c.l.b16 %v74
  %v267 = vunpack.c.l.b16 %v75
  %v268 = vunpack.c.l.b16 %v76
  %v269 = vunpack.c.l.b16 %v77
  %v270 = vunpack.c.l.b16 %v78
  %v271 = vunpack.c.l.b16 %v79
  %v272 = vunpack.c.l.b16 %v80
  %v273 = vunpack.c.l.b16 %v81
  %v274 = vunpack.c.l.b16 %v82
  %v275 = vunpack.c.l.b16 %v83
  %v276 = vunpack.c.l.b16 %v84
  %v277 = vunpack.c.l.b16 %v85
  %v278 = vpack.c.b16 %v243, %v242
  %v279 = vpack.c.b16 %v245, %v244
  %v280 = vpack.c.b16 %v247, %v246
  %v281 = vpack.c.b16 %v249, %v248
  %v282 = vpack.c.b16 %v251, %v250
  %v283 = vpack.c.b16 %v253, %v252
  %v284 = vpack.c.b16 %v255, %v254
  %v285 = vpack.c.b16 %v257, %v256
  %v286 = vpack.c.b16 %v259, %v258
  %v287 = vpack.c.b16 %v261, %v260
  %v288 = vpack.c.b16 %v263, %v262
  %v289 = vpack.c.b16 %v265, %v264
  %v290 = vpack.c.b16 %v267, %v266
  %v291 = vpack.c.b16 %v269, %v268
  %v292 = vpack.c.b16 %v271, %v270
  %v293 = vpack.c.b16 %v273, %v272
  %v294 = vpack.c.b16 %v275, %v274
  %v295 = vpack.c.b16 %v277, %v276
  %vm314 = vcmask 261120
  %v316 = vsel %vm314, %v168, 0
  %v319 = vsel %vm314, %v171, 0
  %v322 = vsel %vm314, %v174, 0
  %v325 = vsel %vm314, %v177, 0
  %v328 = vsel %vm314, %v180, 0
  %v331 = vsel %vm314, %v183, 0
  %v334 = vsel %vm314, %v186, 0
  %v337 = vsel %vm314, %v189, 0
  %339 = vmatpush.bf16.msra.mxu0 %v285
  %340 = vmatpush.bf16.msra.mxu0 %v284
  %341 = vmatpush.bf16.msra.mxu0 %v283
  %342 = vmatpush.bf16.msra.mxu0 %v282
  %343 = vmatpush.bf16.msra.mxu0 %v281
  %344 = vmatpush.bf16.msra.mxu0 %v280
  %345 = vmatpush.bf16.msra.mxu0 %v279
  %346 = vmatpush.bf16.msra.mxu0 %v278
  %347 = vmatmul.bf16.gmra.mxu0 %v166
  %v348 = vpop.f32.mrf.mxu0
  %v349 = vadd.f32 0.0, %v348
  %v350 = vpop.f32.mrf.mxu0
  %v351 = vadd.f32 0.0, %v350
  %352 = vmatmul.bf16.gmra.mxu0 %v169
  %v353 = vpop.f32.mrf.mxu0
  %v354 = vadd.f32 0.0, %v353
  %v355 = vpop.f32.mrf.mxu0
  %v356 = vadd.f32 0.0, %v355
  %357 = vmatmul.bf16.gmra.mxu0 %v172
  %v358 = vpop.f32.mrf.mxu0
  %v359 = vadd.f32 0.0, %v358
  %v360 = vpop.f32.mrf.mxu0
  %v361 = vadd.f32 0.0, %v360
  %362 = vmatmul.bf16.gmra.mxu0 %v175
  %v363 = vpop.f32.mrf.mxu0
  %v364 = vadd.f32 0.0, %v363
  %v365 = vpop.f32.mrf.mxu0
  %v366 = vadd.f32 0.0, %v365
  %367 = vmatmul.bf16.gmra.mxu0 %v178
  %v368 = vpop.f32.mrf.mxu0
  %v369 = vadd.f32 0.0, %v368
  %v370 = vpop.f32.mrf.mxu0
  %v371 = vadd.f32 0.0, %v370
  %372 = vmatmul.bf16.gmra.mxu0 %v181
  %v373 = vpop.f32.mrf.mxu0
  %v374 = vadd.f32 0.0, %v373
  %v375 = vpop.f32.mrf.mxu0
  %v376 = vadd.f32 0.0, %v375
  %377 = vmatmul.bf16.gmra.mxu0 %v184
  %v378 = vpop.f32.mrf.mxu0
  %v379 = vadd.f32 0.0, %v378
  %v380 = vpop.f32.mrf.mxu0
  %v381 = vadd.f32 0.0, %v380
  %382 = vmatmul.bf16.gmra.mxu0 %v187
  %v383 = vpop.f32.mrf.mxu0
  %v384 = vadd.f32 0.0, %v383
  %v385 = vpop.f32.mrf.mxu0
  %v386 = vadd.f32 0.0, %v385
  %387 = vdwg.mxu0
  %388 = vmatpush.bf16.msra.mxu0 %v293
  %389 = vmatpush.bf16.msra.mxu0 %v292
  %390 = vmatpush.bf16.msra.mxu0 %v291
  %391 = vmatpush.bf16.msra.mxu0 %v290
  %392 = vmatpush.bf16.msra.mxu0 %v289
  %393 = vmatpush.bf16.msra.mxu0 %v288
  %394 = vmatpush.bf16.msra.mxu0 %v287
  %395 = vmatpush.bf16.msra.mxu0 %v286
  %396 = vmatmul.bf16.gmra.mxu0 %v167
  %v397 = vpop.f32.mrf.mxu0
  %v398 = vadd.f32 %v349, %v397
  %v399 = vpop.f32.mrf.mxu0
  %v400 = vadd.f32 %v351, %v399
  %401 = vmatmul.bf16.gmra.mxu0 %v170
  %v402 = vpop.f32.mrf.mxu0
  %v403 = vadd.f32 %v354, %v402
  %v404 = vpop.f32.mrf.mxu0
  %v405 = vadd.f32 %v356, %v404
  %406 = vmatmul.bf16.gmra.mxu0 %v173
  %v407 = vpop.f32.mrf.mxu0
  %v408 = vadd.f32 %v359, %v407
  %v409 = vpop.f32.mrf.mxu0
  %v410 = vadd.f32 %v361, %v409
  %411 = vmatmul.bf16.gmra.mxu0 %v176
  %v412 = vpop.f32.mrf.mxu0
  %v413 = vadd.f32 %v364, %v412
  %v414 = vpop.f32.mrf.mxu0
  %v415 = vadd.f32 %v366, %v414
  %416 = vmatmul.bf16.gmra.mxu0 %v179
  %v417 = vpop.f32.mrf.mxu0
  %v418 = vadd.f32 %v369, %v417
  %v419 = vpop.f32.mrf.mxu0
  %v420 = vadd.f32 %v371, %v419
  %421 = vmatmul.bf16.gmra.mxu0 %v182
  %v422 = vpop.f32.mrf.mxu0
  %v423 = vadd.f32 %v374, %v422
  %v424 = vpop.f32.mrf.mxu0
  %v425 = vadd.f32 %v376, %v424
  %426 = vmatmul.bf16.gmra.mxu0 %v185
  %v427 = vpop.f32.mrf.mxu0
  %v428 = vadd.f32 %v379, %v427
  %v429 = vpop.f32.mrf.mxu0
  %v430 = vadd.f32 %v381, %v429
  %431 = vmatmul.bf16.gmra.mxu0 %v188
  %v432 = vpop.f32.mrf.mxu0
  %v433 = vadd.f32 %v384, %v432
  %v434 = vpop.f32.mrf.mxu0
  %v435 = vadd.f32 %v386, %v434
  %436 = vdwg.mxu0
  %437 = vmatpush.bf16.msra.mxu0 0
  %438 = vmatpush.bf16.msra.mxu0 0
  %439 = vmatpush.bf16.msra.mxu0 0
  %440 = vmatpush.bf16.msra.mxu0 0
  %441 = vmatpush.bf16.msra.mxu0 0
  %442 = vmatpush.bf16.msra.mxu0 0
  %443 = vmatpush.bf16.msra.mxu0 %v295
  %444 = vmatpush.bf16.msra.mxu0 %v294
  %445 = vmatmul.bf16.gmra.mxu0 %v316
  %v446 = vpop.f32.mrf.mxu0
  %v447 = vadd.f32 %v398, %v446
  %v448 = vpop.f32.mrf.mxu0
  %v449 = vadd.f32 %v400, %v448
  %450 = vmatmul.bf16.gmra.mxu0 %v319
  %v451 = vpop.f32.mrf.mxu0
  %v452 = vadd.f32 %v403, %v451
  %v453 = vpop.f32.mrf.mxu0
  %v454 = vadd.f32 %v405, %v453
  %455 = vmatmul.bf16.gmra.mxu0 %v322
  %v456 = vpop.f32.mrf.mxu0
  %v457 = vadd.f32 %v408, %v456
  %v458 = vpop.f32.mrf.mxu0
  %v459 = vadd.f32 %v410, %v458
  %460 = vmatmul.bf16.gmra.mxu0 %v325
  %v461 = vpop.f32.mrf.mxu0
  %v462 = vadd.f32 %v413, %v461
  %v463 = vpop.f32.mrf.mxu0
  %v464 = vadd.f32 %v415, %v463
  %465 = vmatmul.bf16.gmra.mxu0 %v328
  %v466 = vpop.f32.mrf.mxu0
  %v467 = vadd.f32 %v418, %v466
  %v468 = vpop.f32.mrf.mxu0
  %v469 = vadd.f32 %v420, %v468
  %470 = vmatmul.bf16.gmra.mxu0 %v331
  %v471 = vpop.f32.mrf.mxu0
  %v472 = vadd.f32 %v423, %v471
  %v473 = vpop.f32.mrf.mxu0
  %v474 = vadd.f32 %v425, %v473
  %475 = vmatmul.bf16.gmra.mxu0 %v334
  %v476 = vpop.f32.mrf.mxu0
  %v477 = vadd.f32 %v428, %v476
  %v478 = vpop.f32.mrf.mxu0
  %v479 = vadd.f32 %v430, %v478
  %480 = vmatmul.bf16.gmra.mxu0 %v337
  %v481 = vpop.f32.mrf.mxu0
  %v482 = vadd.f32 %v433, %v481
  %v483 = vpop.f32.mrf.mxu0
  %v484 = vadd.f32 %v435, %v483
  %485 = vdwg.mxu0
  %v486 = vld [vmem:[%s2] sm:$0x1]
  %v487 = vld [vmem:[%s3] sm:$0x1]
  %v488 = vsel %vm314, %v447, 0.0
  %v489 = vsel %vm314, %v449, 0.0
  %v490 = vadd.f32 %v488, %v489
  %v491 = vsel %vm314, %v452, 0.0
  %v492 = vadd.f32 %v490, %v491
  %v493 = vsel %vm314, %v454, 0.0
  %v494 = vadd.f32 %v492, %v493
  %v495 = vsel %vm314, %v457, 0.0
  %v496 = vadd.f32 %v494, %v495
  %v497 = vsel %vm314, %v459, 0.0
  %v498 = vadd.f32 %v496, %v497
  %v499 = vsel %vm314, %v462, 0.0
  %v500 = vadd.f32 %v498, %v499
  %v501 = vsel %vm314, %v464, 0.0
  %v502 = vadd.f32 %v500, %v501
  %v503 = vsel %vm314, %v467, 0.0
  %v504 = vadd.f32 %v502, %v503
  %v505 = vsel %vm314, %v469, 0.0
  %v506 = vadd.f32 %v504, %v505
  %v507 = vsel %vm314, %v472, 0.0
  %v508 = vadd.f32 %v506, %v507
  %v509 = vsel %vm314, %v474, 0.0
  %v510 = vadd.f32 %v508, %v509
  %v511 = vsel %vm314, %v477, 0.0
  %v512 = vadd.f32 %v510, %v511
  %v513 = vsel %vm314, %v479, 0.0
  %v514 = vadd.f32 %v512, %v513
  %v515 = vsel %vm314, %v482, 0.0
  %v516 = vadd.f32 %v514, %v515
  %v517 = vsel %vm314, %v484, 0.0
  %v518 = vadd.f32 %v516, %v517
  %v519 = vrot.slane %v518, 4
  %v520 = vadd.f32 %v518, %v519
  %v521 = vrot.slane %v520, 2
  %v522 = vadd.f32 %v520, %v521
  %v523 = vrot.slane %v522, 1
  %v524 = vadd.f32 %v522, %v523
  %v525 = vmul.f32 %v447, %v447
  %v526 = vmul.f32 %v449, %v449
  %v527 = vmul.f32 %v452, %v452
  %v528 = vmul.f32 %v454, %v454
  %v529 = vmul.f32 %v457, %v457
  %v530 = vmul.f32 %v459, %v459
  %v531 = vmul.f32 %v462, %v462
  %v532 = vmul.f32 %v464, %v464
  %v533 = vmul.f32 %v467, %v467
  %v534 = vmul.f32 %v469, %v469
  %v535 = vmul.f32 %v472, %v472
  %v536 = vmul.f32 %v474, %v474
  %v537 = vmul.f32 %v477, %v477
  %v538 = vmul.f32 %v479, %v479
  %v539 = vmul.f32 %v482, %v482
  %v540 = vmul.f32 %v484, %v484
  %v541 = vsel %vm314, %v525, 0.0
  %v542 = vsel %vm314, %v526, 0.0
  %v543 = vadd.f32 %v541, %v542
  %v544 = vsel %vm314, %v527, 0.0
  %v545 = vadd.f32 %v543, %v544
  %v546 = vsel %vm314, %v528, 0.0
  %v547 = vadd.f32 %v545, %v546
  %v548 = vsel %vm314, %v529, 0.0
  %v549 = vadd.f32 %v547, %v548
  %v550 = vsel %vm314, %v530, 0.0
  %v551 = vadd.f32 %v549, %v550
  %v552 = vsel %vm314, %v531, 0.0
  %v553 = vadd.f32 %v551, %v552
  %v554 = vsel %vm314, %v532, 0.0
  %v555 = vadd.f32 %v553, %v554
  %v556 = vsel %vm314, %v533, 0.0
  %v557 = vadd.f32 %v555, %v556
  %v558 = vsel %vm314, %v534, 0.0
  %v559 = vadd.f32 %v557, %v558
  %v560 = vsel %vm314, %v535, 0.0
  %v561 = vadd.f32 %v559, %v560
  %v562 = vsel %vm314, %v536, 0.0
  %v563 = vadd.f32 %v561, %v562
  %v564 = vsel %vm314, %v537, 0.0
  %v565 = vadd.f32 %v563, %v564
  %v566 = vsel %vm314, %v538, 0.0
  %v567 = vadd.f32 %v565, %v566
  %v568 = vsel %vm314, %v539, 0.0
  %v569 = vadd.f32 %v567, %v568
  %v570 = vsel %vm314, %v540, 0.0
  %v571 = vadd.f32 %v569, %v570
  %v572 = vrot.slane %v571, 4
  %v573 = vadd.f32 %v571, %v572
  %v574 = vrot.slane %v573, 2
  %v575 = vadd.f32 %v573, %v574
  %v576 = vrot.slane %v575, 1
  %v577 = vadd.f32 %v575, %v576
  %v578 = vmul.f32 %v524, 0.0078125
  %v579 = vmul.f32 %v577, 0.0078125
  %v580 = vmul.f32 %v578, %v578
  %v581 = vsub.f32 %v579, %v580
  %v582 = vmax.f32 %v581, 0.0
  %v583 = vsub.f32 %v447, %v578
  %v584 = vsub.f32 %v449, %v578
  %v585 = vsub.f32 %v452, %v578
  %v586 = vsub.f32 %v454, %v578
  %v587 = vsub.f32 %v457, %v578
  %v588 = vsub.f32 %v459, %v578
  %v589 = vsub.f32 %v462, %v578
  %v590 = vsub.f32 %v464, %v578
  %v591 = vsub.f32 %v467, %v578
  %v592 = vsub.f32 %v469, %v578
  %v593 = vsub.f32 %v472, %v578
  %v594 = vsub.f32 %v474, %v578
  %v595 = vsub.f32 %v477, %v578
  %v596 = vsub.f32 %v479, %v578
  %v597 = vsub.f32 %v482, %v578
  %v598 = vsub.f32 %v484, %v578
  %v599 = vadd.f32 %v582, 1e-05
  %v600 = vrsqrt.pop %v599
  %v601 = vmul.f32 %v600, %v599
  %v602 = vmul.f32 %v601, %v600
  %v603 = vmul.f32 0.5, %v602
  %v604 = vsub.f32 1.5, %v603
  %v605 = vmul.f32 %v600, %v604
  %vm606 = vweird.f32 %v599
  %vm607 = vweird.f32 %v600
  %vm608 = vmor %vm606, %vm607
  %v609 = vsel %vm608, %v600, %v605
  %v610 = vmul.f32 %v583, %v609
  %v611 = vmul.f32 %v584, %v609
  %v612 = vmul.f32 %v585, %v609
  %v613 = vmul.f32 %v586, %v609
  %v614 = vmul.f32 %v587, %v609
  %v615 = vmul.f32 %v588, %v609
  %v616 = vmul.f32 %v589, %v609
  %v617 = vmul.f32 %v590, %v609
  %v618 = vmul.f32 %v591, %v609
  %v619 = vmul.f32 %v592, %v609
  %v620 = vmul.f32 %v593, %v609
  %v621 = vmul.f32 %v594, %v609
  %v622 = vmul.f32 %v595, %v609
  %v623 = vmul.f32 %v596, %v609
  %v624 = vmul.f32 %v597, %v609
  %v625 = vmul.f32 %v598, %v609
  %v627 = vperm.slane %v486, 0
  %v629 = vmul.f32 %v610, %v627
  %v630 = vmul.f32 %v611, %v627
  %v631 = vmul.f32 %v612, %v627
  %v632 = vmul.f32 %v613, %v627
  %v633 = vmul.f32 %v614, %v627
  %v634 = vmul.f32 %v615, %v627
  %v635 = vmul.f32 %v616, %v627
  %v636 = vmul.f32 %v617, %v627
  %v637 = vmul.f32 %v618, %v627
  %v638 = vmul.f32 %v619, %v627
  %v639 = vmul.f32 %v620, %v627
  %v640 = vmul.f32 %v621, %v627
  %v641 = vmul.f32 %v622, %v627
  %v642 = vmul.f32 %v623, %v627
  %v643 = vmul.f32 %v624, %v627
  %v644 = vmul.f32 %v625, %v627
  %v646 = vperm.slane %v487, 0
  %v648 = vadd.f32 %v629, %v646
  %v649 = vadd.f32 %v630, %v646
  %v650 = vadd.f32 %v631, %v646
  %v651 = vadd.f32 %v632, %v646
  %v652 = vadd.f32 %v633, %v646
  %v653 = vadd.f32 %v634, %v646
  %v654 = vadd.f32 %v635, %v646
  %v655 = vadd.f32 %v636, %v646
  %v656 = vadd.f32 %v637, %v646
  %v657 = vadd.f32 %v638, %v646
  %v658 = vadd.f32 %v639, %v646
  %v659 = vadd.f32 %v640, %v646
  %v660 = vadd.f32 %v641, %v646
  %v661 = vadd.f32 %v642, %v646
  %v662 = vadd.f32 %v643, %v646
  %v663 = vadd.f32 %v644, %v646
  %vm664 = vcmp.ge.f32.partialorder %v648, 0.0
  %vm665 = vcmp.ge.f32.partialorder %v649, 0.0
  %vm666 = vcmp.ge.f32.partialorder %v650, 0.0
  %vm667 = vcmp.ge.f32.partialorder %v651, 0.0
  %vm668 = vcmp.ge.f32.partialorder %v652, 0.0
  %vm669 = vcmp.ge.f32.partialorder %v653, 0.0
  %vm670 = vcmp.ge.f32.partialorder %v654, 0.0
  %vm671 = vcmp.ge.f32.partialorder %v655, 0.0
  %vm672 = vcmp.ge.f32.partialorder %v656, 0.0
  %vm673 = vcmp.ge.f32.partialorder %v657, 0.0
  %vm674 = vcmp.ge.f32.partialorder %v658, 0.0
  %vm675 = vcmp.ge.f32.partialorder %v659, 0.0
  %vm676 = vcmp.ge.f32.partialorder %v660, 0.0
  %vm677 = vcmp.ge.f32.partialorder %v661, 0.0
  %vm678 = vcmp.ge.f32.partialorder %v662, 0.0
  %vm679 = vcmp.ge.f32.partialorder %v663, 0.0
  %v680 = vmul.f32 %v648, 0.01
  %v681 = vmul.f32 %v649, 0.01
  %v682 = vmul.f32 %v650, 0.01
  %v683 = vmul.f32 %v651, 0.01
  %v684 = vmul.f32 %v652, 0.01
  %v685 = vmul.f32 %v653, 0.01
  %v686 = vmul.f32 %v654, 0.01
  %v687 = vmul.f32 %v655, 0.01
  %v688 = vmul.f32 %v656, 0.01
  %v689 = vmul.f32 %v657, 0.01
  %v690 = vmul.f32 %v658, 0.01
  %v691 = vmul.f32 %v659, 0.01
  %v692 = vmul.f32 %v660, 0.01
  %v693 = vmul.f32 %v661, 0.01
  %v694 = vmul.f32 %v662, 0.01
  %v695 = vmul.f32 %v663, 0.01
  %v696 = vsel %vm664, %v648, %v680
  %v697 = vsel %vm665, %v649, %v681
  %v698 = vsel %vm666, %v650, %v682
  %v699 = vsel %vm667, %v651, %v683
  %v700 = vsel %vm668, %v652, %v684
  %v701 = vsel %vm669, %v653, %v685
  %v702 = vsel %vm670, %v654, %v686
  %v703 = vsel %vm671, %v655, %v687
  %v704 = vsel %vm672, %v656, %v688
  %v705 = vsel %vm673, %v657, %v689
  %v706 = vsel %vm674, %v658, %v690
  %v707 = vsel %vm675, %v659, %v691
  %v708 = vsel %vm676, %v660, %v692
  %v709 = vsel %vm677, %v661, %v693
  %v710 = vsel %vm678, %v662, %v694
  %v711 = vsel %vm679, %v663, %v695
  %v712 = vpack.c.bf16 %v696, %v696
  %v713 = vpack.c.bf16 %v697, %v697
  %v714 = vpack.c.bf16 %v698, %v698
  %v715 = vpack.c.bf16 %v699, %v699
  %v716 = vpack.c.bf16 %v700, %v700
  %v717 = vpack.c.bf16 %v701, %v701
  %v718 = vpack.c.bf16 %v702, %v702
  %v719 = vpack.c.bf16 %v703, %v703
  %v720 = vpack.c.bf16 %v704, %v704
  %v721 = vpack.c.bf16 %v705, %v705
  %v722 = vpack.c.bf16 %v706, %v706
  %v723 = vpack.c.bf16 %v707, %v707
  %v724 = vpack.c.bf16 %v708, %v708
  %v725 = vpack.c.bf16 %v709, %v709
  %v726 = vpack.c.bf16 %v710, %v710
  %v727 = vpack.c.bf16 %v711, %v711
  %vm728 = vcmask 257024
  %729 = vst.msk [vmem:[%s4] sm:$0xf] %vm728, %v712
  %730 = vst.msk [vmem:[%s4 + $0x4] sm:$0xf] %vm728, %v713
  %731 = vst.msk [vmem:[%s4 + $0x8] sm:$0xf] %vm728, %v714
  %732 = vst.msk [vmem:[%s4 + $0xc] sm:$0xf] %vm728, %v715
  %733 = vst.msk [vmem:[%s4 + $0x10] sm:$0xf] %vm728, %v716
  %734 = vst.msk [vmem:[%s4 + $0x14] sm:$0xf] %vm728, %v717
  %735 = vst.msk [vmem:[%s4 + $0x18] sm:$0xf] %vm728, %v718
  %736 = vst.msk [vmem:[%s4 + $0x1c] sm:$0xf] %vm728, %v719
  %737 = vst.msk [vmem:[%s4 + $0x20] sm:$0xf] %vm728, %v720
  %738 = vst.msk [vmem:[%s4 + $0x24] sm:$0xf] %vm728, %v721
  %739 = vst.msk [vmem:[%s4 + $0x28] sm:$0xf] %vm728, %v722
  %740 = vst.msk [vmem:[%s4 + $0x2c] sm:$0xf] %vm728, %v723
  %741 = vst.msk [vmem:[%s4 + $0x30] sm:$0xf] %vm728, %v724
  %742 = vst.msk [vmem:[%s4 + $0x34] sm:$0xf] %vm728, %v725
  %743 = vst.msk [vmem:[%s4 + $0x38] sm:$0xf] %vm728, %v726
  %744 = vst.msk [vmem:[%s4 + $0x3c] sm:$0xf] %vm728, %v727
  // Predicated region
  $region18: #{decoder_forward.9} parent=0 // pred_check
    _
  $region19: #{decoder_forward.9} parent=0 // pred_check_branch
    %746 = sbr.rel (0) target = $region21
  $region20: #{decoder_forward.9} parent=0 // pred_region
    _
  $region21: #{decoder_forward.9} parent=0 // pred_fallthru
    _
  // Predicated region
  $region22: #{decoder_forward.9} parent=0 // pred_check
    _
  $region23: #{decoder_forward.9} parent=0 // pred_check_branch
    %748 = sbr.rel (0) target = $region25
  $region24: #{decoder_forward.9} parent=0 // pred_region
    _
  $region25: #{decoder_forward.9} parent=0 // pred_fallthru
    _

// kernel: decoder_forward.10
$region0: #{decoder_forward.10}
  #allocation0 [shape = 'u32[]', space=smem, size = 0x4, offset = 0x4, fixed_abs, tag = 'smem constant byte address 0x4 - core index']
  #allocation1 [shape = 'u32[72,128]{1,0:T(1,128)}', space=vmem, size = 0x9000, scoped, tag = 'internal scratch']
  %s0 = inlined_call_operand.vmem [shape: bf16[128,288], index: 0, kind: input, shape index: {}]
  %s1 = inlined_call_operand.vmem [shape: bf16[288,64], index: 1, kind: input, shape index: {}]
  %s2 = inlined_call_operand.vmem [shape: f32[1,64], index: 2, kind: input, shape index: {}]
  %s3 = inlined_call_operand.vmem [shape: f32[1,64], index: 3, kind: input, shape index: {}]
  %s4 = inlined_call_operand.vmem [shape: f32[64,64], index: 4, kind: input, shape index: {}]
  %s5 = inlined_call_operand.vmem [shape: bf16[128,64], index: 5, kind: output, shape index: {}]
  %s6 = sld [smem:[#allocation0]]
  $region30: #{decoder_forward.10} parent=0
    _
  %s8 = ssub.s32 1, %s6
  %s9 = scalar_select 0, %s8, %s6
  // Predicated region
  $region2: #{decoder_forward.10} parent=0 // pred_check
    _
  $region3: #{decoder_forward.10} parent=0 // pred_check_branch
    %11 = sbr.rel (0) target = $region5
  $region4: #{decoder_forward.10} parent=0 // pred_region
    _
  $region5: #{decoder_forward.10} parent=0 // pred_fallthru
    _
  // Predicated region
  $region6: #{decoder_forward.10} parent=0 // pred_check
    _
  $region7: #{decoder_forward.10} parent=0 // pred_check_branch
    %13 = sbr.rel (0) target = $region9
  $region8: #{decoder_forward.10} parent=0 // pred_region
    _
  $region9: #{decoder_forward.10} parent=0 // pred_fallthru
    _
  // Predicated region
  $region10: #{decoder_forward.10} parent=0 // pred_check
    _
  $region11: #{decoder_forward.10} parent=0 // pred_check_branch
    %15 = sbr.rel (0) target = $region13
  $region12: #{decoder_forward.10} parent=0 // pred_region
    _
  $region13: #{decoder_forward.10} parent=0 // pred_fallthru
    _
  // Predicated region
  $region14: #{decoder_forward.10} parent=0 // pred_check
    _
  $region15: #{decoder_forward.10} parent=0 // pred_check_branch
    %17 = sbr.rel (0) target = $region17
  $region16: #{decoder_forward.10} parent=0 // pred_region
    _
  $region17: #{decoder_forward.10} parent=0 // pred_fallthru
    _
  // Predicated region
  $region18: #{decoder_forward.10} parent=0 // pred_check
    _
  $region19: #{decoder_forward.10} parent=0 // pred_check_branch
    %19 = sbr.rel (0) target = $region21
  $region20: #{decoder_forward.10} parent=0 // pred_region
    _
  $region21: #{decoder_forward.10} parent=0 // pred_fallthru
    _
  %v21 = vld [vmem:[%s0] sm:$0xff]
  %v22 = vld [vmem:[%s0 + $0x8] sm:$0xf]
  %v23 = vld [vmem:[%s0 + $0xc] sm:$0xff]
  %v24 = vld [vmem:[%s0 + $0x14] sm:$0xf]
  %v25 = vld [vmem:[%s0 + $0x18] sm:$0xff]
  %v26 = vld [vmem:[%s0 + $0x20] sm:$0xf]
  %v27 = vld [vmem:[%s0 + $0x24] sm:$0xff]
  %v28 = vld [vmem:[%s0 + $0x2c] sm:$0xf]
  %v29 = vld [vmem:[%s0 + $0x30] sm:$0xff]
  %v30 = vld [vmem:[%s0 + $0x38] sm:$0xf]
  %v31 = vld [vmem:[%s0 + $0x3c] sm:$0xff]
  %v32 = vld [vmem:[%s0 + $0x44] sm:$0xf]
  %v33 = vld [vmem:[%s0 + $0x48] sm:$0xff]
  %v34 = vld [vmem:[%s0 + $0x50] sm:$0xf]
  %v35 = vld [vmem:[%s0 + $0x54] sm:$0xff]
  %v36 = vld [vmem:[%s0 + $0x5c] sm:$0xf]
  %v37 = vld [vmem:[%s0 + $0x60] sm:$0xff]
  %v38 = vld [vmem:[%s0 + $0x68] sm:$0xf]
  %v39 = vld [vmem:[%s0 + $0x6c] sm:$0xff]
  %v40 = vld [vmem:[%s0 + $0x74] sm:$0xf]
  %v41 = vld [vmem:[%s0 + $0x78] sm:$0xff]
  %v42 = vld [vmem:[%s0 + $0x80] sm:$0xf]
  %v43 = vld [vmem:[%s0 + $0x84] sm:$0xff]
  %v44 = vld [vmem:[%s0 + $0x8c] sm:$0xf]
  %v45 = vld [vmem:[%s0 + $0x90] sm:$0xff]
  %v46 = vld [vmem:[%s0 + $0x98] sm:$0xf]
  %v47 = vld [vmem:[%s0 + $0x9c] sm:$0xff]
  %v48 = vld [vmem:[%s0 + $0xa4] sm:$0xf]
  %v49 = vld [vmem:[%s0 + $0xa8] sm:$0xff]
  %v50 = vld [vmem:[%s0 + $0xb0] sm:$0xf]
  %v51 = vld [vmem:[%s0 + $0xb4] sm:$0xff]
  %v52 = vld [vmem:[%s0 + $0xbc] sm:$0xf]
  %v53 = vld [vmem:[%s1] sm:$0xf]
  %v54 = vld [vmem:[%s1 + $0x4] sm:$0xf]
  %v55 = vld [vmem:[%s1 + $0x8] sm:$0xf]
  %v56 = vld [vmem:[%s1 + $0xc] sm:$0xf]
  %v57 = vld [vmem:[%s1 + $0x10] sm:$0xf]
  %v58 = vld [vmem:[%s1 + $0x14] sm:$0xf]
  %v59 = vld [vmem:[%s1 + $0x18] sm:$0xf]
  %v60 = vld [vmem:[%s1 + $0x1c] sm:$0xf]
  %v61 = vld [vmem:[%s1 + $0x20] sm:$0xf]
  %v62 = vld [vmem:[%s1 + $0x24] sm:$0xf]
  %v63 = vld [vmem:[%s1 + $0x28] sm:$0xf]
  %v64 = vld [vmem:[%s1 + $0x2c] sm:$0xf]
  %v65 = vld [vmem:[%s1 + $0x30] sm:$0xf]
  %v66 = vld [vmem:[%s1 + $0x34] sm:$0xf]
  %v67 = vld [vmem:[%s1 + $0x38] sm:$0xf]
  %v68 = vld [vmem:[%s1 + $0x3c] sm:$0xf]
  %v69 = vld [vmem:[%s1 + $0x40] sm:$0xf]
  %v70 = vld [vmem:[%s1 + $0x44] sm:$0xf]
  %v71 = vld [vmem:[%s1 + $0x48] sm:$0xf]
  %v72 = vld [vmem:[%s1 + $0x4c] sm:$0xf]
  %v73 = vld [vmem:[%s1 + $0x50] sm:$0xf]
  %v74 = vld [vmem:[%s1 + $0x54] sm:$0xf]
  %v75 = vld [vmem:[%s1 + $0x58] sm:$0xf]
  %v76 = vld [vmem:[%s1 + $0x5c] sm:$0xf]
  %v77 = vld [vmem:[%s1 + $0x60] sm:$0xf]
  %v78 = vld [vmem:[%s1 + $0x64] sm:$0xf]
  %v79 = vld [vmem:[%s1 + $0x68] sm:$0xf]
  %v80 = vld [vmem:[%s1 + $0x6c] sm:$0xf]
  %v81 = vld [vmem:[%s1 + $0x70] sm:$0xf]
  %v82 = vld [vmem:[%s1 + $0x74] sm:$0xf]
  %v83 = vld [vmem:[%s1 + $0x78] sm:$0xf]
  %v84 = vld [vmem:[%s1 + $0x7c] sm:$0xf]
  %v85 = vld [vmem:[%s1 + $0x80] sm:$0xf]
  %v86 = vld [vmem:[%s1 + $0x84] sm:$0xf]
  %v87 = vld [vmem:[%s1 + $0x88] sm:$0xf]
  %v88 = vld [vmem:[%s1 + $0x8c] sm:$0xf]
  %v121 = vunpack.c.l.b16 %v21
  %v122 = vunpack.c.h.b16 %v21
  %v123 = vunpack.c.l.b16 %v22
  %v124 = vunpack.c.l.b16 %v23
  %v125 = vunpack.c.h.b16 %v23
  %v126 = vunpack.c.l.b16 %v24
  %v127 = vunpack.c.l.b16 %v25
  %v128 = vunpack.c.h.b16 %v25
  %v129 = vunpack.c.l.b16 %v26
  %v130 = vunpack.c.l.b16 %v27
  %v131 = vunpack.c.h.b16 %v27
  %v132 = vunpack.c.l.b16 %v28
  %v133 = vunpack.c.l.b16 %v29
  %v134 = vunpack.c.h.b16 %v29
  %v135 = vunpack.c.l.b16 %v30
  %v136 = vunpack.c.l.b16 %v31
  %v137 = vunpack.c.h.b16 %v31
  %v138 = vunpack.c.l.b16 %v32
  %v139 = vunpack.c.l.b16 %v33
  %v140 = vunpack.c.h.b16 %v33
  %v141 = vunpack.c.l.b16 %v34
  %v142 = vunpack.c.l.b16 %v35
  %v143 = vunpack.c.h.b16 %v35
  %v144 = vunpack.c.l.b16 %v36
  %v145 = vunpack.c.l.b16 %v37
  %v146 = vunpack.c.h.b16 %v37
  %v147 = vunpack.c.l.b16 %v38
  %v148 = vunpack.c.l.b16 %v39
  %v149 = vunpack.c.h.b16 %v39
  %v150 = vunpack.c.l.b16 %v40
  %v151 = vunpack.c.l.b16 %v41
  %v152 = vunpack.c.h.b16 %v41
  %v153 = vunpack.c.l.b16 %v42
  %v154 = vunpack.c.l.b16 %v43
  %v155 = vunpack.c.h.b16 %v43
  %v156 = vunpack.c.l.b16 %v44
  %v157 = vunpack.c.l.b16 %v45
  %v158 = vunpack.c.h.b16 %v45
  %v159 = vunpack.c.l.b16 %v46
  %v160 = vunpack.c.l.b16 %v47
  %v161 = vunpack.c.h.b16 %v47
  %v162 = vunpack.c.l.b16 %v48
  %v163 = vunpack.c.l.b16 %v49
  %v164 = vunpack.c.h.b16 %v49
  %v165 = vunpack.c.l.b16 %v50
  %v166 = vunpack.c.l.b16 %v51
  %v167 = vunpack.c.h.b16 %v51
  %v168 = vunpack.c.l.b16 %v52
  %v169 = vpack.c.b16 %v124, %v121
  %v170 = vpack.c.b16 %v125, %v122
  %v171 = vpack.c.b16 %v126, %v123
  %v172 = vpack.c.b16 %v130, %v127
  %v173 = vpack.c.b16 %v131, %v128
  %v174 = vpack.c.b16 %v132, %v129
  %v175 = vpack.c.b16 %v136, %v133
  %v176 = vpack.c.b16 %v137, %v134
  %v177 = vpack.c.b16 %v138, %v135
  %v178 = vpack.c.b16 %v142, %v139
  %v179 = vpack.c.b16 %v143, %v140
  %v180 = vpack.c.b16 %v144, %v141
  %v181 = vpack.c.b16 %v148, %v145
  %v182 = vpack.c.b16 %v149, %v146
  %v183 = vpack.c.b16 %v150, %v147
  %v184 = vpack.c.b16 %v154, %v151
  %v185 = vpack.c.b16 %v155, %v152
  %v186 = vpack.c.b16 %v156, %v153
  %v187 = vpack.c.b16 %v160, %v157
  %v188 = vpack.c.b16 %v161, %v158
  %v189 = vpack.c.b16 %v162, %v159
  %v190 = vpack.c.b16 %v166, %v163
  %v191 = vpack.c.b16 %v167, %v164
  %v192 = vpack.c.b16 %v168, %v165
  %v245 = vunpack.c.l.b16 %v53
  %v246 = vunpack.c.l.b16 %v54
  %v247 = vunpack.c.l.b16 %v55
  %v248 = vunpack.c.l.b16 %v56
  %v249 = vunpack.c.l.b16 %v57
  %v250 = vunpack.c.l.b16 %v58
  %v251 = vunpack.c.l.b16 %v59
  %v252 = vunpack.c.l.b16 %v60
  %v253 = vunpack.c.l.b16 %v61
  %v254 = vunpack.c.l.b16 %v62
  %v255 = vunpack.c.l.b16 %v63
  %v256 = vunpack.c.l.b16 %v64
  %v257 = vunpack.c.l.b16 %v65
  %v258 = vunpack.c.l.b16 %v66
  %v259 = vunpack.c.l.b16 %v67
  %v260 = vunpack.c.l.b16 %v68
  %v261 = vunpack.c.l.b16 %v69
  %v262 = vunpack.c.l.b16 %v70
  %v263 = vunpack.c.l.b16 %v71
  %v264 = vunpack.c.l.b16 %v72
  %v265 = vunpack.c.l.b16 %v73
  %v266 = vunpack.c.l.b16 %v74
  %v267 = vunpack.c.l.b16 %v75
  %v268 = vunpack.c.l.b16 %v76
  %v269 = vunpack.c.l.b16 %v77
  %v270 = vunpack.c.l.b16 %v78
  %v271 = vunpack.c.l.b16 %v79
  %v272 = vunpack.c.l.b16 %v80
  %v273 = vunpack.c.l.b16 %v81
  %v274 = vunpack.c.l.b16 %v82
  %v275 = vunpack.c.l.b16 %v83
  %v276 = vunpack.c.l.b16 %v84
  %v277 = vunpack.c.l.b16 %v85
  %v278 = vunpack.c.l.b16 %v86
  %v279 = vunpack.c.l.b16 %v87
  %v280 = vunpack.c.l.b16 %v88
  %v281 = vpack.c.b16 %v246, %v245
  %v282 = vpack.c.b16 %v248, %v247
  %v283 = vpack.c.b16 %v250, %v249
  %v284 = vpack.c.b16 %v252, %v251
  %v285 = vpack.c.b16 %v254, %v253
  %v286 = vpack.c.b16 %v256, %v255
  %v287 = vpack.c.b16 %v258, %v257
  %v288 = vpack.c.b16 %v260, %v259
  %v289 = vpack.c.b16 %v262, %v261
  %v290 = vpack.c.b16 %v264, %v263
  %v291 = vpack.c.b16 %v266, %v265
  %v292 = vpack.c.b16 %v268, %v267
  %v293 = vpack.c.b16 %v270, %v269
  %v294 = vpack.c.b16 %v272, %v271
  %v295 = vpack.c.b16 %v274, %v273
  %v296 = vpack.c.b16 %v276, %v275
  %v297 = vpack.c.b16 %v278, %v277
  %v298 = vpack.c.b16 %v280, %v279
  %vm317 = vcmask 261120
  %v319 = vsel %vm317, %v171, 0
  %v322 = vsel %vm317, %v174, 0
  %v325 = vsel %vm317, %v177, 0
  %v328 = vsel %vm317, %v180, 0
  %v331 = vsel %vm317, %v183, 0
  %v334 = vsel %vm317, %v186, 0
  %v337 = vsel %vm317, %v189, 0
  %v340 = vsel %vm317, %v192, 0
  %342 = vmatpush.bf16.msra.mxu0 %v288
  %343 = vmatpush.bf16.msra.mxu0 %v287
  %344 = vmatpush.bf16.msra.mxu0 %v286
  %345 = vmatpush.bf16.msra.mxu0 %v285
  %346 = vmatpush.bf16.msra.mxu0 %v284
  %347 = vmatpush.bf16.msra.mxu0 %v283
  %348 = vmatpush.bf16.msra.mxu0 %v282
  %349 = vmatpush.bf16.msra.mxu0 %v281
  %350 = vmatmul.bf16.gmra.mxu0 %v169
  %v351 = vpop.f32.mrf.mxu0
  %v352 = vadd.f32 0.0, %v351
  %v353 = vpop.f32.mrf.mxu0
  %v354 = vadd.f32 0.0, %v353
  %355 = vmatmul.bf16.gmra.mxu0 %v172
  %v356 = vpop.f32.mrf.mxu0
  %v357 = vadd.f32 0.0, %v356
  %v358 = vpop.f32.mrf.mxu0
  %v359 = vadd.f32 0.0, %v358
  %360 = vmatmul.bf16.gmra.mxu0 %v175
  %v361 = vpop.f32.mrf.mxu0
  %v362 = vadd.f32 0.0, %v361
  %v363 = vpop.f32.mrf.mxu0
  %v364 = vadd.f32 0.0, %v363
  %365 = vmatmul.bf16.gmra.mxu0 %v178
  %v366 = vpop.f32.mrf.mxu0
  %v367 = vadd.f32 0.0, %v366
  %v368 = vpop.f32.mrf.mxu0
  %v369 = vadd.f32 0.0, %v368
  %370 = vmatmul.bf16.gmra.mxu0 %v181
  %v371 = vpop.f32.mrf.mxu0
  %v372 = vadd.f32 0.0, %v371
  %v373 = vpop.f32.mrf.mxu0
  %v374 = vadd.f32 0.0, %v373
  %375 = vmatmul.bf16.gmra.mxu0 %v184
  %v376 = vpop.f32.mrf.mxu0
  %v377 = vadd.f32 0.0, %v376
  %v378 = vpop.f32.mrf.mxu0
  %v379 = vadd.f32 0.0, %v378
  %380 = vmatmul.bf16.gmra.mxu0 %v187
  %v381 = vpop.f32.mrf.mxu0
  %v382 = vadd.f32 0.0, %v381
  %v383 = vpop.f32.mrf.mxu0
  %v384 = vadd.f32 0.0, %v383
  %385 = vmatmul.bf16.gmra.mxu0 %v190
  %v386 = vpop.f32.mrf.mxu0
  %v387 = vadd.f32 0.0, %v386
  %v388 = vpop.f32.mrf.mxu0
  %v389 = vadd.f32 0.0, %v388
  %390 = vdwg.mxu0
  %391 = vmatpush.bf16.msra.mxu0 %v296
  %392 = vmatpush.bf16.msra.mxu0 %v295
  %393 = vmatpush.bf16.msra.mxu0 %v294
  %394 = vmatpush.bf16.msra.mxu0 %v293
  %395 = vmatpush.bf16.msra.mxu0 %v292
  %396 = vmatpush.bf16.msra.mxu0 %v291
  %397 = vmatpush.bf16.msra.mxu0 %v290
  %398 = vmatpush.bf16.msra.mxu0 %v289
  %399 = vmatmul.bf16.gmra.mxu0 %v170
  %v400 = vpop.f32.mrf.mxu0
  %v401 = vadd.f32 %v352, %v400
  %v402 = vpop.f32.mrf.mxu0
  %v403 = vadd.f32 %v354, %v402
  %404 = vmatmul.bf16.gmra.mxu0 %v173
  %v405 = vpop.f32.mrf.mxu0
  %v406 = vadd.f32 %v357, %v405
  %v407 = vpop.f32.mrf.mxu0
  %v408 = vadd.f32 %v359, %v407
  %409 = vmatmul.bf16.gmra.mxu0 %v176
  %v410 = vpop.f32.mrf.mxu0
  %v411 = vadd.f32 %v362, %v410
  %v412 = vpop.f32.mrf.mxu0
  %v413 = vadd.f32 %v364, %v412
  %414 = vmatmul.bf16.gmra.mxu0 %v179
  %v415 = vpop.f32.mrf.mxu0
  %v416 = vadd.f32 %v367, %v415
  %v417 = vpop.f32.mrf.mxu0
  %v418 = vadd.f32 %v369, %v417
  %419 = vmatmul.bf16.gmra.mxu0 %v182
  %v420 = vpop.f32.mrf.mxu0
  %v421 = vadd.f32 %v372, %v420
  %v422 = vpop.f32.mrf.mxu0
  %v423 = vadd.f32 %v374, %v422
  %424 = vmatmul.bf16.gmra.mxu0 %v185
  %v425 = vpop.f32.mrf.mxu0
  %v426 = vadd.f32 %v377, %v425
  %v427 = vpop.f32.mrf.mxu0
  %v428 = vadd.f32 %v379, %v427
  %429 = vmatmul.bf16.gmra.mxu0 %v188
  %v430 = vpop.f32.mrf.mxu0
  %v431 = vadd.f32 %v382, %v430
  %v432 = vpop.f32.mrf.mxu0
  %v433 = vadd.f32 %v384, %v432
  %434 = vmatmul.bf16.gmra.mxu0 %v191
  %v435 = vpop.f32.mrf.mxu0
  %v436 = vadd.f32 %v387, %v435
  %v437 = vpop.f32.mrf.mxu0
  %v438 = vadd.f32 %v389, %v437
  %439 = vdwg.mxu0
  %440 = vmatpush.bf16.msra.mxu0 0
  %441 = vmatpush.bf16.msra.mxu0 0
  %442 = vmatpush.bf16.msra.mxu0 0
  %443 = vmatpush.bf16.msra.mxu0 0
  %444 = vmatpush.bf16.msra.mxu0 0
  %445 = vmatpush.bf16.msra.mxu0 0
  %446 = vmatpush.bf16.msra.mxu0 %v298
  %447 = vmatpush.bf16.msra.mxu0 %v297
  %448 = vmatmul.bf16.gmra.mxu0 %v319
  %v449 = vpop.f32.mrf.mxu0
  %v450 = vadd.f32 %v401, %v449
  %v451 = vpop.f32.mrf.mxu0
  %v452 = vadd.f32 %v403, %v451
  %453 = vmatmul.bf16.gmra.mxu0 %v322
  %v454 = vpop.f32.mrf.mxu0
  %v455 = vadd.f32 %v406, %v454
  %v456 = vpop.f32.mrf.mxu0
  %v457 = vadd.f32 %v408, %v456
  %458 = vmatmul.bf16.gmra.mxu0 %v325
  %v459 = vpop.f32.mrf.mxu0
  %v460 = vadd.f32 %v411, %v459
  %v461 = vpop.f32.mrf.mxu0
  %v462 = vadd.f32 %v413, %v461
  %463 = vmatmul.bf16.gmra.mxu0 %v328
  %v464 = vpop.f32.mrf.mxu0
  %v465 = vadd.f32 %v416, %v464
  %v466 = vpop.f32.mrf.mxu0
  %v467 = vadd.f32 %v418, %v466
  %468 = vmatmul.bf16.gmra.mxu0 %v331
  %v469 = vpop.f32.mrf.mxu0
  %v470 = vadd.f32 %v421, %v469
  %v471 = vpop.f32.mrf.mxu0
  %v472 = vadd.f32 %v423, %v471
  %473 = vmatmul.bf16.gmra.mxu0 %v334
  %v474 = vpop.f32.mrf.mxu0
  %v475 = vadd.f32 %v426, %v474
  %v476 = vpop.f32.mrf.mxu0
  %v477 = vadd.f32 %v428, %v476
  %478 = vmatmul.bf16.gmra.mxu0 %v337
  %v479 = vpop.f32.mrf.mxu0
  %v480 = vadd.f32 %v431, %v479
  %v481 = vpop.f32.mrf.mxu0
  %v482 = vadd.f32 %v433, %v481
  %483 = vmatmul.bf16.gmra.mxu0 %v340
  %v484 = vpop.f32.mrf.mxu0
  %v485 = vadd.f32 %v436, %v484
  %v486 = vpop.f32.mrf.mxu0
  %v487 = vadd.f32 %v438, %v486
  %488 = vdwg.mxu0
  %v489 = vld [vmem:[%s2] sm:$0x1]
  %v490 = vld [vmem:[%s3] sm:$0x1]
  %v491 = vld [vmem:[%s4] sm:$0xff]
  %v492 = vld [vmem:[%s4 + $0x8] sm:$0xff]
  %v493 = vld [vmem:[%s4 + $0x10] sm:$0xff]
  %v494 = vld [vmem:[%s4 + $0x18] sm:$0xff]
  %v495 = vld [vmem:[%s4 + $0x20] sm:$0xff]
  %v496 = vld [vmem:[%s4 + $0x28] sm:$0xff]
  %v497 = vld [vmem:[%s4 + $0x30] sm:$0xff]
  %v498 = vld [vmem:[%s4 + $0x38] sm:$0xff]
  %vm499 = vcmask 523264
  %v500 = vsel %vm499, %v450, 0.0
  %v501 = vsel %vm499, %v452, 0.0
  %v502 = vadd.f32 %v500, %v501
  %v503 = vsel %vm499, %v455, 0.0
  %v504 = vadd.f32 %v502, %v503
  %v505 = vsel %vm499, %v457, 0.0
  %v506 = vadd.f32 %v504, %v505
  %v507 = vsel %vm499, %v460, 0.0
  %v508 = vadd.f32 %v506, %v507
  %v509 = vsel %vm499, %v462, 0.0
  %v510 = vadd.f32 %v508, %v509
  %v511 = vsel %vm499, %v465, 0.0
  %v512 = vadd.f32 %v510, %v511
  %v513 = vsel %vm499, %v467, 0.0
  %v514 = vadd.f32 %v512, %v513
  %v515 = vsel %vm499, %v470, 0.0
  %v516 = vadd.f32 %v514, %v515
  %v517 = vsel %vm499, %v472, 0.0
  %v518 = vadd.f32 %v516, %v517
  %v519 = vsel %vm499, %v475, 0.0
  %v520 = vadd.f32 %v518, %v519
  %v521 = vsel %vm499, %v477, 0.0
  %v522 = vadd.f32 %v520, %v521
  %v523 = vsel %vm499, %v480, 0.0
  %v524 = vadd.f32 %v522, %v523
  %v525 = vsel %vm499, %v482, 0.0
  %v526 = vadd.f32 %v524, %v525
  %v527 = vsel %vm499, %v485, 0.0
  %v528 = vadd.f32 %v526, %v527
  %v529 = vsel %vm499, %v487, 0.0
  %v530 = vadd.f32 %v528, %v529
  %v531 = vrot.slane %v530, 4
  %v532 = vadd.f32 %v530, %v531
  %v533 = vrot.slane %v532, 2
  %v534 = vadd.f32 %v532, %v533
  %v535 = vrot.slane %v534, 1
  %v536 = vadd.f32 %v534, %v535
  %v537 = vmul.f32 %v450, %v450
  %v538 = vmul.f32 %v452, %v452
  %v539 = vmul.f32 %v455, %v455
  %v540 = vmul.f32 %v457, %v457
  %v541 = vmul.f32 %v460, %v460
  %v542 = vmul.f32 %v462, %v462
  %v543 = vmul.f32 %v465, %v465
  %v544 = vmul.f32 %v467, %v467
  %v545 = vmul.f32 %v470, %v470
  %v546 = vmul.f32 %v472, %v472
  %v547 = vmul.f32 %v475, %v475
  %v548 = vmul.f32 %v477, %v477
  %v549 = vmul.f32 %v480, %v480
  %v550 = vmul.f32 %v482, %v482
  %v551 = vmul.f32 %v485, %v485
  %v552 = vmul.f32 %v487, %v487
  %v553 = vsel %vm499, %v537, 0.0
  %v554 = vsel %vm499, %v538, 0.0
  %v555 = vadd.f32 %v553, %v554
  %v556 = vsel %vm499, %v539, 0.0
  %v557 = vadd.f32 %v555, %v556
  %v558 = vsel %vm499, %v540, 0.0
  %v559 = vadd.f32 %v557, %v558
  %v560 = vsel %vm499, %v541, 0.0
  %v561 = vadd.f32 %v559, %v560
  %v562 = vsel %vm499, %v542, 0.0
  %v563 = vadd.f32 %v561, %v562
  %v564 = vsel %vm499, %v543, 0.0
  %v565 = vadd.f32 %v563, %v564
  %v566 = vsel %vm499, %v544, 0.0
  %v567 = vadd.f32 %v565, %v566
  %v568 = vsel %vm499, %v545, 0.0
  %v569 = vadd.f32 %v567, %v568
  %v570 = vsel %vm499, %v546, 0.0
  %v571 = vadd.f32 %v569, %v570
  %v572 = vsel %vm499, %v547, 0.0
  %v573 = vadd.f32 %v571, %v572
  %v574 = vsel %vm499, %v548, 0.0
  %v575 = vadd.f32 %v573, %v574
  %v576 = vsel %vm499, %v549, 0.0
  %v577 = vadd.f32 %v575, %v576
  %v578 = vsel %vm499, %v550, 0.0
  %v579 = vadd.f32 %v577, %v578
  %v580 = vsel %vm499, %v551, 0.0
  %v581 = vadd.f32 %v579, %v580
  %v582 = vsel %vm499, %v552, 0.0
  %v583 = vadd.f32 %v581, %v582
  %v584 = vrot.slane %v583, 4
  %v585 = vadd.f32 %v583, %v584
  %v586 = vrot.slane %v585, 2
  %v587 = vadd.f32 %v585, %v586
  %v588 = vrot.slane %v587, 1
  %v589 = vadd.f32 %v587, %v588
  %v591 = vsel %vm499, %v536, 0
  %593 = vmatpush.msra.mxu0 0.0
  %594 = vmatpush.msra.mxu0 0.0
  %595 = vmatpush.msra.mxu0 0.0
  %596 = vmatpush.msra.mxu0 0.0
  %597 = vmatpush.msra.mxu0 0.0
  %598 = vmatpush.msra.mxu0 0.0
  %599 = vmatpush.msra.mxu0 0.0
  %600 = vmatpush.msra.mxu0 0.0
  %601 = vmatpush.msra.mxu0 %v498
  %602 = vmatpush.msra.mxu0 %v497
  %603 = vmatpush.msra.mxu0 %v496
  %604 = vmatpush.msra.mxu0 %v495
  %605 = vmatpush.msra.mxu0 %v494
  %606 = vmatpush.msra.mxu0 %v493
  %607 = vmatpush.msra.mxu0 %v492
  %608 = vmatpush.msra.mxu0 %v491
  %609 = vmatmul.f32.gmra.mxu0 %v591
  %v610 = vpop.f32.mrf.mxu0
  %v611 = vadd.f32 0.0, %v610
  %612 = vdwg.mxu0
  %v614 = vsel %vm499, %v589, 0
  %616 = vmatpush.msra.mxu0 0.0
  %617 = vmatpush.msra.mxu0 0.0
  %618 = vmatpush.msra.mxu0 0.0
  %619 = vmatpush.msra.mxu0 0.0
  %620 = vmatpush.msra.mxu0 0.0
  %621 = vmatpush.msra.mxu0 0.0
  %622 = vmatpush.msra.mxu0 0.0
  %623 = vmatpush.msra.mxu0 0.0
  %624 = vmatpush.msra.mxu0 %v498
  %625 = vmatpush.msra.mxu0 %v497
  %626 = vmatpush.msra.mxu0 %v496
  %627 = vmatpush.msra.mxu0 %v495
  %628 = vmatpush.msra.mxu0 %v494
  %629 = vmatpush.msra.mxu0 %v493
  %630 = vmatpush.msra.mxu0 %v492
  %631 = vmatpush.msra.mxu0 %v491
  %632 = vmatmul.f32.gmra.mxu0 %v614
  %v633 = vpop.f32.mrf.mxu0
  %v634 = vadd.f32 0.0, %v633
  %635 = vdwg.mxu0
  %v636 = vmul.f32 %v611, 0.001953125
  %v637 = vmul.f32 %v634, 0.001953125
  %v638 = vmul.f32 %v636, %v636
  %v639 = vsub.f32 %v637, %v638
  %v640 = vmax.f32 %v639, 0.0
  %v641 = vperm.slane %v636, 0
  %v642 = vsub.f32 %v450, %v641
  %v643 = vsub.f32 %v452, %v641
  %v644 = vsub.f32 %v455, %v641
  %v645 = vsub.f32 %v457, %v641
  %v646 = vsub.f32 %v460, %v641
  %v647 = vsub.f32 %v462, %v641
  %v648 = vsub.f32 %v465, %v641
  %v649 = vsub.f32 %v467, %v641
  %v650 = vsub.f32 %v470, %v641
  %v651 = vsub.f32 %v472, %v641
  %v652 = vsub.f32 %v475, %v641
  %v653 = vsub.f32 %v477, %v641
  %v654 = vsub.f32 %v480, %v641
  %v655 = vsub.f32 %v482, %v641
  %v656 = vsub.f32 %v485, %v641
  %v657 = vsub.f32 %v487, %v641
  %v658 = vadd.f32 %v640, 1e-05
  %v659 = vrsqrt.pop %v658
  %v660 = vmul.f32 %v659, %v658
  %v661 = vmul.f32 %v660, %v659
  %v662 = vmul.f32 0.5, %v661
  %v663 = vsub.f32 1.5, %v662
  %v664 = vmul.f32 %v659, %v663
  %vm665 = vweird.f32 %v658
  %vm666 = vweird.f32 %v659
  %vm667 = vmor %vm665, %vm666
  %v668 = vsel %vm667, %v659, %v664
  %v669 = vperm.slane %v668, 0
  %v670 = vmul.f32 %v642, %v669
  %v671 = vmul.f32 %v643, %v669
  %v672 = vmul.f32 %v644, %v669
  %v673 = vmul.f32 %v645, %v669
  %v674 = vmul.f32 %v646, %v669
  %v675 = vmul.f32 %v647, %v669
  %v676 = vmul.f32 %v648, %v669
  %v677 = vmul.f32 %v649, %v669
  %v678 = vmul.f32 %v650, %v669
  %v679 = vmul.f32 %v651, %v669
  %v680 = vmul.f32 %v652, %v669
  %v681 = vmul.f32 %v653, %v669
  %v682 = vmul.f32 %v654, %v669
  %v683 = vmul.f32 %v655, %v669
  %v684 = vmul.f32 %v656, %v669
  %v685 = vmul.f32 %v657, %v669
  %v687 = vperm.slane %v489, 0
  %v689 = vmul.f32 %v670, %v687
  %v690 = vmul.f32 %v671, %v687
  %v691 = vmul.f32 %v672, %v687
  %v692 = vmul.f32 %v673, %v687
  %v693 = vmul.f32 %v674, %v687
  %v694 = vmul.f32 %v675, %v687
  %v695 = vmul.f32 %v676, %v687
  %v696 = vmul.f32 %v677, %v687
  %v697 = vmul.f32 %v678, %v687
  %v698 = vmul.f32 %v679, %v687
  %v699 = vmul.f32 %v680, %v687
  %v700 = vmul.f32 %v681, %v687
  %v701 = vmul.f32 %v682, %v687
  %v702 = vmul.f32 %v683, %v687
  %v703 = vmul.f32 %v684, %v687
  %v704 = vmul.f32 %v685, %v687
  %v706 = vperm.slane %v490, 0
  %v708 = vadd.f32 %v689, %v706
  %v709 = vadd.f32 %v690, %v706
  %v710 = vadd.f32 %v691, %v706
  %v711 = vadd.f32 %v692, %v706
  %v712 = vadd.f32 %v693, %v706
  %v713 = vadd.f32 %v694, %v706
  %v714 = vadd.f32 %v695, %v706
  %v715 = vadd.f32 %v696, %v706
  %v716 = vadd.f32 %v697, %v706
  %v717 = vadd.f32 %v698, %v706
  %v718 = vadd.f32 %v699, %v706
  %v719 = vadd.f32 %v700, %v706
  %v720 = vadd.f32 %v701, %v706
  %v721 = vadd.f32 %v702, %v706
  %v722 = vadd.f32 %v703, %v706
  %v723 = vadd.f32 %v704, %v706
  %vm724 = vcmp.ge.f32.partialorder %v708, 0.0
  %vm725 = vcmp.ge.f32.partialorder %v709, 0.0
  %vm726 = vcmp.ge.f32.partialorder %v710, 0.0
  %vm727 = vcmp.ge.f32.partialorder %v711, 0.0
  %vm728 = vcmp.ge.f32.partialorder %v712, 0.0
  %vm729 = vcmp.ge.f32.partialorder %v713, 0.0
  %vm730 = vcmp.ge.f32.partialorder %v714, 0.0
  %vm731 = vcmp.ge.f32.partialorder %v715, 0.0
  %vm732 = vcmp.ge.f32.partialorder %v716, 0.0
  %vm733 = vcmp.ge.f32.partialorder %v717, 0.0
  %vm734 = vcmp.ge.f32.partialorder %v718, 0.0
  %vm735 = vcmp.ge.f32.partialorder %v719, 0.0
  %vm736 = vcmp.ge.f32.partialorder %v720, 0.0
  %vm737 = vcmp.ge.f32.partialorder %v721, 0.0
  %vm738 = vcmp.ge.f32.partialorder %v722, 0.0
  %vm739 = vcmp.ge.f32.partialorder %v723, 0.0
  %v740 = vmul.f32 %v708, 0.01
  %v741 = vmul.f32 %v709, 0.01
  %v742 = vmul.f32 %v710, 0.01
  %v743 = vmul.f32 %v711, 0.01
  %v744 = vmul.f32 %v712, 0.01
  %v745 = vmul.f32 %v713, 0.01
  %v746 = vmul.f32 %v714, 0.01
  %v747 = vmul.f32 %v715, 0.01
  %v748 = vmul.f32 %v716, 0.01
  %v749 = vmul.f32 %v717, 0.01
  %v750 = vmul.f32 %v718, 0.01
  %v751 = vmul.f32 %v719, 0.01
  %v752 = vmul.f32 %v720, 0.01
  %v753 = vmul.f32 %v721, 0.01
  %v754 = vmul.f32 %v722, 0.01
  %v755 = vmul.f32 %v723, 0.01
  %v756 = vsel %vm724, %v708, %v740
  %v757 = vsel %vm725, %v709, %v741
  %v758 = vsel %vm726, %v710, %v742
  %v759 = vsel %vm727, %v711, %v743
  %v760 = vsel %vm728, %v712, %v744
  %v761 = vsel %vm729, %v713, %v745
  %v762 = vsel %vm730, %v714, %v746
  %v763 = vsel %vm731, %v715, %v747
  %v764 = vsel %vm732, %v716, %v748
  %v765 = vsel %vm733, %v717, %v749
  %v766 = vsel %vm734, %v718, %v750
  %v767 = vsel %vm735, %v719, %v751
  %v768 = vsel %vm736, %v720, %v752
  %v769 = vsel %vm737, %v721, %v753
  %v770 = vsel %vm738, %v722, %v754
  %v771 = vsel %vm739, %v723, %v755
  %v772 = vpack.c.bf16 %v756, %v756
  %v773 = vpack.c.bf16 %v757, %v757
  %v774 = vpack.c.bf16 %v758, %v758
  %v775 = vpack.c.bf16 %v759, %v759
  %v776 = vpack.c.bf16 %v760, %v760
  %v777 = vpack.c.bf16 %v761, %v761
  %v778 = vpack.c.bf16 %v762, %v762
  %v779 = vpack.c.bf16 %v763, %v763
  %v780 = vpack.c.bf16 %v764, %v764
  %v781 = vpack.c.bf16 %v765, %v765
  %v782 = vpack.c.bf16 %v766, %v766
  %v783 = vpack.c.bf16 %v767, %v767
  %v784 = vpack.c.bf16 %v768, %v768
  %v785 = vpack.c.bf16 %v769, %v769
  %v786 = vpack.c.bf16 %v770, %v770
  %v787 = vpack.c.bf16 %v771, %v771
  %vm788 = vcmask 519168
  %789 = vst.msk [vmem:[%s5] sm:$0xf] %vm788, %v772
  %790 = vst.msk [vmem:[%s5 + $0x4] sm:$0xf] %vm788, %v773
  %791 = vst.msk [vmem:[%s5 + $0x8] sm:$0xf] %vm788, %v774
  %792 = vst.msk [vmem:[%s5 + $0xc] sm:$0xf] %vm788, %v775
  %793 = vst.msk [vmem:[%s5 + $0x10] sm:$0xf] %vm788, %v776
  %794 = vst.msk [vmem:[%s5 + $0x14] sm:$0xf] %vm788, %v777
  %795 = vst.msk [vmem:[%s5 + $0x18] sm:$0xf] %vm788, %v778
  %796 = vst.msk [vmem:[%s5 + $0x1c] sm:$0xf] %vm788, %v779
  %797 = vst.msk [vmem:[%s5 + $0x20] sm:$0xf] %vm788, %v780
  %798 = vst.msk [vmem:[%s5 + $0x24] sm:$0xf] %vm788, %v781
  %799 = vst.msk [vmem:[%s5 + $0x28] sm:$0xf] %vm788, %v782
  %800 = vst.msk [vmem:[%s5 + $0x2c] sm:$0xf] %vm788, %v783
  %801 = vst.msk [vmem:[%s5 + $0x30] sm:$0xf] %vm788, %v784
  %802 = vst.msk [vmem:[%s5 + $0x34] sm:$0xf] %vm788, %v785
  %803 = vst.msk [vmem:[%s5 + $0x38] sm:$0xf] %vm788, %v786
  %804 = vst.msk [vmem:[%s5 + $0x3c] sm:$0xf] %vm788, %v787
  // Predicated region
  $region22: #{decoder_forward.10} parent=0 // pred_check
    _
  $region23: #{decoder_forward.10} parent=0 // pred_check_branch
    %806 = sbr.rel (0) target = $region25
  $region24: #{decoder_forward.10} parent=0 // pred_region
    _
  $region25: #{decoder_forward.10} parent=0 // pred_fallthru
    _
  // Predicated region
  $region26: #{decoder_forward.10} parent=0 // pred_check
    _
  $region27: #{decoder_forward.10} parent=0 // pred_check_branch
    %808 = sbr.rel (0) target = $region29
  $region28: #{decoder_forward.10} parent=0 // pred_region
    _
  $region29: #{decoder_forward.10} parent=0 // pred_fallthru
    _

// kernel: decoder_forward.11
$region0: #{decoder_forward.11}
  #allocation0 [shape = 'u32[]', space=smem, size = 0x4, offset = 0x4, fixed_abs, tag = 'smem constant byte address 0x4 - core index']
  #allocation1 [shape = 'u32[72,128]{1,0:T(1,128)}', space=vmem, size = 0x9000, scoped, tag = 'internal scratch']
  %s0 = inlined_call_operand.vmem [shape: bf16[512,144], index: 0, kind: input, shape index: {}]
  %s1 = inlined_call_operand.vmem [shape: bf16[144,16], index: 1, kind: input, shape index: {}]
  %s2 = inlined_call_operand.vmem [shape: f32[1,16], index: 2, kind: input, shape index: {}]
  %s3 = inlined_call_operand.vmem [shape: f32[1,16], index: 3, kind: input, shape index: {}]
  %s4 = inlined_call_operand.vmem [shape: bf16[1,16], index: 4, kind: input, shape index: {}]
  %s5 = inlined_call_operand.vmem [shape: f32[1,512], index: 5, kind: output, shape index: {}]
  %s6 = sld [smem:[#allocation0]]
  $region30: #{decoder_forward.11} parent=0
    _
  %s8 = ssub.s32 1, %s6
  %s9 = scalar_select 0, %s8, %s6
  // Predicated region
  $region2: #{decoder_forward.11} parent=0 // pred_check
    _
  $region3: #{decoder_forward.11} parent=0 // pred_check_branch
    %11 = sbr.rel (0) target = $region5
  $region4: #{decoder_forward.11} parent=0 // pred_region
    _
  $region5: #{decoder_forward.11} parent=0 // pred_fallthru
    _
  // Predicated region
  $region6: #{decoder_forward.11} parent=0 // pred_check
    _
  $region7: #{decoder_forward.11} parent=0 // pred_check_branch
    %13 = sbr.rel (0) target = $region9
  $region8: #{decoder_forward.11} parent=0 // pred_region
    _
  $region9: #{decoder_forward.11} parent=0 // pred_fallthru
    _
  // Predicated region
  $region10: #{decoder_forward.11} parent=0 // pred_check
    _
  $region11: #{decoder_forward.11} parent=0 // pred_check_branch
    %15 = sbr.rel (0) target = $region13
  $region12: #{decoder_forward.11} parent=0 // pred_region
    _
  $region13: #{decoder_forward.11} parent=0 // pred_fallthru
    _
  // Predicated region
  $region14: #{decoder_forward.11} parent=0 // pred_check
    _
  $region15: #{decoder_forward.11} parent=0 // pred_check_branch
    %17 = sbr.rel (0) target = $region17
  $region16: #{decoder_forward.11} parent=0 // pred_region
    _
  $region17: #{decoder_forward.11} parent=0 // pred_fallthru
    _
  // Predicated region
  $region18: #{decoder_forward.11} parent=0 // pred_check
    _
  $region19: #{decoder_forward.11} parent=0 // pred_check_branch
    %19 = sbr.rel (0) target = $region21
  $region20: #{decoder_forward.11} parent=0 // pred_region
    _
  $region21: #{decoder_forward.11} parent=0 // pred_fallthru
    _
  %v21 = vld [vmem:[%s0] sm:$0xff]
  %v22 = vld [vmem:[%s0 + $0x8] sm:$0xff]
  %v23 = vld [vmem:[%s0 + $0x10] sm:$0xff]
  %v24 = vld [vmem:[%s0 + $0x18] sm:$0xff]
  %v25 = vld [vmem:[%s0 + $0x20] sm:$0xff]
  %v26 = vld [vmem:[%s0 + $0x28] sm:$0xff]
  %v27 = vld [vmem:[%s0 + $0x30] sm:$0xff]
  %v28 = vld [vmem:[%s0 + $0x38] sm:$0xff]
  %v29 = vld [vmem:[%s0 + $0x40] sm:$0xff]
  %v30 = vld [vmem:[%s0 + $0x48] sm:$0xff]
  %v31 = vld [vmem:[%s0 + $0x50] sm:$0xff]
  %v32 = vld [vmem:[%s0 + $0x58] sm:$0xff]
  %v33 = vld [vmem:[%s0 + $0x60] sm:$0xff]
  %v34 = vld [vmem:[%s0 + $0x68] sm:$0xff]
  %v35 = vld [vmem:[%s0 + $0x70] sm:$0xff]
  %v36 = vld [vmem:[%s0 + $0x78] sm:$0xff]
  %v37 = vld [vmem:[%s0 + $0x80] sm:$0xff]
  %v38 = vld [vmem:[%s0 + $0x88] sm:$0xff]
  %v39 = vld [vmem:[%s0 + $0x90] sm:$0xff]
  %v40 = vld [vmem:[%s0 + $0x98] sm:$0xff]
  %v41 = vld [vmem:[%s0 + $0xa0] sm:$0xff]
  %v42 = vld [vmem:[%s0 + $0xa8] sm:$0xff]
  %v43 = vld [vmem:[%s0 + $0xb0] sm:$0xff]
  %v44 = vld [vmem:[%s0 + $0xb8] sm:$0xff]
  %v45 = vld [vmem:[%s0 + $0xc0] sm:$0xff]
  %v46 = vld [vmem:[%s0 + $0xc8] sm:$0xff]
  %v47 = vld [vmem:[%s0 + $0xd0] sm:$0xff]
  %v48 = vld [vmem:[%s0 + $0xd8] sm:$0xff]
  %v49 = vld [vmem:[%s0 + $0xe0] sm:$0xff]
  %v50 = vld [vmem:[%s0 + $0xe8] sm:$0xff]
  %v51 = vld [vmem:[%s0 + $0xf0] sm:$0xff]
  %v52 = vld [vmem:[%s0 + $0xf8] sm:$0xff]
  %v53 = vld [vmem:[%s0 + $0x100] sm:$0xff]
  %v54 = vld [vmem:[%s0 + $0x108] sm:$0xff]
  %v55 = vld [vmem:[%s0 + $0x110] sm:$0xff]
  %v56 = vld [vmem:[%s0 + $0x118] sm:$0xff]
  %v57 = vld [vmem:[%s0 + $0x120] sm:$0xff]
  %v58 = vld [vmem:[%s0 + $0x128] sm:$0xff]
  %v59 = vld [vmem:[%s0 + $0x130] sm:$0xff]
  %v60 = vld [vmem:[%s0 + $0x138] sm:$0xff]
  %v61 = vld [vmem:[%s0 + $0x140] sm:$0xff]
  %v62 = vld [vmem:[%s0 + $0x148] sm:$0xff]
  %v63 = vld [vmem:[%s0 + $0x150] sm:$0xff]
  %v64 = vld [vmem:[%s0 + $0x158] sm:$0xff]
  %v65 = vld [vmem:[%s0 + $0x160] sm:$0xff]
  %v66 = vld [vmem:[%s0 + $0x168] sm:$0xff]
  %v67 = vld [vmem:[%s0 + $0x170] sm:$0xff]
  %v68 = vld [vmem:[%s0 + $0x178] sm:$0xff]
  %v69 = vld [vmem:[%s0 + $0x180] sm:$0xff]
  %v70 = vld [vmem:[%s0 + $0x188] sm:$0xff]
  %v71 = vld [vmem:[%s0 + $0x190] sm:$0xff]
  %v72 = vld [vmem:[%s0 + $0x198] sm:$0xff]
  %v73 = vld [vmem:[%s0 + $0x1a0] sm:$0xff]
  %v74 = vld [vmem:[%s0 + $0x1a8] sm:$0xff]
  %v75 = vld [vmem:[%s0 + $0x1b0] sm:$0xff]
  %v76 = vld [vmem:[%s0 + $0x1b8] sm:$0xff]
  %v77 = vld [vmem:[%s0 + $0x1c0] sm:$0xff]
  %v78 = vld [vmem:[%s0 + $0x1c8] sm:$0xff]
  %v79 = vld [vmem:[%s0 + $0x1d0] sm:$0xff]
  %v80 = vld [vmem:[%s0 + $0x1d8] sm:$0xff]
  %v81 = vld [vmem:[%s0 + $0x1e0] sm:$0xff]
  %v82 = vld [vmem:[%s0 + $0x1e8] sm:$0xff]
  %v83 = vld [vmem:[%s0 + $0x1f0] sm:$0xff]
  %v84 = vld [vmem:[%s0 + $0x1f8] sm:$0xff]
  %v85 = vld [vmem:[%s1] sm:$0xf]
  %v86 = vld [vmem:[%s1 + $0x4] sm:$0xf]
  %v87 = vld [vmem:[%s1 + $0x8] sm:$0xf]
  %v88 = vld [vmem:[%s1 + $0xc] sm:$0xf]
  %v89 = vld [vmem:[%s1 + $0x10] sm:$0xf]
  %v90 = vld [vmem:[%s1 + $0x14] sm:$0xf]
  %v91 = vld [vmem:[%s1 + $0x18] sm:$0xf]
  %v92 = vld [vmem:[%s1 + $0x1c] sm:$0xf]
  %v93 = vld [vmem:[%s1 + $0x20] sm:$0xf]
  %v94 = vld [vmem:[%s1 + $0x24] sm:$0xf]
  %v95 = vld [vmem:[%s1 + $0x28] sm:$0xf]
  %v96 = vld [vmem:[%s1 + $0x2c] sm:$0xf]
  %v97 = vld [vmem:[%s1 + $0x30] sm:$0xf]
  %v98 = vld [vmem:[%s1 + $0x34] sm:$0xf]
  %v99 = vld [vmem:[%s1 + $0x38] sm:$0xf]
  %v100 = vld [vmem:[%s1 + $0x3c] sm:$0xf]
  %v101 = vld [vmem:[%s1 + $0x40] sm:$0xf]
  %v102 = vld [vmem:[%s1 + $0x44] sm:$0xf]
  %v167 = vunpack.c.l.b16 %v21
  %v168 = vunpack.c.h.b16 %v21
  %v169 = vunpack.c.l.b16 %v22
  %v170 = vunpack.c.h.b16 %v22
  %v171 = vunpack.c.l.b16 %v23
  %v172 = vunpack.c.h.b16 %v23
  %v173 = vunpack.c.l.b16 %v24
  %v174 = vunpack.c.h.b16 %v24
  %v175 = vunpack.c.l.b16 %v25
  %v176 = vunpack.c.h.b16 %v25
  %v177 = vunpack.c.l.b16 %v26
  %v178 = vunpack.c.h.b16 %v26
  %v179 = vunpack.c.l.b16 %v27
  %v180 = vunpack.c.h.b16 %v27
  %v181 = vunpack.c.l.b16 %v28
  %v182 = vunpack.c.h.b16 %v28
  %v183 = vunpack.c.l.b16 %v29
  %v184 = vunpack.c.h.b16 %v29
  %v185 = vunpack.c.l.b16 %v30
  %v186 = vunpack.c.h.b16 %v30
  %v187 = vunpack.c.l.b16 %v31
  %v188 = vunpack.c.h.b16 %v31
  %v189 = vunpack.c.l.b16 %v32
  %v190 = vunpack.c.h.b16 %v32
  %v191 = vunpack.c.l.b16 %v33
  %v192 = vunpack.c.h.b16 %v33
  %v193 = vunpack.c.l.b16 %v34
  %v194 = vunpack.c.h.b16 %v34
  %v195 = vunpack.c.l.b16 %v35
  %v196 = vunpack.c.h.b16 %v35
  %v197 = vunpack.c.l.b16 %v36
  %v198 = vunpack.c.h.b16 %v36
  %v199 = vunpack.c.l.b16 %v37
  %v200 = vunpack.c.h.b16 %v37
  %v201 = vunpack.c.l.b16 %v38
  %v202 = vunpack.c.h.b16 %v38
  %v203 = vunpack.c.l.b16 %v39
  %v204 = vunpack.c.h.b16 %v39
  %v205 = vunpack.c.l.b16 %v40
  %v206 = vunpack.c.h.b16 %v40
  %v207 = vunpack.c.l.b16 %v41
  %v208 = vunpack.c.h.b16 %v41
  %v209 = vunpack.c.l.b16 %v42
  %v210 = vunpack.c.h.b16 %v42
  %v211 = vunpack.c.l.b16 %v43
  %v212 = vunpack.c.h.b16 %v43
  %v213 = vunpack.c.l.b16 %v44
  %v214 = vunpack.c.h.b16 %v44
  %v215 = vunpack.c.l.b16 %v45
  %v216 = vunpack.c.h.b16 %v45
  %v217 = vunpack.c.l.b16 %v46
  %v218 = vunpack.c.h.b16 %v46
  %v219 = vunpack.c.l.b16 %v47
  %v220 = vunpack.c.h.b16 %v47
  %v221 = vunpack.c.l.b16 %v48
  %v222 = vunpack.c.h.b16 %v48
  %v223 = vunpack.c.l.b16 %v49
  %v224 = vunpack.c.h.b16 %v49
  %v225 = vunpack.c.l.b16 %v50
  %v226 = vunpack.c.h.b16 %v50
  %v227 = vunpack.c.l.b16 %v51
  %v228 = vunpack.c.h.b16 %v51
  %v229 = vunpack.c.l.b16 %v52
  %v230 = vunpack.c.h.b16 %v52
  %v231 = vunpack.c.l.b16 %v53
  %v232 = vunpack.c.h.b16 %v53
  %v233 = vunpack.c.l.b16 %v54
  %v234 = vunpack.c.h.b16 %v54
  %v235 = vunpack.c.l.b16 %v55
  %v236 = vunpack.c.h.b16 %v55
  %v237 = vunpack.c.l.b16 %v56
  %v238 = vunpack.c.h.b16 %v56
  %v239 = vunpack.c.l.b16 %v57
  %v240 = vunpack.c.h.b16 %v57
  %v241 = vunpack.c.l.b16 %v58
  %v242 = vunpack.c.h.b16 %v58
  %v243 = vunpack.c.l.b16 %v59
  %v244 = vunpack.c.h.b16 %v59
  %v245 = vunpack.c.l.b16 %v60
  %v246 = vunpack.c.h.b16 %v60
  %v247 = vunpack.c.l.b16 %v61
  %v248 = vunpack.c.h.b16 %v61
  %v249 = vunpack.c.l.b16 %v62
  %v250 = vunpack.c.h.b16 %v62
  %v251 = vunpack.c.l.b16 %v63
  %v252 = vunpack.c.h.b16 %v63
  %v253 = vunpack.c.l.b16 %v64
  %v254 = vunpack.c.h.b16 %v64
  %v255 = vunpack.c.l.b16 %v65
  %v256 = vunpack.c.h.b16 %v65
  %v257 = vunpack.c.l.b16 %v66
  %v258 = vunpack.c.h.b16 %v66
  %v259 = vunpack.c.l.b16 %v67
  %v260 = vunpack.c.h.b16 %v67
  %v261 = vunpack.c.l.b16 %v68
  %v262 = vunpack.c.h.b16 %v68
  %v263 = vunpack.c.l.b16 %v69
  %v264 = vunpack.c.h.b16 %v69
  %v265 = vunpack.c.l.b16 %v70
  %v266 = vunpack.c.h.b16 %v70
  %v267 = vunpack.c.l.b16 %v71
  %v268 = vunpack.c.h.b16 %v71
  %v269 = vunpack.c.l.b16 %v72
  %v270 = vunpack.c.h.b16 %v72
  %v271 = vunpack.c.l.b16 %v73
  %v272 = vunpack.c.h.b16 %v73
  %v273 = vunpack.c.l.b16 %v74
  %v274 = vunpack.c.h.b16 %v74
  %v275 = vunpack.c.l.b16 %v75
  %v276 = vunpack.c.h.b16 %v75
  %v277 = vunpack.c.l.b16 %v76
  %v278 = vunpack.c.h.b16 %v76
  %v279 = vunpack.c.l.b16 %v77
  %v280 = vunpack.c.h.b16 %v77
  %v281 = vunpack.c.l.b16 %v78
  %v282 = vunpack.c.h.b16 %v78
  %v283 = vunpack.c.l.b16 %v79
  %v284 = vunpack.c.h.b16 %v79
  %v285 = vunpack.c.l.b16 %v80
  %v286 = vunpack.c.h.b16 %v80
  %v287 = vunpack.c.l.b16 %v81
  %v288 = vunpack.c.h.b16 %v81
  %v289 = vunpack.c.l.b16 %v82
  %v290 = vunpack.c.h.b16 %v82
  %v291 = vunpack.c.l.b16 %v83
  %v292 = vunpack.c.h.b16 %v83
  %v293 = vunpack.c.l.b16 %v84
  %v294 = vunpack.c.h.b16 %v84
  %v295 = vpack.c.b16 %v169, %v167
  %v296 = vpack.c.b16 %v170, %v168
  %v297 = vpack.c.b16 %v173, %v171
  %v298 = vpack.c.b16 %v174, %v172
  %v299 = vpack.c.b16 %v177, %v175
  %v300 = vpack.c.b16 %v178, %v176
  %v301 = vpack.c.b16 %v181, %v179
  %v302 = vpack.c.b16 %v182, %v180
  %v303 = vpack.c.b16 %v185, %v183
  %v304 = vpack.c.b16 %v186, %v184
  %v305 = vpack.c.b16 %v189, %v187
  %v306 = vpack.c.b16 %v190, %v188
  %v307 = vpack.c.b16 %v193, %v191
  %v308 = vpack.c.b16 %v194, %v192
  %v309 = vpack.c.b16 %v197, %v195
  %v310 = vpack.c.b16 %v198, %v196
  %v311 = vpack.c.b16 %v201, %v199
  %v312 = vpack.c.b16 %v202, %v200
  %v313 = vpack.c.b16 %v205, %v203
  %v314 = vpack.c.b16 %v206, %v204
  %v315 = vpack.c.b16 %v209, %v207
  %v316 = vpack.c.b16 %v210, %v208
  %v317 = vpack.c.b16 %v213, %v211
  %v318 = vpack.c.b16 %v214, %v212
  %v319 = vpack.c.b16 %v217, %v215
  %v320 = vpack.c.b16 %v218, %v216
  %v321 = vpack.c.b16 %v221, %v219
  %v322 = vpack.c.b16 %v222, %v220
  %v323 = vpack.c.b16 %v225, %v223
  %v324 = vpack.c.b16 %v226, %v224
  %v325 = vpack.c.b16 %v229, %v227
  %v326 = vpack.c.b16 %v230, %v228
  %v327 = vpack.c.b16 %v233, %v231
  %v328 = vpack.c.b16 %v234, %v232
  %v329 = vpack.c.b16 %v237, %v235
  %v330 = vpack.c.b16 %v238, %v236
  %v331 = vpack.c.b16 %v241, %v239
  %v332 = vpack.c.b16 %v242, %v240
  %v333 = vpack.c.b16 %v245, %v243
  %v334 = vpack.c.b16 %v246, %v244
  %v335 = vpack.c.b16 %v249, %v247
  %v336 = vpack.c.b16 %v250, %v248
  %v337 = vpack.c.b16 %v253, %v251
  %v338 = vpack.c.b16 %v254, %v252
  %v339 = vpack.c.b16 %v257, %v255
  %v340 = vpack.c.b16 %v258, %v256
  %v341 = vpack.c.b16 %v261, %v259
  %v342 = vpack.c.b16 %v262, %v260
  %v343 = vpack.c.b16 %v265, %v263
  %v344 = vpack.c.b16 %v266, %v264
  %v345 = vpack.c.b16 %v269, %v267
  %v346 = vpack.c.b16 %v270, %v268
  %v347 = vpack.c.b16 %v273, %v271
  %v348 = vpack.c.b16 %v274, %v272
  %v349 = vpack.c.b16 %v277, %v275
  %v350 = vpack.c.b16 %v278, %v276
  %v351 = vpack.c.b16 %v281, %v279
  %v352 = vpack.c.b16 %v282, %v280
  %v353 = vpack.c.b16 %v285, %v283
  %v354 = vpack.c.b16 %v286, %v284
  %v355 = vpack.c.b16 %v289, %v287
  %v356 = vpack.c.b16 %v290, %v288
  %v357 = vpack.c.b16 %v293, %v291
  %v358 = vpack.c.b16 %v294, %v292
  %v409 = vunpack.c.l.b16 %v85
  %v410 = vunpack.c.l.b16 %v86
  %v411 = vunpack.c.l.b16 %v87
  %v412 = vunpack.c.l.b16 %v88
  %v413 = vunpack.c.l.b16 %v89
  %v414 = vunpack.c.l.b16 %v90
  %v415 = vunpack.c.l.b16 %v91
  %v416 = vunpack.c.l.b16 %v92
  %v417 = vunpack.c.l.b16 %v93
  %v418 = vunpack.c.l.b16 %v94
  %v419 = vunpack.c.l.b16 %v95
  %v420 = vunpack.c.l.b16 %v96
  %v421 = vunpack.c.l.b16 %v97
  %v422 = vunpack.c.l.b16 %v98
  %v423 = vunpack.c.l.b16 %v99
  %v424 = vunpack.c.l.b16 %v100
  %v425 = vunpack.c.l.b16 %v101
  %v426 = vunpack.c.l.b16 %v102
  %v427 = vpack.c.b16 %v410, %v409
  %v428 = vpack.c.b16 %v412, %v411
  %v429 = vpack.c.b16 %v414, %v413
  %v430 = vpack.c.b16 %v416, %v415
  %v431 = vpack.c.b16 %v418, %v417
  %v432 = vpack.c.b16 %v420, %v419
  %v433 = vpack.c.b16 %v422, %v421
  %v434 = vpack.c.b16 %v424, %v423
  %v435 = vpack.c.b16 %v426, %v425
  %vm445 = vcmask 130048
  %v447 = vsel %vm445, %v296, 0
  %v450 = vsel %vm445, %v298, 0
  %v453 = vsel %vm445, %v300, 0
  %v456 = vsel %vm445, %v302, 0
  %v459 = vsel %vm445, %v304, 0
  %v462 = vsel %vm445, %v306, 0
  %v465 = vsel %vm445, %v308, 0
  %v468 = vsel %vm445, %v310, 0
  %v471 = vsel %vm445, %v312, 0
  %v474 = vsel %vm445, %v314, 0
  %v477 = vsel %vm445, %v316, 0
  %v480 = vsel %vm445, %v318, 0
  %v483 = vsel %vm445, %v320, 0
  %v486 = vsel %vm445, %v322, 0
  %v489 = vsel %vm445, %v324, 0
  %v492 = vsel %vm445, %v326, 0
  %v495 = vsel %vm445, %v328, 0
  %v498 = vsel %vm445, %v330, 0
  %v501 = vsel %vm445, %v332, 0
  %v504 = vsel %vm445, %v334, 0
  %v507 = vsel %vm445, %v336, 0
  %v510 = vsel %vm445, %v338, 0
  %v513 = vsel %vm445, %v340, 0
  %v516 = vsel %vm445, %v342, 0
  %v519 = vsel %vm445, %v344, 0
  %v522 = vsel %vm445, %v346, 0
  %v525 = vsel %vm445, %v348, 0
  %v528 = vsel %vm445, %v350, 0
  %v531 = vsel %vm445, %v352, 0
  %v534 = vsel %vm445, %v354, 0
  %v537 = vsel %vm445, %v356, 0
  %v540 = vsel %vm445, %v358, 0
  %542 = vmatpush.bf16.msra.mxu0 %v434
  %543 = vmatpush.bf16.msra.mxu0 %v433
  %544 = vmatpush.bf16.msra.mxu0 %v432
  %545 = vmatpush.bf16.msra.mxu0 %v431
  %546 = vmatpush.bf16.msra.mxu0 %v430
  %547 = vmatpush.bf16.msra.mxu0 %v429
  %548 = vmatpush.bf16.msra.mxu0 %v428
  %549 = vmatpush.bf16.msra.mxu0 %v427
  %550 = vmatmul.bf16.gmra.mxu0 %v295
  %v551 = vpop.f32.mrf.mxu0
  %v552 = vadd.f32 0.0, %v551
  %v553 = vpop.f32.mrf.mxu0
  %v554 = vadd.f32 0.0, %v553
  %555 = vmatmul.bf16.gmra.mxu0 %v297
  %v556 = vpop.f32.mrf.mxu0
  %v557 = vadd.f32 0.0, %v556
  %v558 = vpop.f32.mrf.mxu0
  %v559 = vadd.f32 0.0, %v558
  %560 = vmatmul.bf16.gmra.mxu0 %v299
  %v561 = vpop.f32.mrf.mxu0
  %v562 = vadd.f32 0.0, %v561
  %v563 = vpop.f32.mrf.mxu0
  %v564 = vadd.f32 0.0, %v563
  %565 = vmatmul.bf16.gmra.mxu0 %v301
  %v566 = vpop.f32.mrf.mxu0
  %v567 = vadd.f32 0.0, %v566
  %v568 = vpop.f32.mrf.mxu0
  %v569 = vadd.f32 0.0, %v568
  %570 = vmatmul.bf16.gmra.mxu0 %v303
  %v571 = vpop.f32.mrf.mxu0
  %v572 = vadd.f32 0.0, %v571
  %v573 = vpop.f32.mrf.mxu0
  %v574 = vadd.f32 0.0, %v573
  %575 = vmatmul.bf16.gmra.mxu0 %v305
  %v576 = vpop.f32.mrf.mxu0
  %v577 = vadd.f32 0.0, %v576
  %v578 = vpop.f32.mrf.mxu0
  %v579 = vadd.f32 0.0, %v578
  %580 = vmatmul.bf16.gmra.mxu0 %v307
  %v581 = vpop.f32.mrf.mxu0
  %v582 = vadd.f32 0.0, %v581
  %v583 = vpop.f32.mrf.mxu0
  %v584 = vadd.f32 0.0, %v583
  %585 = vmatmul.bf16.gmra.mxu0 %v309
  %v586 = vpop.f32.mrf.mxu0
  %v587 = vadd.f32 0.0, %v586
  %v588 = vpop.f32.mrf.mxu0
  %v589 = vadd.f32 0.0, %v588
  %590 = vmatmul.bf16.gmra.mxu0 %v311
  %v591 = vpop.f32.mrf.mxu0
  %v592 = vadd.f32 0.0, %v591
  %v593 = vpop.f32.mrf.mxu0
  %v594 = vadd.f32 0.0, %v593
  %595 = vmatmul.bf16.gmra.mxu0 %v313
  %v596 = vpop.f32.mrf.mxu0
  %v597 = vadd.f32 0.0, %v596
  %v598 = vpop.f32.mrf.mxu0
  %v599 = vadd.f32 0.0, %v598
  %600 = vmatmul.bf16.gmra.mxu0 %v315
  %v601 = vpop.f32.mrf.mxu0
  %v602 = vadd.f32 0.0, %v601
  %v603 = vpop.f32.mrf.mxu0
  %v604 = vadd.f32 0.0, %v603
  %605 = vmatmul.bf16.gmra.mxu0 %v317
  %v606 = vpop.f32.mrf.mxu0
  %v607 = vadd.f32 0.0, %v606
  %v608 = vpop.f32.mrf.mxu0
  %v609 = vadd.f32 0.0, %v608
  %610 = vmatmul.bf16.gmra.mxu0 %v319
  %v611 = vpop.f32.mrf.mxu0
  %v612 = vadd.f32 0.0, %v611
  %v613 = vpop.f32.mrf.mxu0
  %v614 = vadd.f32 0.0, %v613
  %615 = vmatmul.bf16.gmra.mxu0 %v321
  %v616 = vpop.f32.mrf.mxu0
  %v617 = vadd.f32 0.0, %v616
  %v618 = vpop.f32.mrf.mxu0
  %v619 = vadd.f32 0.0, %v618
  %620 = vmatmul.bf16.gmra.mxu0 %v323
  %v621 = vpop.f32.mrf.mxu0
  %v622 = vadd.f32 0.0, %v621
  %v623 = vpop.f32.mrf.mxu0
  %v624 = vadd.f32 0.0, %v623
  %625 = vmatmul.bf16.gmra.mxu0 %v325
  %v626 = vpop.f32.mrf.mxu0
  %v627 = vadd.f32 0.0, %v626
  %v628 = vpop.f32.mrf.mxu0
  %v629 = vadd.f32 0.0, %v628
  %630 = vmatmul.bf16.gmra.mxu0 %v327
  %v631 = vpop.f32.mrf.mxu0
  %v632 = vadd.f32 0.0, %v631
  %v633 = vpop.f32.mrf.mxu0
  %v634 = vadd.f32 0.0, %v633
  %635 = vmatmul.bf16.gmra.mxu0 %v329
  %v636 = vpop.f32.mrf.mxu0
  %v637 = vadd.f32 0.0, %v636
  %v638 = vpop.f32.mrf.mxu0
  %v639 = vadd.f32 0.0, %v638
  %640 = vmatmul.bf16.gmra.mxu0 %v331
  %v641 = vpop.f32.mrf.mxu0
  %v642 = vadd.f32 0.0, %v641
  %v643 = vpop.f32.mrf.mxu0
  %v644 = vadd.f32 0.0, %v643
  %645 = vmatmul.bf16.gmra.mxu0 %v333
  %v646 = vpop.f32.mrf.mxu0
  %v647 = vadd.f32 0.0, %v646
  %v648 = vpop.f32.mrf.mxu0
  %v649 = vadd.f32 0.0, %v648
  %650 = vmatmul.bf16.gmra.mxu0 %v335
  %v651 = vpop.f32.mrf.mxu0
  %v652 = vadd.f32 0.0, %v651
  %v653 = vpop.f32.mrf.mxu0
  %v654 = vadd.f32 0.0, %v653
  %655 = vmatmul.bf16.gmra.mxu0 %v337
  %v656 = vpop.f32.mrf.mxu0
  %v657 = vadd.f32 0.0, %v656
  %v658 = vpop.f32.mrf.mxu0
  %v659 = vadd.f32 0.0, %v658
  %660 = vmatmul.bf16.gmra.mxu0 %v339
  %v661 = vpop.f32.mrf.mxu0
  %v662 = vadd.f32 0.0, %v661
  %v663 = vpop.f32.mrf.mxu0
  %v664 = vadd.f32 0.0, %v663
  %665 = vmatmul.bf16.gmra.mxu0 %v341
  %v666 = vpop.f32.mrf.mxu0
  %v667 = vadd.f32 0.0, %v666
  %v668 = vpop.f32.mrf.mxu0
  %v669 = vadd.f32 0.0, %v668
  %670 = vmatmul.bf16.gmra.mxu0 %v343
  %v671 = vpop.f32.mrf.mxu0
  %v672 = vadd.f32 0.0, %v671
  %v673 = vpop.f32.mrf.mxu0
  %v674 = vadd.f32 0.0, %v673
  %675 = vmatmul.bf16.gmra.mxu0 %v345
  %v676 = vpop.f32.mrf.mxu0
  %v677 = vadd.f32 0.0, %v676
  %v678 = vpop.f32.mrf.mxu0
  %v679 = vadd.f32 0.0, %v678
  %680 = vmatmul.bf16.gmra.mxu0 %v347
  %v681 = vpop.f32.mrf.mxu0
  %v682 = vadd.f32 0.0, %v681
  %v683 = vpop.f32.mrf.mxu0
  %v684 = vadd.f32 0.0, %v683
  %685 = vmatmul.bf16.gmra.mxu0 %v349
  %v686 = vpop.f32.mrf.mxu0
  %v687 = vadd.f32 0.0, %v686
  %v688 = vpop.f32.mrf.mxu0
  %v689 = vadd.f32 0.0, %v688
  %690 = vmatmul.bf16.gmra.mxu0 %v351
  %v691 = vpop.f32.mrf.mxu0
  %v692 = vadd.f32 0.0, %v691
  %v693 = vpop.f32.mrf.mxu0
  %v694 = vadd.f32 0.0, %v693
  %695 = vmatmul.bf16.gmra.mxu0 %v353
  %v696 = vpop.f32.mrf.mxu0
  %v697 = vadd.f32 0.0, %v696
  %v698 = vpop.f32.mrf.mxu0
  %v699 = vadd.f32 0.0, %v698
  %700 = vmatmul.bf16.gmra.mxu0 %v355
  %v701 = vpop.f32.mrf.mxu0
  %v702 = vadd.f32 0.0, %v701
  %v703 = vpop.f32.mrf.mxu0
  %v704 = vadd.f32 0.0, %v703
  %705 = vmatmul.bf16.gmra.mxu0 %v357
  %v706 = vpop.f32.mrf.mxu0
  %v707 = vadd.f32 0.0, %v706
  %v708 = vpop.f32.mrf.mxu0
  %v709 = vadd.f32 0.0, %v708
  %710 = vdwg.mxu0
  %711 = vmatpush.bf16.msra.mxu0 0
  %712 = vmatpush.bf16.msra.mxu0 0
  %713 = vmatpush.bf16.msra.mxu0 0
  %714 = vmatpush.bf16.msra.mxu0 0
  %715 = vmatpush.bf16.msra.mxu0 0
  %716 = vmatpush.bf16.msra.mxu0 0
  %717 = vmatpush.bf16.msra.mxu0 0
  %718 = vmatpush.bf16.msra.mxu0 %v435
  %719 = vmatmul.bf16.gmra.mxu0 %v447
  %v720 = vpop.f32.mrf.mxu0
  %v721 = vadd.f32 %v552, %v720
  %v722 = vpop.f32.mrf.mxu0
  %v723 = vadd.f32 %v554, %v722
  %724 = vmatmul.bf16.gmra.mxu0 %v450
  %v725 = vpop.f32.mrf.mxu0
  %v726 = vadd.f32 %v557, %v725
  %v727 = vpop.f32.mrf.mxu0
  %v728 = vadd.f32 %v559, %v727
  %729 = vmatmul.bf16.gmra.mxu0 %v453
  %v730 = vpop.f32.mrf.mxu0
  %v731 = vadd.f32 %v562, %v730
  %v732 = vpop.f32.mrf.mxu0
  %v733 = vadd.f32 %v564, %v732
  %734 = vmatmul.bf16.gmra.mxu0 %v456
  %v735 = vpop.f32.mrf.mxu0
  %v736 = vadd.f32 %v567, %v735
  %v737 = vpop.f32.mrf.mxu0
  %v738 = vadd.f32 %v569, %v737
  %739 = vmatmul.bf16.gmra.mxu0 %v459
  %v740 = vpop.f32.mrf.mxu0
  %v741 = vadd.f32 %v572, %v740
  %v742 = vpop.f32.mrf.mxu0
  %v743 = vadd.f32 %v574, %v742
  %744 = vmatmul.bf16.gmra.mxu0 %v462
  %v745 = vpop.f32.mrf.mxu0
  %v746 = vadd.f32 %v577, %v745
  %v747 = vpop.f32.mrf.mxu0
  %v748 = vadd.f32 %v579, %v747
  %749 = vmatmul.bf16.gmra.mxu0 %v465
  %v750 = vpop.f32.mrf.mxu0
  %v751 = vadd.f32 %v582, %v750
  %v752 = vpop.f32.mrf.mxu0
  %v753 = vadd.f32 %v584, %v752
  %754 = vmatmul.bf16.gmra.mxu0 %v468
  %v755 = vpop.f32.mrf.mxu0
  %v756 = vadd.f32 %v587, %v755
  %v757 = vpop.f32.mrf.mxu0
  %v758 = vadd.f32 %v589, %v757
  %759 = vmatmul.bf16.gmra.mxu0 %v471
  %v760 = vpop.f32.mrf.mxu0
  %v761 = vadd.f32 %v592, %v760
  %v762 = vpop.f32.mrf.mxu0
  %v763 = vadd.f32 %v594, %v762
  %764 = vmatmul.bf16.gmra.mxu0 %v474
  %v765 = vpop.f32.mrf.mxu0
  %v766 = vadd.f32 %v597, %v765
  %v767 = vpop.f32.mrf.mxu0
  %v768 = vadd.f32 %v599, %v767
  %769 = vmatmul.bf16.gmra.mxu0 %v477
  %v770 = vpop.f32.mrf.mxu0
  %v771 = vadd.f32 %v602, %v770
  %v772 = vpop.f32.mrf.mxu0
  %v773 = vadd.f32 %v604, %v772
  %774 = vmatmul.bf16.gmra.mxu0 %v480
  %v775 = vpop.f32.mrf.mxu0
  %v776 = vadd.f32 %v607, %v775
  %v777 = vpop.f32.mrf.mxu0
  %v778 = vadd.f32 %v609, %v777
  %779 = vmatmul.bf16.gmra.mxu0 %v483
  %v780 = vpop.f32.mrf.mxu0
  %v781 = vadd.f32 %v612, %v780
  %v782 = vpop.f32.mrf.mxu0
  %v783 = vadd.f32 %v614, %v782
  %784 = vmatmul.bf16.gmra.mxu0 %v486
  %v785 = vpop.f32.mrf.mxu0
  %v786 = vadd.f32 %v617, %v785
  %v787 = vpop.f32.mrf.mxu0
  %v788 = vadd.f32 %v619, %v787
  %789 = vmatmul.bf16.gmra.mxu0 %v489
  %v790 = vpop.f32.mrf.mxu0
  %v791 = vadd.f32 %v622, %v790
  %v792 = vpop.f32.mrf.mxu0
  %v793 = vadd.f32 %v624, %v792
  %794 = vmatmul.bf16.gmra.mxu0 %v492
  %v795 = vpop.f32.mrf.mxu0
  %v796 = vadd.f32 %v627, %v795
  %v797 = vpop.f32.mrf.mxu0
  %v798 = vadd.f32 %v629, %v797
  %799 = vmatmul.bf16.gmra.mxu0 %v495
  %v800 = vpop.f32.mrf.mxu0
  %v801 = vadd.f32 %v632, %v800
  %v802 = vpop.f32.mrf.mxu0
  %v803 = vadd.f32 %v634, %v802
  %804 = vmatmul.bf16.gmra.mxu0 %v498
  %v805 = vpop.f32.mrf.mxu0
  %v806 = vadd.f32 %v637, %v805
  %v807 = vpop.f32.mrf.mxu0
  %v808 = vadd.f32 %v639, %v807
  %809 = vmatmul.bf16.gmra.mxu0 %v501
  %v810 = vpop.f32.mrf.mxu0
  %v811 = vadd.f32 %v642, %v810
  %v812 = vpop.f32.mrf.mxu0
  %v813 = vadd.f32 %v644, %v812
  %814 = vmatmul.bf16.gmra.mxu0 %v504
  %v815 = vpop.f32.mrf.mxu0
  %v816 = vadd.f32 %v647, %v815
  %v817 = vpop.f32.mrf.mxu0
  %v818 = vadd.f32 %v649, %v817
  %819 = vmatmul.bf16.gmra.mxu0 %v507
  %v820 = vpop.f32.mrf.mxu0
  %v821 = vadd.f32 %v652, %v820
  %v822 = vpop.f32.mrf.mxu0
  %v823 = vadd.f32 %v654, %v822
  %824 = vmatmul.bf16.gmra.mxu0 %v510
  %v825 = vpop.f32.mrf.mxu0
  %v826 = vadd.f32 %v657, %v825
  %v827 = vpop.f32.mrf.mxu0
  %v828 = vadd.f32 %v659, %v827
  %829 = vmatmul.bf16.gmra.mxu0 %v513
  %v830 = vpop.f32.mrf.mxu0
  %v831 = vadd.f32 %v662, %v830
  %v832 = vpop.f32.mrf.mxu0
  %v833 = vadd.f32 %v664, %v832
  %834 = vmatmul.bf16.gmra.mxu0 %v516
  %v835 = vpop.f32.mrf.mxu0
  %v836 = vadd.f32 %v667, %v835
  %v837 = vpop.f32.mrf.mxu0
  %v838 = vadd.f32 %v669, %v837
  %839 = vmatmul.bf16.gmra.mxu0 %v519
  %v840 = vpop.f32.mrf.mxu0
  %v841 = vadd.f32 %v672, %v840
  %v842 = vpop.f32.mrf.mxu0
  %v843 = vadd.f32 %v674, %v842
  %844 = vmatmul.bf16.gmra.mxu0 %v522
  %v845 = vpop.f32.mrf.mxu0
  %v846 = vadd.f32 %v677, %v845
  %v847 = vpop.f32.mrf.mxu0
  %v848 = vadd.f32 %v679, %v847
  %849 = vmatmul.bf16.gmra.mxu0 %v525
  %v850 = vpop.f32.mrf.mxu0
  %v851 = vadd.f32 %v682, %v850
  %v852 = vpop.f32.mrf.mxu0
  %v853 = vadd.f32 %v684, %v852
  %854 = vmatmul.bf16.gmra.mxu0 %v528
  %v855 = vpop.f32.mrf.mxu0
  %v856 = vadd.f32 %v687, %v855
  %v857 = vpop.f32.mrf.mxu0
  %v858 = vadd.f32 %v689, %v857
  %859 = vmatmul.bf16.gmra.mxu0 %v531
  %v860 = vpop.f32.mrf.mxu0
  %v861 = vadd.f32 %v692, %v860
  %v862 = vpop.f32.mrf.mxu0
  %v863 = vadd.f32 %v694, %v862
  %864 = vmatmul.bf16.gmra.mxu0 %v534
  %v865 = vpop.f32.mrf.mxu0
  %v866 = vadd.f32 %v697, %v865
  %v867 = vpop.f32.mrf.mxu0
  %v868 = vadd.f32 %v699, %v867
  %869 = vmatmul.bf16.gmra.mxu0 %v537
  %v870 = vpop.f32.mrf.mxu0
  %v871 = vadd.f32 %v702, %v870
  %v872 = vpop.f32.mrf.mxu0
  %v873 = vadd.f32 %v704, %v872
  %874 = vmatmul.bf16.gmra.mxu0 %v540
  %v875 = vpop.f32.mrf.mxu0
  %v876 = vadd.f32 %v707, %v875
  %v877 = vpop.f32.mrf.mxu0
  %v878 = vadd.f32 %v709, %v877
  %879 = vdwg.mxu0
  %v880 = vld [vmem:[%s2] sm:$0x1]
  %v881 = vld [vmem:[%s3] sm:$0x1]
  %v882 = vsel %vm445, %v721, 0.0
  %v883 = vsel %vm445, %v723, 0.0
  %v884 = vadd.f32 %v882, %v883
  %v885 = vsel %vm445, %v726, 0.0
  %v886 = vadd.f32 %v884, %v885
  %v887 = vsel %vm445, %v728, 0.0
  %v888 = vadd.f32 %v886, %v887
  %v889 = vsel %vm445, %v731, 0.0
  %v890 = vadd.f32 %v888, %v889
  %v891 = vsel %vm445, %v733, 0.0
  %v892 = vadd.f32 %v890, %v891
  %v893 = vsel %vm445, %v736, 0.0
  %v894 = vadd.f32 %v892, %v893
  %v895 = vsel %vm445, %v738, 0.0
  %v896 = vadd.f32 %v894, %v895
  %v897 = vsel %vm445, %v741, 0.0
  %v898 = vadd.f32 %v896, %v897
  %v899 = vsel %vm445, %v743, 0.0
  %v900 = vadd.f32 %v898, %v899
  %v901 = vsel %vm445, %v746, 0.0
  %v902 = vadd.f32 %v900, %v901
  %v903 = vsel %vm445, %v748, 0.0
  %v904 = vadd.f32 %v902, %v903
  %v905 = vsel %vm445, %v751, 0.0
  %v906 = vadd.f32 %v904, %v905
  %v907 = vsel %vm445, %v753, 0.0
  %v908 = vadd.f32 %v906, %v907
  %v909 = vsel %vm445, %v756, 0.0
  %v910 = vadd.f32 %v908, %v909
  %v911 = vsel %vm445, %v758, 0.0
  %v912 = vadd.f32 %v910, %v911
  %v913 = vsel %vm445, %v761, 0.0
  %v914 = vadd.f32 %v912, %v913
  %v915 = vsel %vm445, %v763, 0.0
  %v916 = vadd.f32 %v914, %v915
  %v917 = vsel %vm445, %v766, 0.0
  %v918 = vadd.f32 %v916, %v917
  %v919 = vsel %vm445, %v768, 0.0
  %v920 = vadd.f32 %v918, %v919
  %v921 = vsel %vm445, %v771, 0.0
  %v922 = vadd.f32 %v920, %v921
  %v923 = vsel %vm445, %v773, 0.0
  %v924 = vadd.f32 %v922, %v923
  %v925 = vsel %vm445, %v776, 0.0
  %v926 = vadd.f32 %v924, %v925
  %v927 = vsel %vm445, %v778, 0.0
  %v928 = vadd.f32 %v926, %v927
  %v929 = vsel %vm445, %v781, 0.0
  %v930 = vadd.f32 %v928, %v929
  %v931 = vsel %vm445, %v783, 0.0
  %v932 = vadd.f32 %v930, %v931
  %v933 = vsel %vm445, %v786, 0.0
  %v934 = vadd.f32 %v932, %v933
  %v935 = vsel %vm445, %v788, 0.0
  %v936 = vadd.f32 %v934, %v935
  %v937 = vsel %vm445, %v791, 0.0
  %v938 = vadd.f32 %v936, %v937
  %v939 = vsel %vm445, %v793, 0.0
  %v940 = vadd.f32 %v938, %v939
  %v941 = vsel %vm445, %v796, 0.0
  %v942 = vadd.f32 %v940, %v941
  %v943 = vsel %vm445, %v798, 0.0
  %v944 = vadd.f32 %v942, %v943
  %v945 = vsel %vm445, %v801, 0.0
  %v946 = vadd.f32 %v944, %v945
  %v947 = vsel %vm445, %v803, 0.0
  %v948 = vadd.f32 %v946, %v947
  %v949 = vsel %vm445, %v806, 0.0
  %v950 = vadd.f32 %v948, %v949
  %v951 = vsel %vm445, %v808, 0.0
  %v952 = vadd.f32 %v950, %v951
  %v953 = vsel %vm445, %v811, 0.0
  %v954 = vadd.f32 %v952, %v953
  %v955 = vsel %vm445, %v813, 0.0
  %v956 = vadd.f32 %v954, %v955
  %v957 = vsel %vm445, %v816, 0.0
  %v958 = vadd.f32 %v956, %v957
  %v959 = vsel %vm445, %v818, 0.0
  %v960 = vadd.f32 %v958, %v959
  %v961 = vsel %vm445, %v821, 0.0
  %v962 = vadd.f32 %v960, %v961
  %v963 = vsel %vm445, %v823, 0.0
  %v964 = vadd.f32 %v962, %v963
  %v965 = vsel %vm445, %v826, 0.0
  %v966 = vadd.f32 %v964, %v965
  %v967 = vsel %vm445, %v828, 0.0
  %v968 = vadd.f32 %v966, %v967
  %v969 = vsel %vm445, %v831, 0.0
  %v970 = vadd.f32 %v968, %v969
  %v971 = vsel %vm445, %v833, 0.0
  %v972 = vadd.f32 %v970, %v971
  %v973 = vsel %vm445, %v836, 0.0
  %v974 = vadd.f32 %v972, %v973
  %v975 = vsel %vm445, %v838, 0.0
  %v976 = vadd.f32 %v974, %v975
  %v977 = vsel %vm445, %v841, 0.0
  %v978 = vadd.f32 %v976, %v977
  %v979 = vsel %vm445, %v843, 0.0
  %v980 = vadd.f32 %v978, %v979
  %v981 = vsel %vm445, %v846, 0.0
  %v982 = vadd.f32 %v980, %v981
  %v983 = vsel %vm445, %v848, 0.0
  %v984 = vadd.f32 %v982, %v983
  %v985 = vsel %vm445, %v851, 0.0
  %v986 = vadd.f32 %v984, %v985
  %v987 = vsel %vm445, %v853, 0.0
  %v988 = vadd.f32 %v986, %v987
  %v989 = vsel %vm445, %v856, 0.0
  %v990 = vadd.f32 %v988, %v989
  %v991 = vsel %vm445, %v858, 0.0
  %v992 = vadd.f32 %v990, %v991
  %v993 = vsel %vm445, %v861, 0.0
  %v994 = vadd.f32 %v992, %v993
  %v995 = vsel %vm445, %v863, 0.0
  %v996 = vadd.f32 %v994, %v995
  %v997 = vsel %vm445, %v866, 0.0
  %v998 = vadd.f32 %v996, %v997
  %v999 = vsel %vm445, %v868, 0.0
  %v1000 = vadd.f32 %v998, %v999
  %v1001 = vsel %vm445, %v871, 0.0
  %v1002 = vadd.f32 %v1000, %v1001
  %v1003 = vsel %vm445, %v873, 0.0
  %v1004 = vadd.f32 %v1002, %v1003
  %v1005 = vsel %vm445, %v876, 0.0
  %v1006 = vadd.f32 %v1004, %v1005
  %v1007 = vsel %vm445, %v878, 0.0
  %v1008 = vadd.f32 %v1006, %v1007
  %v1009 = vrot.slane %v1008, 4
  %v1010 = vadd.f32 %v1008, %v1009
  %v1011 = vrot.slane %v1010, 2
  %v1012 = vadd.f32 %v1010, %v1011
  %v1013 = vrot.slane %v1012, 1
  %v1014 = vadd.f32 %v1012, %v1013
  %v1015 = vmul.f32 %v721, %v721
  %v1016 = vmul.f32 %v723, %v723
  %v1017 = vmul.f32 %v726, %v726
  %v1018 = vmul.f32 %v728, %v728
  %v1019 = vmul.f32 %v731, %v731
  %v1020 = vmul.f32 %v733, %v733
  %v1021 = vmul.f32 %v736, %v736
  %v1022 = vmul.f32 %v738, %v738
  %v1023 = vmul.f32 %v741, %v741
  %v1024 = vmul.f32 %v743, %v743
  %v1025 = vmul.f32 %v746, %v746
  %v1026 = vmul.f32 %v748, %v748
  %v1027 = vmul.f32 %v751, %v751
  %v1028 = vmul.f32 %v753, %v753
  %v1029 = vmul.f32 %v756, %v756
  %v1030 = vmul.f32 %v758, %v758
  %v1031 = vmul.f32 %v761, %v761
  %v1032 = vmul.f32 %v763, %v763
  %v1033 = vmul.f32 %v766, %v766
  %v1034 = vmul.f32 %v768, %v768
  %v1035 = vmul.f32 %v771, %v771
  %v1036 = vmul.f32 %v773, %v773
  %v1037 = vmul.f32 %v776, %v776
  %v1038 = vmul.f32 %v778, %v778
  %v1039 = vmul.f32 %v781, %v781
  %v1040 = vmul.f32 %v783, %v783
  %v1041 = vmul.f32 %v786, %v786
  %v1042 = vmul.f32 %v788, %v788
  %v1043 = vmul.f32 %v791, %v791
  %v1044 = vmul.f32 %v793, %v793
  %v1045 = vmul.f32 %v796, %v796
  %v1046 = vmul.f32 %v798, %v798
  %v1047 = vmul.f32 %v801, %v801
  %v1048 = vmul.f32 %v803, %v803
  %v1049 = vmul.f32 %v806, %v806
  %v1050 = vmul.f32 %v808, %v808
  %v1051 = vmul.f32 %v811, %v811
  %v1052 = vmul.f32 %v813, %v813
  %v1053 = vmul.f32 %v816, %v816
  %v1054 = vmul.f32 %v818, %v818
  %v1055 = vmul.f32 %v821, %v821
  %v1056 = vmul.f32 %v823, %v823
  %v1057 = vmul.f32 %v826, %v826
  %v1058 = vmul.f32 %v828, %v828
  %v1059 = vmul.f32 %v831, %v831
  %v1060 = vmul.f32 %v833, %v833
  %v1061 = vmul.f32 %v836, %v836
  %v1062 = vmul.f32 %v838, %v838
  %v1063 = vmul.f32 %v841, %v841
  %v1064 = vmul.f32 %v843, %v843
  %v1065 = vmul.f32 %v846, %v846
  %v1066 = vmul.f32 %v848, %v848
  %v1067 = vmul.f32 %v851, %v851
  %v1068 = vmul.f32 %v853, %v853
  %v1069 = vmul.f32 %v856, %v856
  %v1070 = vmul.f32 %v858, %v858
  %v1071 = vmul.f32 %v861, %v861
  %v1072 = vmul.f32 %v863, %v863
  %v1073 = vmul.f32 %v866, %v866
  %v1074 = vmul.f32 %v868, %v868
  %v1075 = vmul.f32 %v871, %v871
  %v1076 = vmul.f32 %v873, %v873
  %v1077 = vmul.f32 %v876, %v876
  %v1078 = vmul.f32 %v878, %v878
  %v1079 = vsel %vm445, %v1015, 0.0
  %v1080 = vsel %vm445, %v1016, 0.0
  %v1081 = vadd.f32 %v1079, %v1080
  %v1082 = vsel %vm445, %v1017, 0.0
  %v1083 = vadd.f32 %v1081, %v1082
  %v1084 = vsel %vm445, %v1018, 0.0
  %v1085 = vadd.f32 %v1083, %v1084
  %v1086 = vsel %vm445, %v1019, 0.0
  %v1087 = vadd.f32 %v1085, %v1086
  %v1088 = vsel %vm445, %v1020, 0.0
  %v1089 = vadd.f32 %v1087, %v1088
  %v1090 = vsel %vm445, %v1021, 0.0
  %v1091 = vadd.f32 %v1089, %v1090
  %v1092 = vsel %vm445, %v1022, 0.0
  %v1093 = vadd.f32 %v1091, %v1092
  %v1094 = vsel %vm445, %v1023, 0.0
  %v1095 = vadd.f32 %v1093, %v1094
  %v1096 = vsel %vm445, %v1024, 0.0
  %v1097 = vadd.f32 %v1095, %v1096
  %v1098 = vsel %vm445, %v1025, 0.0
  %v1099 = vadd.f32 %v1097, %v1098
  %v1100 = vsel %vm445, %v1026, 0.0
  %v1101 = vadd.f32 %v1099, %v1100
  %v1102 = vsel %vm445, %v1027, 0.0
  %v1103 = vadd.f32 %v1101, %v1102
  %v1104 = vsel %vm445, %v1028, 0.0
  %v1105 = vadd.f32 %v1103, %v1104
  %v1106 = vsel %vm445, %v1029, 0.0
  %v1107 = vadd.f32 %v1105, %v1106
  %v1108 = vsel %vm445, %v1030, 0.0
  %v1109 = vadd.f32 %v1107, %v1108
  %v1110 = vsel %vm445, %v1031, 0.0
  %v1111 = vadd.f32 %v1109, %v1110
  %v1112 = vsel %vm445, %v1032, 0.0
  %v1113 = vadd.f32 %v1111, %v1112
  %v1114 = vsel %vm445, %v1033, 0.0
  %v1115 = vadd.f32 %v1113, %v1114
  %v1116 = vsel %vm445, %v1034, 0.0
  %v1117 = vadd.f32 %v1115, %v1116
  %v1118 = vsel %vm445, %v1035, 0.0
  %v1119 = vadd.f32 %v1117, %v1118
  %v1120 = vsel %vm445, %v1036, 0.0
  %v1121 = vadd.f32 %v1119, %v1120
  %v1122 = vsel %vm445, %v1037, 0.0
  %v1123 = vadd.f32 %v1121, %v1122
  %v1124 = vsel %vm445, %v1038, 0.0
  %v1125 = vadd.f32 %v1123, %v1124
  %v1126 = vsel %vm445, %v1039, 0.0
  %v1127 = vadd.f32 %v1125, %v1126
  %v1128 = vsel %vm445, %v1040, 0.0
  %v1129 = vadd.f32 %v1127, %v1128
  %v1130 = vsel %vm445, %v1041, 0.0
  %v1131 = vadd.f32 %v1129, %v1130
  %v1132 = vsel %vm445, %v1042, 0.0
  %v1133 = vadd.f32 %v1131, %v1132
  %v1134 = vsel %vm445, %v1043, 0.0
  %v1135 = vadd.f32 %v1133, %v1134
  %v1136 = vsel %vm445, %v1044, 0.0
  %v1137 = vadd.f32 %v1135, %v1136
  %v1138 = vsel %vm445, %v1045, 0.0
  %v1139 = vadd.f32 %v1137, %v1138
  %v1140 = vsel %vm445, %v1046, 0.0
  %v1141 = vadd.f32 %v1139, %v1140
  %v1142 = vsel %vm445, %v1047, 0.0
  %v1143 = vadd.f32 %v1141, %v1142
  %v1144 = vsel %vm445, %v1048, 0.0
  %v1145 = vadd.f32 %v1143, %v1144
  %v1146 = vsel %vm445, %v1049, 0.0
  %v1147 = vadd.f32 %v1145, %v1146
  %v1148 = vsel %vm445, %v1050, 0.0
  %v1149 = vadd.f32 %v1147, %v1148
  %v1150 = vsel %vm445, %v1051, 0.0
  %v1151 = vadd.f32 %v1149, %v1150
  %v1152 = vsel %vm445, %v1052, 0.0
  %v1153 = vadd.f32 %v1151, %v1152
  %v1154 = vsel %vm445, %v1053, 0.0
  %v1155 = vadd.f32 %v1153, %v1154
  %v1156 = vsel %vm445, %v1054, 0.0
  %v1157 = vadd.f32 %v1155, %v1156
  %v1158 = vsel %vm445, %v1055, 0.0
  %v1159 = vadd.f32 %v1157, %v1158
  %v1160 = vsel %vm445, %v1056, 0.0
  %v1161 = vadd.f32 %v1159, %v1160
  %v1162 = vsel %vm445, %v1057, 0.0
  %v1163 = vadd.f32 %v1161, %v1162
  %v1164 = vsel %vm445, %v1058, 0.0
  %v1165 = vadd.f32 %v1163, %v1164
  %v1166 = vsel %vm445, %v1059, 0.0
  %v1167 = vadd.f32 %v1165, %v1166
  %v1168 = vsel %vm445, %v1060, 0.0
  %v1169 = vadd.f32 %v1167, %v1168
  %v1170 = vsel %vm445, %v1061, 0.0
  %v1171 = vadd.f32 %v1169, %v1170
  %v1172 = vsel %vm445, %v1062, 0.0
  %v1173 = vadd.f32 %v1171, %v1172
  %v1174 = vsel %vm445, %v1063, 0.0
  %v1175 = vadd.f32 %v1173, %v1174
  %v1176 = vsel %vm445, %v1064, 0.0
  %v1177 = vadd.f32 %v1175, %v1176
  %v1178 = vsel %vm445, %v1065, 0.0
  %v1179 = vadd.f32 %v1177, %v1178
  %v1180 = vsel %vm445, %v1066, 0.0
  %v1181 = vadd.f32 %v1179, %v1180
  %v1182 = vsel %vm445, %v1067, 0.0
  %v1183 = vadd.f32 %v1181, %v1182
  %v1184 = vsel %vm445, %v1068, 0.0
  %v1185 = vadd.f32 %v1183, %v1184
  %v1186 = vsel %vm445, %v1069, 0.0
  %v1187 = vadd.f32 %v1185, %v1186
  %v1188 = vsel %vm445, %v1070, 0.0
  %v1189 = vadd.f32 %v1187, %v1188
  %v1190 = vsel %vm445, %v1071, 0.0
  %v1191 = vadd.f32 %v1189, %v1190
  %v1192 = vsel %vm445, %v1072, 0.0
  %v1193 = vadd.f32 %v1191, %v1192
  %v1194 = vsel %vm445, %v1073, 0.0
  %v1195 = vadd.f32 %v1193, %v1194
  %v1196 = vsel %vm445, %v1074, 0.0
  %v1197 = vadd.f32 %v1195, %v1196
  %v1198 = vsel %vm445, %v1075, 0.0
  %v1199 = vadd.f32 %v1197, %v1198
  %v1200 = vsel %vm445, %v1076, 0.0
  %v1201 = vadd.f32 %v1199, %v1200
  %v1202 = vsel %vm445, %v1077, 0.0
  %v1203 = vadd.f32 %v1201, %v1202
  %v1204 = vsel %vm445, %v1078, 0.0
  %v1205 = vadd.f32 %v1203, %v1204
  %v1206 = vrot.slane %v1205, 4
  %v1207 = vadd.f32 %v1205, %v1206
  %v1208 = vrot.slane %v1207, 2
  %v1209 = vadd.f32 %v1207, %v1208
  %v1210 = vrot.slane %v1209, 1
  %v1211 = vadd.f32 %v1209, %v1210
  %v1212 = vmul.f32 %v1014, 0.001953125
  %v1213 = vmul.f32 %v1211, 0.001953125
  %v1214 = vmul.f32 %v1212, %v1212
  %v1215 = vsub.f32 %v1213, %v1214
  %v1216 = vmax.f32 %v1215, 0.0
  %v1217 = vsub.f32 %v721, %v1212
  %v1218 = vsub.f32 %v723, %v1212
  %v1219 = vsub.f32 %v726, %v1212
  %v1220 = vsub.f32 %v728, %v1212
  %v1221 = vsub.f32 %v731, %v1212
  %v1222 = vsub.f32 %v733, %v1212
  %v1223 = vsub.f32 %v736, %v1212
  %v1224 = vsub.f32 %v738, %v1212
  %v1225 = vsub.f32 %v741, %v1212
  %v1226 = vsub.f32 %v743, %v1212
  %v1227 = vsub.f32 %v746, %v1212
  %v1228 = vsub.f32 %v748, %v1212
  %v1229 = vsub.f32 %v751, %v1212
  %v1230 = vsub.f32 %v753, %v1212
  %v1231 = vsub.f32 %v756, %v1212
  %v1232 = vsub.f32 %v758, %v1212
  %v1233 = vsub.f32 %v761, %v1212
  %v1234 = vsub.f32 %v763, %v1212
  %v1235 = vsub.f32 %v766, %v1212
  %v1236 = vsub.f32 %v768, %v1212
  %v1237 = vsub.f32 %v771, %v1212
  %v1238 = vsub.f32 %v773, %v1212
  %v1239 = vsub.f32 %v776, %v1212
  %v1240 = vsub.f32 %v778, %v1212
  %v1241 = vsub.f32 %v781, %v1212
  %v1242 = vsub.f32 %v783, %v1212
  %v1243 = vsub.f32 %v786, %v1212
  %v1244 = vsub.f32 %v788, %v1212
  %v1245 = vsub.f32 %v791, %v1212
  %v1246 = vsub.f32 %v793, %v1212
  %v1247 = vsub.f32 %v796, %v1212
  %v1248 = vsub.f32 %v798, %v1212
  %v1249 = vsub.f32 %v801, %v1212
  %v1250 = vsub.f32 %v803, %v1212
  %v1251 = vsub.f32 %v806, %v1212
  %v1252 = vsub.f32 %v808, %v1212
  %v1253 = vsub.f32 %v811, %v1212
  %v1254 = vsub.f32 %v813, %v1212
  %v1255 = vsub.f32 %v816, %v1212
  %v1256 = vsub.f32 %v818, %v1212
  %v1257 = vsub.f32 %v821, %v1212
  %v1258 = vsub.f32 %v823, %v1212
  %v1259 = vsub.f32 %v826, %v1212
  %v1260 = vsub.f32 %v828, %v1212
  %v1261 = vsub.f32 %v831, %v1212
  %v1262 = vsub.f32 %v833, %v1212
  %v1263 = vsub.f32 %v836, %v1212
  %v1264 = vsub.f32 %v838, %v1212
  %v1265 = vsub.f32 %v841, %v1212
  %v1266 = vsub.f32 %v843, %v1212
  %v1267 = vsub.f32 %v846, %v1212
  %v1268 = vsub.f32 %v848, %v1212
  %v1269 = vsub.f32 %v851, %v1212
  %v1270 = vsub.f32 %v853, %v1212
  %v1271 = vsub.f32 %v856, %v1212
  %v1272 = vsub.f32 %v858, %v1212
  %v1273 = vsub.f32 %v861, %v1212
  %v1274 = vsub.f32 %v863, %v1212
  %v1275 = vsub.f32 %v866, %v1212
  %v1276 = vsub.f32 %v868, %v1212
  %v1277 = vsub.f32 %v871, %v1212
  %v1278 = vsub.f32 %v873, %v1212
  %v1279 = vsub.f32 %v876, %v1212
  %v1280 = vsub.f32 %v878, %v1212
  %v1281 = vadd.f32 %v1216, 1e-05
  %v1282 = vrsqrt.pop %v1281
  %v1283 = vmul.f32 %v1282, %v1281
  %v1284 = vmul.f32 %v1283, %v1282
  %v1285 = vmul.f32 0.5, %v1284
  %v1286 = vsub.f32 1.5, %v1285
  %v1287 = vmul.f32 %v1282, %v1286
  %vm1288 = vweird.f32 %v1281
  %vm1289 = vweird.f32 %v1282
  %vm1290 = vmor %vm1288, %vm1289
  %v1291 = vsel %vm1290, %v1282, %v1287
  %v1292 = vmul.f32 %v1217, %v1291
  %v1293 = vmul.f32 %v1218, %v1291
  %v1294 = vmul.f32 %v1219, %v1291
  %v1295 = vmul.f32 %v1220, %v1291
  %v1296 = vmul.f32 %v1221, %v1291
  %v1297 = vmul.f32 %v1222, %v1291
  %v1298 = vmul.f32 %v1223, %v1291
  %v1299 = vmul.f32 %v1224, %v1291
  %v1300 = vmul.f32 %v1225, %v1291
  %v1301 = vmul.f32 %v1226, %v1291
  %v1302 = vmul.f32 %v1227, %v1291
  %v1303 = vmul.f32 %v1228, %v1291
  %v1304 = vmul.f32 %v1229, %v1291
  %v1305 = vmul.f32 %v1230, %v1291
  %v1306 = vmul.f32 %v1231, %v1291
  %v1307 = vmul.f32 %v1232, %v1291
  %v1308 = vmul.f32 %v1233, %v1291
  %v1309 = vmul.f32 %v1234, %v1291
  %v1310 = vmul.f32 %v1235, %v1291
  %v1311 = vmul.f32 %v1236, %v1291
  %v1312 = vmul.f32 %v1237, %v1291
  %v1313 = vmul.f32 %v1238, %v1291
  %v1314 = vmul.f32 %v1239, %v1291
  %v1315 = vmul.f32 %v1240, %v1291
  %v1316 = vmul.f32 %v1241, %v1291
  %v1317 = vmul.f32 %v1242, %v1291
  %v1318 = vmul.f32 %v1243, %v1291
  %v1319 = vmul.f32 %v1244, %v1291
  %v1320 = vmul.f32 %v1245, %v1291
  %v1321 = vmul.f32 %v1246, %v1291
  %v1322 = vmul.f32 %v1247, %v1291
  %v1323 = vmul.f32 %v1248, %v1291
  %v1324 = vmul.f32 %v1249, %v1291
  %v1325 = vmul.f32 %v1250, %v1291
  %v1326 = vmul.f32 %v1251, %v1291
  %v1327 = vmul.f32 %v1252, %v1291
  %v1328 = vmul.f32 %v1253, %v1291
  %v1329 = vmul.f32 %v1254, %v1291
  %v1330 = vmul.f32 %v1255, %v1291
  %v1331 = vmul.f32 %v1256, %v1291
  %v1332 = vmul.f32 %v1257, %v1291
  %v1333 = vmul.f32 %v1258, %v1291
  %v1334 = vmul.f32 %v1259, %v1291
  %v1335 = vmul.f32 %v1260, %v1291
  %v1336 = vmul.f32 %v1261, %v1291
  %v1337 = vmul.f32 %v1262, %v1291
  %v1338 = vmul.f32 %v1263, %v1291
  %v1339 = vmul.f32 %v1264, %v1291
  %v1340 = vmul.f32 %v1265, %v1291
  %v1341 = vmul.f32 %v1266, %v1291
  %v1342 = vmul.f32 %v1267, %v1291
  %v1343 = vmul.f32 %v1268, %v1291
  %v1344 = vmul.f32 %v1269, %v1291
  %v1345 = vmul.f32 %v1270, %v1291
  %v1346 = vmul.f32 %v1271, %v1291
  %v1347 = vmul.f32 %v1272, %v1291
  %v1348 = vmul.f32 %v1273, %v1291
  %v1349 = vmul.f32 %v1274, %v1291
  %v1350 = vmul.f32 %v1275, %v1291
  %v1351 = vmul.f32 %v1276, %v1291
  %v1352 = vmul.f32 %v1277, %v1291
  %v1353 = vmul.f32 %v1278, %v1291
  %v1354 = vmul.f32 %v1279, %v1291
  %v1355 = vmul.f32 %v1280, %v1291
  %v1357 = vperm.slane %v880, 0
  %v1359 = vmul.f32 %v1292, %v1357
  %v1360 = vmul.f32 %v1293, %v1357
  %v1361 = vmul.f32 %v1294, %v1357
  %v1362 = vmul.f32 %v1295, %v1357
  %v1363 = vmul.f32 %v1296, %v1357
  %v1364 = vmul.f32 %v1297, %v1357
  %v1365 = vmul.f32 %v1298, %v1357
  %v1366 = vmul.f32 %v1299, %v1357
  %v1367 = vmul.f32 %v1300, %v1357
  %v1368 = vmul.f32 %v1301, %v1357
  %v1369 = vmul.f32 %v1302, %v1357
  %v1370 = vmul.f32 %v1303, %v1357
  %v1371 = vmul.f32 %v1304, %v1357
  %v1372 = vmul.f32 %v1305, %v1357
  %v1373 = vmul.f32 %v1306, %v1357
  %v1374 = vmul.f32 %v1307, %v1357
  %v1375 = vmul.f32 %v1308, %v1357
  %v1376 = vmul.f32 %v1309, %v1357
  %v1377 = vmul.f32 %v1310, %v1357
  %v1378 = vmul.f32 %v1311, %v1357
  %v1379 = vmul.f32 %v1312, %v1357
  %v1380 = vmul.f32 %v1313, %v1357
  %v1381 = vmul.f32 %v1314, %v1357
  %v1382 = vmul.f32 %v1315, %v1357
  %v1383 = vmul.f32 %v1316, %v1357
  %v1384 = vmul.f32 %v1317, %v1357
  %v1385 = vmul.f32 %v1318, %v1357
  %v1386 = vmul.f32 %v1319, %v1357
  %v1387 = vmul.f32 %v1320, %v1357
  %v1388 = vmul.f32 %v1321, %v1357
  %v1389 = vmul.f32 %v1322, %v1357
  %v1390 = vmul.f32 %v1323, %v1357
  %v1391 = vmul.f32 %v1324, %v1357
  %v1392 = vmul.f32 %v1325, %v1357
  %v1393 = vmul.f32 %v1326, %v1357
  %v1394 = vmul.f32 %v1327, %v1357
  %v1395 = vmul.f32 %v1328, %v1357
  %v1396 = vmul.f32 %v1329, %v1357
  %v1397 = vmul.f32 %v1330, %v1357
  %v1398 = vmul.f32 %v1331, %v1357
  %v1399 = vmul.f32 %v1332, %v1357
  %v1400 = vmul.f32 %v1333, %v1357
  %v1401 = vmul.f32 %v1334, %v1357
  %v1402 = vmul.f32 %v1335, %v1357
  %v1403 = vmul.f32 %v1336, %v1357
  %v1404 = vmul.f32 %v1337, %v1357
  %v1405 = vmul.f32 %v1338, %v1357
  %v1406 = vmul.f32 %v1339, %v1357
  %v1407 = vmul.f32 %v1340, %v1357
  %v1408 = vmul.f32 %v1341, %v1357
  %v1409 = vmul.f32 %v1342, %v1357
  %v1410 = vmul.f32 %v1343, %v1357
  %v1411 = vmul.f32 %v1344, %v1357
  %v1412 = vmul.f32 %v1345, %v1357
  %v1413 = vmul.f32 %v1346, %v1357
  %v1414 = vmul.f32 %v1347, %v1357
  %v1415 = vmul.f32 %v1348, %v1357
  %v1416 = vmul.f32 %v1349, %v1357
  %v1417 = vmul.f32 %v1350, %v1357
  %v1418 = vmul.f32 %v1351, %v1357
  %v1419 = vmul.f32 %v1352, %v1357
  %v1420 = vmul.f32 %v1353, %v1357
  %v1421 = vmul.f32 %v1354, %v1357
  %v1422 = vmul.f32 %v1355, %v1357
  %v1424 = vperm.slane %v881, 0
  %v1426 = vadd.f32 %v1359, %v1424
  %v1427 = vadd.f32 %v1360, %v1424
  %v1428 = vadd.f32 %v1361, %v1424
  %v1429 = vadd.f32 %v1362, %v1424
  %v1430 = vadd.f32 %v1363, %v1424
  %v1431 = vadd.f32 %v1364, %v1424
  %v1432 = vadd.f32 %v1365, %v1424
  %v1433 = vadd.f32 %v1366, %v1424
  %v1434 = vadd.f32 %v1367, %v1424
  %v1435 = vadd.f32 %v1368, %v1424
  %v1436 = vadd.f32 %v1369, %v1424
  %v1437 = vadd.f32 %v1370, %v1424
  %v1438 = vadd.f32 %v1371, %v1424
  %v1439 = vadd.f32 %v1372, %v1424
  %v1440 = vadd.f32 %v1373, %v1424
  %v1441 = vadd.f32 %v1374, %v1424
  %v1442 = vadd.f32 %v1375, %v1424
  %v1443 = vadd.f32 %v1376, %v1424
  %v1444 = vadd.f32 %v1377, %v1424
  %v1445 = vadd.f32 %v1378, %v1424
  %v1446 = vadd.f32 %v1379, %v1424
  %v1447 = vadd.f32 %v1380, %v1424
  %v1448 = vadd.f32 %v1381, %v1424
  %v1449 = vadd.f32 %v1382, %v1424
  %v1450 = vadd.f32 %v1383, %v1424
  %v1451 = vadd.f32 %v1384, %v1424
  %v1452 = vadd.f32 %v1385, %v1424
  %v1453 = vadd.f32 %v1386, %v1424
  %v1454 = vadd.f32 %v1387, %v1424
  %v1455 = vadd.f32 %v1388, %v1424
  %v1456 = vadd.f32 %v1389, %v1424
  %v1457 = vadd.f32 %v1390, %v1424
  %v1458 = vadd.f32 %v1391, %v1424
  %v1459 = vadd.f32 %v1392, %v1424
  %v1460 = vadd.f32 %v1393, %v1424
  %v1461 = vadd.f32 %v1394, %v1424
  %v1462 = vadd.f32 %v1395, %v1424
  %v1463 = vadd.f32 %v1396, %v1424
  %v1464 = vadd.f32 %v1397, %v1424
  %v1465 = vadd.f32 %v1398, %v1424
  %v1466 = vadd.f32 %v1399, %v1424
  %v1467 = vadd.f32 %v1400, %v1424
  %v1468 = vadd.f32 %v1401, %v1424
  %v1469 = vadd.f32 %v1402, %v1424
  %v1470 = vadd.f32 %v1403, %v1424
  %v1471 = vadd.f32 %v1404, %v1424
  %v1472 = vadd.f32 %v1405, %v1424
  %v1473 = vadd.f32 %v1406, %v1424
  %v1474 = vadd.f32 %v1407, %v1424
  %v1475 = vadd.f32 %v1408, %v1424
  %v1476 = vadd.f32 %v1409, %v1424
  %v1477 = vadd.f32 %v1410, %v1424
  %v1478 = vadd.f32 %v1411, %v1424
  %v1479 = vadd.f32 %v1412, %v1424
  %v1480 = vadd.f32 %v1413, %v1424
  %v1481 = vadd.f32 %v1414, %v1424
  %v1482 = vadd.f32 %v1415, %v1424
  %v1483 = vadd.f32 %v1416, %v1424
  %v1484 = vadd.f32 %v1417, %v1424
  %v1485 = vadd.f32 %v1418, %v1424
  %v1486 = vadd.f32 %v1419, %v1424
  %v1487 = vadd.f32 %v1420, %v1424
  %v1488 = vadd.f32 %v1421, %v1424
  %v1489 = vadd.f32 %v1422, %v1424
  %vm1490 = vcmp.ge.f32.partialorder %v1426, 0.0
  %vm1491 = vcmp.ge.f32.partialorder %v1427, 0.0
  %vm1492 = vcmp.ge.f32.partialorder %v1428, 0.0
  %vm1493 = vcmp.ge.f32.partialorder %v1429, 0.0
  %vm1494 = vcmp.ge.f32.partialorder %v1430, 0.0
  %vm1495 = vcmp.ge.f32.partialorder %v1431, 0.0
  %vm1496 = vcmp.ge.f32.partialorder %v1432, 0.0
  %vm1497 = vcmp.ge.f32.partialorder %v1433, 0.0
  %vm1498 = vcmp.ge.f32.partialorder %v1434, 0.0
  %vm1499 = vcmp.ge.f32.partialorder %v1435, 0.0
  %vm1500 = vcmp.ge.f32.partialorder %v1436, 0.0
  %vm1501 = vcmp.ge.f32.partialorder %v1437, 0.0
  %vm1502 = vcmp.ge.f32.partialorder %v1438, 0.0
  %vm1503 = vcmp.ge.f32.partialorder %v1439, 0.0
  %vm1504 = vcmp.ge.f32.partialorder %v1440, 0.0
  %vm1505 = vcmp.ge.f32.partialorder %v1441, 0.0
  %vm1506 = vcmp.ge.f32.partialorder %v1442, 0.0
  %vm1507 = vcmp.ge.f32.partialorder %v1443, 0.0
  %vm1508 = vcmp.ge.f32.partialorder %v1444, 0.0
  %vm1509 = vcmp.ge.f32.partialorder %v1445, 0.0
  %vm1510 = vcmp.ge.f32.partialorder %v1446, 0.0
  %vm1511 = vcmp.ge.f32.partialorder %v1447, 0.0
  %vm1512 = vcmp.ge.f32.partialorder %v1448, 0.0
  %vm1513 = vcmp.ge.f32.partialorder %v1449, 0.0
  %vm1514 = vcmp.ge.f32.partialorder %v1450, 0.0
  %vm1515 = vcmp.ge.f32.partialorder %v1451, 0.0
  %vm1516 = vcmp.ge.f32.partialorder %v1452, 0.0
  %vm1517 = vcmp.ge.f32.partialorder %v1453, 0.0
  %vm1518 = vcmp.ge.f32.partialorder %v1454, 0.0
  %vm1519 = vcmp.ge.f32.partialorder %v1455, 0.0
  %vm1520 = vcmp.ge.f32.partialorder %v1456, 0.0
  %vm1521 = vcmp.ge.f32.partialorder %v1457, 0.0
  %vm1522 = vcmp.ge.f32.partialorder %v1458, 0.0
  %vm1523 = vcmp.ge.f32.partialorder %v1459, 0.0
  %vm1524 = vcmp.ge.f32.partialorder %v1460, 0.0
  %vm1525 = vcmp.ge.f32.partialorder %v1461, 0.0
  %vm1526 = vcmp.ge.f32.partialorder %v1462, 0.0
  %vm1527 = vcmp.ge.f32.partialorder %v1463, 0.0
  %vm1528 = vcmp.ge.f32.partialorder %v1464, 0.0
  %vm1529 = vcmp.ge.f32.partialorder %v1465, 0.0
  %vm1530 = vcmp.ge.f32.partialorder %v1466, 0.0
  %vm1531 = vcmp.ge.f32.partialorder %v1467, 0.0
  %vm1532 = vcmp.ge.f32.partialorder %v1468, 0.0
  %vm1533 = vcmp.ge.f32.partialorder %v1469, 0.0
  %vm1534 = vcmp.ge.f32.partialorder %v1470, 0.0
  %vm1535 = vcmp.ge.f32.partialorder %v1471, 0.0
  %vm1536 = vcmp.ge.f32.partialorder %v1472, 0.0
  %vm1537 = vcmp.ge.f32.partialorder %v1473, 0.0
  %vm1538 = vcmp.ge.f32.partialorder %v1474, 0.0
  %vm1539 = vcmp.ge.f32.partialorder %v1475, 0.0
  %vm1540 = vcmp.ge.f32.partialorder %v1476, 0.0
  %vm1541 = vcmp.ge.f32.partialorder %v1477, 0.0
  %vm1542 = vcmp.ge.f32.partialorder %v1478, 0.0
  %vm1543 = vcmp.ge.f32.partialorder %v1479, 0.0
  %vm1544 = vcmp.ge.f32.partialorder %v1480, 0.0
  %vm1545 = vcmp.ge.f32.partialorder %v1481, 0.0
  %vm1546 = vcmp.ge.f32.partialorder %v1482, 0.0
  %vm1547 = vcmp.ge.f32.partialorder %v1483, 0.0
  %vm1548 = vcmp.ge.f32.partialorder %v1484, 0.0
  %vm1549 = vcmp.ge.f32.partialorder %v1485, 0.0
  %vm1550 = vcmp.ge.f32.partialorder %v1486, 0.0
  %vm1551 = vcmp.ge.f32.partialorder %v1487, 0.0
  %vm1552 = vcmp.ge.f32.partialorder %v1488, 0.0
  %vm1553 = vcmp.ge.f32.partialorder %v1489, 0.0
  %v1554 = vmul.f32 %v1426, 0.01
  %v1555 = vmul.f32 %v1427, 0.01
  %v1556 = vmul.f32 %v1428, 0.01
  %v1557 = vmul.f32 %v1429, 0.01
  %v1558 = vmul.f32 %v1430, 0.01
  %v1559 = vmul.f32 %v1431, 0.01
  %v1560 = vmul.f32 %v1432, 0.01
  %v1561 = vmul.f32 %v1433, 0.01
  %v1562 = vmul.f32 %v1434, 0.01
  %v1563 = vmul.f32 %v1435, 0.01
  %v1564 = vmul.f32 %v1436, 0.01
  %v1565 = vmul.f32 %v1437, 0.01
  %v1566 = vmul.f32 %v1438, 0.01
  %v1567 = vmul.f32 %v1439, 0.01
  %v1568 = vmul.f32 %v1440, 0.01
  %v1569 = vmul.f32 %v1441, 0.01
  %v1570 = vmul.f32 %v1442, 0.01
  %v1571 = vmul.f32 %v1443, 0.01
  %v1572 = vmul.f32 %v1444, 0.01
  %v1573 = vmul.f32 %v1445, 0.01
  %v1574 = vmul.f32 %v1446, 0.01
  %v1575 = vmul.f32 %v1447, 0.01
  %v1576 = vmul.f32 %v1448, 0.01
  %v1577 = vmul.f32 %v1449, 0.01
  %v1578 = vmul.f32 %v1450, 0.01
  %v1579 = vmul.f32 %v1451, 0.01
  %v1580 = vmul.f32 %v1452, 0.01
  %v1581 = vmul.f32 %v1453, 0.01
  %v1582 = vmul.f32 %v1454, 0.01
  %v1583 = vmul.f32 %v1455, 0.01
  %v1584 = vmul.f32 %v1456, 0.01
  %v1585 = vmul.f32 %v1457, 0.01
  %v1586 = vmul.f32 %v1458, 0.01
  %v1587 = vmul.f32 %v1459, 0.01
  %v1588 = vmul.f32 %v1460, 0.01
  %v1589 = vmul.f32 %v1461, 0.01
  %v1590 = vmul.f32 %v1462, 0.01
  %v1591 = vmul.f32 %v1463, 0.01
  %v1592 = vmul.f32 %v1464, 0.01
  %v1593 = vmul.f32 %v1465, 0.01
  %v1594 = vmul.f32 %v1466, 0.01
  %v1595 = vmul.f32 %v1467, 0.01
  %v1596 = vmul.f32 %v1468, 0.01
  %v1597 = vmul.f32 %v1469, 0.01
  %v1598 = vmul.f32 %v1470, 0.01
  %v1599 = vmul.f32 %v1471, 0.01
  %v1600 = vmul.f32 %v1472, 0.01
  %v1601 = vmul.f32 %v1473, 0.01
  %v1602 = vmul.f32 %v1474, 0.01
  %v1603 = vmul.f32 %v1475, 0.01
  %v1604 = vmul.f32 %v1476, 0.01
  %v1605 = vmul.f32 %v1477, 0.01
  %v1606 = vmul.f32 %v1478, 0.01
  %v1607 = vmul.f32 %v1479, 0.01
  %v1608 = vmul.f32 %v1480, 0.01
  %v1609 = vmul.f32 %v1481, 0.01
  %v1610 = vmul.f32 %v1482, 0.01
  %v1611 = vmul.f32 %v1483, 0.01
  %v1612 = vmul.f32 %v1484, 0.01
  %v1613 = vmul.f32 %v1485, 0.01
  %v1614 = vmul.f32 %v1486, 0.01
  %v1615 = vmul.f32 %v1487, 0.01
  %v1616 = vmul.f32 %v1488, 0.01
  %v1617 = vmul.f32 %v1489, 0.01
  %v1618 = vsel %vm1490, %v1426, %v1554
  %v1619 = vsel %vm1491, %v1427, %v1555
  %v1620 = vsel %vm1492, %v1428, %v1556
  %v1621 = vsel %vm1493, %v1429, %v1557
  %v1622 = vsel %vm1494, %v1430, %v1558
  %v1623 = vsel %vm1495, %v1431, %v1559
  %v1624 = vsel %vm1496, %v1432, %v1560
  %v1625 = vsel %vm1497, %v1433, %v1561
  %v1626 = vsel %vm1498, %v1434, %v1562
  %v1627 = vsel %vm1499, %v1435, %v1563
  %v1628 = vsel %vm1500, %v1436, %v1564
  %v1629 = vsel %vm1501, %v1437, %v1565
  %v1630 = vsel %vm1502, %v1438, %v1566
  %v1631 = vsel %vm1503, %v1439, %v1567
  %v1632 = vsel %vm1504, %v1440, %v1568
  %v1633 = vsel %vm1505, %v1441, %v1569
  %v1634 = vsel %vm1506, %v1442, %v1570
  %v1635 = vsel %vm1507, %v1443, %v1571
  %v1636 = vsel %vm1508, %v1444, %v1572
  %v1637 = vsel %vm1509, %v1445, %v1573
  %v1638 = vsel %vm1510, %v1446, %v1574
  %v1639 = vsel %vm1511, %v1447, %v1575
  %v1640 = vsel %vm1512, %v1448, %v1576
  %v1641 = vsel %vm1513, %v1449, %v1577
  %v1642 = vsel %vm1514, %v1450, %v1578
  %v1643 = vsel %vm1515, %v1451, %v1579
  %v1644 = vsel %vm1516, %v1452, %v1580
  %v1645 = vsel %vm1517, %v1453, %v1581
  %v1646 = vsel %vm1518, %v1454, %v1582
  %v1647 = vsel %vm1519, %v1455, %v1583
  %v1648 = vsel %vm1520, %v1456, %v1584
  %v1649 = vsel %vm1521, %v1457, %v1585
  %v1650 = vsel %vm1522, %v1458, %v1586
  %v1651 = vsel %vm1523, %v1459, %v1587
  %v1652 = vsel %vm1524, %v1460, %v1588
  %v1653 = vsel %vm1525, %v1461, %v1589
  %v1654 = vsel %vm1526, %v1462, %v1590
  %v1655 = vsel %vm1527, %v1463, %v1591
  %v1656 = vsel %vm1528, %v1464, %v1592
  %v1657 = vsel %vm1529, %v1465, %v1593
  %v1658 = vsel %vm1530, %v1466, %v1594
  %v1659 = vsel %vm1531, %v1467, %v1595
  %v1660 = vsel %vm1532, %v1468, %v1596
  %v1661 = vsel %vm1533, %v1469, %v1597
  %v1662 = vsel %vm1534, %v1470, %v1598
  %v1663 = vsel %vm1535, %v1471, %v1599
  %v1664 = vsel %vm1536, %v1472, %v1600
  %v1665 = vsel %vm1537, %v1473, %v1601
  %v1666 = vsel %vm1538, %v1474, %v1602
  %v1667 = vsel %vm1539, %v1475, %v1603
  %v1668 = vsel %vm1540, %v1476, %v1604
  %v1669 = vsel %vm1541, %v1477, %v1605
  %v1670 = vsel %vm1542, %v1478, %v1606
  %v1671 = vsel %vm1543, %v1479, %v1607
  %v1672 = vsel %vm1544, %v1480, %v1608
  %v1673 = vsel %vm1545, %v1481, %v1609
  %v1674 = vsel %vm1546, %v1482, %v1610
  %v1675 = vsel %vm1547, %v1483, %v1611
  %v1676 = vsel %vm1548, %v1484, %v1612
  %v1677 = vsel %vm1549, %v1485, %v1613
  %v1678 = vsel %vm1550, %v1486, %v1614
  %v1679 = vsel %vm1551, %v1487, %v1615
  %v1680 = vsel %vm1552, %v1488, %v1616
  %v1681 = vsel %vm1553, %v1489, %v1617
  %v1682 = vld [vmem:[%s4] sm:$0x1]
  %v1683 = vpack.c.bf16 %v1619, %v1618
  %v1684 = vpack.c.bf16 %v1621, %v1620
  %v1685 = vpack.c.bf16 %v1623, %v1622
  %v1686 = vpack.c.bf16 %v1625, %v1624
  %v1687 = vpack.c.bf16 %v1627, %v1626
  %v1688 = vpack.c.bf16 %v1629, %v1628
  %v1689 = vpack.c.bf16 %v1631, %v1630
  %v1690 = vpack.c.bf16 %v1633, %v1632
  %v1691 = vpack.c.bf16 %v1635, %v1634
  %v1692 = vpack.c.bf16 %v1637, %v1636
  %v1693 = vpack.c.bf16 %v1639, %v1638
  %v1694 = vpack.c.bf16 %v1641, %v1640
  %v1695 = vpack.c.bf16 %v1643, %v1642
  %v1696 = vpack.c.bf16 %v1645, %v1644
  %v1697 = vpack.c.bf16 %v1647, %v1646
  %v1698 = vpack.c.bf16 %v1649, %v1648
  %v1699 = vpack.c.bf16 %v1651, %v1650
  %v1700 = vpack.c.bf16 %v1653, %v1652
  %v1701 = vpack.c.bf16 %v1655, %v1654
  %v1702 = vpack.c.bf16 %v1657, %v1656
  %v1703 = vpack.c.bf16 %v1659, %v1658
  %v1704 = vpack.c.bf16 %v1661, %v1660
  %v1705 = vpack.c.bf16 %v1663, %v1662
  %v1706 = vpack.c.bf16 %v1665, %v1664
  %v1707 = vpack.c.bf16 %v1667, %v1666
  %v1708 = vpack.c.bf16 %v1669, %v1668
  %v1709 = vpack.c.bf16 %v1671, %v1670
  %v1710 = vpack.c.bf16 %v1673, %v1672
  %v1711 = vpack.c.bf16 %v1675, %v1674
  %v1712 = vpack.c.bf16 %v1677, %v1676
  %v1713 = vpack.c.bf16 %v1679, %v1678
  %v1714 = vpack.c.bf16 %v1681, %v1680
  %v1716 = vsel %vm445, %v1682, 0
  %v1719 = vsel %vm445, %v1683, 0
  %v1722 = vsel %vm445, %v1684, 0
  %v1725 = vsel %vm445, %v1685, 0
  %v1728 = vsel %vm445, %v1686, 0
  %v1731 = vsel %vm445, %v1687, 0
  %v1734 = vsel %vm445, %v1688, 0
  %v1737 = vsel %vm445, %v1689, 0
  %v1740 = vsel %vm445, %v1690, 0
  %v1743 = vsel %vm445, %v1691, 0
  %v1746 = vsel %vm445, %v1692, 0
  %v1749 = vsel %vm445, %v1693, 0
  %v1752 = vsel %vm445, %v1694, 0
  %v1755 = vsel %vm445, %v1695, 0
  %v1758 = vsel %vm445, %v1696, 0
  %v1761 = vsel %vm445, %v1697, 0
  %v1764 = vsel %vm445, %v1698, 0
  %v1767 = vsel %vm445, %v1699, 0
  %v1770 = vsel %vm445, %v1700, 0
  %v1773 = vsel %vm445, %v1701, 0
  %v1776 = vsel %vm445, %v1702, 0
  %v1779 = vsel %vm445, %v1703, 0
  %v1782 = vsel %vm445, %v1704, 0
  %v1785 = vsel %vm445, %v1705, 0
  %v1788 = vsel %vm445, %v1706, 0
  %v1791 = vsel %vm445, %v1707, 0
  %v1794 = vsel %vm445, %v1708, 0
  %v1797 = vsel %vm445, %v1709, 0
  %v1800 = vsel %vm445, %v1710, 0
  %v1803 = vsel %vm445, %v1711, 0
  %v1806 = vsel %vm445, %v1712, 0
  %v1809 = vsel %vm445, %v1713, 0
  %v1812 = vsel %vm445, %v1714, 0
  %1814 = vmatpush.bf16.xpose.msra.mxu0 %v1740
  %1815 = vmatpush.bf16.xpose.msra.mxu0 %v1737
  %1816 = vmatpush.bf16.xpose.msra.mxu0 %v1734
  %1817 = vmatpush.bf16.xpose.msra.mxu0 %v1731
  %1818 = vmatpush.bf16.xpose.msra.mxu0 %v1728
  %1819 = vmatpush.bf16.xpose.msra.mxu0 %v1725
  %1820 = vmatpush.bf16.xpose.msra.mxu0 %v1722
  %1821 = vmatpush.bf16.xpose.msra.mxu0 %v1719
  %1822 = vmatmul.bf16.gmra.mxu0 %v1716
  %v1823 = vpop.f32.mrf.mxu0
  %v1824 = vadd.f32 0.0, %v1823
  %v1825 = vpop.f32.mrf.mxu0
  %1826 = vdwg.mxu0
  %1827 = vmatpush.bf16.xpose.msra.mxu0 %v1764
  %1828 = vmatpush.bf16.xpose.msra.mxu0 %v1761
  %1829 = vmatpush.bf16.xpose.msra.mxu0 %v1758
  %1830 = vmatpush.bf16.xpose.msra.mxu0 %v1755
  %1831 = vmatpush.bf16.xpose.msra.mxu0 %v1752
  %1832 = vmatpush.bf16.xpose.msra.mxu0 %v1749
  %1833 = vmatpush.bf16.xpose.msra.mxu0 %v1746
  %1834 = vmatpush.bf16.xpose.msra.mxu0 %v1743
  %1835 = vmatmul.bf16.gmra.mxu0 %v1716
  %v1836 = vpop.f32.mrf.mxu0
  %v1837 = vadd.f32 0.0, %v1836
  %v1838 = vpop.f32.mrf.mxu0
  %1839 = vdwg.mxu0
  %1840 = vmatpush.bf16.xpose.msra.mxu0 %v1788
  %1841 = vmatpush.bf16.xpose.msra.mxu0 %v1785
  %1842 = vmatpush.bf16.xpose.msra.mxu0 %v1782
  %1843 = vmatpush.bf16.xpose.msra.mxu0 %v1779
  %1844 = vmatpush.bf16.xpose.msra.mxu0 %v1776
  %1845 = vmatpush.bf16.xpose.msra.mxu0 %v1773
  %1846 = vmatpush.bf16.xpose.msra.mxu0 %v1770
  %1847 = vmatpush.bf16.xpose.msra.mxu0 %v1767
  %1848 = vmatmul.bf16.gmra.mxu0 %v1716
  %v1849 = vpop.f32.mrf.mxu0
  %v1850 = vadd.f32 0.0, %v1849
  %v1851 = vpop.f32.mrf.mxu0
  %1852 = vdwg.mxu0
  %1853 = vmatpush.bf16.xpose.msra.mxu0 %v1812
  %1854 = vmatpush.bf16.xpose.msra.mxu0 %v1809
  %1855 = vmatpush.bf16.xpose.msra.mxu0 %v1806
  %1856 = vmatpush.bf16.xpose.msra.mxu0 %v1803
  %1857 = vmatpush.bf16.xpose.msra.mxu0 %v1800
  %1858 = vmatpush.bf16.xpose.msra.mxu0 %v1797
  %1859 = vmatpush.bf16.xpose.msra.mxu0 %v1794
  %1860 = vmatpush.bf16.xpose.msra.mxu0 %v1791
  %1861 = vmatmul.bf16.gmra.mxu0 %v1716
  %v1862 = vpop.f32.mrf.mxu0
  %v1863 = vadd.f32 0.0, %v1862
  %v1864 = vpop.f32.mrf.mxu0
  %1865 = vdwg.mxu0
  %v1870 = vrot.slane %v1837, 7
  %v1871 = vrot.slane %v1850, 6
  %v1872 = vrot.slane %v1863, 5
  %vm1873 = vcmask 1040384
  %v1874 = vsel %vm1873, %v1824, %v1870
  %vm1875 = vcmask 1042434
  %v1876 = vsel %vm1875, %v1871, %v1872
  %vm1877 = vcmask 1041408
  %v1878 = vsel %vm1877, %v1874, %v1876
  %v1880 = vlaneseq
  %vm1881 = vcmp.ge.s32.totalorder %v1880, 0
  %vm1882 = vcmp.lt.s32.totalorder %v1880, 512
  %vm1883 = vmand %vm1881, %vm1882
  %1884 = vst.msk [vmem:[%s5] sm:$0xf] %vm1883, %v1878
  // Predicated region
  $region22: #{decoder_forward.11} parent=0 // pred_check
    _
  $region23: #{decoder_forward.11} parent=0 // pred_check_branch
    %1886 = sbr.rel (0) target = $region25
  $region24: #{decoder_forward.11} parent=0 // pred_region
    _
  $region25: #{decoder_forward.11} parent=0 // pred_fallthru
    _
  // Predicated region
  $region26: #{decoder_forward.11} parent=0 // pred_check
    _
  $region27: #{decoder_forward.11} parent=0 // pred_check_branch
    %1888 = sbr.rel (0) target = $region29
  $region28: #{decoder_forward.11} parent=0 // pred_region
    _
  $region29: #{decoder_forward.11} parent=0 // pred_fallthru
    _

</llo_original>
